<compile_context>
chip_gen: v5e
topology: v5e:2x2
jax: 0.10.0
libtpu: 0.0.40
codegen_flags: <defaults>
</compile_context>

<pallas_src>
import functools

import jax
import jax.numpy as jnp
from jax import lax
from jax.experimental import pallas as pl
from jax.experimental.pallas import tpu as pltpu

BN_EPS = 1e-5
LANE = 128  # TPU lane width; channels are zero-padded to a multiple of this.


def _round_up(x, m):
    return (x + m - 1) // m * m


# ---------------------------------------------------------------------------
# Kernel 1: [optional fused BN+ReLU prologue] + 3x3 conv (pad=1)
#           + per-channel partial batch statistics (sum, sum-of-squares).
#
# grid = (B, Cout_tiles).  Batch axis is "parallel" (megacore), cout axis is
# "arbitrary" because all cout tiles of one image reuse a per-image scratch
# that is (re)built at j == 0.
# ---------------------------------------------------------------------------
def _conv3x3_kernel(x_ref, w_ref, scale_ref, shift_ref, y_ref, stats_ref,
                    s_ref, *, H, W, Cin, TCout, apply_bn):
    j = pl.program_id(1)

    @pl.when(j == 0)
    def _stage_input():
        x = x_ref[0]                                            # (H, W, Cin)
        if apply_bn:
            # BN (precomputed per-channel scale/shift) + ReLU of the previous
            # layer, fused here so the normalized tensor never hits HBM.
            a = jnp.maximum(x * scale_ref[...] + shift_ref[...], 0.0)
        else:
            a = x
        # Stage three W-shifted, zero-padded copies so every conv tap below is
        # an aligned leading-dim slice (no relayout copies per tap):
        #   s_ref[kw, r, w, :] == zero_pad(a)[r, w + kw, :]
        s_ref[...] = jnp.zeros_like(s_ref)
        s_ref[1, 1:H + 1, :, :] = a
        s_ref[0, 1:H + 1, 1:W, :] = a[:, 0:W - 1, :]
        s_ref[2, 1:H + 1, 0:W - 1, :] = a[:, 1:W, :]

    # 3x3 conv as 9 lane-dense MXU matmuls (H*W, Cin) @ (Cin, TCout).
    # Conv bias intentionally omitted (cancelled by the following batch-stat BN).
    acc = jnp.zeros((H * W, TCout), jnp.float32)
    for kh in range(3):
        for kw in range(3):
            lhs = s_ref[kw, kh:kh + H, :, :].reshape(H * W, Cin)
            acc += jnp.dot(lhs, w_ref[kh, kw],
                           preferred_element_type=jnp.float32)

    y_ref[0] = acc.reshape(H, W, TCout)
    # Per-(image, cout-tile) partials for the two-pass BatchNorm — one
    # unmasked (2, TCout) store (sum row, sumsq row).
    s1 = jnp.sum(acc, axis=0, keepdims=True)                    # (1, TCout)
    s2 = jnp.sum(acc * acc, axis=0, keepdims=True)              # (1, TCout)
    stats_ref[0] = jnp.concatenate([s1, s2], axis=0)            # (2, TCout)


def _conv3x3(x, w, scale_in, shift_in, *, apply_bn, tcout=LANE):
    """x: (B, H, W, Cin_p) f32 NHWC; w: (3, 3, Cin_p, Cout_p) f32.
    Returns raw (pre-BN) conv output (B, H, W, Cout_p) and per-image
    per-channel (sum, sumsq) partials of shape (B, 2, Cout_p)."""
    B, H, W, Cin = x.shape
    Coutp = w.shape[-1]
    nj = Coutp // tcout
    kernel = functools.partial(_conv3x3_kernel, H=H, W=W, Cin=Cin,
                               TCout=tcout, apply_bn=apply_bn)
    return pl.pallas_call(
        kernel,
        out_shape=(jax.ShapeDtypeStruct((B, H, W, Coutp), jnp.float32),
                   jax.ShapeDtypeStruct((B, 2, Coutp), jnp.float32)),
        grid=(B, nj),
        in_specs=[
            pl.BlockSpec((1, H, W, Cin), lambda b, j: (b, 0, 0, 0)),
            pl.BlockSpec((3, 3, Cin, tcout), lambda b, j: (0, 0, 0, j)),
            pl.BlockSpec((1, Cin), lambda b, j: (0, 0)),
            pl.BlockSpec((1, Cin), lambda b, j: (0, 0)),
        ],
        out_specs=(
            pl.BlockSpec((1, H, W, tcout), lambda b, j: (b, 0, 0, j)),
            pl.BlockSpec((1, 2, tcout), lambda b, j: (b, 0, j)),
        ),
        scratch_shapes=[pltpu.VMEM((3, H + 2, W, Cin), jnp.float32)],
        compiler_params=pltpu.CompilerParams(
            dimension_semantics=("parallel", "arbitrary")),
    )(x, w, scale_in, shift_in)


# ---------------------------------------------------------------------------
# Kernel 2: BN + ReLU + fused 2x2/2 max pool.
# Emits both the pre-pool feature map and the pooled output in one pass.
# ---------------------------------------------------------------------------
def _bn_relu_pool_kernel(y_ref, scale_ref, shift_ref, feat_ref, pool_ref,
                         rows_ref, *, H, W, TC):
    a = jnp.maximum(y_ref[0] * scale_ref[...] + shift_ref[...], 0.0)  # (H,W,TC)
    feat_ref[0] = a
    # H direction: free leading-dim reshape + pairwise max.
    a4 = a.reshape(H // 2, 2, W, TC)
    rows_ref[...] = jnp.maximum(a4[:, 0], a4[:, 1])                   # (H/2,W,TC)
    # W direction: stride-2 sublane reads from the VMEM scratch.
    pool_ref[0] = jnp.maximum(rows_ref[:, pl.ds(0, W // 2, 2), :],
                              rows_ref[:, pl.ds(1, W // 2, 2), :])


def _bn_relu_pool(y, scale, shift, *, tcout=LANE):
    B, H, W, C = y.shape
    nj = C // tcout
    kernel = functools.partial(_bn_relu_pool_kernel, H=H, W=W, TC=tcout)
    return pl.pallas_call(
        kernel,
        out_shape=(jax.ShapeDtypeStruct((B, H, W, C), jnp.float32),
                   jax.ShapeDtypeStruct((B, H // 2, W // 2, C), jnp.float32)),
        grid=(B, nj),
        in_specs=[
            pl.BlockSpec((1, H, W, tcout), lambda b, j: (b, 0, 0, j)),
            pl.BlockSpec((1, tcout), lambda b, j: (0, j)),
            pl.BlockSpec((1, tcout), lambda b, j: (0, j)),
        ],
        out_specs=(
            pl.BlockSpec((1, H, W, tcout), lambda b, j: (b, 0, 0, j)),
            pl.BlockSpec((1, H // 2, W // 2, tcout), lambda b, j: (b, 0, 0, j)),
        ),
        scratch_shapes=[pltpu.VMEM((H // 2, W, tcout), jnp.float32)],
        compiler_params=pltpu.CompilerParams(
            dimension_semantics=("parallel", "parallel")),
    )(y, scale, shift)


# ---------------------------------------------------------------------------
# Tiny JAX-side helpers (parameter layout + BN stats finalize).
# ---------------------------------------------------------------------------
def _prep_weight(w_oihw, cin_p, cout_p):
    cout, cin = w_oihw.shape[0], w_oihw.shape[1]
    w = jnp.transpose(w_oihw.astype(jnp.float32), (2, 3, 1, 0))  # (3,3,cin,cout)
    return jnp.pad(w, ((0, 0), (0, 0), (0, cin_p - cin), (0, cout_p - cout)))


def _bn_scale_shift(stats, gamma, beta, count, c_pad):
    """stats: (B, 2, c_pad) per-image (sum, sumsq).  Returns per-channel
    (scale, shift) in (1, c_pad) f32 so BN+ReLU is a fused multiply-add."""
    s = jnp.sum(stats, axis=0)                         # (2, c_pad)
    mean = s[0] / count
    var = s[1] / count - mean * mean                   # biased (training mode)
    var = jnp.maximum(var, 0.0)                        # numerical safety
    c = gamma.shape[0]
    g = jnp.pad(gamma.astype(jnp.float32), (0, c_pad - c))
    bt = jnp.pad(beta.astype(jnp.float32), (0, c_pad - c))
    scale = g * lax.rsqrt(var + BN_EPS)
    shift = bt - mean * scale
    return scale.reshape(1, c_pad), shift.reshape(1, c_pad)


# ---------------------------------------------------------------------------
# EncoderBlock forward (NCHW in / NCHW out, like the PyTorch module)
# ---------------------------------------------------------------------------
def encoder_block_forward(x_nchw, params):
    B, Cin, H, W = x_nchw.shape
    Cout = params["w1"].shape[0]
    assert H % 2 == 0 and W % 2 == 0, "MaxPool2d(2,2) path assumes even H, W"
    cin_p = _round_up(max(Cin, LANE), LANE)
    cout_p = _round_up(max(Cout, LANE), LANE)

    # One-time layout transform: NCHW -> NHWC, channels zero-padded so the
    # channel dim is lane-dense inside the kernels.
    x = jnp.transpose(x_nchw, (0, 2, 3, 1)).astype(jnp.float32)
    x = jnp.pad(x, ((0, 0), (0, 0), (0, 0), (0, cin_p - Cin)))
    w1 = _prep_weight(params["w1"], cin_p, cout_p)
    w2 = _prep_weight(params["w2"], cout_p, cout_p)

    one = jnp.ones((1, cin_p), jnp.float32)
    zero = jnp.zeros((1, cin_p), jnp.float32)
    count = B * H * W

    # conv1 (raw) + BN1 partial stats
    y1, st1 = _conv3x3(x, w1, one, zero, apply_bn=False)
    scale1, shift1 = _bn_scale_shift(st1, params["g1"], params["be1"],
                                     count, cout_p)
    # BN1+ReLU fused into conv2's prologue; conv2 (raw) + BN2 partial stats
    y2, st2 = _conv3x3(y1, w2, scale1, shift1, apply_bn=True)
    scale2, shift2 = _bn_scale_shift(st2, params["g2"], params["be2"],
                                     count, cout_p)
    # BN2 + ReLU + fused 2x2 max pool (features + pooled from one kernel)
    feat, pooled = _bn_relu_pool(y2, scale2, shift2)

    # Channel un-padding fuses into the unavoidable NHWC -> NCHW boundary op.
    feat_nchw = jnp.transpose(feat[..., :Cout], (0, 3, 1, 2))
    out_nchw = jnp.transpose(pooled[..., :Cout], (0, 3, 1, 2))
    return out_nchw, feat_nchw


# ---------------------------------------------------------------------------
# Pure-JAX reference (mirrors the PyTorch module, incl. the conv bias that the
# kernel path folds away) for correctness checking.
# ---------------------------------------------------------------------------
def _ref_forward(x_nchw, params):
    x = jnp.transpose(x_nchw, (0, 2, 3, 1)).astype(jnp.float32)

    def cbr(x, w_oihw, b, g, be):
        w_hwio = jnp.transpose(w_oihw, (2, 3, 1, 0))
        y = lax.conv_general_dilated(
            x, w_hwio, (1, 1), "SAME",
            dimension_numbers=("NHWC", "HWIO", "NHWC")) + b
        mean = jnp.mean(y, axis=(0, 1, 2), keepdims=True)
        var = jnp.mean((y - mean) ** 2, axis=(0, 1, 2), keepdims=True)
        y = (y - mean) / jnp.sqrt(var + BN_EPS) * g + be
        return jnp.maximum(y, 0.0)

    x = cbr(x, params["w1"], params["b1"], params["g1"], params["be1"])
    x = cbr(x, params["w2"], params["b2"], params["g2"], params["be2"])
    pooled = lax.reduce_window(x, -jnp.inf, lax.max,
                               (1, 2, 2, 1), (1, 2, 2, 1), "VALID")
    return jnp.transpose(pooled, (0, 3, 1, 2)), jnp.transpose(x, (0, 3, 1, 2))


def init_params(key, cin, cout):
    ks = jax.random.split(key, 8)
    return {
        # Conv weights in PyTorch OIHW layout, biases (Cout,)
        "w1": jax.random.normal(ks[0], (cout, cin, 3, 3), jnp.float32) * 0.1,
        "b1": jax.random.normal(ks[1], (cout,), jnp.float32) * 0.1,
        "w2": jax.random.normal(ks[2], (cout, cout, 3, 3), jnp.float32) * 0.1,
        "b2": jax.random.normal(ks[3], (cout,), jnp.float32) * 0.1,
        # BN affine params (PyTorch inits gamma=1, beta=0; perturb to exercise math)
        "g1": 1.0 + 0.1 * jax.random.normal(ks[4], (cout,), jnp.float32),
        "be1": 0.1 * jax.random.normal(ks[5], (cout,), jnp.float32),
        "g2": 1.0 + 0.1 * jax.random.normal(ks[6], (cout,), jnp.float32),
        "be2": 0.1 * jax.random.normal(ks[7], (cout,), jnp.float32),
    }


if __name__ == "__main__":
    key = jax.random.PRNGKey(0)
    kx, kp = jax.random.split(key)
    B, Cin, Cout, HW = 2, 4, 8, 16
    x = jax.random.normal(kx, (B, Cin, HW, HW), jnp.float32)  # NCHW like PyTorch
    params = init_params(kp, Cin, Cout)

    fwd = jax.jit(encoder_block_forward)
    out, feat = fwd(x, params)
    out = jax.block_until_ready(out)
    feat = jax.block_until_ready(feat)

    ref_out, ref_feat = _ref_forward(x, params)
    assert out.shape == (B, Cout, HW // 2, HW // 2)
    assert feat.shape == (B, Cout, HW, HW)
    assert jnp.allclose(out, ref_out, rtol=1e-3, atol=1e-3)
    assert jnp.allclose(feat, ref_feat, rtol=1e-3, atol=1e-3)

    print("KERNEL_OK")
</pallas_src>

<mosaic_0001>
module attributes {stable_mosaic.version = 11 : i64} {
  func.func @_conv3x3_kernel(%arg0: i32, %arg1: i32, %arg2: memref<1x16x16x128xf32, #tpu.memory_space<vmem>>, %arg3: memref<3x3x128x128xf32, #tpu.memory_space<vmem>>, %arg4: memref<1x128xf32, #tpu.memory_space<vmem>>, %arg5: memref<1x128xf32, #tpu.memory_space<vmem>>, %arg6: memref<1x16x16x128xf32, #tpu.memory_space<vmem>>, %arg7: memref<1x2x128xf32, #tpu.memory_space<vmem>>, %arg8: memref<3x18x16x128xf32, #tpu.memory_space<vmem>>) attributes {dimension_semantics = [#tpu.dimension_semantics<parallel>, #tpu.dimension_semantics<arbitrary>], iteration_bounds = array<i64: 2, 1>, scalar_prefetch = 0 : i64, scratch_operands = 1 : i64, tpu.core_type = #tpu.core_type<tc>, window_params = [{transform_indices = @transform_0, window_bounds = array<i64: 1, 16, 16, 128>}, {transform_indices = @transform_1, window_bounds = array<i64: 3, 3, 128, 128>}, {pipeline_mode = #tpu.pipeline_mode<synchronous>, transform_indices = @transform_2, window_bounds = array<i64: 1, 128>}, {pipeline_mode = #tpu.pipeline_mode<synchronous>, transform_indices = @transform_3, window_bounds = array<i64: 1, 128>}, {transform_indices = @transform_4, window_bounds = array<i64: 1, 16, 16, 128>}, {transform_indices = @transform_5, window_bounds = array<i64: 1, 2, 128>}]} {
    %c0_i32 = arith.constant 0 : i32
    %0 = arith.cmpi eq, %arg1, %c0_i32 : i32
    %1 = arith.extui %0 : i1 to i32
    %c0_i32_0 = arith.constant 0 : i32
    %2 = arith.cmpi ne, %1, %c0_i32_0 : i32
    scf.if %2 {
      %c0_88 = arith.constant 0 : index
      %c0_89 = arith.constant 0 : index
      %c0_90 = arith.constant 0 : index
      %c0_91 = arith.constant 0 : index
      %80 = vector.load %arg2[%c0_88, %c0_89, %c0_90, %c0_91] : memref<1x16x16x128xf32, #tpu.memory_space<vmem>>, vector<1x16x16x128xf32>
      %81 = vector.shape_cast %80 : vector<1x16x16x128xf32> to vector<16x16x128xf32>
      %cst_92 = arith.constant 0.000000e+00 : f32
      %82 = vector.broadcast %cst_92 : f32 to vector<3x18x16x128xf32>
      %c0_93 = arith.constant 0 : index
      %c0_94 = arith.constant 0 : index
      %c0_95 = arith.constant 0 : index
      %c0_96 = arith.constant 0 : index
      %83 = vector.load %arg8[%c0_93, %c0_94, %c0_95, %c0_96] : memref<3x18x16x128xf32, #tpu.memory_space<vmem>>, vector<3x18x16x128xf32>
      tpu.vector_store %arg8[%c0_93, %c0_94, %c0_95, %c0_96], %82 {strides = array<i32>} : memref<3x18x16x128xf32, #tpu.memory_space<vmem>>, vector<3x18x16x128xf32>,
      %c1_97 = arith.constant 1 : index
      %c1_98 = arith.constant 1 : index
      %c0_99 = arith.constant 0 : index
      %c0_100 = arith.constant 0 : index
      %84 = vector.load %arg8[%c1_97, %c1_98, %c0_99, %c0_100] : memref<3x18x16x128xf32, #tpu.memory_space<vmem>>, vector<1x16x16x128xf32>
      %85 = vector.shape_cast %84 : vector<1x16x16x128xf32> to vector<16x16x128xf32>
      %86 = vector.shape_cast %81 : vector<16x16x128xf32> to vector<1x16x16x128xf32>
      tpu.vector_store %arg8[%c1_97, %c1_98, %c0_99, %c0_100], %86 {strides = array<i32>} : memref<3x18x16x128xf32, #tpu.memory_space<vmem>>, vector<1x16x16x128xf32>,
      %87 = vector.extract_strided_slice %81 {offsets = [0, 0, 0], sizes = [16, 15, 128], strides = [1, 1, 1]} : vector<16x16x128xf32> to vector<16x15x128xf32>
      %c0_101 = arith.constant 0 : index
      %c1_102 = arith.constant 1 : index
      %c1_103 = arith.constant 1 : index
      %c0_104 = arith.constant 0 : index
      %88 = vector.load %arg8[%c0_101, %c1_102, %c1_103, %c0_104] : memref<3x18x16x128xf32, #tpu.memory_space<vmem>>, vector<1x16x15x128xf32>
      %89 = vector.shape_cast %88 : vector<1x16x15x128xf32> to vector<16x15x128xf32>
      %90 = vector.shape_cast %87 : vector<16x15x128xf32> to vector<1x16x15x128xf32>
      tpu.vector_store %arg8[%c0_101, %c1_102, %c1_103, %c0_104], %90 {strides = array<i32>} : memref<3x18x16x128xf32, #tpu.memory_space<vmem>>, vector<1x16x15x128xf32>,
      %91 = vector.extract_strided_slice %81 {offsets = [0, 1, 0], sizes = [16, 15, 128], strides = [1, 1, 1]} : vector<16x16x128xf32> to vector<16x15x128xf32>
      %c2_105 = arith.constant 2 : index
      %c1_106 = arith.constant 1 : index
      %c0_107 = arith.constant 0 : index
      %c0_108 = arith.constant 0 : index
      %92 = vector.load %arg8[%c2_105, %c1_106, %c0_107, %c0_108] : memref<3x18x16x128xf32, #tpu.memory_space<vmem>>, vector<1x16x15x128xf32>
      %93 = vector.shape_cast %92 : vector<1x16x15x128xf32> to vector<16x15x128xf32>
      %94 = vector.shape_cast %91 : vector<16x15x128xf32> to vector<1x16x15x128xf32>
      tpu.vector_store %arg8[%c2_105, %c1_106, %c0_107, %c0_108], %94 {strides = array<i32>} : memref<3x18x16x128xf32, #tpu.memory_space<vmem>>, vector<1x16x15x128xf32>,
    } else {
    }
    %cst = arith.constant 0.000000e+00 : f32
    %3 = vector.broadcast %cst : f32 to vector<256x128xf32>
    %c0 = arith.constant 0 : index
    %c0_1 = arith.constant 0 : index
    %c0_2 = arith.constant 0 : index
    %c0_3 = arith.constant 0 : index
    %4 = vector.load %arg8[%c0, %c0_1, %c0_2, %c0_3] : memref<3x18x16x128xf32, #tpu.memory_space<vmem>>, vector<1x16x16x128xf32>
    %5 = vector.shape_cast %4 : vector<1x16x16x128xf32> to vector<16x16x128xf32>
    %6 = vector.shape_cast %5 : vector<16x16x128xf32> to vector<256x128xf32>
    %c0_4 = arith.constant 0 : index
    %c0_5 = arith.constant 0 : index
    %c0_6 = arith.constant 0 : index
    %c0_7 = arith.constant 0 : index
    %7 = vector.load %arg3[%c0_4, %c0_5, %c0_6, %c0_7] : memref<3x3x128x128xf32, #tpu.memory_space<vmem>>, vector<1x1x128x128xf32>
    %8 = vector.shape_cast %7 : vector<1x1x128x128xf32> to vector<128x128xf32>
    %cst_8 = arith.constant dense<0.000000e+00> : vector<256x128xf32>
    %9 = tpu.matmul %6, %8, %cst_8 {dimension_numbers = #tpu.dot_dimension_numbers<[1], [0], [0], [1], [0, 0, 1, 1], [], []>} : vector<256x128xf32>, vector<128x128xf32>, vector<256x128xf32> -> vector<256x128xf32>
    %10 = arith.addf %3, %9 : vector<256x128xf32>
    %c1 = arith.constant 1 : index
    %c0_9 = arith.constant 0 : index
    %c0_10 = arith.constant 0 : index
    %c0_11 = arith.constant 0 : index
    %11 = vector.load %arg8[%c1, %c0_9, %c0_10, %c0_11] : memref<3x18x16x128xf32, #tpu.memory_space<vmem>>, vector<1x16x16x128xf32>
    %12 = vector.shape_cast %11 : vector<1x16x16x128xf32> to vector<16x16x128xf32>
    %13 = vector.shape_cast %12 : vector<16x16x128xf32> to vector<256x128xf32>
    %c0_12 = arith.constant 0 : index
    %c1_13 = arith.constant 1 : index
    %c0_14 = arith.constant 0 : index
    %c0_15 = arith.constant 0 : index
    %14 = vector.load %arg3[%c0_12, %c1_13, %c0_14, %c0_15] : memref<3x3x128x128xf32, #tpu.memory_space<vmem>>, vector<1x1x128x128xf32>
    %15 = vector.shape_cast %14 : vector<1x1x128x128xf32> to vector<128x128xf32>
    %cst_16 = arith.constant dense<0.000000e+00> : vector<256x128xf32>
    %16 = tpu.matmul %13, %15, %cst_16 {dimension_numbers = #tpu.dot_dimension_numbers<[1], [0], [0], [1], [0, 0, 1, 1], [], []>} : vector<256x128xf32>, vector<128x128xf32>, vector<256x128xf32> -> vector<256x128xf32>
    %17 = arith.addf %10, %16 : vector<256x128xf32>
    %c2 = arith.constant 2 : index
    %c0_17 = arith.constant 0 : index
    %c0_18 = arith.constant 0 : index
    %c0_19 = arith.constant 0 : index
    %18 = vector.load %arg8[%c2, %c0_17, %c0_18, %c0_19] : memref<3x18x16x128xf32, #tpu.memory_space<vmem>>, vector<1x16x16x128xf32>
    %19 = vector.shape_cast %18 : vector<1x16x16x128xf32> to vector<16x16x128xf32>
    %20 = vector.shape_cast %19 : vector<16x16x128xf32> to vector<256x128xf32>
    %c0_20 = arith.constant 0 : index
    %c2_21 = arith.constant 2 : index
    %c0_22 = arith.constant 0 : index
    %c0_23 = arith.constant 0 : index
    %21 = vector.load %arg3[%c0_20, %c2_21, %c0_22, %c0_23] : memref<3x3x128x128xf32, #tpu.memory_space<vmem>>, vector<1x1x128x128xf32>
    %22 = vector.shape_cast %21 : vector<1x1x128x128xf32> to vector<128x128xf32>
    %cst_24 = arith.constant dense<0.000000e+00> : vector<256x128xf32>
    %23 = tpu.matmul %20, %22, %cst_24 {dimension_numbers = #tpu.dot_dimension_numbers<[1], [0], [0], [1], [0, 0, 1, 1], [], []>} : vector<256x128xf32>, vector<128x128xf32>, vector<256x128xf32> -> vector<256x128xf32>
    %24 = arith.addf %17, %23 : vector<256x128xf32>
    %c0_25 = arith.constant 0 : index
    %c1_26 = arith.constant 1 : index
    %c0_27 = arith.constant 0 : index
    %c0_28 = arith.constant 0 : index
    %25 = vector.load %arg8[%c0_25, %c1_26, %c0_27, %c0_28] : memref<3x18x16x128xf32, #tpu.memory_space<vmem>>, vector<1x16x16x128xf32>
    %26 = vector.shape_cast %25 : vector<1x16x16x128xf32> to vector<16x16x128xf32>
    %27 = vector.shape_cast %26 : vector<16x16x128xf32> to vector<256x128xf32>
    %c1_29 = arith.constant 1 : index
    %c0_30 = arith.constant 0 : index
    %c0_31 = arith.constant 0 : index
    %c0_32 = arith.constant 0 : index
    %28 = vector.load %arg3[%c1_29, %c0_30, %c0_31, %c0_32] : memref<3x3x128x128xf32, #tpu.memory_space<vmem>>, vector<1x1x128x128xf32>
    %29 = vector.shape_cast %28 : vector<1x1x128x128xf32> to vector<128x128xf32>
    %cst_33 = arith.constant dense<0.000000e+00> : vector<256x128xf32>
    %30 = tpu.matmul %27, %29, %cst_33 {dimension_numbers = #tpu.dot_dimension_numbers<[1], [0], [0], [1], [0, 0, 1, 1], [], []>} : vector<256x128xf32>, vector<128x128xf32>, vector<256x128xf32> -> vector<256x128xf32>
    %31 = arith.addf %24, %30 : vector<256x128xf32>
    %c1_34 = arith.constant 1 : index
    %c1_35 = arith.constant 1 : index
    %c0_36 = arith.constant 0 : index
    %c0_37 = arith.constant 0 : index
    %32 = vector.load %arg8[%c1_34, %c1_35, %c0_36, %c0_37] : memref<3x18x16x128xf32, #tpu.memory_space<vmem>>, vector<1x16x16x128xf32>
    %33 = vector.shape_cast %32 : vector<1x16x16x128xf32> to vector<16x16x128xf32>
    %34 = vector.shape_cast %33 : vector<16x16x128xf32> to vector<256x128xf32>
    %c1_38 = arith.constant 1 : index
    %c1_39 = arith.constant 1 : index
    %c0_40 = arith.constant 0 : index
    %c0_41 = arith.constant 0 : index
    %35 = vector.load %arg3[%c1_38, %c1_39, %c0_40, %c0_41] : memref<3x3x128x128xf32, #tpu.memory_space<vmem>>, vector<1x1x128x128xf32>
    %36 = vector.shape_cast %35 : vector<1x1x128x128xf32> to vector<128x128xf32>
    %cst_42 = arith.constant dense<0.000000e+00> : vector<256x128xf32>
    %37 = tpu.matmul %34, %36, %cst_42 {dimension_numbers = #tpu.dot_dimension_numbers<[1], [0], [0], [1], [0, 0, 1, 1], [], []>} : vector<256x128xf32>, vector<128x128xf32>, vector<256x128xf32> -> vector<256x128xf32>
    %38 = arith.addf %31, %37 : vector<256x128xf32>
    %c2_43 = arith.constant 2 : index
    %c1_44 = arith.constant 1 : index
    %c0_45 = arith.constant 0 : index
    %c0_46 = arith.constant 0 : index
    %39 = vector.load %arg8[%c2_43, %c1_44, %c0_45, %c0_46] : memref<3x18x16x128xf32, #tpu.memory_space<vmem>>, vector<1x16x16x128xf32>
    %40 = vector.shape_cast %39 : vector<1x16x16x128xf32> to vector<16x16x128xf32>
    %41 = vector.shape_cast %40 : vector<16x16x128xf32> to vector<256x128xf32>
    %c1_47 = arith.constant 1 : index
    %c2_48 = arith.constant 2 : index
    %c0_49 = arith.constant 0 : index
    %c0_50 = arith.constant 0 : index
    %42 = vector.load %arg3[%c1_47, %c2_48, %c0_49, %c0_50] : memref<3x3x128x128xf32, #tpu.memory_space<vmem>>, vector<1x1x128x128xf32>
    %43 = vector.shape_cast %42 : vector<1x1x128x128xf32> to vector<128x128xf32>
    %cst_51 = arith.constant dense<0.000000e+00> : vector<256x128xf32>
    %44 = tpu.matmul %41, %43, %cst_51 {dimension_numbers = #tpu.dot_dimension_numbers<[1], [0], [0], [1], [0, 0, 1, 1], [], []>} : vector<256x128xf32>, vector<128x128xf32>, vector<256x128xf32> -> vector<256x128xf32>
    %45 = arith.addf %38, %44 : vector<256x128xf32>
    %c0_52 = arith.constant 0 : index
    %c2_53 = arith.constant 2 : index
    %c0_54 = arith.constant 0 : index
    %c0_55 = arith.constant 0 : index
    %46 = vector.load %arg8[%c0_52, %c2_53, %c0_54, %c0_55] : memref<3x18x16x128xf32, #tpu.memory_space<vmem>>, vector<1x16x16x128xf32>
    %47 = vector.shape_cast %46 : vector<1x16x16x128xf32> to vector<16x16x128xf32>
    %48 = vector.shape_cast %47 : vector<16x16x128xf32> to vector<256x128xf32>
    %c2_56 = arith.constant 2 : index
    %c0_57 = arith.constant 0 : index
    %c0_58 = arith.constant 0 : index
    %c0_59 = arith.constant 0 : index
    %49 = vector.load %arg3[%c2_56, %c0_57, %c0_58, %c0_59] : memref<3x3x128x128xf32, #tpu.memory_space<vmem>>, vector<1x1x128x128xf32>
    %50 = vector.shape_cast %49 : vector<1x1x128x128xf32> to vector<128x128xf32>
    %cst_60 = arith.constant dense<0.000000e+00> : vector<256x128xf32>
    %51 = tpu.matmul %48, %50, %cst_60 {dimension_numbers = #tpu.dot_dimension_numbers<[1], [0], [0], [1], [0, 0, 1, 1], [], []>} : vector<256x128xf32>, vector<128x128xf32>, vector<256x128xf32> -> vector<256x128xf32>
    %52 = arith.addf %45, %51 : vector<256x128xf32>
    %c1_61 = arith.constant 1 : index
    %c2_62 = arith.constant 2 : index
    %c0_63 = arith.constant 0 : index
    %c0_64 = arith.constant 0 : index
    %53 = vector.load %arg8[%c1_61, %c2_62, %c0_63, %c0_64] : memref<3x18x16x128xf32, #tpu.memory_space<vmem>>, vector<1x16x16x128xf32>
    %54 = vector.shape_cast %53 : vector<1x16x16x128xf32> to vector<16x16x128xf32>
    %55 = vector.shape_cast %54 : vector<16x16x128xf32> to vector<256x128xf32>
    %c2_65 = arith.constant 2 : index
    %c1_66 = arith.constant 1 : index
    %c0_67 = arith.constant 0 : index
    %c0_68 = arith.constant 0 : index
    %56 = vector.load %arg3[%c2_65, %c1_66, %c0_67, %c0_68] : memref<3x3x128x128xf32, #tpu.memory_space<vmem>>, vector<1x1x128x128xf32>
    %57 = vector.shape_cast %56 : vector<1x1x128x128xf32> to vector<128x128xf32>
    %cst_69 = arith.constant dense<0.000000e+00> : vector<256x128xf32>
    %58 = tpu.matmul %55, %57, %cst_69 {dimension_numbers = #tpu.dot_dimension_numbers<[1], [0], [0], [1], [0, 0, 1, 1], [], []>} : vector<256x128xf32>, vector<128x128xf32>, vector<256x128xf32> -> vector<256x128xf32>
    %59 = arith.addf %52, %58 : vector<256x128xf32>
    %c2_70 = arith.constant 2 : index
    %c2_71 = arith.constant 2 : index
    %c0_72 = arith.constant 0 : index
    %c0_73 = arith.constant 0 : index
    %60 = vector.load %arg8[%c2_70, %c2_71, %c0_72, %c0_73] : memref<3x18x16x128xf32, #tpu.memory_space<vmem>>, vector<1x16x16x128xf32>
    %61 = vector.shape_cast %60 : vector<1x16x16x128xf32> to vector<16x16x128xf32>
    %62 = vector.shape_cast %61 : vector<16x16x128xf32> to vector<256x128xf32>
    %c2_74 = arith.constant 2 : index
    %c2_75 = arith.constant 2 : index
    %c0_76 = arith.constant 0 : index
    %c0_77 = arith.constant 0 : index
    %63 = vector.load %arg3[%c2_74, %c2_75, %c0_76, %c0_77] : memref<3x3x128x128xf32, #tpu.memory_space<vmem>>, vector<1x1x128x128xf32>
    %64 = vector.shape_cast %63 : vector<1x1x128x128xf32> to vector<128x128xf32>
    %cst_78 = arith.constant dense<0.000000e+00> : vector<256x128xf32>
    %65 = tpu.matmul %62, %64, %cst_78 {dimension_numbers = #tpu.dot_dimension_numbers<[1], [0], [0], [1], [0, 0, 1, 1], [], []>} : vector<256x128xf32>, vector<128x128xf32>, vector<256x128xf32> -> vector<256x128xf32>
    %66 = arith.addf %59, %65 : vector<256x128xf32>
    %67 = vector.shape_cast %66 : vector<256x128xf32> to vector<16x16x128xf32>
    %c0_79 = arith.constant 0 : index
    %c0_80 = arith.constant 0 : index
    %c0_81 = arith.constant 0 : index
    %c0_82 = arith.constant 0 : index
    %68 = vector.load %arg6[%c0_79, %c0_80, %c0_81, %c0_82] : memref<1x16x16x128xf32, #tpu.memory_space<vmem>>, vector<1x16x16x128xf32>
    %69 = vector.shape_cast %68 : vector<1x16x16x128xf32> to vector<16x16x128xf32>
    %70 = vector.shape_cast %67 : vector<16x16x128xf32> to vector<1x16x16x128xf32>
    tpu.vector_store %arg6[%c0_79, %c0_80, %c0_81, %c0_82], %70 {strides = array<i32>} : memref<1x16x16x128xf32, #tpu.memory_space<vmem>>, vector<1x16x16x128xf32>,
    %cst_83 = arith.constant dense<0.000000e+00> : vector<128xf32>
    %71 = vector.multi_reduction <add>, %66, %cst_83 [0] : vector<256x128xf32> to vector<128xf32>
    %72 = vector.shape_cast %71 : vector<128xf32> to vector<1x128xf32>
    %73 = arith.mulf %66, %66 : vector<256x128xf32>
    %cst_84 = arith.constant dense<0.000000e+00> : vector<128xf32>
    %74 = vector.multi_reduction <add>, %73, %cst_84 [0] : vector<256x128xf32> to vector<128xf32>
    %75 = vector.shape_cast %74 : vector<128xf32> to vector<1x128xf32>
    %76 = tpu.concatenate %72, %75 in 0 : vector<1x128xf32>, vector<1x128xf32> -> vector<2x128xf32>
    %c0_85 = arith.constant 0 : index
    %c0_86 = arith.constant 0 : index
    %c0_87 = arith.constant 0 : index
    %77 = vector.load %arg7[%c0_85, %c0_86, %c0_87] : memref<1x2x128xf32, #tpu.memory_space<vmem>>, vector<1x2x128xf32>
    %78 = vector.shape_cast %77 : vector<1x2x128xf32> to vector<2x128xf32>
    %79 = vector.shape_cast %76 : vector<2x128xf32> to vector<1x2x128xf32>
    tpu.vector_store %arg7[%c0_85, %c0_86, %c0_87], %79 {strides = array<i32>} : memref<1x2x128xf32, #tpu.memory_space<vmem>>, vector<1x2x128xf32>,
    return
  }
  func.func @transform_0(%arg0: i32, %arg1: i32) -> (i32, i32, i32, i32) {
    %c0_i32 = arith.constant 0 : i32
    %c0_i32_0 = arith.constant 0 : i32
    %c0_i32_1 = arith.constant 0 : i32
    %c0_i32_2 = arith.constant 0 : i32
    return %arg0, %c0_i32, %c0_i32_0, %c0_i32_1 : i32, i32, i32, i32
  }
  func.func @transform_1(%arg0: i32, %arg1: i32) -> (i32, i32, i32, i32) {
    %c0_i32 = arith.constant 0 : i32
    %c0_i32_0 = arith.constant 0 : i32
    %c0_i32_1 = arith.constant 0 : i32
    %c0_i32_2 = arith.constant 0 : i32
    return %c0_i32, %c0_i32_0, %c0_i32_1, %arg1 : i32, i32, i32, i32
  }
  func.func @transform_2(%arg0: i32, %arg1: i32) -> (i32, i32) {
    %c0_i32 = arith.constant 0 : i32
    %c0_i32_0 = arith.constant 0 : i32
    %c0_i32_1 = arith.constant 0 : i32
    return %c0_i32, %c0_i32_0 : i32, i32
  }
  func.func @transform_3(%arg0: i32, %arg1: i32) -> (i32, i32) {
    %c0_i32 = arith.constant 0 : i32
    %c0_i32_0 = arith.constant 0 : i32
    %c0_i32_1 = arith.constant 0 : i32
    return %c0_i32, %c0_i32_0 : i32, i32
  }
  func.func @transform_4(%arg0: i32, %arg1: i32) -> (i32, i32, i32, i32) {
    %c0_i32 = arith.constant 0 : i32
    %c0_i32_0 = arith.constant 0 : i32
    %c0_i32_1 = arith.constant 0 : i32
    return %arg0, %c0_i32, %c0_i32_0, %arg1 : i32, i32, i32, i32
  }
  func.func @transform_5(%arg0: i32, %arg1: i32) -> (i32, i32, i32) {
    %c0_i32 = arith.constant 0 : i32
    %c0_i32_0 = arith.constant 0 : i32
    return %arg0, %c0_i32, %arg1 : i32, i32, i32
  }
}

module attributes {stable_mosaic.version = 11 : i64} {
  func.func @_bn_relu_pool_kernel(%arg0: i32, %arg1: i32, %arg2: memref<1x16x16x128xf32, #tpu.memory_space<vmem>>, %arg3: memref<1x128xf32, #tpu.memory_space<vmem>>, %arg4: memref<1x128xf32, #tpu.memory_space<vmem>>, %arg5: memref<1x16x16x128xf32, #tpu.memory_space<vmem>>, %arg6: memref<1x8x8x128xf32, #tpu.memory_space<vmem>>, %arg7: memref<8x16x128xf32, #tpu.memory_space<vmem>>) attributes {dimension_semantics = [#tpu.dimension_semantics<parallel>, #tpu.dimension_semantics<parallel>], iteration_bounds = array<i64: 2, 1>, scalar_prefetch = 0 : i64, scratch_operands = 1 : i64, tpu.core_type = #tpu.core_type<tc>, window_params = [{transform_indices = @transform_0, window_bounds = array<i64: 1, 16, 16, 128>}, {transform_indices = @transform_1, window_bounds = array<i64: 1, 128>}, {transform_indices = @transform_2, window_bounds = array<i64: 1, 128>}, {transform_indices = @transform_3, window_bounds = array<i64: 1, 16, 16, 128>}, {transform_indices = @transform_4, window_bounds = array<i64: 1, 8, 8, 128>}]} {
    %c0 = arith.constant 0 : index
    %c0_0 = arith.constant 0 : index
    %c0_1 = arith.constant 0 : index
    %c0_2 = arith.constant 0 : index
    %0 = vector.load %arg2[%c0, %c0_0, %c0_1, %c0_2] : memref<1x16x16x128xf32, #tpu.memory_space<vmem>>, vector<1x16x16x128xf32>
    %1 = vector.shape_cast %0 : vector<1x16x16x128xf32> to vector<16x16x128xf32>
    %c0_3 = arith.constant 0 : index
    %c0_4 = arith.constant 0 : index
    %2 = vector.load %arg3[%c0_3, %c0_4] : memref<1x128xf32, #tpu.memory_space<vmem>>, vector<1x128xf32>
    %3 = vector.shape_cast %2 : vector<1x128xf32> to vector<1x1x128xf32>
    %4 = vector.broadcast %3 : vector<1x1x128xf32> to vector<16x16x128xf32>
    %5 = arith.mulf %1, %4 : vector<16x16x128xf32>
    %c0_5 = arith.constant 0 : index
    %c0_6 = arith.constant 0 : index
    %6 = vector.load %arg4[%c0_5, %c0_6] : memref<1x128xf32, #tpu.memory_space<vmem>>, vector<1x128xf32>
    %7 = vector.shape_cast %6 : vector<1x128xf32> to vector<1x1x128xf32>
    %8 = vector.broadcast %7 : vector<1x1x128xf32> to vector<16x16x128xf32>
    %9 = arith.addf %5, %8 : vector<16x16x128xf32>
    %cst = arith.constant 0.000000e+00 : f32
    %10 = vector.broadcast %cst : f32 to vector<16x16x128xf32>
    %11 = arith.maximumf %9, %10 : vector<16x16x128xf32>
    %c0_7 = arith.constant 0 : index
    %c0_8 = arith.constant 0 : index
    %c0_9 = arith.constant 0 : index
    %c0_10 = arith.constant 0 : index
    %12 = vector.load %arg5[%c0_7, %c0_8, %c0_9, %c0_10] : memref<1x16x16x128xf32, #tpu.memory_space<vmem>>, vector<1x16x16x128xf32>
    %13 = vector.shape_cast %12 : vector<1x16x16x128xf32> to vector<16x16x128xf32>
    %14 = vector.shape_cast %11 : vector<16x16x128xf32> to vector<1x16x16x128xf32>
    tpu.vector_store %arg5[%c0_7, %c0_8, %c0_9, %c0_10], %14 {strides = array<i32>} : memref<1x16x16x128xf32, #tpu.memory_space<vmem>>, vector<1x16x16x128xf32>,
    %15 = vector.shape_cast %11 : vector<16x16x128xf32> to vector<8x2x16x128xf32>
    %16 = vector.extract_strided_slice %15 {offsets = [0, 0, 0, 0], sizes = [8, 1, 16, 128], strides = [1, 1, 1, 1]} : vector<8x2x16x128xf32> to vector<8x1x16x128xf32>
    %17 = vector.shape_cast %16 : vector<8x1x16x128xf32> to vector<8x16x128xf32>
    %18 = vector.extract_strided_slice %15 {offsets = [0, 1, 0, 0], sizes = [8, 1, 16, 128], strides = [1, 1, 1, 1]} : vector<8x2x16x128xf32> to vector<8x1x16x128xf32>
    %19 = vector.shape_cast %18 : vector<8x1x16x128xf32> to vector<8x16x128xf32>
    %20 = arith.maximumf %17, %19 : vector<8x16x128xf32>
    %c0_11 = arith.constant 0 : index
    %c0_12 = arith.constant 0 : index
    %c0_13 = arith.constant 0 : index
    %21 = vector.load %arg7[%c0_11, %c0_12, %c0_13] : memref<8x16x128xf32, #tpu.memory_space<vmem>>, vector<8x16x128xf32>
    tpu.vector_store %arg7[%c0_11, %c0_12, %c0_13], %20 {strides = array<i32>} : memref<8x16x128xf32, #tpu.memory_space<vmem>>, vector<8x16x128xf32>,
    %c0_14 = arith.constant 0 : index
    %c0_15 = arith.constant 0 : index
    %c0_16 = arith.constant 0 : index
    %22 = tpu.strided_load %arg7[%c0_14, %c0_15, %c0_16] {strides = array<i32: 1, 2, 1>} : memref<8x16x128xf32, #tpu.memory_space<vmem>>, vector<8x8x128xf32>
    %c0_17 = arith.constant 0 : index
    %c1 = arith.constant 1 : index
    %c0_18 = arith.constant 0 : index
    %23 = tpu.strided_load %arg7[%c0_17, %c1, %c0_18] {strides = array<i32: 1, 2, 1>} : memref<8x16x128xf32, #tpu.memory_space<vmem>>, vector<8x8x128xf32>
    %24 = arith.maximumf %22, %23 : vector<8x8x128xf32>
    %c0_19 = arith.constant 0 : index
    %c0_20 = arith.constant 0 : index
    %c0_21 = arith.constant 0 : index
    %c0_22 = arith.constant 0 : index
    %25 = vector.load %arg6[%c0_19, %c0_20, %c0_21, %c0_22] : memref<1x8x8x128xf32, #tpu.memory_space<vmem>>, vector<1x8x8x128xf32>
    %26 = vector.shape_cast %25 : vector<1x8x8x128xf32> to vector<8x8x128xf32>
    %27 = vector.shape_cast %24 : vector<8x8x128xf32> to vector<1x8x8x128xf32>
    tpu.vector_store %arg6[%c0_19, %c0_20, %c0_21, %c0_22], %27 {strides = array<i32>} : memref<1x8x8x128xf32, #tpu.memory_space<vmem>>, vector<1x8x8x128xf32>,
    return
  }
  func.func @transform_0(%arg0: i32, %arg1: i32) -> (i32, i32, i32, i32) {
    %c0_i32 = arith.constant 0 : i32
    %c0_i32_0 = arith.constant 0 : i32
    %c0_i32_1 = arith.constant 0 : i32
    return %arg0, %c0_i32, %c0_i32_0, %arg1 : i32, i32, i32, i32
  }
  func.func @transform_1(%arg0: i32, %arg1: i32) -> (i32, i32) {
    %c0_i32 = arith.constant 0 : i32
    %c0_i32_0 = arith.constant 0 : i32
    return %c0_i32, %arg1 : i32, i32
  }
  func.func @transform_2(%arg0: i32, %arg1: i32) -> (i32, i32) {
    %c0_i32 = arith.constant 0 : i32
    %c0_i32_0 = arith.constant 0 : i32
    return %c0_i32, %arg1 : i32, i32
  }
  func.func @transform_3(%arg0: i32, %arg1: i32) -> (i32, i32, i32, i32) {
    %c0_i32 = arith.constant 0 : i32
    %c0_i32_0 = arith.constant 0 : i32
    %c0_i32_1 = arith.constant 0 : i32
    return %arg0, %c0_i32, %c0_i32_0, %arg1 : i32, i32, i32, i32
  }
  func.func @transform_4(%arg0: i32, %arg1: i32) -> (i32, i32, i32, i32) {
    %c0_i32 = arith.constant 0 : i32
    %c0_i32_0 = arith.constant 0 : i32
    %c0_i32_1 = arith.constant 0 : i32
    return %arg0, %c0_i32, %c0_i32_0, %arg1 : i32, i32, i32, i32
  }
}

module attributes {stable_mosaic.version = 11 : i64} {
  func.func @_conv3x3_kernel(%arg0: i32, %arg1: i32, %arg2: memref<1x16x16x128xf32, #tpu.memory_space<vmem>>, %arg3: memref<3x3x128x128xf32, #tpu.memory_space<vmem>>, %arg4: memref<1x128xf32, #tpu.memory_space<vmem>>, %arg5: memref<1x128xf32, #tpu.memory_space<vmem>>, %arg6: memref<1x16x16x128xf32, #tpu.memory_space<vmem>>, %arg7: memref<1x2x128xf32, #tpu.memory_space<vmem>>, %arg8: memref<3x18x16x128xf32, #tpu.memory_space<vmem>>) attributes {dimension_semantics = [#tpu.dimension_semantics<parallel>, #tpu.dimension_semantics<arbitrary>], iteration_bounds = array<i64: 2, 1>, scalar_prefetch = 0 : i64, scratch_operands = 1 : i64, tpu.core_type = #tpu.core_type<tc>, window_params = [{transform_indices = @transform_0, window_bounds = array<i64: 1, 16, 16, 128>}, {transform_indices = @transform_1, window_bounds = array<i64: 3, 3, 128, 128>}, {pipeline_mode = #tpu.pipeline_mode<synchronous>, transform_indices = @transform_2, window_bounds = array<i64: 1, 128>}, {pipeline_mode = #tpu.pipeline_mode<synchronous>, transform_indices = @transform_3, window_bounds = array<i64: 1, 128>}, {transform_indices = @transform_4, window_bounds = array<i64: 1, 16, 16, 128>}, {transform_indices = @transform_5, window_bounds = array<i64: 1, 2, 128>}]} {
    %c0_i32 = arith.constant 0 : i32
    %0 = arith.cmpi eq, %arg1, %c0_i32 : i32
    %1 = arith.extui %0 : i1 to i32
    %c0_i32_0 = arith.constant 0 : i32
    %2 = arith.cmpi ne, %1, %c0_i32_0 : i32
    scf.if %2 {
      %c0_88 = arith.constant 0 : index
      %c0_89 = arith.constant 0 : index
      %c0_90 = arith.constant 0 : index
      %c0_91 = arith.constant 0 : index
      %80 = vector.load %arg2[%c0_88, %c0_89, %c0_90, %c0_91] : memref<1x16x16x128xf32, #tpu.memory_space<vmem>>, vector<1x16x16x128xf32>
      %81 = vector.shape_cast %80 : vector<1x16x16x128xf32> to vector<16x16x128xf32>
      %c0_92 = arith.constant 0 : index
      %c0_93 = arith.constant 0 : index
      %82 = vector.load %arg4[%c0_92, %c0_93] : memref<1x128xf32, #tpu.memory_space<vmem>>, vector<1x128xf32>
      %83 = vector.shape_cast %82 : vector<1x128xf32> to vector<1x1x128xf32>
      %84 = vector.broadcast %83 : vector<1x1x128xf32> to vector<16x16x128xf32>
      %85 = arith.mulf %81, %84 : vector<16x16x128xf32>
      %c0_94 = arith.constant 0 : index
      %c0_95 = arith.constant 0 : index
      %86 = vector.load %arg5[%c0_94, %c0_95] : memref<1x128xf32, #tpu.memory_space<vmem>>, vector<1x128xf32>
      %87 = vector.shape_cast %86 : vector<1x128xf32> to vector<1x1x128xf32>
      %88 = vector.broadcast %87 : vector<1x1x128xf32> to vector<16x16x128xf32>
      %89 = arith.addf %85, %88 : vector<16x16x128xf32>
      %cst_96 = arith.constant 0.000000e+00 : f32
      %90 = vector.broadcast %cst_96 : f32 to vector<16x16x128xf32>
      %91 = arith.maximumf %89, %90 : vector<16x16x128xf32>
      %cst_97 = arith.constant 0.000000e+00 : f32
      %92 = vector.broadcast %cst_97 : f32 to vector<3x18x16x128xf32>
      %c0_98 = arith.constant 0 : index
      %c0_99 = arith.constant 0 : index
      %c0_100 = arith.constant 0 : index
      %c0_101 = arith.constant 0 : index
      %93 = vector.load %arg8[%c0_98, %c0_99, %c0_100, %c0_101] : memref<3x18x16x128xf32, #tpu.memory_space<vmem>>, vector<3x18x16x128xf32>
      tpu.vector_store %arg8[%c0_98, %c0_99, %c0_100, %c0_101], %92 {strides = array<i32>} : memref<3x18x16x128xf32, #tpu.memory_space<vmem>>, vector<3x18x16x128xf32>,
      %c1_102 = arith.constant 1 : index
      %c1_103 = arith.constant 1 : index
      %c0_104 = arith.constant 0 : index
      %c0_105 = arith.constant 0 : index
      %94 = vector.load %arg8[%c1_102, %c1_103, %c0_104, %c0_105] : memref<3x18x16x128xf32, #tpu.memory_space<vmem>>, vector<1x16x16x128xf32>
      %95 = vector.shape_cast %94 : vector<1x16x16x128xf32> to vector<16x16x128xf32>
      %96 = vector.shape_cast %91 : vector<16x16x128xf32> to vector<1x16x16x128xf32>
      tpu.vector_store %arg8[%c1_102, %c1_103, %c0_104, %c0_105], %96 {strides = array<i32>} : memref<3x18x16x128xf32, #tpu.memory_space<vmem>>, vector<1x16x16x128xf32>,
      %97 = vector.extract_strided_slice %91 {offsets = [0, 0, 0], sizes = [16, 15, 128], strides = [1, 1, 1]} : vector<16x16x128xf32> to vector<16x15x128xf32>
      %c0_106 = arith.constant 0 : index
      %c1_107 = arith.constant 1 : index
      %c1_108 = arith.constant 1 : index
      %c0_109 = arith.constant 0 : index
      %98 = vector.load %arg8[%c0_106, %c1_107, %c1_108, %c0_109] : memref<3x18x16x128xf32, #tpu.memory_space<vmem>>, vector<1x16x15x128xf32>
      %99 = vector.shape_cast %98 : vector<1x16x15x128xf32> to vector<16x15x128xf32>
      %100 = vector.shape_cast %97 : vector<16x15x128xf32> to vector<1x16x15x128xf32>
      tpu.vector_store %arg8[%c0_106, %c1_107, %c1_108, %c0_109], %100 {strides = array<i32>} : memref<3x18x16x128xf32, #tpu.memory_space<vmem>>, vector<1x16x15x128xf32>,
      %101 = vector.extract_strided_slice %91 {offsets = [0, 1, 0], sizes = [16, 15, 128], strides = [1, 1, 1]} : vector<16x16x128xf32> to vector<16x15x128xf32>
      %c2_110 = arith.constant 2 : index
      %c1_111 = arith.constant 1 : index
      %c0_112 = arith.constant 0 : index
      %c0_113 = arith.constant 0 : index
      %102 = vector.load %arg8[%c2_110, %c1_111, %c0_112, %c0_113] : memref<3x18x16x128xf32, #tpu.memory_space<vmem>>, vector<1x16x15x128xf32>
      %103 = vector.shape_cast %102 : vector<1x16x15x128xf32> to vector<16x15x128xf32>
      %104 = vector.shape_cast %101 : vector<16x15x128xf32> to vector<1x16x15x128xf32>
      tpu.vector_store %arg8[%c2_110, %c1_111, %c0_112, %c0_113], %104 {strides = array<i32>} : memref<3x18x16x128xf32, #tpu.memory_space<vmem>>, vector<1x16x15x128xf32>,
    } else {
    }
    %cst = arith.constant 0.000000e+00 : f32
    %3 = vector.broadcast %cst : f32 to vector<256x128xf32>
    %c0 = arith.constant 0 : index
    %c0_1 = arith.constant 0 : index
    %c0_2 = arith.constant 0 : index
    %c0_3 = arith.constant 0 : index
    %4 = vector.load %arg8[%c0, %c0_1, %c0_2, %c0_3] : memref<3x18x16x128xf32, #tpu.memory_space<vmem>>, vector<1x16x16x128xf32>
    %5 = vector.shape_cast %4 : vector<1x16x16x128xf32> to vector<16x16x128xf32>
    %6 = vector.shape_cast %5 : vector<16x16x128xf32> to vector<256x128xf32>
    %c0_4 = arith.constant 0 : index
    %c0_5 = arith.constant 0 : index
    %c0_6 = arith.constant 0 : index
    %c0_7 = arith.constant 0 : index
    %7 = vector.load %arg3[%c0_4, %c0_5, %c0_6, %c0_7] : memref<3x3x128x128xf32, #tpu.memory_space<vmem>>, vector<1x1x128x128xf32>
    %8 = vector.shape_cast %7 : vector<1x1x128x128xf32> to vector<128x128xf32>
    %cst_8 = arith.constant dense<0.000000e+00> : vector<256x128xf32>
    %9 = tpu.matmul %6, %8, %cst_8 {dimension_numbers = #tpu.dot_dimension_numbers<[1], [0], [0], [1], [0, 0, 1, 1], [], []>} : vector<256x128xf32>, vector<128x128xf32>, vector<256x128xf32> -> vector<256x128xf32>
    %10 = arith.addf %3, %9 : vector<256x128xf32>
    %c1 = arith.constant 1 : index
    %c0_9 = arith.constant 0 : index
    %c0_10 = arith.constant 0 : index
    %c0_11 = arith.constant 0 : index
    %11 = vector.load %arg8[%c1, %c0_9, %c0_10, %c0_11] : memref<3x18x16x128xf32, #tpu.memory_space<vmem>>, vector<1x16x16x128xf32>
    %12 = vector.shape_cast %11 : vector<1x16x16x128xf32> to vector<16x16x128xf32>
    %13 = vector.shape_cast %12 : vector<16x16x128xf32> to vector<256x128xf32>
    %c0_12 = arith.constant 0 : index
    %c1_13 = arith.constant 1 : index
    %c0_14 = arith.constant 0 : index
    %c0_15 = arith.constant 0 : index
    %14 = vector.load %arg3[%c0_12, %c1_13, %c0_14, %c0_15] : memref<3x3x128x128xf32, #tpu.memory_space<vmem>>, vector<1x1x128x128xf32>
    %15 = vector.shape_cast %14 : vector<1x1x128x128xf32> to vector<128x128xf32>
    %cst_16 = arith.constant dense<0.000000e+00> : vector<256x128xf32>
    %16 = tpu.matmul %13, %15, %cst_16 {dimension_numbers = #tpu.dot_dimension_numbers<[1], [0], [0], [1], [0, 0, 1, 1], [], []>} : vector<256x128xf32>, vector<128x128xf32>, vector<256x128xf32> -> vector<256x128xf32>
    %17 = arith.addf %10, %16 : vector<256x128xf32>
    %c2 = arith.constant 2 : index
    %c0_17 = arith.constant 0 : index
    %c0_18 = arith.constant 0 : index
    %c0_19 = arith.constant 0 : index
    %18 = vector.load %arg8[%c2, %c0_17, %c0_18, %c0_19] : memref<3x18x16x128xf32, #tpu.memory_space<vmem>>, vector<1x16x16x128xf32>
    %19 = vector.shape_cast %18 : vector<1x16x16x128xf32> to vector<16x16x128xf32>
    %20 = vector.shape_cast %19 : vector<16x16x128xf32> to vector<256x128xf32>
    %c0_20 = arith.constant 0 : index
    %c2_21 = arith.constant 2 : index
    %c0_22 = arith.constant 0 : index
    %c0_23 = arith.constant 0 : index
    %21 = vector.load %arg3[%c0_20, %c2_21, %c0_22, %c0_23] : memref<3x3x128x128xf32, #tpu.memory_space<vmem>>, vector<1x1x128x128xf32>
    %22 = vector.shape_cast %21 : vector<1x1x128x128xf32> to vector<128x128xf32>
    %cst_24 = arith.constant dense<0.000000e+00> : vector<256x128xf32>
    %23 = tpu.matmul %20, %22, %cst_24 {dimension_numbers = #tpu.dot_dimension_numbers<[1], [0], [0], [1], [0, 0, 1, 1], [], []>} : vector<256x128xf32>, vector<128x128xf32>, vector<256x128xf32> -> vector<256x128xf32>
    %24 = arith.addf %17, %23 : vector<256x128xf32>
    %c0_25 = arith.constant 0 : index
    %c1_26 = arith.constant 1 : index
    %c0_27 = arith.constant 0 : index
    %c0_28 = arith.constant 0 : index
    %25 = vector.load %arg8[%c0_25, %c1_26, %c0_27, %c0_28] : memref<3x18x16x128xf32, #tpu.memory_space<vmem>>, vector<1x16x16x128xf32>
    %26 = vector.shape_cast %25 : vector<1x16x16x128xf32> to vector<16x16x128xf32>
    %27 = vector.shape_cast %26 : vector<16x16x128xf32> to vector<256x128xf32>
    %c1_29 = arith.constant 1 : index
    %c0_30 = arith.constant 0 : index
    %c0_31 = arith.constant 0 : index
    %c0_32 = arith.constant 0 : index
    %28 = vector.load %arg3[%c1_29, %c0_30, %c0_31, %c0_32] : memref<3x3x128x128xf32, #tpu.memory_space<vmem>>, vector<1x1x128x128xf32>
    %29 = vector.shape_cast %28 : vector<1x1x128x128xf32> to vector<128x128xf32>
    %cst_33 = arith.constant dense<0.000000e+00> : vector<256x128xf32>
    %30 = tpu.matmul %27, %29, %cst_33 {dimension_numbers = #tpu.dot_dimension_numbers<[1], [0], [0], [1], [0, 0, 1, 1], [], []>} : vector<256x128xf32>, vector<128x128xf32>, vector<256x128xf32> -> vector<256x128xf32>
    %31 = arith.addf %24, %30 : vector<256x128xf32>
    %c1_34 = arith.constant 1 : index
    %c1_35 = arith.constant 1 : index
    %c0_36 = arith.constant 0 : index
    %c0_37 = arith.constant 0 : index
    %32 = vector.load %arg8[%c1_34, %c1_35, %c0_36, %c0_37] : memref<3x18x16x128xf32, #tpu.memory_space<vmem>>, vector<1x16x16x128xf32>
    %33 = vector.shape_cast %32 : vector<1x16x16x128xf32> to vector<16x16x128xf32>
    %34 = vector.shape_cast %33 : vector<16x16x128xf32> to vector<256x128xf32>
    %c1_38 = arith.constant 1 : index
    %c1_39 = arith.constant 1 : index
    %c0_40 = arith.constant 0 : index
    %c0_41 = arith.constant 0 : index
    %35 = vector.load %arg3[%c1_38, %c1_39, %c0_40, %c0_41] : memref<3x3x128x128xf32, #tpu.memory_space<vmem>>, vector<1x1x128x128xf32>
    %36 = vector.shape_cast %35 : vector<1x1x128x128xf32> to vector<128x128xf32>
    %cst_42 = arith.constant dense<0.000000e+00> : vector<256x128xf32>
    %37 = tpu.matmul %34, %36, %cst_42 {dimension_numbers = #tpu.dot_dimension_numbers<[1], [0], [0], [1], [0, 0, 1, 1], [], []>} : vector<256x128xf32>, vector<128x128xf32>, vector<256x128xf32> -> vector<256x128xf32>
    %38 = arith.addf %31, %37 : vector<256x128xf32>
    %c2_43 = arith.constant 2 : index
    %c1_44 = arith.constant 1 : index
    %c0_45 = arith.constant 0 : index
    %c0_46 = arith.constant 0 : index
    %39 = vector.load %arg8[%c2_43, %c1_44, %c0_45, %c0_46] : memref<3x18x16x128xf32, #tpu.memory_space<vmem>>, vector<1x16x16x128xf32>
    %40 = vector.shape_cast %39 : vector<1x16x16x128xf32> to vector<16x16x128xf32>
    %41 = vector.shape_cast %40 : vector<16x16x128xf32> to vector<256x128xf32>
    %c1_47 = arith.constant 1 : index
    %c2_48 = arith.constant 2 : index
    %c0_49 = arith.constant 0 : index
    %c0_50 = arith.constant 0 : index
    %42 = vector.load %arg3[%c1_47, %c2_48, %c0_49, %c0_50] : memref<3x3x128x128xf32, #tpu.memory_space<vmem>>, vector<1x1x128x128xf32>
    %43 = vector.shape_cast %42 : vector<1x1x128x128xf32> to vector<128x128xf32>
    %cst_51 = arith.constant dense<0.000000e+00> : vector<256x128xf32>
    %44 = tpu.matmul %41, %43, %cst_51 {dimension_numbers = #tpu.dot_dimension_numbers<[1], [0], [0], [1], [0, 0, 1, 1], [], []>} : vector<256x128xf32>, vector<128x128xf32>, vector<256x128xf32> -> vector<256x128xf32>
    %45 = arith.addf %38, %44 : vector<256x128xf32>
    %c0_52 = arith.constant 0 : index
    %c2_53 = arith.constant 2 : index
    %c0_54 = arith.constant 0 : index
    %c0_55 = arith.constant 0 : index
    %46 = vector.load %arg8[%c0_52, %c2_53, %c0_54, %c0_55] : memref<3x18x16x128xf32, #tpu.memory_space<vmem>>, vector<1x16x16x128xf32>
    %47 = vector.shape_cast %46 : vector<1x16x16x128xf32> to vector<16x16x128xf32>
    %48 = vector.shape_cast %47 : vector<16x16x128xf32> to vector<256x128xf32>
    %c2_56 = arith.constant 2 : index
    %c0_57 = arith.constant 0 : index
    %c0_58 = arith.constant 0 : index
    %c0_59 = arith.constant 0 : index
    %49 = vector.load %arg3[%c2_56, %c0_57, %c0_58, %c0_59] : memref<3x3x128x128xf32, #tpu.memory_space<vmem>>, vector<1x1x128x128xf32>
    %50 = vector.shape_cast %49 : vector<1x1x128x128xf32> to vector<128x128xf32>
    %cst_60 = arith.constant dense<0.000000e+00> : vector<256x128xf32>
    %51 = tpu.matmul %48, %50, %cst_60 {dimension_numbers = #tpu.dot_dimension_numbers<[1], [0], [0], [1], [0, 0, 1, 1], [], []>} : vector<256x128xf32>, vector<128x128xf32>, vector<256x128xf32> -> vector<256x128xf32>
    %52 = arith.addf %45, %51 : vector<256x128xf32>
    %c1_61 = arith.constant 1 : index
    %c2_62 = arith.constant 2 : index
    %c0_63 = arith.constant 0 : index
    %c0_64 = arith.constant 0 : index
    %53 = vector.load %arg8[%c1_61, %c2_62, %c0_63, %c0_64] : memref<3x18x16x128xf32, #tpu.memory_space<vmem>>, vector<1x16x16x128xf32>
    %54 = vector.shape_cast %53 : vector<1x16x16x128xf32> to vector<16x16x128xf32>
    %55 = vector.shape_cast %54 : vector<16x16x128xf32> to vector<256x128xf32>
    %c2_65 = arith.constant 2 : index
    %c1_66 = arith.constant 1 : index
    %c0_67 = arith.constant 0 : index
    %c0_68 = arith.constant 0 : index
    %56 = vector.load %arg3[%c2_65, %c1_66, %c0_67, %c0_68] : memref<3x3x128x128xf32, #tpu.memory_space<vmem>>, vector<1x1x128x128xf32>
    %57 = vector.shape_cast %56 : vector<1x1x128x128xf32> to vector<128x128xf32>
    %cst_69 = arith.constant dense<0.000000e+00> : vector<256x128xf32>
    %58 = tpu.matmul %55, %57, %cst_69 {dimension_numbers = #tpu.dot_dimension_numbers<[1], [0], [0], [1], [0, 0, 1, 1], [], []>} : vector<256x128xf32>, vector<128x128xf32>, vector<256x128xf32> -> vector<256x128xf32>
    %59 = arith.addf %52, %58 : vector<256x128xf32>
    %c2_70 = arith.constant 2 : index
    %c2_71 = arith.constant 2 : index
    %c0_72 = arith.constant 0 : index
    %c0_73 = arith.constant 0 : index
    %60 = vector.load %arg8[%c2_70, %c2_71, %c0_72, %c0_73] : memref<3x18x16x128xf32, #tpu.memory_space<vmem>>, vector<1x16x16x128xf32>
    %61 = vector.shape_cast %60 : vector<1x16x16x128xf32> to vector<16x16x128xf32>
    %62 = vector.shape_cast %61 : vector<16x16x128xf32> to vector<256x128xf32>
    %c2_74 = arith.constant 2 : index
    %c2_75 = arith.constant 2 : index
    %c0_76 = arith.constant 0 : index
    %c0_77 = arith.constant 0 : index
    %63 = vector.load %arg3[%c2_74, %c2_75, %c0_76, %c0_77] : memref<3x3x128x128xf32, #tpu.memory_space<vmem>>, vector<1x1x128x128xf32>
    %64 = vector.shape_cast %63 : vector<1x1x128x128xf32> to vector<128x128xf32>
    %cst_78 = arith.constant dense<0.000000e+00> : vector<256x128xf32>
    %65 = tpu.matmul %62, %64, %cst_78 {dimension_numbers = #tpu.dot_dimension_numbers<[1], [0], [0], [1], [0, 0, 1, 1], [], []>} : vector<256x128xf32>, vector<128x128xf32>, vector<256x128xf32> -> vector<256x128xf32>
    %66 = arith.addf %59, %65 : vector<256x128xf32>
    %67 = vector.shape_cast %66 : vector<256x128xf32> to vector<16x16x128xf32>
    %c0_79 = arith.constant 0 : index
    %c0_80 = arith.constant 0 : index
    %c0_81 = arith.constant 0 : index
    %c0_82 = arith.constant 0 : index
    %68 = vector.load %arg6[%c0_79, %c0_80, %c0_81, %c0_82] : memref<1x16x16x128xf32, #tpu.memory_space<vmem>>, vector<1x16x16x128xf32>
    %69 = vector.shape_cast %68 : vector<1x16x16x128xf32> to vector<16x16x128xf32>
    %70 = vector.shape_cast %67 : vector<16x16x128xf32> to vector<1x16x16x128xf32>
    tpu.vector_store %arg6[%c0_79, %c0_80, %c0_81, %c0_82], %70 {strides = array<i32>} : memref<1x16x16x128xf32, #tpu.memory_space<vmem>>, vector<1x16x16x128xf32>,
    %cst_83 = arith.constant dense<0.000000e+00> : vector<128xf32>
    %71 = vector.multi_reduction <add>, %66, %cst_83 [0] : vector<256x128xf32> to vector<128xf32>
    %72 = vector.shape_cast %71 : vector<128xf32> to vector<1x128xf32>
    %73 = arith.mulf %66, %66 : vector<256x128xf32>
    %cst_84 = arith.constant dense<0.000000e+00> : vector<128xf32>
    %74 = vector.multi_reduction <add>, %73, %cst_84 [0] : vector<256x128xf32> to vector<128xf32>
    %75 = vector.shape_cast %74 : vector<128xf32> to vector<1x128xf32>
    %76 = tpu.concatenate %72, %75 in 0 : vector<1x128xf32>, vector<1x128xf32> -> vector<2x128xf32>
    %c0_85 = arith.constant 0 : index
    %c0_86 = arith.constant 0 : index
    %c0_87 = arith.constant 0 : index
    %77 = vector.load %arg7[%c0_85, %c0_86, %c0_87] : memref<1x2x128xf32, #tpu.memory_space<vmem>>, vector<1x2x128xf32>
    %78 = vector.shape_cast %77 : vector<1x2x128xf32> to vector<2x128xf32>
    %79 = vector.shape_cast %76 : vector<2x128xf32> to vector<1x2x128xf32>
    tpu.vector_store %arg7[%c0_85, %c0_86, %c0_87], %79 {strides = array<i32>} : memref<1x2x128xf32, #tpu.memory_space<vmem>>, vector<1x2x128xf32>,
    return
  }
  func.func @transform_0(%arg0: i32, %arg1: i32) -> (i32, i32, i32, i32) {
    %c0_i32 = arith.constant 0 : i32
    %c0_i32_0 = arith.constant 0 : i32
    %c0_i32_1 = arith.constant 0 : i32
    %c0_i32_2 = arith.constant 0 : i32
    return %arg0, %c0_i32, %c0_i32_0, %c0_i32_1 : i32, i32, i32, i32
  }
  func.func @transform_1(%arg0: i32, %arg1: i32) -> (i32, i32, i32, i32) {
    %c0_i32 = arith.constant 0 : i32
    %c0_i32_0 = arith.constant 0 : i32
    %c0_i32_1 = arith.constant 0 : i32
    %c0_i32_2 = arith.constant 0 : i32
    return %c0_i32, %c0_i32_0, %c0_i32_1, %arg1 : i32, i32, i32, i32
  }
  func.func @transform_2(%arg0: i32, %arg1: i32) -> (i32, i32) {
    %c0_i32 = arith.constant 0 : i32
    %c0_i32_0 = arith.constant 0 : i32
    %c0_i32_1 = arith.constant 0 : i32
    return %c0_i32, %c0_i32_0 : i32, i32
  }
  func.func @transform_3(%arg0: i32, %arg1: i32) -> (i32, i32) {
    %c0_i32 = arith.constant 0 : i32
    %c0_i32_0 = arith.constant 0 : i32
    %c0_i32_1 = arith.constant 0 : i32
    return %c0_i32, %c0_i32_0 : i32, i32
  }
  func.func @transform_4(%arg0: i32, %arg1: i32) -> (i32, i32, i32, i32) {
    %c0_i32 = arith.constant 0 : i32
    %c0_i32_0 = arith.constant 0 : i32
    %c0_i32_1 = arith.constant 0 : i32
    return %arg0, %c0_i32, %c0_i32_0, %arg1 : i32, i32, i32, i32
  }
  func.func @transform_5(%arg0: i32, %arg1: i32) -> (i32, i32, i32) {
    %c0_i32 = arith.constant 0 : i32
    %c0_i32_0 = arith.constant 0 : i32
    return %arg0, %c0_i32, %arg1 : i32, i32, i32
  }
}

</mosaic_0001>

<llo_original>
// kernel: encoder_block_forward.5
$region0: #{encoder_block_forward.5}
  #allocation0 [shape = 'u32[]', space=smem, size = 0x4, offset = 0x4, fixed_abs, tag = 'smem constant byte address 0x4 - core index']
  #allocation1 [shape = 'u32[72,128]{1,0:T(1,128)}', space=vmem, size = 0x9000, scoped, tag = 'internal scratch']
  #allocation2 [shape = 'f32[8,16,128]{2,1,0:T(8,128)}', space=vmem, size = 0x10000, scoped, tag = 'scratch operand']
  %s0 = inlined_call_operand.vmem [shape: f32[2,16,16,128], index: 0, kind: input, shape index: {}]
  %s1 = inlined_call_operand.vmem [shape: f32[1,128], index: 1, kind: input, shape index: {}]
  %s2 = inlined_call_operand.vmem [shape: f32[1,128], index: 2, kind: input, shape index: {}]
  %s3 = inlined_call_operand.vmem [shape: f32[2,16,16,128], index: 3, kind: output, shape index: {0}]
  %s4 = inlined_call_operand.vmem [shape: f32[2,8,8,128], index: 4, kind: output, shape index: {1}]
  %5 = xla_tuple %s3, %s4
  %s6 = sld [smem:[#allocation0]]
  $region53: #{encoder_block_forward.5} parent=0
    _
  %s8 = ssub.s32 1, %s6
  %s9 = scalar_select 0, %s8, %s6
  loop: start=0, step=1, limit=4
  $region2: #{encoder_block_forward.5} parent=0 // loop_pre_header
    _
  $region3: #{encoder_block_forward.5} parent=0 // loop_header
    %s11 = sphi 0, %s15
    %p12 = scmp.ge.s32.totalorder %s11, 4
    %s18 = sphi 0, %s30
    %s19 = sphi 0, %s26
    %s20 = sphi 0, %s18
    %s21 = sphi 0, %s19
    %s22 = sphi 0, %s20
    %s23 = sphi 0, %s21
    %s35 = sphi 0, %s37
    %s38 = sphi 0, %s35
    %s39 = sphi 0, %s38
    %s55 = sphi 0, %s39
    %s61 = sphi 0, %s63
    %s64 = sphi 0, %s61
    %s65 = sphi 0, %s64
    %s81 = sphi 0, %s65
    %s87 = sphi 0, %s89
    %s90 = sphi 0, %s87
    %s91 = sphi 0, %s90
    %s107 = sphi 0, %s91
    %s115 = sphi 0, %s117
    %s118 = sphi 0, %s115
    %s119 = sphi 0, %s118
    %s135 = sphi 0, %s119
    %s143 = sphi 0, %s145
    %s146 = sphi 0, %s143
    %s147 = sphi 0, %s146
    %s163 = sphi 0, %s147
  $region4: #{encoder_block_forward.5} parent=0 // loop_header_branch
    %14 = sbr.rel (%p12) target = $region8
  $region5: #{encoder_block_forward.5} parent=0 // loop_body
    %s16 = ssub.s32 %s11, 1
    %s17 = ssub.s32 %s11, 2
    %s24 = sadd.s32 1, %s19
    %p25 = scmp.ge.s32.totalorder %s24, 1
    %s26 = scalar_select %p25, 0, %s24
    %s27 = sadd.s32 1, %s18
    %s28 = scalar_select %p25, %s27, %s18
    %p29 = scmp.ge.s32.totalorder %s28, 2
    %s30 = scalar_select %p29, 0, %s28
    %s31 = ssub.s32 %s18, %s30
    %s32 = ssub.s32 %s19, %s26
    %s33 = sor.u32 %s31, %s32
    %p34 = scmp.eq.s32.totalorder %s33, 0
    %s36 = sadd.s32 %s35, 1
    %s37 = scalar_select %p34, %s35, %s36
    %p40 = pneg %p34
    %p41 = scmp.eq.s32.totalorder %s11, 1
    %p42 = por %p40, %p41
    %p43 = scmp.ne.s32.totalorder %s35, %s38
    %p44 = scmp.eq.s32.totalorder %s11, 0
    %p45 = por %p43, %p44
    %p46 = scmp.ne.s32.totalorder %s35, %s38
    %p47 = scmp.eq.s32.totalorder %s16, 1
    %p48 = por %p46, %p47
    %p49 = scmp.ne.s32.totalorder %s38, %s39
    %p50 = scmp.eq.s32.totalorder %s16, 0
    %p51 = por %p49, %p50
    %p52 = scmp.ne.s32.totalorder %s38, %s39
    %p53 = scmp.eq.s32.totalorder %s17, 1
    %p54 = por %p52, %p53
    %p56 = scmp.ne.s32.totalorder %s39, %s55
    %p57 = scmp.eq.s32.totalorder %s17, 0
    %p58 = por %p56, %p57
    %s59 = ssub.s32 %s19, %s26
    %p60 = scmp.eq.s32.totalorder %s59, 0
    %s62 = sadd.s32 %s61, 1
    %s63 = scalar_select %p60, %s61, %s62
    %p66 = pneg %p60
    %p67 = scmp.eq.s32.totalorder %s11, 1
    %p68 = por %p66, %p67
    %p69 = scmp.ne.s32.totalorder %s61, %s64
    %p70 = scmp.eq.s32.totalorder %s11, 0
    %p71 = por %p69, %p70
    %p72 = scmp.ne.s32.totalorder %s61, %s64
    %p73 = scmp.eq.s32.totalorder %s16, 1
    %p74 = por %p72, %p73
    %p75 = scmp.ne.s32.totalorder %s64, %s65
    %p76 = scmp.eq.s32.totalorder %s16, 0
    %p77 = por %p75, %p76
    %p78 = scmp.ne.s32.totalorder %s64, %s65
    %p79 = scmp.eq.s32.totalorder %s17, 1
    %p80 = por %p78, %p79
    %p82 = scmp.ne.s32.totalorder %s65, %s81
    %p83 = scmp.eq.s32.totalorder %s17, 0
    %p84 = por %p82, %p83
    %s85 = ssub.s32 %s19, %s26
    %p86 = scmp.eq.s32.totalorder %s85, 0
    %s88 = sadd.s32 %s87, 1
    %s89 = scalar_select %p86, %s87, %s88
    %p92 = pneg %p86
    %p93 = scmp.eq.s32.totalorder %s11, 1
    %p94 = por %p92, %p93
    %p95 = scmp.ne.s32.totalorder %s87, %s90
    %p96 = scmp.eq.s32.totalorder %s11, 0
    %p97 = por %p95, %p96
    %p98 = scmp.ne.s32.totalorder %s87, %s90
    %p99 = scmp.eq.s32.totalorder %s16, 1
    %p100 = por %p98, %p99
    %p101 = scmp.ne.s32.totalorder %s90, %s91
    %p102 = scmp.eq.s32.totalorder %s16, 0
    %p103 = por %p101, %p102
    %p104 = scmp.ne.s32.totalorder %s90, %s91
    %p105 = scmp.eq.s32.totalorder %s17, 1
    %p106 = por %p104, %p105
    %p108 = scmp.ne.s32.totalorder %s91, %s107
    %p109 = scmp.eq.s32.totalorder %s17, 0
    %p110 = por %p108, %p109
    %s111 = ssub.s32 %s18, %s30
    %s112 = ssub.s32 %s19, %s26
    %s113 = sor.u32 %s111, %s112
    %p114 = scmp.eq.s32.totalorder %s113, 0
    %s116 = sadd.s32 %s115, 1
    %s117 = scalar_select %p114, %s115, %s116
    %p120 = pneg %p114
    %p121 = scmp.eq.s32.totalorder %s11, 1
    %p122 = por %p120, %p121
    %p123 = scmp.ne.s32.totalorder %s115, %s118
    %p124 = scmp.eq.s32.totalorder %s11, 0
    %p125 = por %p123, %p124
    %p126 = scmp.ne.s32.totalorder %s115, %s118
    %p127 = scmp.eq.s32.totalorder %s16, 1
    %p128 = por %p126, %p127
    %p129 = scmp.ne.s32.totalorder %s118, %s119
    %p130 = scmp.eq.s32.totalorder %s16, 0
    %p131 = por %p129, %p130
    %p132 = scmp.ne.s32.totalorder %s118, %s119
    %p133 = scmp.eq.s32.totalorder %s17, 1
    %p134 = por %p132, %p133
    %p136 = scmp.ne.s32.totalorder %s119, %s135
    %p137 = scmp.eq.s32.totalorder %s17, 0
    %p138 = por %p136, %p137
    %s139 = ssub.s32 %s18, %s30
    %s140 = ssub.s32 %s19, %s26
    %s141 = sor.u32 %s139, %s140
    %p142 = scmp.eq.s32.totalorder %s141, 0
    %s144 = sadd.s32 %s143, 1
    %s145 = scalar_select %p142, %s143, %s144
    %p148 = pneg %p142
    %p149 = scmp.eq.s32.totalorder %s11, 1
    %p150 = por %p148, %p149
    %p151 = scmp.ne.s32.totalorder %s143, %s146
    %p152 = scmp.eq.s32.totalorder %s11, 0
    %p153 = por %p151, %p152
    %p154 = scmp.ne.s32.totalorder %s143, %s146
    %p155 = scmp.eq.s32.totalorder %s16, 1
    %p156 = por %p154, %p155
    %p157 = scmp.ne.s32.totalorder %s146, %s147
    %p158 = scmp.eq.s32.totalorder %s16, 0
    %p159 = por %p157, %p158
    %p160 = scmp.ne.s32.totalorder %s146, %s147
    %p161 = scmp.eq.s32.totalorder %s17, 1
    %p162 = por %p160, %p161
    %p164 = scmp.ne.s32.totalorder %s147, %s163
    %p165 = scmp.eq.s32.totalorder %s17, 0
    %p166 = por %p164, %p165
    %p167 = scmp.le.s32.totalorder 1, %s11
    %p168 = scmp.lt.s32.totalorder %s11, 3
    %p169 = pnand %p167, %p168
    %p170 = pneg %p169
    // Predicated region
    $region9: #{encoder_block_forward.5} parent=5 // pred_check
      _
    $region10: #{encoder_block_forward.5} parent=5 // pred_check_branch
      %172 = sbr.rel (%p169) target = $region12
    $region11: #{encoder_block_forward.5} parent=5 // pred_region
      %s173 = ssub.s32 %s11, 1
      // Predicated region
      $region13: #{encoder_block_forward.5} parent=11 // pred_check
        %p174 = pneg %p77
      $region14: #{encoder_block_forward.5} parent=11 // pred_check_branch
        %176 = sbr.rel (%p174) target = $region16
      $region15: #{encoder_block_forward.5} parent=11 // pred_region
        %p177 = scmp.lt.s32.totalorder %s21, 0
        %s178 = scalar_select %p177, %s21, 0
        %s179 = scalar_lea.vmem %s1, %s178
      $region16: #{encoder_block_forward.5} parent=11 // pred_fallthru
        _
      // Predicated region
      $region17: #{encoder_block_forward.5} parent=11 // pred_check
        %p180 = pneg %p103
      $region18: #{encoder_block_forward.5} parent=11 // pred_check_branch
        %182 = sbr.rel (%p180) target = $region20
      $region19: #{encoder_block_forward.5} parent=11 // pred_region
        %p183 = scmp.lt.s32.totalorder %s21, 0
        %s184 = scalar_select %p183, %s21, 0
        %s185 = scalar_lea.vmem %s2, %s184
      $region20: #{encoder_block_forward.5} parent=11 // pred_fallthru
        _
    $region12: #{encoder_block_forward.5} parent=5 // pred_fallthru
      _
    %p186 = scmp.lt.s32.totalorder %s11, 2
    // Predicated region
    $region21: #{encoder_block_forward.5} parent=5 // pred_check
      %p187 = pneg %p186
    $region22: #{encoder_block_forward.5} parent=5 // pred_check_branch
      %189 = sbr.rel (%p187) target = $region24
    $region23: #{encoder_block_forward.5} parent=5 // pred_region
      // Predicated region
      $region25: #{encoder_block_forward.5} parent=23 // pred_check
        %p190 = pneg %p45
      $region26: #{encoder_block_forward.5} parent=23 // pred_check_branch
        %192 = sbr.rel (%p190) target = $region28
      $region27: #{encoder_block_forward.5} parent=23 // pred_region
        %p193 = scmp.lt.s32.totalorder %s18, 1
        %s194 = scalar_select %p193, %s18, 1
        %p195 = scmp.lt.s32.totalorder %s19, 0
        %s196 = scalar_select %p195, %s19, 0
        %s197 = smul.addr %s194, 32
        %s198 = sadd.s32 %s196, %s197
        %s199 = smul.addr %s198, 8
        %s200 = scalar_lea.vmem %s0, %s199
      $region28: #{encoder_block_forward.5} parent=23 // pred_fallthru
        _
    $region24: #{encoder_block_forward.5} parent=5 // pred_fallthru
      _
    %p201 = scmp.le.s32.totalorder 1, %s11
    %p202 = scmp.lt.s32.totalorder %s11, 3
    %p203 = pnand %p201, %p202
    %p204 = pneg %p203
    // Predicated region
    $region29: #{encoder_block_forward.5} parent=5 // pred_check
      _
    $region30: #{encoder_block_forward.5} parent=5 // pred_check_branch
      %206 = sbr.rel (%p203) target = $region32
    $region31: #{encoder_block_forward.5} parent=5 // pred_region
      %s207 = ssub.s32 %s11, 1
      %p208 = scmp.lt.s32.totalorder %s20, 1
      %s209 = scalar_select %p208, %s20, 1
      %p210 = scmp.lt.s32.totalorder %s21, 0
      %s211 = scalar_select %p210, %s21, 0
      %s212 = smul.addr %s209, 32
      %s213 = sadd.s32 %s211, %s212
      %s214 = smul.addr %s213, 8
      %s215 = scalar_lea.vmem %s0, %s214
      %p216 = pneg %p51
      %p217 = pneg %p48
      %p218 = scmp.lt.s32.totalorder %s21, 0
      %s219 = scalar_select %p218, %s21, 0
      %s220 = scalar_lea.vmem %s1, %s219
      %p221 = pneg %p77
      %p222 = pneg %p74
      %p223 = scmp.lt.s32.totalorder %s21, 0
      %s224 = scalar_select %p223, %s21, 0
      %s225 = scalar_lea.vmem %s2, %s224
      %p226 = pneg %p103
      %p227 = pneg %p100
      %p228 = pneg %p131
      %p229 = pneg %p128
      %p230 = scmp.lt.s32.totalorder %s20, 1
      %s231 = scalar_select %p230, %s20, 1
      %p232 = scmp.lt.s32.totalorder %s21, 0
      %s233 = scalar_select %p232, %s21, 0
      %s234 = smul.addr %s231, 32
      %s235 = sadd.s32 %s233, %s234
      %s236 = smul.addr %s235, 8
      %s237 = scalar_lea.vmem %s3, %s236
      %p238 = pneg %p159
      %p239 = pneg %p156
      %p240 = scmp.lt.s32.totalorder %s20, 1
      %s241 = scalar_select %p240, %s20, 1
      %p242 = scmp.lt.s32.totalorder %s21, 0
      %s243 = scalar_select %p242, %s21, 0
      %s244 = smul.addr %s241, 8
      %s245 = sadd.s32 %s243, %s244
      %s246 = smul.addr %s245, 8
      %s247 = scalar_lea.vmem %s4, %s246
      %p248 = scmp.lt.s32.totalorder %s20, 1
      %s249 = scalar_select %p248, %s20, 1
      %p250 = scmp.lt.s32.totalorder %s21, 0
      %s251 = scalar_select %p250, %s21, 0
      %s252 = smul.addr %s249, 32
      %s253 = sadd.s32 %s251, %s252
      %s254 = smul.addr %s253, 8
      %s255 = scalar_lea.vmem %s0, %s254
      %p256 = scmp.lt.s32.totalorder %s21, 0
      %s257 = scalar_select %p256, %s21, 0
      %s258 = scalar_lea.vmem %s1, %s257
      %p259 = scmp.lt.s32.totalorder %s21, 0
      %s260 = scalar_select %p259, %s21, 0
      %s261 = scalar_lea.vmem %s2, %s260
      %p262 = scmp.lt.s32.totalorder %s20, 1
      %s263 = scalar_select %p262, %s20, 1
      %p264 = scmp.lt.s32.totalorder %s21, 0
      %s265 = scalar_select %p264, %s21, 0
      %s266 = smul.addr %s263, 32
      %s267 = sadd.s32 %s265, %s266
      %s268 = smul.addr %s267, 8
      %s269 = scalar_lea.vmem %s3, %s268
      %p270 = scmp.lt.s32.totalorder %s20, 1
      %s271 = scalar_select %p270, %s20, 1
      %p272 = scmp.lt.s32.totalorder %s21, 0
      %s273 = scalar_select %p272, %s21, 0
      %s274 = smul.addr %s271, 8
      %s275 = sadd.s32 %s273, %s274
      %s276 = smul.addr %s275, 8
      %s277 = scalar_lea.vmem %s4, %s276
      %v278 = vld [vmem:[%s255] sm:$0xff]
      %v279 = vld [vmem:[%s255 + $0x8] sm:$0xff]
      %v280 = vld [vmem:[%s255 + $0x10] sm:$0xff]
      %v281 = vld [vmem:[%s255 + $0x18] sm:$0xff]
      %v282 = vld [vmem:[%s255 + $0x20] sm:$0xff]
      %v283 = vld [vmem:[%s255 + $0x28] sm:$0xff]
      %v284 = vld [vmem:[%s255 + $0x30] sm:$0xff]
      %v285 = vld [vmem:[%s255 + $0x38] sm:$0xff]
      %v286 = vld [vmem:[%s255 + $0x40] sm:$0xff]
      %v287 = vld [vmem:[%s255 + $0x48] sm:$0xff]
      %v288 = vld [vmem:[%s255 + $0x50] sm:$0xff]
      %v289 = vld [vmem:[%s255 + $0x58] sm:$0xff]
      %v290 = vld [vmem:[%s255 + $0x60] sm:$0xff]
      %v291 = vld [vmem:[%s255 + $0x68] sm:$0xff]
      %v292 = vld [vmem:[%s255 + $0x70] sm:$0xff]
      %v293 = vld [vmem:[%s255 + $0x78] sm:$0xff]
      %v294 = vld [vmem:[%s255 + $0x80] sm:$0xff]
      %v295 = vld [vmem:[%s255 + $0x88] sm:$0xff]
      %v296 = vld [vmem:[%s255 + $0x90] sm:$0xff]
      %v297 = vld [vmem:[%s255 + $0x98] sm:$0xff]
      %v298 = vld [vmem:[%s255 + $0xa0] sm:$0xff]
      %v299 = vld [vmem:[%s255 + $0xa8] sm:$0xff]
      %v300 = vld [vmem:[%s255 + $0xb0] sm:$0xff]
      %v301 = vld [vmem:[%s255 + $0xb8] sm:$0xff]
      %v302 = vld [vmem:[%s255 + $0xc0] sm:$0xff]
      %v303 = vld [vmem:[%s255 + $0xc8] sm:$0xff]
      %v304 = vld [vmem:[%s255 + $0xd0] sm:$0xff]
      %v305 = vld [vmem:[%s255 + $0xd8] sm:$0xff]
      %v306 = vld [vmem:[%s255 + $0xe0] sm:$0xff]
      %v307 = vld [vmem:[%s255 + $0xe8] sm:$0xff]
      %v308 = vld [vmem:[%s255 + $0xf0] sm:$0xff]
      %v309 = vld [vmem:[%s255 + $0xf8] sm:$0xff]
      %v310 = vld [vmem:[%s258] sm:$0x1]
      %v312 = vperm.slane %v310, 0
      %v314 = vmul.f32 %v278, %v312
      %v315 = vmul.f32 %v279, %v312
      %v316 = vmul.f32 %v280, %v312
      %v317 = vmul.f32 %v281, %v312
      %v318 = vmul.f32 %v282, %v312
      %v319 = vmul.f32 %v283, %v312
      %v320 = vmul.f32 %v284, %v312
      %v321 = vmul.f32 %v285, %v312
      %v322 = vmul.f32 %v286, %v312
      %v323 = vmul.f32 %v287, %v312
      %v324 = vmul.f32 %v288, %v312
      %v325 = vmul.f32 %v289, %v312
      %v326 = vmul.f32 %v290, %v312
      %v327 = vmul.f32 %v291, %v312
      %v328 = vmul.f32 %v292, %v312
      %v329 = vmul.f32 %v293, %v312
      %v330 = vmul.f32 %v294, %v312
      %v331 = vmul.f32 %v295, %v312
      %v332 = vmul.f32 %v296, %v312
      %v333 = vmul.f32 %v297, %v312
      %v334 = vmul.f32 %v298, %v312
      %v335 = vmul.f32 %v299, %v312
      %v336 = vmul.f32 %v300, %v312
      %v337 = vmul.f32 %v301, %v312
      %v338 = vmul.f32 %v302, %v312
      %v339 = vmul.f32 %v303, %v312
      %v340 = vmul.f32 %v304, %v312
      %v341 = vmul.f32 %v305, %v312
      %v342 = vmul.f32 %v306, %v312
      %v343 = vmul.f32 %v307, %v312
      %v344 = vmul.f32 %v308, %v312
      %v345 = vmul.f32 %v309, %v312
      %v346 = vld [vmem:[%s261] sm:$0x1]
      %v348 = vperm.slane %v346, 0
      %v350 = vadd.f32 %v314, %v348
      %v351 = vadd.f32 %v315, %v348
      %v352 = vadd.f32 %v316, %v348
      %v353 = vadd.f32 %v317, %v348
      %v354 = vadd.f32 %v318, %v348
      %v355 = vadd.f32 %v319, %v348
      %v356 = vadd.f32 %v320, %v348
      %v357 = vadd.f32 %v321, %v348
      %v358 = vadd.f32 %v322, %v348
      %v359 = vadd.f32 %v323, %v348
      %v360 = vadd.f32 %v324, %v348
      %v361 = vadd.f32 %v325, %v348
      %v362 = vadd.f32 %v326, %v348
      %v363 = vadd.f32 %v327, %v348
      %v364 = vadd.f32 %v328, %v348
      %v365 = vadd.f32 %v329, %v348
      %v366 = vadd.f32 %v330, %v348
      %v367 = vadd.f32 %v331, %v348
      %v368 = vadd.f32 %v332, %v348
      %v369 = vadd.f32 %v333, %v348
      %v370 = vadd.f32 %v334, %v348
      %v371 = vadd.f32 %v335, %v348
      %v372 = vadd.f32 %v336, %v348
      %v373 = vadd.f32 %v337, %v348
      %v374 = vadd.f32 %v338, %v348
      %v375 = vadd.f32 %v339, %v348
      %v376 = vadd.f32 %v340, %v348
      %v377 = vadd.f32 %v341, %v348
      %v378 = vadd.f32 %v342, %v348
      %v379 = vadd.f32 %v343, %v348
      %v380 = vadd.f32 %v344, %v348
      %v381 = vadd.f32 %v345, %v348
      %v382 = vmax.f32 %v350, 0.0
      %v383 = vmax.f32 %v351, 0.0
      %v384 = vmax.f32 %v352, 0.0
      %v385 = vmax.f32 %v353, 0.0
      %v386 = vmax.f32 %v354, 0.0
      %v387 = vmax.f32 %v355, 0.0
      %v388 = vmax.f32 %v356, 0.0
      %v389 = vmax.f32 %v357, 0.0
      %v390 = vmax.f32 %v358, 0.0
      %v391 = vmax.f32 %v359, 0.0
      %v392 = vmax.f32 %v360, 0.0
      %v393 = vmax.f32 %v361, 0.0
      %v394 = vmax.f32 %v362, 0.0
      %v395 = vmax.f32 %v363, 0.0
      %v396 = vmax.f32 %v364, 0.0
      %v397 = vmax.f32 %v365, 0.0
      %v398 = vmax.f32 %v366, 0.0
      %v399 = vmax.f32 %v367, 0.0
      %v400 = vmax.f32 %v368, 0.0
      %v401 = vmax.f32 %v369, 0.0
      %v402 = vmax.f32 %v370, 0.0
      %v403 = vmax.f32 %v371, 0.0
      %v404 = vmax.f32 %v372, 0.0
      %v405 = vmax.f32 %v373, 0.0
      %v406 = vmax.f32 %v374, 0.0
      %v407 = vmax.f32 %v375, 0.0
      %v408 = vmax.f32 %v376, 0.0
      %v409 = vmax.f32 %v377, 0.0
      %v410 = vmax.f32 %v378, 0.0
      %v411 = vmax.f32 %v379, 0.0
      %v412 = vmax.f32 %v380, 0.0
      %v413 = vmax.f32 %v381, 0.0
      %414 = vst [vmem:[%s269] sm:$0xff] %v382
      %415 = vst [vmem:[%s269 + $0x8] sm:$0xff] %v383
      %416 = vst [vmem:[%s269 + $0x10] sm:$0xff] %v384
      %417 = vst [vmem:[%s269 + $0x18] sm:$0xff] %v385
      %418 = vst [vmem:[%s269 + $0x20] sm:$0xff] %v386
      %419 = vst [vmem:[%s269 + $0x28] sm:$0xff] %v387
      %420 = vst [vmem:[%s269 + $0x30] sm:$0xff] %v388
      %421 = vst [vmem:[%s269 + $0x38] sm:$0xff] %v389
      %422 = vst [vmem:[%s269 + $0x40] sm:$0xff] %v390
      %423 = vst [vmem:[%s269 + $0x48] sm:$0xff] %v391
      %424 = vst [vmem:[%s269 + $0x50] sm:$0xff] %v392
      %425 = vst [vmem:[%s269 + $0x58] sm:$0xff] %v393
      %426 = vst [vmem:[%s269 + $0x60] sm:$0xff] %v394
      %427 = vst [vmem:[%s269 + $0x68] sm:$0xff] %v395
      %428 = vst [vmem:[%s269 + $0x70] sm:$0xff] %v396
      %429 = vst [vmem:[%s269 + $0x78] sm:$0xff] %v397
      %430 = vst [vmem:[%s269 + $0x80] sm:$0xff] %v398
      %431 = vst [vmem:[%s269 + $0x88] sm:$0xff] %v399
      %432 = vst [vmem:[%s269 + $0x90] sm:$0xff] %v400
      %433 = vst [vmem:[%s269 + $0x98] sm:$0xff] %v401
      %434 = vst [vmem:[%s269 + $0xa0] sm:$0xff] %v402
      %435 = vst [vmem:[%s269 + $0xa8] sm:$0xff] %v403
      %436 = vst [vmem:[%s269 + $0xb0] sm:$0xff] %v404
      %437 = vst [vmem:[%s269 + $0xb8] sm:$0xff] %v405
      %438 = vst [vmem:[%s269 + $0xc0] sm:$0xff] %v406
      %439 = vst [vmem:[%s269 + $0xc8] sm:$0xff] %v407
      %440 = vst [vmem:[%s269 + $0xd0] sm:$0xff] %v408
      %441 = vst [vmem:[%s269 + $0xd8] sm:$0xff] %v409
      %442 = vst [vmem:[%s269 + $0xe0] sm:$0xff] %v410
      %443 = vst [vmem:[%s269 + $0xe8] sm:$0xff] %v411
      %444 = vst [vmem:[%s269 + $0xf0] sm:$0xff] %v412
      %445 = vst [vmem:[%s269 + $0xf8] sm:$0xff] %v413
      %v446 = vmax.f32 %v382, %v384
      %v447 = vmax.f32 %v383, %v385
      %v448 = vmax.f32 %v386, %v388
      %v449 = vmax.f32 %v387, %v389
      %v450 = vmax.f32 %v390, %v392
      %v451 = vmax.f32 %v391, %v393
      %v452 = vmax.f32 %v394, %v396
      %v453 = vmax.f32 %v395, %v397
      %v454 = vmax.f32 %v398, %v400
      %v455 = vmax.f32 %v399, %v401
      %v456 = vmax.f32 %v402, %v404
      %v457 = vmax.f32 %v403, %v405
      %v458 = vmax.f32 %v406, %v408
      %v459 = vmax.f32 %v407, %v409
      %v460 = vmax.f32 %v410, %v412
      %v461 = vmax.f32 %v411, %v413
      %462 = vst [vmem:[#allocation2] sm:$0xff] %v446
      %463 = vst [vmem:[#allocation2 + $0x8] sm:$0xff] %v447
      %464 = vst [vmem:[#allocation2 + $0x10] sm:$0xff] %v448
      %465 = vst [vmem:[#allocation2 + $0x18] sm:$0xff] %v449
      %466 = vst [vmem:[#allocation2 + $0x20] sm:$0xff] %v450
      %467 = vst [vmem:[#allocation2 + $0x28] sm:$0xff] %v451
      %468 = vst [vmem:[#allocation2 + $0x30] sm:$0xff] %v452
      %469 = vst [vmem:[#allocation2 + $0x38] sm:$0xff] %v453
      %470 = vst [vmem:[#allocation2 + $0x40] sm:$0xff] %v454
      %471 = vst [vmem:[#allocation2 + $0x48] sm:$0xff] %v455
      %472 = vst [vmem:[#allocation2 + $0x50] sm:$0xff] %v456
      %473 = vst [vmem:[#allocation2 + $0x58] sm:$0xff] %v457
      %474 = vst [vmem:[#allocation2 + $0x60] sm:$0xff] %v458
      %475 = vst [vmem:[#allocation2 + $0x68] sm:$0xff] %v459
      %476 = vst [vmem:[#allocation2 + $0x70] sm:$0xff] %v460
      %477 = vst [vmem:[#allocation2 + $0x78] sm:$0xff] %v461
      %v478 = vld [vmem:[#allocation2] ss:$2 sm:$0xff]
      %s479 = scalar_lea.vmem [#allocation2], 16
      %v480 = vld [vmem:[%s479] ss:$2 sm:$0xff]
      %s481 = scalar_lea.vmem [#allocation2], 32
      %v482 = vld [vmem:[%s481] ss:$2 sm:$0xff]
      %s483 = scalar_lea.vmem [#allocation2], 48
      %v484 = vld [vmem:[%s483] ss:$2 sm:$0xff]
      %s485 = scalar_lea.vmem [#allocation2], 64
      %v486 = vld [vmem:[%s485] ss:$2 sm:$0xff]
      %s487 = scalar_lea.vmem [#allocation2], 80
      %v488 = vld [vmem:[%s487] ss:$2 sm:$0xff]
      %s489 = scalar_lea.vmem [#allocation2], 96
      %v490 = vld [vmem:[%s489] ss:$2 sm:$0xff]
      %s491 = scalar_lea.vmem [#allocation2], 112
      %v492 = vld [vmem:[%s491] ss:$2 sm:$0xff]
      %s493 = scalar_lea.vmem [#allocation2], 1
      %v494 = vld [vmem:[%s493] ss:$2 sm:$0xff]
      %s495 = scalar_lea.vmem [#allocation2], 17
      %v496 = vld [vmem:[%s495] ss:$2 sm:$0xff]
      %s497 = scalar_lea.vmem [#allocation2], 33
      %v498 = vld [vmem:[%s497] ss:$2 sm:$0xff]
      %s499 = scalar_lea.vmem [#allocation2], 49
      %v500 = vld [vmem:[%s499] ss:$2 sm:$0xff]
      %s501 = scalar_lea.vmem [#allocation2], 65
      %v502 = vld [vmem:[%s501] ss:$2 sm:$0xff]
      %s503 = scalar_lea.vmem [#allocation2], 81
      %v504 = vld [vmem:[%s503] ss:$2 sm:$0xff]
      %s505 = scalar_lea.vmem [#allocation2], 97
      %v506 = vld [vmem:[%s505] ss:$2 sm:$0xff]
      %s507 = scalar_lea.vmem [#allocation2], 113
      %v508 = vld [vmem:[%s507] ss:$2 sm:$0xff]
      %v509 = vmax.f32 %v478, %v494
      %v510 = vmax.f32 %v480, %v496
      %v511 = vmax.f32 %v482, %v498
      %v512 = vmax.f32 %v484, %v500
      %v513 = vmax.f32 %v486, %v502
      %v514 = vmax.f32 %v488, %v504
      %v515 = vmax.f32 %v490, %v506
      %v516 = vmax.f32 %v492, %v508
      %517 = vst [vmem:[%s277] sm:$0xff] %v509
      %518 = vst [vmem:[%s277 + $0x8] sm:$0xff] %v510
      %519 = vst [vmem:[%s277 + $0x10] sm:$0xff] %v511
      %520 = vst [vmem:[%s277 + $0x18] sm:$0xff] %v512
      %521 = vst [vmem:[%s277 + $0x20] sm:$0xff] %v513
      %522 = vst [vmem:[%s277 + $0x28] sm:$0xff] %v514
      %523 = vst [vmem:[%s277 + $0x30] sm:$0xff] %v515
      %524 = vst [vmem:[%s277 + $0x38] sm:$0xff] %v516
      %p525 = scmp.lt.s32.totalorder %s20, 1
      %s526 = scalar_select %p525, %s20, 1
      %p527 = scmp.lt.s32.totalorder %s21, 0
      %s528 = scalar_select %p527, %s21, 0
      %s529 = smul.addr %s526, 32
      %s530 = sadd.s32 %s528, %s529
      %s531 = smul.addr %s530, 8
      %s532 = scalar_lea.vmem %s3, %s531
      %p533 = scmp.lt.s32.totalorder %s20, 1
      %s534 = scalar_select %p533, %s20, 1
      %p535 = scmp.lt.s32.totalorder %s21, 0
      %s536 = scalar_select %p535, %s21, 0
      %s537 = smul.addr %s534, 8
      %s538 = sadd.s32 %s536, %s537
      %s539 = smul.addr %s538, 8
      %s540 = scalar_lea.vmem %s4, %s539
      // Predicated region
      $region33: #{encoder_block_forward.5} parent=31 // pred_check
        %p541 = pneg %p128
      $region34: #{encoder_block_forward.5} parent=31 // pred_check_branch
        %543 = sbr.rel (%p541) target = $region36
      $region35: #{encoder_block_forward.5} parent=31 // pred_region
        _
      $region36: #{encoder_block_forward.5} parent=31 // pred_fallthru
        _
      // Predicated region
      $region37: #{encoder_block_forward.5} parent=31 // pred_check
        %p544 = pneg %p156
      $region38: #{encoder_block_forward.5} parent=31 // pred_check_branch
        %546 = sbr.rel (%p544) target = $region40
      $region39: #{encoder_block_forward.5} parent=31 // pred_region
        _
      $region40: #{encoder_block_forward.5} parent=31 // pred_fallthru
        _
    $region32: #{encoder_block_forward.5} parent=5 // pred_fallthru
      _
    %p547 = scmp.le.s32.totalorder 2, %s11
    // Predicated region
    $region41: #{encoder_block_forward.5} parent=5 // pred_check
      %p548 = pneg %p547
    $region42: #{encoder_block_forward.5} parent=5 // pred_check_branch
      %550 = sbr.rel (%p548) target = $region44
    $region43: #{encoder_block_forward.5} parent=5 // pred_region
      %s551 = ssub.s32 %s11, 2
      // Predicated region
      $region45: #{encoder_block_forward.5} parent=43 // pred_check
        %p552 = pneg %p134
      $region46: #{encoder_block_forward.5} parent=43 // pred_check_branch
        %554 = sbr.rel (%p552) target = $region48
      $region47: #{encoder_block_forward.5} parent=43 // pred_region
        %p555 = scmp.lt.s32.totalorder %s22, 1
        %s556 = scalar_select %p555, %s22, 1
        %p557 = scmp.lt.s32.totalorder %s23, 0
        %s558 = scalar_select %p557, %s23, 0
        %s559 = smul.addr %s556, 32
        %s560 = sadd.s32 %s558, %s559
        %s561 = smul.addr %s560, 8
        %s562 = scalar_lea.vmem %s3, %s561
      $region48: #{encoder_block_forward.5} parent=43 // pred_fallthru
        _
      // Predicated region
      $region49: #{encoder_block_forward.5} parent=43 // pred_check
        %p563 = pneg %p162
      $region50: #{encoder_block_forward.5} parent=43 // pred_check_branch
        %565 = sbr.rel (%p563) target = $region52
      $region51: #{encoder_block_forward.5} parent=43 // pred_region
        %p566 = scmp.lt.s32.totalorder %s22, 1
        %s567 = scalar_select %p566, %s22, 1
        %p568 = scmp.lt.s32.totalorder %s23, 0
        %s569 = scalar_select %p568, %s23, 0
        %s570 = smul.addr %s567, 8
        %s571 = sadd.s32 %s569, %s570
        %s572 = smul.addr %s571, 8
        %s573 = scalar_lea.vmem %s4, %s572
      $region52: #{encoder_block_forward.5} parent=43 // pred_fallthru
        _
    $region44: #{encoder_block_forward.5} parent=5 // pred_fallthru
      _
  $region6: #{encoder_block_forward.5} parent=0 // loop_footer
    %s15 = sadd.s32 1, %s11
  $region7: #{encoder_block_forward.5} parent=0 // loop_footer_branch
    %10 = sbr.rel target = $region3
  $region8: #{encoder_block_forward.5} parent=0 // loop_exit
    _

// kernel: encoder_block_forward.3
$region0: #{encoder_block_forward.3}
  #allocation0 [shape = 'u32[]', space=smem, size = 0x4, offset = 0x4, fixed_abs, tag = 'smem constant byte address 0x4 - core index']
  #allocation1 [shape = 'u32[72,128]{1,0:T(1,128)}', space=vmem, size = 0x9000, scoped, tag = 'internal scratch']
  #allocation2 [shape = 'f32[3,18,16,128]{3,2,1,0:T(8,128)}', space=vmem, size = 0x6c000, scoped, tag = 'scratch operand']
  %s0 = inlined_call_operand.vmem [shape: f32[2,16,16,128], index: 0, kind: input, shape index: {}]
  %s1 = inlined_call_operand.vmem [shape: f32[3,3,128,128], index: 1, kind: input, shape index: {}]
  %s2 = inlined_call_operand.vmem [shape: f32[1,128], index: 2, kind: input, shape index: {}]
  %s3 = inlined_call_operand.vmem [shape: f32[1,128], index: 3, kind: input, shape index: {}]
  %s4 = inlined_call_operand.vmem [shape: f32[2,16,16,128], index: 4, kind: output, shape index: {0}]
  %s5 = inlined_call_operand.vmem [shape: f32[2,2,128], index: 5, kind: output, shape index: {1}]
  %6 = xla_tuple %s4, %s5
  %s7 = sld [smem:[#allocation0]]
  $region61: #{encoder_block_forward.3} parent=0
    _
  %s9 = ssub.s32 1, %s7
  %s10 = scalar_select 0, %s9, %s7
  loop: start=0, step=1, limit=4
  $region2: #{encoder_block_forward.3} parent=0 // loop_pre_header
    _
  $region3: #{encoder_block_forward.3} parent=0 // loop_header
    %s12 = sphi 0, %s16
    %p13 = scmp.ge.s32.totalorder %s12, 4
    %s19 = sphi 0, %s31
    %s20 = sphi 0, %s27
    %s21 = sphi 0, %s19
    %s22 = sphi 0, %s20
    %s23 = sphi 0, %s21
    %s24 = sphi 0, %s22
    %s34 = sphi 0, %s36
    %s37 = sphi 0, %s34
    %s38 = sphi 0, %s37
    %s54 = sphi 0, %s38
    %s60 = sphi 0, %s62
    %s63 = sphi 0, %s60
    %s64 = sphi 0, %s63
    %s80 = sphi 0, %s64
    %s84 = sphi 0, %s84
    %s86 = sphi 0, %s84
    %s87 = sphi 0, %s86
    %s101 = sphi 0, %s87
    %s105 = sphi 0, %s105
    %s107 = sphi 0, %s105
    %s108 = sphi 0, %s107
    %s122 = sphi 0, %s108
    %s130 = sphi 0, %s132
    %s133 = sphi 0, %s130
    %s134 = sphi 0, %s133
    %s150 = sphi 0, %s134
    %s158 = sphi 0, %s160
    %s161 = sphi 0, %s158
    %s162 = sphi 0, %s161
    %s178 = sphi 0, %s162
  $region4: #{encoder_block_forward.3} parent=0 // loop_header_branch
    %15 = sbr.rel (%p13) target = $region8
  $region5: #{encoder_block_forward.3} parent=0 // loop_body
    %s17 = ssub.s32 %s12, 1
    %s18 = ssub.s32 %s12, 2
    %s25 = sadd.s32 1, %s20
    %p26 = scmp.ge.s32.totalorder %s25, 1
    %s27 = scalar_select %p26, 0, %s25
    %s28 = sadd.s32 1, %s19
    %s29 = scalar_select %p26, %s28, %s19
    %p30 = scmp.ge.s32.totalorder %s29, 2
    %s31 = scalar_select %p30, 0, %s29
    %s32 = ssub.s32 %s19, %s31
    %p33 = scmp.eq.s32.totalorder %s32, 0
    %s35 = sadd.s32 %s34, 1
    %s36 = scalar_select %p33, %s34, %s35
    %p39 = pneg %p33
    %p40 = scmp.eq.s32.totalorder %s12, 1
    %p41 = por %p39, %p40
    %p42 = scmp.ne.s32.totalorder %s34, %s37
    %p43 = scmp.eq.s32.totalorder %s12, 0
    %p44 = por %p42, %p43
    %p45 = scmp.ne.s32.totalorder %s34, %s37
    %p46 = scmp.eq.s32.totalorder %s17, 1
    %p47 = por %p45, %p46
    %p48 = scmp.ne.s32.totalorder %s37, %s38
    %p49 = scmp.eq.s32.totalorder %s17, 0
    %p50 = por %p48, %p49
    %p51 = scmp.ne.s32.totalorder %s37, %s38
    %p52 = scmp.eq.s32.totalorder %s18, 1
    %p53 = por %p51, %p52
    %p55 = scmp.ne.s32.totalorder %s38, %s54
    %p56 = scmp.eq.s32.totalorder %s18, 0
    %p57 = por %p55, %p56
    %s58 = ssub.s32 %s20, %s27
    %p59 = scmp.eq.s32.totalorder %s58, 0
    %s61 = sadd.s32 %s60, 1
    %s62 = scalar_select %p59, %s60, %s61
    %p65 = pneg %p59
    %p66 = scmp.eq.s32.totalorder %s12, 1
    %p67 = por %p65, %p66
    %p68 = scmp.ne.s32.totalorder %s60, %s63
    %p69 = scmp.eq.s32.totalorder %s12, 0
    %p70 = por %p68, %p69
    %p71 = scmp.ne.s32.totalorder %s60, %s63
    %p72 = scmp.eq.s32.totalorder %s17, 1
    %p73 = por %p71, %p72
    %p74 = scmp.ne.s32.totalorder %s63, %s64
    %p75 = scmp.eq.s32.totalorder %s17, 0
    %p76 = por %p74, %p75
    %p77 = scmp.ne.s32.totalorder %s63, %s64
    %p78 = scmp.eq.s32.totalorder %s18, 1
    %p79 = por %p77, %p78
    %p81 = scmp.ne.s32.totalorder %s64, %s80
    %p82 = scmp.eq.s32.totalorder %s18, 0
    %p83 = por %p81, %p82
    %s85 = sadd.s32 %s84, 1
    %p88 = scmp.eq.s32.totalorder %s12, 1
    %p89 = scmp.ne.s32.totalorder %s84, %s86
    %p90 = scmp.eq.s32.totalorder %s12, 0
    %p91 = por %p89, %p90
    %p92 = scmp.ne.s32.totalorder %s84, %s86
    %p93 = scmp.eq.s32.totalorder %s17, 1
    %p94 = por %p92, %p93
    %p95 = scmp.ne.s32.totalorder %s86, %s87
    %p96 = scmp.eq.s32.totalorder %s17, 0
    %p97 = por %p95, %p96
    %p98 = scmp.ne.s32.totalorder %s86, %s87
    %p99 = scmp.eq.s32.totalorder %s18, 1
    %p100 = por %p98, %p99
    %p102 = scmp.ne.s32.totalorder %s87, %s101
    %p103 = scmp.eq.s32.totalorder %s18, 0
    %p104 = por %p102, %p103
    %s106 = sadd.s32 %s105, 1
    %p109 = scmp.eq.s32.totalorder %s12, 1
    %p110 = scmp.ne.s32.totalorder %s105, %s107
    %p111 = scmp.eq.s32.totalorder %s12, 0
    %p112 = por %p110, %p111
    %p113 = scmp.ne.s32.totalorder %s105, %s107
    %p114 = scmp.eq.s32.totalorder %s17, 1
    %p115 = por %p113, %p114
    %p116 = scmp.ne.s32.totalorder %s107, %s108
    %p117 = scmp.eq.s32.totalorder %s17, 0
    %p118 = por %p116, %p117
    %p119 = scmp.ne.s32.totalorder %s107, %s108
    %p120 = scmp.eq.s32.totalorder %s18, 1
    %p121 = por %p119, %p120
    %p123 = scmp.ne.s32.totalorder %s108, %s122
    %p124 = scmp.eq.s32.totalorder %s18, 0
    %p125 = por %p123, %p124
    %s126 = ssub.s32 %s19, %s31
    %s127 = ssub.s32 %s20, %s27
    %s128 = sor.u32 %s126, %s127
    %p129 = scmp.eq.s32.totalorder %s128, 0
    %s131 = sadd.s32 %s130, 1
    %s132 = scalar_select %p129, %s130, %s131
    %p135 = pneg %p129
    %p136 = scmp.eq.s32.totalorder %s12, 1
    %p137 = por %p135, %p136
    %p138 = scmp.ne.s32.totalorder %s130, %s133
    %p139 = scmp.eq.s32.totalorder %s12, 0
    %p140 = por %p138, %p139
    %p141 = scmp.ne.s32.totalorder %s130, %s133
    %p142 = scmp.eq.s32.totalorder %s17, 1
    %p143 = por %p141, %p142
    %p144 = scmp.ne.s32.totalorder %s133, %s134
    %p145 = scmp.eq.s32.totalorder %s17, 0
    %p146 = por %p144, %p145
    %p147 = scmp.ne.s32.totalorder %s133, %s134
    %p148 = scmp.eq.s32.totalorder %s18, 1
    %p149 = por %p147, %p148
    %p151 = scmp.ne.s32.totalorder %s134, %s150
    %p152 = scmp.eq.s32.totalorder %s18, 0
    %p153 = por %p151, %p152
    %s154 = ssub.s32 %s19, %s31
    %s155 = ssub.s32 %s20, %s27
    %s156 = sor.u32 %s154, %s155
    %p157 = scmp.eq.s32.totalorder %s156, 0
    %s159 = sadd.s32 %s158, 1
    %s160 = scalar_select %p157, %s158, %s159
    %p163 = pneg %p157
    %p164 = scmp.eq.s32.totalorder %s12, 1
    %p165 = por %p163, %p164
    %p166 = scmp.ne.s32.totalorder %s158, %s161
    %p167 = scmp.eq.s32.totalorder %s12, 0
    %p168 = por %p166, %p167
    %p169 = scmp.ne.s32.totalorder %s158, %s161
    %p170 = scmp.eq.s32.totalorder %s17, 1
    %p171 = por %p169, %p170
    %p172 = scmp.ne.s32.totalorder %s161, %s162
    %p173 = scmp.eq.s32.totalorder %s17, 0
    %p174 = por %p172, %p173
    %p175 = scmp.ne.s32.totalorder %s161, %s162
    %p176 = scmp.eq.s32.totalorder %s18, 1
    %p177 = por %p175, %p176
    %p179 = scmp.ne.s32.totalorder %s162, %s178
    %p180 = scmp.eq.s32.totalorder %s18, 0
    %p181 = por %p179, %p180
    %p182 = scmp.le.s32.totalorder 1, %s12
    %p183 = scmp.lt.s32.totalorder %s12, 3
    %p184 = pnand %p182, %p183
    %p185 = pneg %p184
    // Predicated region
    $region9: #{encoder_block_forward.3} parent=5 // pred_check
      _
    $region10: #{encoder_block_forward.3} parent=5 // pred_check_branch
      %187 = sbr.rel (%p184) target = $region12
    $region11: #{encoder_block_forward.3} parent=5 // pred_region
      %s188 = ssub.s32 %s12, 1
      // Predicated region
      $region13: #{encoder_block_forward.3} parent=11 // pred_check
        %p189 = pneg %p76
      $region14: #{encoder_block_forward.3} parent=11 // pred_check_branch
        %191 = sbr.rel (%p189) target = $region16
      $region15: #{encoder_block_forward.3} parent=11 // pred_region
        %p192 = scmp.lt.s32.totalorder %s22, 0
        %s193 = scalar_select %p192, %s22, 0
        %s194 = smul.addr %s193, 8
        %s195 = scalar_lea.vmem %s1, %s194
      $region16: #{encoder_block_forward.3} parent=11 // pred_fallthru
        _
      // Predicated region
      $region17: #{encoder_block_forward.3} parent=11 // pred_check
        %p196 = pneg %p97
      $region18: #{encoder_block_forward.3} parent=11 // pred_check_branch
        %198 = sbr.rel (%p196) target = $region20
      $region19: #{encoder_block_forward.3} parent=11 // pred_region
        _
      $region20: #{encoder_block_forward.3} parent=11 // pred_fallthru
        _
      // Predicated region
      $region21: #{encoder_block_forward.3} parent=11 // pred_check
        %p199 = pneg %p118
      $region22: #{encoder_block_forward.3} parent=11 // pred_check_branch
        %201 = sbr.rel (%p199) target = $region24
      $region23: #{encoder_block_forward.3} parent=11 // pred_region
        _
      $region24: #{encoder_block_forward.3} parent=11 // pred_fallthru
        _
    $region12: #{encoder_block_forward.3} parent=5 // pred_fallthru
      _
    %p202 = scmp.lt.s32.totalorder %s12, 2
    // Predicated region
    $region25: #{encoder_block_forward.3} parent=5 // pred_check
      %p203 = pneg %p202
    $region26: #{encoder_block_forward.3} parent=5 // pred_check_branch
      %205 = sbr.rel (%p203) target = $region28
    $region27: #{encoder_block_forward.3} parent=5 // pred_region
      // Predicated region
      $region29: #{encoder_block_forward.3} parent=27 // pred_check
        %p206 = pneg %p44
      $region30: #{encoder_block_forward.3} parent=27 // pred_check_branch
        %208 = sbr.rel (%p206) target = $region32
      $region31: #{encoder_block_forward.3} parent=27 // pred_region
        %p209 = scmp.lt.s32.totalorder %s19, 1
        %s210 = scalar_select %p209, %s19, 1
        %s211 = smul.addr %s210, 32
        %s212 = smul.addr %s211, 8
        %s213 = scalar_lea.vmem %s0, %s212
      $region32: #{encoder_block_forward.3} parent=27 // pred_fallthru
        _
    $region28: #{encoder_block_forward.3} parent=5 // pred_fallthru
      _
    %p214 = scmp.le.s32.totalorder 1, %s12
    %p215 = scmp.lt.s32.totalorder %s12, 3
    %p216 = pnand %p214, %p215
    %p217 = pneg %p216
    // Predicated region
    $region33: #{encoder_block_forward.3} parent=5 // pred_check
      _
    $region34: #{encoder_block_forward.3} parent=5 // pred_check_branch
      %219 = sbr.rel (%p216) target = $region36
    $region35: #{encoder_block_forward.3} parent=5 // pred_region
      %s220 = ssub.s32 %s12, 1
      %p221 = scmp.lt.s32.totalorder %s21, 1
      %s222 = scalar_select %p221, %s21, 1
      %s223 = smul.addr %s222, 32
      %s224 = smul.addr %s223, 8
      %s225 = scalar_lea.vmem %s0, %s224
      %p226 = pneg %p50
      %p227 = pneg %p47
      %p228 = scmp.lt.s32.totalorder %s22, 0
      %s229 = scalar_select %p228, %s22, 0
      %s230 = smul.addr %s229, 8
      %s231 = scalar_lea.vmem %s1, %s230
      %p232 = pneg %p76
      %p233 = pneg %p73
      %p234 = pneg %p97
      %p235 = pneg %p94
      %p236 = pneg %p118
      %p237 = pneg %p115
      %p238 = pneg %p146
      %p239 = pneg %p143
      %p240 = scmp.lt.s32.totalorder %s21, 1
      %s241 = scalar_select %p240, %s21, 1
      %p242 = scmp.lt.s32.totalorder %s22, 0
      %s243 = scalar_select %p242, %s22, 0
      %s244 = smul.addr %s241, 32
      %s245 = sadd.s32 %s243, %s244
      %s246 = smul.addr %s245, 8
      %s247 = scalar_lea.vmem %s4, %s246
      %p248 = pneg %p174
      %p249 = pneg %p171
      %p250 = scmp.lt.s32.totalorder %s21, 1
      %s251 = scalar_select %p250, %s21, 1
      %p252 = scmp.lt.s32.totalorder %s22, 0
      %s253 = scalar_select %p252, %s22, 0
      %s254 = sadd.s32 %s253, %s251
      %s255 = smul.addr %s254, 2
      %s256 = scalar_lea.vmem %s5, %s255
      %p257 = scmp.lt.s32.totalorder %s21, 1
      %s258 = scalar_select %p257, %s21, 1
      %s259 = smul.addr %s258, 32
      %s260 = smul.addr %s259, 8
      %s261 = scalar_lea.vmem %s0, %s260
      %p262 = scmp.lt.s32.totalorder %s22, 0
      %s263 = scalar_select %p262, %s22, 0
      %s264 = smul.addr %s263, 8
      %s265 = scalar_lea.vmem %s1, %s264
      %p266 = scmp.lt.s32.totalorder %s21, 1
      %s267 = scalar_select %p266, %s21, 1
      %p268 = scmp.lt.s32.totalorder %s22, 0
      %s269 = scalar_select %p268, %s22, 0
      %s270 = smul.addr %s267, 32
      %s271 = sadd.s32 %s269, %s270
      %s272 = smul.addr %s271, 8
      %s273 = scalar_lea.vmem %s4, %s272
      %p274 = scmp.lt.s32.totalorder %s21, 1
      %s275 = scalar_select %p274, %s21, 1
      %p276 = scmp.lt.s32.totalorder %s22, 0
      %s277 = scalar_select %p276, %s22, 0
      %s278 = sadd.s32 %s277, %s275
      %s279 = smul.addr %s278, 2
      %s280 = scalar_lea.vmem %s5, %s279
      %p281 = scmp.eq.s32.totalorder %s22, 0
      // Predicated region
      $region37: #{encoder_block_forward.3} parent=35 // pred_check
        %p282 = pneg %p281
      $region38: #{encoder_block_forward.3} parent=35 // pred_check_branch
        %284 = sbr.rel (%p282) target = $region40
      $region39: #{encoder_block_forward.3} parent=35 // pred_region
        %v285 = vld [vmem:[%s261] sm:$0xff]
        %v286 = vld [vmem:[%s261 + $0x8] sm:$0xff]
        %v287 = vld [vmem:[%s261 + $0x10] sm:$0xff]
        %v288 = vld [vmem:[%s261 + $0x18] sm:$0xff]
        %v289 = vld [vmem:[%s261 + $0x20] sm:$0xff]
        %v290 = vld [vmem:[%s261 + $0x28] sm:$0xff]
        %v291 = vld [vmem:[%s261 + $0x30] sm:$0xff]
        %v292 = vld [vmem:[%s261 + $0x38] sm:$0xff]
        %v293 = vld [vmem:[%s261 + $0x40] sm:$0xff]
        %v294 = vld [vmem:[%s261 + $0x48] sm:$0xff]
        %v295 = vld [vmem:[%s261 + $0x50] sm:$0xff]
        %v296 = vld [vmem:[%s261 + $0x58] sm:$0xff]
        %v297 = vld [vmem:[%s261 + $0x60] sm:$0xff]
        %v298 = vld [vmem:[%s261 + $0x68] sm:$0xff]
        %v299 = vld [vmem:[%s261 + $0x70] sm:$0xff]
        %v300 = vld [vmem:[%s261 + $0x78] sm:$0xff]
        %v301 = vld [vmem:[%s261 + $0x80] sm:$0xff]
        %v302 = vld [vmem:[%s261 + $0x88] sm:$0xff]
        %v303 = vld [vmem:[%s261 + $0x90] sm:$0xff]
        %v304 = vld [vmem:[%s261 + $0x98] sm:$0xff]
        %v305 = vld [vmem:[%s261 + $0xa0] sm:$0xff]
        %v306 = vld [vmem:[%s261 + $0xa8] sm:$0xff]
        %v307 = vld [vmem:[%s261 + $0xb0] sm:$0xff]
        %v308 = vld [vmem:[%s261 + $0xb8] sm:$0xff]
        %v309 = vld [vmem:[%s261 + $0xc0] sm:$0xff]
        %v310 = vld [vmem:[%s261 + $0xc8] sm:$0xff]
        %v311 = vld [vmem:[%s261 + $0xd0] sm:$0xff]
        %v312 = vld [vmem:[%s261 + $0xd8] sm:$0xff]
        %v313 = vld [vmem:[%s261 + $0xe0] sm:$0xff]
        %v314 = vld [vmem:[%s261 + $0xe8] sm:$0xff]
        %v315 = vld [vmem:[%s261 + $0xf0] sm:$0xff]
        %v316 = vld [vmem:[%s261 + $0xf8] sm:$0xff]
        %317 = vst [vmem:[#allocation2] sm:$0xff] 0.0
        %318 = vst [vmem:[#allocation2 + $0x8] sm:$0xff] 0.0
        %319 = vst [vmem:[#allocation2 + $0x10] sm:$0xff] 0.0
        %320 = vst [vmem:[#allocation2 + $0x18] sm:$0xff] 0.0
        %321 = vst [vmem:[#allocation2 + $0x20] sm:$0xff] 0.0
        %322 = vst [vmem:[#allocation2 + $0x28] sm:$0xff] 0.0
        %323 = vst [vmem:[#allocation2 + $0x30] sm:$0xff] 0.0
        %324 = vst [vmem:[#allocation2 + $0x38] sm:$0xff] 0.0
        %325 = vst [vmem:[#allocation2 + $0x40] sm:$0xff] 0.0
        %326 = vst [vmem:[#allocation2 + $0x48] sm:$0xff] 0.0
        %327 = vst [vmem:[#allocation2 + $0x50] sm:$0xff] 0.0
        %328 = vst [vmem:[#allocation2 + $0x58] sm:$0xff] 0.0
        %329 = vst [vmem:[#allocation2 + $0x60] sm:$0xff] 0.0
        %330 = vst [vmem:[#allocation2 + $0x68] sm:$0xff] 0.0
        %331 = vst [vmem:[#allocation2 + $0x70] sm:$0xff] 0.0
        %332 = vst [vmem:[#allocation2 + $0x78] sm:$0xff] 0.0
        %333 = vst [vmem:[#allocation2 + $0x80] sm:$0xff] 0.0
        %334 = vst [vmem:[#allocation2 + $0x88] sm:$0xff] 0.0
        %335 = vst [vmem:[#allocation2 + $0x90] sm:$0xff] 0.0
        %336 = vst [vmem:[#allocation2 + $0x98] sm:$0xff] 0.0
        %337 = vst [vmem:[#allocation2 + $0xa0] sm:$0xff] 0.0
        %338 = vst [vmem:[#allocation2 + $0xa8] sm:$0xff] 0.0
        %339 = vst [vmem:[#allocation2 + $0xb0] sm:$0xff] 0.0
        %340 = vst [vmem:[#allocation2 + $0xb8] sm:$0xff] 0.0
        %341 = vst [vmem:[#allocation2 + $0xc0] sm:$0xff] 0.0
        %342 = vst [vmem:[#allocation2 + $0xc8] sm:$0xff] 0.0
        %343 = vst [vmem:[#allocation2 + $0xd0] sm:$0xff] 0.0
        %344 = vst [vmem:[#allocation2 + $0xd8] sm:$0xff] 0.0
        %345 = vst [vmem:[#allocation2 + $0xe0] sm:$0xff] 0.0
        %346 = vst [vmem:[#allocation2 + $0xe8] sm:$0xff] 0.0
        %347 = vst [vmem:[#allocation2 + $0xf0] sm:$0xff] 0.0
        %348 = vst [vmem:[#allocation2 + $0xf8] sm:$0xff] 0.0
        %349 = vst [vmem:[#allocation2 + $0x100] sm:$0xff] 0.0
        %350 = vst [vmem:[#allocation2 + $0x108] sm:$0xff] 0.0
        %351 = vst [vmem:[#allocation2 + $0x110] sm:$0xff] 0.0
        %352 = vst [vmem:[#allocation2 + $0x118] sm:$0xff] 0.0
        %353 = vst [vmem:[#allocation2 + $0x120] sm:$0xff] 0.0
        %354 = vst [vmem:[#allocation2 + $0x128] sm:$0xff] 0.0
        %355 = vst [vmem:[#allocation2 + $0x130] sm:$0xff] 0.0
        %356 = vst [vmem:[#allocation2 + $0x138] sm:$0xff] 0.0
        %357 = vst [vmem:[#allocation2 + $0x140] sm:$0xff] 0.0
        %358 = vst [vmem:[#allocation2 + $0x148] sm:$0xff] 0.0
        %359 = vst [vmem:[#allocation2 + $0x150] sm:$0xff] 0.0
        %360 = vst [vmem:[#allocation2 + $0x158] sm:$0xff] 0.0
        %361 = vst [vmem:[#allocation2 + $0x160] sm:$0xff] 0.0
        %362 = vst [vmem:[#allocation2 + $0x168] sm:$0xff] 0.0
        %363 = vst [vmem:[#allocation2 + $0x170] sm:$0xff] 0.0
        %364 = vst [vmem:[#allocation2 + $0x178] sm:$0xff] 0.0
        %365 = vst [vmem:[#allocation2 + $0x180] sm:$0xff] 0.0
        %366 = vst [vmem:[#allocation2 + $0x188] sm:$0xff] 0.0
        %367 = vst [vmem:[#allocation2 + $0x190] sm:$0xff] 0.0
        %368 = vst [vmem:[#allocation2 + $0x198] sm:$0xff] 0.0
        %369 = vst [vmem:[#allocation2 + $0x1a0] sm:$0xff] 0.0
        %370 = vst [vmem:[#allocation2 + $0x1a8] sm:$0xff] 0.0
        %371 = vst [vmem:[#allocation2 + $0x1b0] sm:$0xff] 0.0
        %372 = vst [vmem:[#allocation2 + $0x1b8] sm:$0xff] 0.0
        %373 = vst [vmem:[#allocation2 + $0x1c0] sm:$0xff] 0.0
        %374 = vst [vmem:[#allocation2 + $0x1c8] sm:$0xff] 0.0
        %375 = vst [vmem:[#allocation2 + $0x1d0] sm:$0xff] 0.0
        %376 = vst [vmem:[#allocation2 + $0x1d8] sm:$0xff] 0.0
        %377 = vst [vmem:[#allocation2 + $0x1e0] sm:$0xff] 0.0
        %378 = vst [vmem:[#allocation2 + $0x1e8] sm:$0xff] 0.0
        %379 = vst [vmem:[#allocation2 + $0x1f0] sm:$0xff] 0.0
        %380 = vst [vmem:[#allocation2 + $0x1f8] sm:$0xff] 0.0
        %381 = vst [vmem:[#allocation2 + $0x200] sm:$0xff] 0.0
        %382 = vst [vmem:[#allocation2 + $0x208] sm:$0xff] 0.0
        %383 = vst [vmem:[#allocation2 + $0x210] sm:$0xff] 0.0
        %384 = vst [vmem:[#allocation2 + $0x218] sm:$0xff] 0.0
        %385 = vst [vmem:[#allocation2 + $0x220] sm:$0xff] 0.0
        %386 = vst [vmem:[#allocation2 + $0x228] sm:$0xff] 0.0
        %387 = vst [vmem:[#allocation2 + $0x230] sm:$0xff] 0.0
        %388 = vst [vmem:[#allocation2 + $0x238] sm:$0xff] 0.0
        %389 = vst [vmem:[#allocation2 + $0x240] sm:$0xff] 0.0
        %390 = vst [vmem:[#allocation2 + $0x248] sm:$0xff] 0.0
        %391 = vst [vmem:[#allocation2 + $0x250] sm:$0xff] 0.0
        %392 = vst [vmem:[#allocation2 + $0x258] sm:$0xff] 0.0
        %393 = vst [vmem:[#allocation2 + $0x260] sm:$0xff] 0.0
        %394 = vst [vmem:[#allocation2 + $0x268] sm:$0xff] 0.0
        %395 = vst [vmem:[#allocation2 + $0x270] sm:$0xff] 0.0
        %396 = vst [vmem:[#allocation2 + $0x278] sm:$0xff] 0.0
        %397 = vst [vmem:[#allocation2 + $0x280] sm:$0xff] 0.0
        %398 = vst [vmem:[#allocation2 + $0x288] sm:$0xff] 0.0
        %399 = vst [vmem:[#allocation2 + $0x290] sm:$0xff] 0.0
        %400 = vst [vmem:[#allocation2 + $0x298] sm:$0xff] 0.0
        %401 = vst [vmem:[#allocation2 + $0x2a0] sm:$0xff] 0.0
        %402 = vst [vmem:[#allocation2 + $0x2a8] sm:$0xff] 0.0
        %403 = vst [vmem:[#allocation2 + $0x2b0] sm:$0xff] 0.0
        %404 = vst [vmem:[#allocation2 + $0x2b8] sm:$0xff] 0.0
        %405 = vst [vmem:[#allocation2 + $0x2c0] sm:$0xff] 0.0
        %406 = vst [vmem:[#allocation2 + $0x2c8] sm:$0xff] 0.0
        %407 = vst [vmem:[#allocation2 + $0x2d0] sm:$0xff] 0.0
        %408 = vst [vmem:[#allocation2 + $0x2d8] sm:$0xff] 0.0
        %409 = vst [vmem:[#allocation2 + $0x2e0] sm:$0xff] 0.0
        %410 = vst [vmem:[#allocation2 + $0x2e8] sm:$0xff] 0.0
        %411 = vst [vmem:[#allocation2 + $0x2f0] sm:$0xff] 0.0
        %412 = vst [vmem:[#allocation2 + $0x2f8] sm:$0xff] 0.0
        %413 = vst [vmem:[#allocation2 + $0x300] sm:$0xff] 0.0
        %414 = vst [vmem:[#allocation2 + $0x308] sm:$0xff] 0.0
        %415 = vst [vmem:[#allocation2 + $0x310] sm:$0xff] 0.0
        %416 = vst [vmem:[#allocation2 + $0x318] sm:$0xff] 0.0
        %417 = vst [vmem:[#allocation2 + $0x320] sm:$0xff] 0.0
        %418 = vst [vmem:[#allocation2 + $0x328] sm:$0xff] 0.0
        %419 = vst [vmem:[#allocation2 + $0x330] sm:$0xff] 0.0
        %420 = vst [vmem:[#allocation2 + $0x338] sm:$0xff] 0.0
        %421 = vst [vmem:[#allocation2 + $0x340] sm:$0xff] 0.0
        %422 = vst [vmem:[#allocation2 + $0x348] sm:$0xff] 0.0
        %423 = vst [vmem:[#allocation2 + $0x350] sm:$0xff] 0.0
        %424 = vst [vmem:[#allocation2 + $0x358] sm:$0xff] 0.0
        %s425 = scalar_lea.vmem [#allocation2], 304
        %426 = vst [vmem:[%s425] sm:$0xff] %v285
        %427 = vst [vmem:[%s425 + $0x8] sm:$0xff] %v286
        %428 = vst [vmem:[%s425 + $0x10] sm:$0xff] %v287
        %429 = vst [vmem:[%s425 + $0x18] sm:$0xff] %v288
        %430 = vst [vmem:[%s425 + $0x20] sm:$0xff] %v289
        %431 = vst [vmem:[%s425 + $0x28] sm:$0xff] %v290
        %432 = vst [vmem:[%s425 + $0x30] sm:$0xff] %v291
        %433 = vst [vmem:[%s425 + $0x38] sm:$0xff] %v292
        %434 = vst [vmem:[%s425 + $0x40] sm:$0xff] %v293
        %435 = vst [vmem:[%s425 + $0x48] sm:$0xff] %v294
        %436 = vst [vmem:[%s425 + $0x50] sm:$0xff] %v295
        %437 = vst [vmem:[%s425 + $0x58] sm:$0xff] %v296
        %438 = vst [vmem:[%s425 + $0x60] sm:$0xff] %v297
        %439 = vst [vmem:[%s425 + $0x68] sm:$0xff] %v298
        %440 = vst [vmem:[%s425 + $0x70] sm:$0xff] %v299
        %441 = vst [vmem:[%s425 + $0x78] sm:$0xff] %v300
        %442 = vst [vmem:[%s425 + $0x80] sm:$0xff] %v301
        %443 = vst [vmem:[%s425 + $0x88] sm:$0xff] %v302
        %444 = vst [vmem:[%s425 + $0x90] sm:$0xff] %v303
        %445 = vst [vmem:[%s425 + $0x98] sm:$0xff] %v304
        %446 = vst [vmem:[%s425 + $0xa0] sm:$0xff] %v305
        %447 = vst [vmem:[%s425 + $0xa8] sm:$0xff] %v306
        %448 = vst [vmem:[%s425 + $0xb0] sm:$0xff] %v307
        %449 = vst [vmem:[%s425 + $0xb8] sm:$0xff] %v308
        %450 = vst [vmem:[%s425 + $0xc0] sm:$0xff] %v309
        %451 = vst [vmem:[%s425 + $0xc8] sm:$0xff] %v310
        %452 = vst [vmem:[%s425 + $0xd0] sm:$0xff] %v311
        %453 = vst [vmem:[%s425 + $0xd8] sm:$0xff] %v312
        %454 = vst [vmem:[%s425 + $0xe0] sm:$0xff] %v313
        %455 = vst [vmem:[%s425 + $0xe8] sm:$0xff] %v314
        %456 = vst [vmem:[%s425 + $0xf0] sm:$0xff] %v315
        %457 = vst [vmem:[%s425 + $0xf8] sm:$0xff] %v316
        %s458 = scalar_lea.vmem [#allocation2], 16
        %459 = vst [vmem:[%s458 + $0x1] sm:$0xff] %v285
        %460 = vst [vmem:[%s458 + $0x9] sm:$0x7f] %v286
        %461 = vst [vmem:[%s458 + $0x11] sm:$0xff] %v287
        %462 = vst [vmem:[%s458 + $0x19] sm:$0x7f] %v288
        %463 = vst [vmem:[%s458 + $0x21] sm:$0xff] %v289
        %464 = vst [vmem:[%s458 + $0x29] sm:$0x7f] %v290
        %465 = vst [vmem:[%s458 + $0x31] sm:$0xff] %v291
        %466 = vst [vmem:[%s458 + $0x39] sm:$0x7f] %v292
        %467 = vst [vmem:[%s458 + $0x41] sm:$0xff] %v293
        %468 = vst [vmem:[%s458 + $0x49] sm:$0x7f] %v294
        %469 = vst [vmem:[%s458 + $0x51] sm:$0xff] %v295
        %470 = vst [vmem:[%s458 + $0x59] sm:$0x7f] %v296
        %471 = vst [vmem:[%s458 + $0x61] sm:$0xff] %v297
        %472 = vst [vmem:[%s458 + $0x69] sm:$0x7f] %v298
        %473 = vst [vmem:[%s458 + $0x71] sm:$0xff] %v299
        %474 = vst [vmem:[%s458 + $0x79] sm:$0x7f] %v300
        %475 = vst [vmem:[%s458 + $0x81] sm:$0xff] %v301
        %476 = vst [vmem:[%s458 + $0x89] sm:$0x7f] %v302
        %477 = vst [vmem:[%s458 + $0x91] sm:$0xff] %v303
        %478 = vst [vmem:[%s458 + $0x99] sm:$0x7f] %v304
        %479 = vst [vmem:[%s458 + $0xa1] sm:$0xff] %v305
        %480 = vst [vmem:[%s458 + $0xa9] sm:$0x7f] %v306
        %481 = vst [vmem:[%s458 + $0xb1] sm:$0xff] %v307
        %482 = vst [vmem:[%s458 + $0xb9] sm:$0x7f] %v308
        %483 = vst [vmem:[%s458 + $0xc1] sm:$0xff] %v309
        %484 = vst [vmem:[%s458 + $0xc9] sm:$0x7f] %v310
        %485 = vst [vmem:[%s458 + $0xd1] sm:$0xff] %v311
        %486 = vst [vmem:[%s458 + $0xd9] sm:$0x7f] %v312
        %487 = vst [vmem:[%s458 + $0xe1] sm:$0xff] %v313
        %488 = vst [vmem:[%s458 + $0xe9] sm:$0x7f] %v314
        %489 = vst [vmem:[%s458 + $0xf1] sm:$0xff] %v315
        %490 = vst [vmem:[%s458 + $0xf9] sm:$0x7f] %v316
        %s491 = scalar_lea.vmem [#allocation2], 592
        %492 = vst [vmem:[%s491 - $0x1] sm:$0xfe] %v285
        %493 = vst [vmem:[%s491 + $0x7] sm:$0xff] %v286
        %494 = vst [vmem:[%s491 + $0xf] sm:$0xfe] %v287
        %495 = vst [vmem:[%s491 + $0x17] sm:$0xff] %v288
        %496 = vst [vmem:[%s491 + $0x1f] sm:$0xfe] %v289
        %497 = vst [vmem:[%s491 + $0x27] sm:$0xff] %v290
        %498 = vst [vmem:[%s491 + $0x2f] sm:$0xfe] %v291
        %499 = vst [vmem:[%s491 + $0x37] sm:$0xff] %v292
        %500 = vst [vmem:[%s491 + $0x3f] sm:$0xfe] %v293
        %501 = vst [vmem:[%s491 + $0x47] sm:$0xff] %v294
        %502 = vst [vmem:[%s491 + $0x4f] sm:$0xfe] %v295
        %503 = vst [vmem:[%s491 + $0x57] sm:$0xff] %v296
        %504 = vst [vmem:[%s491 + $0x5f] sm:$0xfe] %v297
        %505 = vst [vmem:[%s491 + $0x67] sm:$0xff] %v298
        %506 = vst [vmem:[%s491 + $0x6f] sm:$0xfe] %v299
        %507 = vst [vmem:[%s491 + $0x77] sm:$0xff] %v300
        %508 = vst [vmem:[%s491 + $0x7f] sm:$0xfe] %v301
        %509 = vst [vmem:[%s491 + $0x87] sm:$0xff] %v302
        %510 = vst [vmem:[%s491 + $0x8f] sm:$0xfe] %v303
        %511 = vst [vmem:[%s491 + $0x97] sm:$0xff] %v304
        %512 = vst [vmem:[%s491 + $0x9f] sm:$0xfe] %v305
        %513 = vst [vmem:[%s491 + $0xa7] sm:$0xff] %v306
        %514 = vst [vmem:[%s491 + $0xaf] sm:$0xfe] %v307
        %515 = vst [vmem:[%s491 + $0xb7] sm:$0xff] %v308
        %516 = vst [vmem:[%s491 + $0xbf] sm:$0xfe] %v309
        %517 = vst [vmem:[%s491 + $0xc7] sm:$0xff] %v310
        %518 = vst [vmem:[%s491 + $0xcf] sm:$0xfe] %v311
        %519 = vst [vmem:[%s491 + $0xd7] sm:$0xff] %v312
        %520 = vst [vmem:[%s491 + $0xdf] sm:$0xfe] %v313
        %521 = vst [vmem:[%s491 + $0xe7] sm:$0xff] %v314
        %522 = vst [vmem:[%s491 + $0xef] sm:$0xfe] %v315
        %523 = vst [vmem:[%s491 + $0xf7] sm:$0xff] %v316
      $region40: #{encoder_block_forward.3} parent=35 // pred_fallthru
        _
      %v524 = vld [vmem:[#allocation2] sm:$0xff]
      %v525 = vld [vmem:[#allocation2 + $0x8] sm:$0xff]
      %v526 = vld [vmem:[#allocation2 + $0x10] sm:$0xff]
      %v527 = vld [vmem:[#allocation2 + $0x18] sm:$0xff]
      %v528 = vld [vmem:[#allocation2 + $0x20] sm:$0xff]
      %v529 = vld [vmem:[#allocation2 + $0x28] sm:$0xff]
      %v530 = vld [vmem:[#allocation2 + $0x30] sm:$0xff]
      %v531 = vld [vmem:[#allocation2 + $0x38] sm:$0xff]
      %v532 = vld [vmem:[#allocation2 + $0x40] sm:$0xff]
      %v533 = vld [vmem:[#allocation2 + $0x48] sm:$0xff]
      %v534 = vld [vmem:[#allocation2 + $0x50] sm:$0xff]
      %v535 = vld [vmem:[#allocation2 + $0x58] sm:$0xff]
      %v536 = vld [vmem:[#allocation2 + $0x60] sm:$0xff]
      %v537 = vld [vmem:[#allocation2 + $0x68] sm:$0xff]
      %v538 = vld [vmem:[#allocation2 + $0x70] sm:$0xff]
      %v539 = vld [vmem:[#allocation2 + $0x78] sm:$0xff]
      %v540 = vld [vmem:[#allocation2 + $0x80] sm:$0xff]
      %v541 = vld [vmem:[#allocation2 + $0x88] sm:$0xff]
      %v542 = vld [vmem:[#allocation2 + $0x90] sm:$0xff]
      %v543 = vld [vmem:[#allocation2 + $0x98] sm:$0xff]
      %v544 = vld [vmem:[#allocation2 + $0xa0] sm:$0xff]
      %v545 = vld [vmem:[#allocation2 + $0xa8] sm:$0xff]
      %v546 = vld [vmem:[#allocation2 + $0xb0] sm:$0xff]
      %v547 = vld [vmem:[#allocation2 + $0xb8] sm:$0xff]
      %v548 = vld [vmem:[#allocation2 + $0xc0] sm:$0xff]
      %v549 = vld [vmem:[#allocation2 + $0xc8] sm:$0xff]
      %v550 = vld [vmem:[#allocation2 + $0xd0] sm:$0xff]
      %v551 = vld [vmem:[#allocation2 + $0xd8] sm:$0xff]
      %v552 = vld [vmem:[#allocation2 + $0xe0] sm:$0xff]
      %v553 = vld [vmem:[#allocation2 + $0xe8] sm:$0xff]
      %v554 = vld [vmem:[#allocation2 + $0xf0] sm:$0xff]
      %v555 = vld [vmem:[#allocation2 + $0xf8] sm:$0xff]
      %v556 = vld [vmem:[%s265] sm:$0xff]
      %v557 = vld [vmem:[%s265 + $0x8] sm:$0xff]
      %v558 = vld [vmem:[%s265 + $0x10] sm:$0xff]
      %v559 = vld [vmem:[%s265 + $0x18] sm:$0xff]
      %v560 = vld [vmem:[%s265 + $0x20] sm:$0xff]
      %v561 = vld [vmem:[%s265 + $0x28] sm:$0xff]
      %v562 = vld [vmem:[%s265 + $0x30] sm:$0xff]
      %v563 = vld [vmem:[%s265 + $0x38] sm:$0xff]
      %v564 = vld [vmem:[%s265 + $0x40] sm:$0xff]
      %v565 = vld [vmem:[%s265 + $0x48] sm:$0xff]
      %v566 = vld [vmem:[%s265 + $0x50] sm:$0xff]
      %v567 = vld [vmem:[%s265 + $0x58] sm:$0xff]
      %v568 = vld [vmem:[%s265 + $0x60] sm:$0xff]
      %v569 = vld [vmem:[%s265 + $0x68] sm:$0xff]
      %v570 = vld [vmem:[%s265 + $0x70] sm:$0xff]
      %v571 = vld [vmem:[%s265 + $0x78] sm:$0xff]
      %s572 = scalar_lea.vmem [#allocation2], 288
      %v573 = vld [vmem:[%s572] sm:$0xff]
      %v574 = vld [vmem:[%s572 + $0x8] sm:$0xff]
      %v575 = vld [vmem:[%s572 + $0x10] sm:$0xff]
      %v576 = vld [vmem:[%s572 + $0x18] sm:$0xff]
      %v577 = vld [vmem:[%s572 + $0x20] sm:$0xff]
      %v578 = vld [vmem:[%s572 + $0x28] sm:$0xff]
      %v579 = vld [vmem:[%s572 + $0x30] sm:$0xff]
      %v580 = vld [vmem:[%s572 + $0x38] sm:$0xff]
      %v581 = vld [vmem:[%s572 + $0x40] sm:$0xff]
      %v582 = vld [vmem:[%s572 + $0x48] sm:$0xff]
      %v583 = vld [vmem:[%s572 + $0x50] sm:$0xff]
      %v584 = vld [vmem:[%s572 + $0x58] sm:$0xff]
      %v585 = vld [vmem:[%s572 + $0x60] sm:$0xff]
      %v586 = vld [vmem:[%s572 + $0x68] sm:$0xff]
      %v587 = vld [vmem:[%s572 + $0x70] sm:$0xff]
      %v588 = vld [vmem:[%s572 + $0x78] sm:$0xff]
      %v589 = vld [vmem:[%s572 + $0x80] sm:$0xff]
      %v590 = vld [vmem:[%s572 + $0x88] sm:$0xff]
      %v591 = vld [vmem:[%s572 + $0x90] sm:$0xff]
      %v592 = vld [vmem:[%s572 + $0x98] sm:$0xff]
      %v593 = vld [vmem:[%s572 + $0xa0] sm:$0xff]
      %v594 = vld [vmem:[%s572 + $0xa8] sm:$0xff]
      %v595 = vld [vmem:[%s572 + $0xb0] sm:$0xff]
      %v596 = vld [vmem:[%s572 + $0xb8] sm:$0xff]
      %v597 = vld [vmem:[%s572 + $0xc0] sm:$0xff]
      %v598 = vld [vmem:[%s572 + $0xc8] sm:$0xff]
      %v599 = vld [vmem:[%s572 + $0xd0] sm:$0xff]
      %v600 = vld [vmem:[%s572 + $0xd8] sm:$0xff]
      %v601 = vld [vmem:[%s572 + $0xe0] sm:$0xff]
      %v602 = vld [vmem:[%s572 + $0xe8] sm:$0xff]
      %v603 = vld [vmem:[%s572 + $0xf0] sm:$0xff]
      %v604 = vld [vmem:[%s572 + $0xf8] sm:$0xff]
      %s605 = scalar_lea.vmem %s265, 128
      %v606 = vld [vmem:[%s605] sm:$0xff]
      %v607 = vld [vmem:[%s605 + $0x8] sm:$0xff]
      %v608 = vld [vmem:[%s605 + $0x10] sm:$0xff]
      %v609 = vld [vmem:[%s605 + $0x18] sm:$0xff]
      %v610 = vld [vmem:[%s605 + $0x20] sm:$0xff]
      %v611 = vld [vmem:[%s605 + $0x28] sm:$0xff]
      %v612 = vld [vmem:[%s605 + $0x30] sm:$0xff]
      %v613 = vld [vmem:[%s605 + $0x38] sm:$0xff]
      %v614 = vld [vmem:[%s605 + $0x40] sm:$0xff]
      %v615 = vld [vmem:[%s605 + $0x48] sm:$0xff]
      %v616 = vld [vmem:[%s605 + $0x50] sm:$0xff]
      %v617 = vld [vmem:[%s605 + $0x58] sm:$0xff]
      %v618 = vld [vmem:[%s605 + $0x60] sm:$0xff]
      %v619 = vld [vmem:[%s605 + $0x68] sm:$0xff]
      %v620 = vld [vmem:[%s605 + $0x70] sm:$0xff]
      %v621 = vld [vmem:[%s605 + $0x78] sm:$0xff]
      %622 = vmatpush.msra.mxu0 %v621
      %623 = vmatpush.msra.mxu0 %v620
      %624 = vmatpush.msra.mxu0 %v619
      %625 = vmatpush.msra.mxu0 %v618
      %626 = vmatpush.msra.mxu0 %v617
      %627 = vmatpush.msra.mxu0 %v616
      %628 = vmatpush.msra.mxu0 %v615
      %629 = vmatpush.msra.mxu0 %v614
      %630 = vmatpush.msra.mxu0 %v613
      %631 = vmatpush.msra.mxu0 %v612
      %632 = vmatpush.msra.mxu0 %v611
      %633 = vmatpush.msra.mxu0 %v610
      %634 = vmatpush.msra.mxu0 %v609
      %635 = vmatpush.msra.mxu0 %v608
      %636 = vmatpush.msra.mxu0 %v607
      %637 = vmatpush.msra.mxu0 %v606
      %638 = vmatmul.f32.gmra.mxu0 %v573
      %v639 = vpop.f32.mrf.mxu0
      %v640 = vadd.f32 0.0, %v639
      %641 = vmatmul.f32.gmra.mxu0 %v574
      %v642 = vpop.f32.mrf.mxu0
      %v643 = vadd.f32 0.0, %v642
      %644 = vmatmul.f32.gmra.mxu0 %v575
      %v645 = vpop.f32.mrf.mxu0
      %v646 = vadd.f32 0.0, %v645
      %647 = vmatmul.f32.gmra.mxu0 %v576
      %v648 = vpop.f32.mrf.mxu0
      %v649 = vadd.f32 0.0, %v648
      %650 = vmatmul.f32.gmra.mxu0 %v577
      %v651 = vpop.f32.mrf.mxu0
      %v652 = vadd.f32 0.0, %v651
      %653 = vmatmul.f32.gmra.mxu0 %v578
      %v654 = vpop.f32.mrf.mxu0
      %v655 = vadd.f32 0.0, %v654
      %656 = vmatmul.f32.gmra.mxu0 %v579
      %v657 = vpop.f32.mrf.mxu0
      %v658 = vadd.f32 0.0, %v657
      %659 = vmatmul.f32.gmra.mxu0 %v580
      %v660 = vpop.f32.mrf.mxu0
      %v661 = vadd.f32 0.0, %v660
      %662 = vmatmul.f32.gmra.mxu0 %v581
      %v663 = vpop.f32.mrf.mxu0
      %v664 = vadd.f32 0.0, %v663
      %665 = vmatmul.f32.gmra.mxu0 %v582
      %v666 = vpop.f32.mrf.mxu0
      %v667 = vadd.f32 0.0, %v666
      %668 = vmatmul.f32.gmra.mxu0 %v583
      %v669 = vpop.f32.mrf.mxu0
      %v670 = vadd.f32 0.0, %v669
      %671 = vmatmul.f32.gmra.mxu0 %v584
      %v672 = vpop.f32.mrf.mxu0
      %v673 = vadd.f32 0.0, %v672
      %674 = vmatmul.f32.gmra.mxu0 %v585
      %v675 = vpop.f32.mrf.mxu0
      %v676 = vadd.f32 0.0, %v675
      %677 = vmatmul.f32.gmra.mxu0 %v586
      %v678 = vpop.f32.mrf.mxu0
      %v679 = vadd.f32 0.0, %v678
      %680 = vmatmul.f32.gmra.mxu0 %v587
      %v681 = vpop.f32.mrf.mxu0
      %v682 = vadd.f32 0.0, %v681
      %683 = vmatmul.f32.gmra.mxu0 %v588
      %v684 = vpop.f32.mrf.mxu0
      %v685 = vadd.f32 0.0, %v684
      %686 = vmatmul.f32.gmra.mxu0 %v589
      %v687 = vpop.f32.mrf.mxu0
      %v688 = vadd.f32 0.0, %v687
      %689 = vmatmul.f32.gmra.mxu0 %v590
      %v690 = vpop.f32.mrf.mxu0
      %v691 = vadd.f32 0.0, %v690
      %692 = vmatmul.f32.gmra.mxu0 %v591
      %v693 = vpop.f32.mrf.mxu0
      %v694 = vadd.f32 0.0, %v693
      %695 = vmatmul.f32.gmra.mxu0 %v592
      %v696 = vpop.f32.mrf.mxu0
      %v697 = vadd.f32 0.0, %v696
      %698 = vmatmul.f32.gmra.mxu0 %v593
      %v699 = vpop.f32.mrf.mxu0
      %v700 = vadd.f32 0.0, %v699
      %701 = vmatmul.f32.gmra.mxu0 %v594
      %v702 = vpop.f32.mrf.mxu0
      %v703 = vadd.f32 0.0, %v702
      %704 = vmatmul.f32.gmra.mxu0 %v595
      %v705 = vpop.f32.mrf.mxu0
      %v706 = vadd.f32 0.0, %v705
      %707 = vmatmul.f32.gmra.mxu0 %v596
      %v708 = vpop.f32.mrf.mxu0
      %v709 = vadd.f32 0.0, %v708
      %710 = vmatmul.f32.gmra.mxu0 %v597
      %v711 = vpop.f32.mrf.mxu0
      %v712 = vadd.f32 0.0, %v711
      %713 = vmatmul.f32.gmra.mxu0 %v598
      %v714 = vpop.f32.mrf.mxu0
      %v715 = vadd.f32 0.0, %v714
      %716 = vmatmul.f32.gmra.mxu0 %v599
      %v717 = vpop.f32.mrf.mxu0
      %v718 = vadd.f32 0.0, %v717
      %719 = vmatmul.f32.gmra.mxu0 %v600
      %v720 = vpop.f32.mrf.mxu0
      %v721 = vadd.f32 0.0, %v720
      %722 = vmatmul.f32.gmra.mxu0 %v601
      %v723 = vpop.f32.mrf.mxu0
      %v724 = vadd.f32 0.0, %v723
      %725 = vmatmul.f32.gmra.mxu0 %v602
      %v726 = vpop.f32.mrf.mxu0
      %v727 = vadd.f32 0.0, %v726
      %728 = vmatmul.f32.gmra.mxu0 %v603
      %v729 = vpop.f32.mrf.mxu0
      %v730 = vadd.f32 0.0, %v729
      %731 = vmatmul.f32.gmra.mxu0 %v604
      %v732 = vpop.f32.mrf.mxu0
      %v733 = vadd.f32 0.0, %v732
      %734 = vdwg.mxu0
      %735 = vmatpush.msra.mxu0 %v571
      %736 = vmatpush.msra.mxu0 %v570
      %737 = vmatpush.msra.mxu0 %v569
      %738 = vmatpush.msra.mxu0 %v568
      %739 = vmatpush.msra.mxu0 %v567
      %740 = vmatpush.msra.mxu0 %v566
      %741 = vmatpush.msra.mxu0 %v565
      %742 = vmatpush.msra.mxu0 %v564
      %743 = vmatpush.msra.mxu0 %v563
      %744 = vmatpush.msra.mxu0 %v562
      %745 = vmatpush.msra.mxu0 %v561
      %746 = vmatpush.msra.mxu0 %v560
      %747 = vmatpush.msra.mxu0 %v559
      %748 = vmatpush.msra.mxu0 %v558
      %749 = vmatpush.msra.mxu0 %v557
      %750 = vmatpush.msra.mxu0 %v556
      %751 = vmatmul.f32.gmra.mxu0 %v524
      %v752 = vpop.f32.mrf.mxu0
      %v753 = vadd.f32 %v640, %v752
      %754 = vmatmul.f32.gmra.mxu0 %v525
      %v755 = vpop.f32.mrf.mxu0
      %v756 = vadd.f32 %v643, %v755
      %757 = vmatmul.f32.gmra.mxu0 %v526
      %v758 = vpop.f32.mrf.mxu0
      %v759 = vadd.f32 %v646, %v758
      %760 = vmatmul.f32.gmra.mxu0 %v527
      %v761 = vpop.f32.mrf.mxu0
      %v762 = vadd.f32 %v649, %v761
      %763 = vmatmul.f32.gmra.mxu0 %v528
      %v764 = vpop.f32.mrf.mxu0
      %v765 = vadd.f32 %v652, %v764
      %766 = vmatmul.f32.gmra.mxu0 %v529
      %v767 = vpop.f32.mrf.mxu0
      %v768 = vadd.f32 %v655, %v767
      %769 = vmatmul.f32.gmra.mxu0 %v530
      %v770 = vpop.f32.mrf.mxu0
      %v771 = vadd.f32 %v658, %v770
      %772 = vmatmul.f32.gmra.mxu0 %v531
      %v773 = vpop.f32.mrf.mxu0
      %v774 = vadd.f32 %v661, %v773
      %775 = vmatmul.f32.gmra.mxu0 %v532
      %v776 = vpop.f32.mrf.mxu0
      %v777 = vadd.f32 %v664, %v776
      %778 = vmatmul.f32.gmra.mxu0 %v533
      %v779 = vpop.f32.mrf.mxu0
      %v780 = vadd.f32 %v667, %v779
      %781 = vmatmul.f32.gmra.mxu0 %v534
      %v782 = vpop.f32.mrf.mxu0
      %v783 = vadd.f32 %v670, %v782
      %784 = vmatmul.f32.gmra.mxu0 %v535
      %v785 = vpop.f32.mrf.mxu0
      %v786 = vadd.f32 %v673, %v785
      %787 = vmatmul.f32.gmra.mxu0 %v536
      %v788 = vpop.f32.mrf.mxu0
      %v789 = vadd.f32 %v676, %v788
      %790 = vmatmul.f32.gmra.mxu0 %v537
      %v791 = vpop.f32.mrf.mxu0
      %v792 = vadd.f32 %v679, %v791
      %793 = vmatmul.f32.gmra.mxu0 %v538
      %v794 = vpop.f32.mrf.mxu0
      %v795 = vadd.f32 %v682, %v794
      %796 = vmatmul.f32.gmra.mxu0 %v539
      %v797 = vpop.f32.mrf.mxu0
      %v798 = vadd.f32 %v685, %v797
      %799 = vmatmul.f32.gmra.mxu0 %v540
      %v800 = vpop.f32.mrf.mxu0
      %v801 = vadd.f32 %v688, %v800
      %802 = vmatmul.f32.gmra.mxu0 %v541
      %v803 = vpop.f32.mrf.mxu0
      %v804 = vadd.f32 %v691, %v803
      %805 = vmatmul.f32.gmra.mxu0 %v542
      %v806 = vpop.f32.mrf.mxu0
      %v807 = vadd.f32 %v694, %v806
      %808 = vmatmul.f32.gmra.mxu0 %v543
      %v809 = vpop.f32.mrf.mxu0
      %v810 = vadd.f32 %v697, %v809
      %811 = vmatmul.f32.gmra.mxu0 %v544
      %v812 = vpop.f32.mrf.mxu0
      %v813 = vadd.f32 %v700, %v812
      %814 = vmatmul.f32.gmra.mxu0 %v545
      %v815 = vpop.f32.mrf.mxu0
      %v816 = vadd.f32 %v703, %v815
      %817 = vmatmul.f32.gmra.mxu0 %v546
      %v818 = vpop.f32.mrf.mxu0
      %v819 = vadd.f32 %v706, %v818
      %820 = vmatmul.f32.gmra.mxu0 %v547
      %v821 = vpop.f32.mrf.mxu0
      %v822 = vadd.f32 %v709, %v821
      %823 = vmatmul.f32.gmra.mxu0 %v548
      %v824 = vpop.f32.mrf.mxu0
      %v825 = vadd.f32 %v712, %v824
      %826 = vmatmul.f32.gmra.mxu0 %v549
      %v827 = vpop.f32.mrf.mxu0
      %v828 = vadd.f32 %v715, %v827
      %829 = vmatmul.f32.gmra.mxu0 %v550
      %v830 = vpop.f32.mrf.mxu0
      %v831 = vadd.f32 %v718, %v830
      %832 = vmatmul.f32.gmra.mxu0 %v551
      %v833 = vpop.f32.mrf.mxu0
      %v834 = vadd.f32 %v721, %v833
      %835 = vmatmul.f32.gmra.mxu0 %v552
      %v836 = vpop.f32.mrf.mxu0
      %v837 = vadd.f32 %v724, %v836
      %838 = vmatmul.f32.gmra.mxu0 %v553
      %v839 = vpop.f32.mrf.mxu0
      %v840 = vadd.f32 %v727, %v839
      %841 = vmatmul.f32.gmra.mxu0 %v554
      %v842 = vpop.f32.mrf.mxu0
      %v843 = vadd.f32 %v730, %v842
      %844 = vmatmul.f32.gmra.mxu0 %v555
      %v845 = vpop.f32.mrf.mxu0
      %v846 = vadd.f32 %v733, %v845
      %847 = vdwg.mxu0
      %s848 = scalar_lea.vmem [#allocation2], 576
      %v849 = vld [vmem:[%s848] sm:$0xff]
      %v850 = vld [vmem:[%s848 + $0x8] sm:$0xff]
      %v851 = vld [vmem:[%s848 + $0x10] sm:$0xff]
      %v852 = vld [vmem:[%s848 + $0x18] sm:$0xff]
      %v853 = vld [vmem:[%s848 + $0x20] sm:$0xff]
      %v854 = vld [vmem:[%s848 + $0x28] sm:$0xff]
      %v855 = vld [vmem:[%s848 + $0x30] sm:$0xff]
      %v856 = vld [vmem:[%s848 + $0x38] sm:$0xff]
      %v857 = vld [vmem:[%s848 + $0x40] sm:$0xff]
      %v858 = vld [vmem:[%s848 + $0x48] sm:$0xff]
      %v859 = vld [vmem:[%s848 + $0x50] sm:$0xff]
      %v860 = vld [vmem:[%s848 + $0x58] sm:$0xff]
      %v861 = vld [vmem:[%s848 + $0x60] sm:$0xff]
      %v862 = vld [vmem:[%s848 + $0x68] sm:$0xff]
      %v863 = vld [vmem:[%s848 + $0x70] sm:$0xff]
      %v864 = vld [vmem:[%s848 + $0x78] sm:$0xff]
      %v865 = vld [vmem:[%s848 + $0x80] sm:$0xff]
      %v866 = vld [vmem:[%s848 + $0x88] sm:$0xff]
      %v867 = vld [vmem:[%s848 + $0x90] sm:$0xff]
      %v868 = vld [vmem:[%s848 + $0x98] sm:$0xff]
      %v869 = vld [vmem:[%s848 + $0xa0] sm:$0xff]
      %v870 = vld [vmem:[%s848 + $0xa8] sm:$0xff]
      %v871 = vld [vmem:[%s848 + $0xb0] sm:$0xff]
      %v872 = vld [vmem:[%s848 + $0xb8] sm:$0xff]
      %v873 = vld [vmem:[%s848 + $0xc0] sm:$0xff]
      %v874 = vld [vmem:[%s848 + $0xc8] sm:$0xff]
      %v875 = vld [vmem:[%s848 + $0xd0] sm:$0xff]
      %v876 = vld [vmem:[%s848 + $0xd8] sm:$0xff]
      %v877 = vld [vmem:[%s848 + $0xe0] sm:$0xff]
      %v878 = vld [vmem:[%s848 + $0xe8] sm:$0xff]
      %v879 = vld [vmem:[%s848 + $0xf0] sm:$0xff]
      %v880 = vld [vmem:[%s848 + $0xf8] sm:$0xff]
      %s881 = scalar_lea.vmem %s265, 256
      %v882 = vld [vmem:[%s881] sm:$0xff]
      %v883 = vld [vmem:[%s881 + $0x8] sm:$0xff]
      %v884 = vld [vmem:[%s881 + $0x10] sm:$0xff]
      %v885 = vld [vmem:[%s881 + $0x18] sm:$0xff]
      %v886 = vld [vmem:[%s881 + $0x20] sm:$0xff]
      %v887 = vld [vmem:[%s881 + $0x28] sm:$0xff]
      %v888 = vld [vmem:[%s881 + $0x30] sm:$0xff]
      %v889 = vld [vmem:[%s881 + $0x38] sm:$0xff]
      %v890 = vld [vmem:[%s881 + $0x40] sm:$0xff]
      %v891 = vld [vmem:[%s881 + $0x48] sm:$0xff]
      %v892 = vld [vmem:[%s881 + $0x50] sm:$0xff]
      %v893 = vld [vmem:[%s881 + $0x58] sm:$0xff]
      %v894 = vld [vmem:[%s881 + $0x60] sm:$0xff]
      %v895 = vld [vmem:[%s881 + $0x68] sm:$0xff]
      %v896 = vld [vmem:[%s881 + $0x70] sm:$0xff]
      %v897 = vld [vmem:[%s881 + $0x78] sm:$0xff]
      %898 = vmatpush.msra.mxu0 %v897
      %899 = vmatpush.msra.mxu0 %v896
      %900 = vmatpush.msra.mxu0 %v895
      %901 = vmatpush.msra.mxu0 %v894
      %902 = vmatpush.msra.mxu0 %v893
      %903 = vmatpush.msra.mxu0 %v892
      %904 = vmatpush.msra.mxu0 %v891
      %905 = vmatpush.msra.mxu0 %v890
      %906 = vmatpush.msra.mxu0 %v889
      %907 = vmatpush.msra.mxu0 %v888
      %908 = vmatpush.msra.mxu0 %v887
      %909 = vmatpush.msra.mxu0 %v886
      %910 = vmatpush.msra.mxu0 %v885
      %911 = vmatpush.msra.mxu0 %v884
      %912 = vmatpush.msra.mxu0 %v883
      %913 = vmatpush.msra.mxu0 %v882
      %914 = vmatmul.f32.gmra.mxu0 %v849
      %v915 = vpop.f32.mrf.mxu0
      %v916 = vadd.f32 0.0, %v915
      %917 = vmatmul.f32.gmra.mxu0 %v850
      %v918 = vpop.f32.mrf.mxu0
      %v919 = vadd.f32 0.0, %v918
      %920 = vmatmul.f32.gmra.mxu0 %v851
      %v921 = vpop.f32.mrf.mxu0
      %v922 = vadd.f32 0.0, %v921
      %923 = vmatmul.f32.gmra.mxu0 %v852
      %v924 = vpop.f32.mrf.mxu0
      %v925 = vadd.f32 0.0, %v924
      %926 = vmatmul.f32.gmra.mxu0 %v853
      %v927 = vpop.f32.mrf.mxu0
      %v928 = vadd.f32 0.0, %v927
      %929 = vmatmul.f32.gmra.mxu0 %v854
      %v930 = vpop.f32.mrf.mxu0
      %v931 = vadd.f32 0.0, %v930
      %932 = vmatmul.f32.gmra.mxu0 %v855
      %v933 = vpop.f32.mrf.mxu0
      %v934 = vadd.f32 0.0, %v933
      %935 = vmatmul.f32.gmra.mxu0 %v856
      %v936 = vpop.f32.mrf.mxu0
      %v937 = vadd.f32 0.0, %v936
      %938 = vmatmul.f32.gmra.mxu0 %v857
      %v939 = vpop.f32.mrf.mxu0
      %v940 = vadd.f32 0.0, %v939
      %941 = vmatmul.f32.gmra.mxu0 %v858
      %v942 = vpop.f32.mrf.mxu0
      %v943 = vadd.f32 0.0, %v942
      %944 = vmatmul.f32.gmra.mxu0 %v859
      %v945 = vpop.f32.mrf.mxu0
      %v946 = vadd.f32 0.0, %v945
      %947 = vmatmul.f32.gmra.mxu0 %v860
      %v948 = vpop.f32.mrf.mxu0
      %v949 = vadd.f32 0.0, %v948
      %950 = vmatmul.f32.gmra.mxu0 %v861
      %v951 = vpop.f32.mrf.mxu0
      %v952 = vadd.f32 0.0, %v951
      %953 = vmatmul.f32.gmra.mxu0 %v862
      %v954 = vpop.f32.mrf.mxu0
      %v955 = vadd.f32 0.0, %v954
      %956 = vmatmul.f32.gmra.mxu0 %v863
      %v957 = vpop.f32.mrf.mxu0
      %v958 = vadd.f32 0.0, %v957
      %959 = vmatmul.f32.gmra.mxu0 %v864
      %v960 = vpop.f32.mrf.mxu0
      %v961 = vadd.f32 0.0, %v960
      %962 = vmatmul.f32.gmra.mxu0 %v865
      %v963 = vpop.f32.mrf.mxu0
      %v964 = vadd.f32 0.0, %v963
      %965 = vmatmul.f32.gmra.mxu0 %v866
      %v966 = vpop.f32.mrf.mxu0
      %v967 = vadd.f32 0.0, %v966
      %968 = vmatmul.f32.gmra.mxu0 %v867
      %v969 = vpop.f32.mrf.mxu0
      %v970 = vadd.f32 0.0, %v969
      %971 = vmatmul.f32.gmra.mxu0 %v868
      %v972 = vpop.f32.mrf.mxu0
      %v973 = vadd.f32 0.0, %v972
      %974 = vmatmul.f32.gmra.mxu0 %v869
      %v975 = vpop.f32.mrf.mxu0
      %v976 = vadd.f32 0.0, %v975
      %977 = vmatmul.f32.gmra.mxu0 %v870
      %v978 = vpop.f32.mrf.mxu0
      %v979 = vadd.f32 0.0, %v978
      %980 = vmatmul.f32.gmra.mxu0 %v871
      %v981 = vpop.f32.mrf.mxu0
      %v982 = vadd.f32 0.0, %v981
      %983 = vmatmul.f32.gmra.mxu0 %v872
      %v984 = vpop.f32.mrf.mxu0
      %v985 = vadd.f32 0.0, %v984
      %986 = vmatmul.f32.gmra.mxu0 %v873
      %v987 = vpop.f32.mrf.mxu0
      %v988 = vadd.f32 0.0, %v987
      %989 = vmatmul.f32.gmra.mxu0 %v874
      %v990 = vpop.f32.mrf.mxu0
      %v991 = vadd.f32 0.0, %v990
      %992 = vmatmul.f32.gmra.mxu0 %v875
      %v993 = vpop.f32.mrf.mxu0
      %v994 = vadd.f32 0.0, %v993
      %995 = vmatmul.f32.gmra.mxu0 %v876
      %v996 = vpop.f32.mrf.mxu0
      %v997 = vadd.f32 0.0, %v996
      %998 = vmatmul.f32.gmra.mxu0 %v877
      %v999 = vpop.f32.mrf.mxu0
      %v1000 = vadd.f32 0.0, %v999
      %1001 = vmatmul.f32.gmra.mxu0 %v878
      %v1002 = vpop.f32.mrf.mxu0
      %v1003 = vadd.f32 0.0, %v1002
      %1004 = vmatmul.f32.gmra.mxu0 %v879
      %v1005 = vpop.f32.mrf.mxu0
      %v1006 = vadd.f32 0.0, %v1005
      %1007 = vmatmul.f32.gmra.mxu0 %v880
      %v1008 = vpop.f32.mrf.mxu0
      %v1009 = vadd.f32 0.0, %v1008
      %1010 = vdwg.mxu0
      %v1011 = vadd.f32 %v753, %v916
      %v1012 = vadd.f32 %v756, %v919
      %v1013 = vadd.f32 %v759, %v922
      %v1014 = vadd.f32 %v762, %v925
      %v1015 = vadd.f32 %v765, %v928
      %v1016 = vadd.f32 %v768, %v931
      %v1017 = vadd.f32 %v771, %v934
      %v1018 = vadd.f32 %v774, %v937
      %v1019 = vadd.f32 %v777, %v940
      %v1020 = vadd.f32 %v780, %v943
      %v1021 = vadd.f32 %v783, %v946
      %v1022 = vadd.f32 %v786, %v949
      %v1023 = vadd.f32 %v789, %v952
      %v1024 = vadd.f32 %v792, %v955
      %v1025 = vadd.f32 %v795, %v958
      %v1026 = vadd.f32 %v798, %v961
      %v1027 = vadd.f32 %v801, %v964
      %v1028 = vadd.f32 %v804, %v967
      %v1029 = vadd.f32 %v807, %v970
      %v1030 = vadd.f32 %v810, %v973
      %v1031 = vadd.f32 %v813, %v976
      %v1032 = vadd.f32 %v816, %v979
      %v1033 = vadd.f32 %v819, %v982
      %v1034 = vadd.f32 %v822, %v985
      %v1035 = vadd.f32 %v825, %v988
      %v1036 = vadd.f32 %v828, %v991
      %v1037 = vadd.f32 %v831, %v994
      %v1038 = vadd.f32 %v834, %v997
      %v1039 = vadd.f32 %v837, %v1000
      %v1040 = vadd.f32 %v840, %v1003
      %v1041 = vadd.f32 %v843, %v1006
      %v1042 = vadd.f32 %v846, %v1009
      %s1043 = scalar_lea.vmem [#allocation2], 16
      %v1044 = vld [vmem:[%s1043] sm:$0xff]
      %v1045 = vld [vmem:[%s1043 + $0x8] sm:$0xff]
      %v1046 = vld [vmem:[%s1043 + $0x10] sm:$0xff]
      %v1047 = vld [vmem:[%s1043 + $0x18] sm:$0xff]
      %v1048 = vld [vmem:[%s1043 + $0x20] sm:$0xff]
      %v1049 = vld [vmem:[%s1043 + $0x28] sm:$0xff]
      %v1050 = vld [vmem:[%s1043 + $0x30] sm:$0xff]
      %v1051 = vld [vmem:[%s1043 + $0x38] sm:$0xff]
      %v1052 = vld [vmem:[%s1043 + $0x40] sm:$0xff]
      %v1053 = vld [vmem:[%s1043 + $0x48] sm:$0xff]
      %v1054 = vld [vmem:[%s1043 + $0x50] sm:$0xff]
      %v1055 = vld [vmem:[%s1043 + $0x58] sm:$0xff]
      %v1056 = vld [vmem:[%s1043 + $0x60] sm:$0xff]
      %v1057 = vld [vmem:[%s1043 + $0x68] sm:$0xff]
      %v1058 = vld [vmem:[%s1043 + $0x70] sm:$0xff]
      %v1059 = vld [vmem:[%s1043 + $0x78] sm:$0xff]
      %v1060 = vld [vmem:[%s1043 + $0x80] sm:$0xff]
      %v1061 = vld [vmem:[%s1043 + $0x88] sm:$0xff]
      %v1062 = vld [vmem:[%s1043 + $0x90] sm:$0xff]
      %v1063 = vld [vmem:[%s1043 + $0x98] sm:$0xff]
      %v1064 = vld [vmem:[%s1043 + $0xa0] sm:$0xff]
      %v1065 = vld [vmem:[%s1043 + $0xa8] sm:$0xff]
      %v1066 = vld [vmem:[%s1043 + $0xb0] sm:$0xff]
      %v1067 = vld [vmem:[%s1043 + $0xb8] sm:$0xff]
      %v1068 = vld [vmem:[%s1043 + $0xc0] sm:$0xff]
      %v1069 = vld [vmem:[%s1043 + $0xc8] sm:$0xff]
      %v1070 = vld [vmem:[%s1043 + $0xd0] sm:$0xff]
      %v1071 = vld [vmem:[%s1043 + $0xd8] sm:$0xff]
      %v1072 = vld [vmem:[%s1043 + $0xe0] sm:$0xff]
      %v1073 = vld [vmem:[%s1043 + $0xe8] sm:$0xff]
      %v1074 = vld [vmem:[%s1043 + $0xf0] sm:$0xff]
      %v1075 = vld [vmem:[%s1043 + $0xf8] sm:$0xff]
      %s1076 = scalar_lea.vmem %s265, 384
      %v1077 = vld [vmem:[%s1076] sm:$0xff]
      %v1078 = vld [vmem:[%s1076 + $0x8] sm:$0xff]
      %v1079 = vld [vmem:[%s1076 + $0x10] sm:$0xff]
      %v1080 = vld [vmem:[%s1076 + $0x18] sm:$0xff]
      %v1081 = vld [vmem:[%s1076 + $0x20] sm:$0xff]
      %v1082 = vld [vmem:[%s1076 + $0x28] sm:$0xff]
      %v1083 = vld [vmem:[%s1076 + $0x30] sm:$0xff]
      %v1084 = vld [vmem:[%s1076 + $0x38] sm:$0xff]
      %v1085 = vld [vmem:[%s1076 + $0x40] sm:$0xff]
      %v1086 = vld [vmem:[%s1076 + $0x48] sm:$0xff]
      %v1087 = vld [vmem:[%s1076 + $0x50] sm:$0xff]
      %v1088 = vld [vmem:[%s1076 + $0x58] sm:$0xff]
      %v1089 = vld [vmem:[%s1076 + $0x60] sm:$0xff]
      %v1090 = vld [vmem:[%s1076 + $0x68] sm:$0xff]
      %v1091 = vld [vmem:[%s1076 + $0x70] sm:$0xff]
      %v1092 = vld [vmem:[%s1076 + $0x78] sm:$0xff]
      %1093 = vmatpush.msra.mxu0 %v1092
      %1094 = vmatpush.msra.mxu0 %v1091
      %1095 = vmatpush.msra.mxu0 %v1090
      %1096 = vmatpush.msra.mxu0 %v1089
      %1097 = vmatpush.msra.mxu0 %v1088
      %1098 = vmatpush.msra.mxu0 %v1087
      %1099 = vmatpush.msra.mxu0 %v1086
      %1100 = vmatpush.msra.mxu0 %v1085
      %1101 = vmatpush.msra.mxu0 %v1084
      %1102 = vmatpush.msra.mxu0 %v1083
      %1103 = vmatpush.msra.mxu0 %v1082
      %1104 = vmatpush.msra.mxu0 %v1081
      %1105 = vmatpush.msra.mxu0 %v1080
      %1106 = vmatpush.msra.mxu0 %v1079
      %1107 = vmatpush.msra.mxu0 %v1078
      %1108 = vmatpush.msra.mxu0 %v1077
      %1109 = vmatmul.f32.gmra.mxu0 %v1044
      %v1110 = vpop.f32.mrf.mxu0
      %v1111 = vadd.f32 0.0, %v1110
      %1112 = vmatmul.f32.gmra.mxu0 %v1045
      %v1113 = vpop.f32.mrf.mxu0
      %v1114 = vadd.f32 0.0, %v1113
      %1115 = vmatmul.f32.gmra.mxu0 %v1046
      %v1116 = vpop.f32.mrf.mxu0
      %v1117 = vadd.f32 0.0, %v1116
      %1118 = vmatmul.f32.gmra.mxu0 %v1047
      %v1119 = vpop.f32.mrf.mxu0
      %v1120 = vadd.f32 0.0, %v1119
      %1121 = vmatmul.f32.gmra.mxu0 %v1048
      %v1122 = vpop.f32.mrf.mxu0
      %v1123 = vadd.f32 0.0, %v1122
      %1124 = vmatmul.f32.gmra.mxu0 %v1049
      %v1125 = vpop.f32.mrf.mxu0
      %v1126 = vadd.f32 0.0, %v1125
      %1127 = vmatmul.f32.gmra.mxu0 %v1050
      %v1128 = vpop.f32.mrf.mxu0
      %v1129 = vadd.f32 0.0, %v1128
      %1130 = vmatmul.f32.gmra.mxu0 %v1051
      %v1131 = vpop.f32.mrf.mxu0
      %v1132 = vadd.f32 0.0, %v1131
      %1133 = vmatmul.f32.gmra.mxu0 %v1052
      %v1134 = vpop.f32.mrf.mxu0
      %v1135 = vadd.f32 0.0, %v1134
      %1136 = vmatmul.f32.gmra.mxu0 %v1053
      %v1137 = vpop.f32.mrf.mxu0
      %v1138 = vadd.f32 0.0, %v1137
      %1139 = vmatmul.f32.gmra.mxu0 %v1054
      %v1140 = vpop.f32.mrf.mxu0
      %v1141 = vadd.f32 0.0, %v1140
      %1142 = vmatmul.f32.gmra.mxu0 %v1055
      %v1143 = vpop.f32.mrf.mxu0
      %v1144 = vadd.f32 0.0, %v1143
      %1145 = vmatmul.f32.gmra.mxu0 %v1056
      %v1146 = vpop.f32.mrf.mxu0
      %v1147 = vadd.f32 0.0, %v1146
      %1148 = vmatmul.f32.gmra.mxu0 %v1057
      %v1149 = vpop.f32.mrf.mxu0
      %v1150 = vadd.f32 0.0, %v1149
      %1151 = vmatmul.f32.gmra.mxu0 %v1058
      %v1152 = vpop.f32.mrf.mxu0
      %v1153 = vadd.f32 0.0, %v1152
      %1154 = vmatmul.f32.gmra.mxu0 %v1059
      %v1155 = vpop.f32.mrf.mxu0
      %v1156 = vadd.f32 0.0, %v1155
      %1157 = vmatmul.f32.gmra.mxu0 %v1060
      %v1158 = vpop.f32.mrf.mxu0
      %v1159 = vadd.f32 0.0, %v1158
      %1160 = vmatmul.f32.gmra.mxu0 %v1061
      %v1161 = vpop.f32.mrf.mxu0
      %v1162 = vadd.f32 0.0, %v1161
      %1163 = vmatmul.f32.gmra.mxu0 %v1062
      %v1164 = vpop.f32.mrf.mxu0
      %v1165 = vadd.f32 0.0, %v1164
      %1166 = vmatmul.f32.gmra.mxu0 %v1063
      %v1167 = vpop.f32.mrf.mxu0
      %v1168 = vadd.f32 0.0, %v1167
      %1169 = vmatmul.f32.gmra.mxu0 %v1064
      %v1170 = vpop.f32.mrf.mxu0
      %v1171 = vadd.f32 0.0, %v1170
      %1172 = vmatmul.f32.gmra.mxu0 %v1065
      %v1173 = vpop.f32.mrf.mxu0
      %v1174 = vadd.f32 0.0, %v1173
      %1175 = vmatmul.f32.gmra.mxu0 %v1066
      %v1176 = vpop.f32.mrf.mxu0
      %v1177 = vadd.f32 0.0, %v1176
      %1178 = vmatmul.f32.gmra.mxu0 %v1067
      %v1179 = vpop.f32.mrf.mxu0
      %v1180 = vadd.f32 0.0, %v1179
      %1181 = vmatmul.f32.gmra.mxu0 %v1068
      %v1182 = vpop.f32.mrf.mxu0
      %v1183 = vadd.f32 0.0, %v1182
      %1184 = vmatmul.f32.gmra.mxu0 %v1069
      %v1185 = vpop.f32.mrf.mxu0
      %v1186 = vadd.f32 0.0, %v1185
      %1187 = vmatmul.f32.gmra.mxu0 %v1070
      %v1188 = vpop.f32.mrf.mxu0
      %v1189 = vadd.f32 0.0, %v1188
      %1190 = vmatmul.f32.gmra.mxu0 %v1071
      %v1191 = vpop.f32.mrf.mxu0
      %v1192 = vadd.f32 0.0, %v1191
      %1193 = vmatmul.f32.gmra.mxu0 %v1072
      %v1194 = vpop.f32.mrf.mxu0
      %v1195 = vadd.f32 0.0, %v1194
      %1196 = vmatmul.f32.gmra.mxu0 %v1073
      %v1197 = vpop.f32.mrf.mxu0
      %v1198 = vadd.f32 0.0, %v1197
      %1199 = vmatmul.f32.gmra.mxu0 %v1074
      %v1200 = vpop.f32.mrf.mxu0
      %v1201 = vadd.f32 0.0, %v1200
      %1202 = vmatmul.f32.gmra.mxu0 %v1075
      %v1203 = vpop.f32.mrf.mxu0
      %v1204 = vadd.f32 0.0, %v1203
      %1205 = vdwg.mxu0
      %v1206 = vadd.f32 %v1011, %v1111
      %v1207 = vadd.f32 %v1012, %v1114
      %v1208 = vadd.f32 %v1013, %v1117
      %v1209 = vadd.f32 %v1014, %v1120
      %v1210 = vadd.f32 %v1015, %v1123
      %v1211 = vadd.f32 %v1016, %v1126
      %v1212 = vadd.f32 %v1017, %v1129
      %v1213 = vadd.f32 %v1018, %v1132
      %v1214 = vadd.f32 %v1019, %v1135
      %v1215 = vadd.f32 %v1020, %v1138
      %v1216 = vadd.f32 %v1021, %v1141
      %v1217 = vadd.f32 %v1022, %v1144
      %v1218 = vadd.f32 %v1023, %v1147
      %v1219 = vadd.f32 %v1024, %v1150
      %v1220 = vadd.f32 %v1025, %v1153
      %v1221 = vadd.f32 %v1026, %v1156
      %v1222 = vadd.f32 %v1027, %v1159
      %v1223 = vadd.f32 %v1028, %v1162
      %v1224 = vadd.f32 %v1029, %v1165
      %v1225 = vadd.f32 %v1030, %v1168
      %v1226 = vadd.f32 %v1031, %v1171
      %v1227 = vadd.f32 %v1032, %v1174
      %v1228 = vadd.f32 %v1033, %v1177
      %v1229 = vadd.f32 %v1034, %v1180
      %v1230 = vadd.f32 %v1035, %v1183
      %v1231 = vadd.f32 %v1036, %v1186
      %v1232 = vadd.f32 %v1037, %v1189
      %v1233 = vadd.f32 %v1038, %v1192
      %v1234 = vadd.f32 %v1039, %v1195
      %v1235 = vadd.f32 %v1040, %v1198
      %v1236 = vadd.f32 %v1041, %v1201
      %v1237 = vadd.f32 %v1042, %v1204
      %s1238 = scalar_lea.vmem [#allocation2], 304
      %v1239 = vld [vmem:[%s1238] sm:$0xff]
      %v1240 = vld [vmem:[%s1238 + $0x8] sm:$0xff]
      %v1241 = vld [vmem:[%s1238 + $0x10] sm:$0xff]
      %v1242 = vld [vmem:[%s1238 + $0x18] sm:$0xff]
      %v1243 = vld [vmem:[%s1238 + $0x20] sm:$0xff]
      %v1244 = vld [vmem:[%s1238 + $0x28] sm:$0xff]
      %v1245 = vld [vmem:[%s1238 + $0x30] sm:$0xff]
      %v1246 = vld [vmem:[%s1238 + $0x38] sm:$0xff]
      %v1247 = vld [vmem:[%s1238 + $0x40] sm:$0xff]
      %v1248 = vld [vmem:[%s1238 + $0x48] sm:$0xff]
      %v1249 = vld [vmem:[%s1238 + $0x50] sm:$0xff]
      %v1250 = vld [vmem:[%s1238 + $0x58] sm:$0xff]
      %v1251 = vld [vmem:[%s1238 + $0x60] sm:$0xff]
      %v1252 = vld [vmem:[%s1238 + $0x68] sm:$0xff]
      %v1253 = vld [vmem:[%s1238 + $0x70] sm:$0xff]
      %v1254 = vld [vmem:[%s1238 + $0x78] sm:$0xff]
      %v1255 = vld [vmem:[%s1238 + $0x80] sm:$0xff]
      %v1256 = vld [vmem:[%s1238 + $0x88] sm:$0xff]
      %v1257 = vld [vmem:[%s1238 + $0x90] sm:$0xff]
      %v1258 = vld [vmem:[%s1238 + $0x98] sm:$0xff]
      %v1259 = vld [vmem:[%s1238 + $0xa0] sm:$0xff]
      %v1260 = vld [vmem:[%s1238 + $0xa8] sm:$0xff]
      %v1261 = vld [vmem:[%s1238 + $0xb0] sm:$0xff]
      %v1262 = vld [vmem:[%s1238 + $0xb8] sm:$0xff]
      %v1263 = vld [vmem:[%s1238 + $0xc0] sm:$0xff]
      %v1264 = vld [vmem:[%s1238 + $0xc8] sm:$0xff]
      %v1265 = vld [vmem:[%s1238 + $0xd0] sm:$0xff]
      %v1266 = vld [vmem:[%s1238 + $0xd8] sm:$0xff]
      %v1267 = vld [vmem:[%s1238 + $0xe0] sm:$0xff]
      %v1268 = vld [vmem:[%s1238 + $0xe8] sm:$0xff]
      %v1269 = vld [vmem:[%s1238 + $0xf0] sm:$0xff]
      %v1270 = vld [vmem:[%s1238 + $0xf8] sm:$0xff]
      %s1271 = scalar_lea.vmem %s265, 512
      %v1272 = vld [vmem:[%s1271] sm:$0xff]
      %v1273 = vld [vmem:[%s1271 + $0x8] sm:$0xff]
      %v1274 = vld [vmem:[%s1271 + $0x10] sm:$0xff]
      %v1275 = vld [vmem:[%s1271 + $0x18] sm:$0xff]
      %v1276 = vld [vmem:[%s1271 + $0x20] sm:$0xff]
      %v1277 = vld [vmem:[%s1271 + $0x28] sm:$0xff]
      %v1278 = vld [vmem:[%s1271 + $0x30] sm:$0xff]
      %v1279 = vld [vmem:[%s1271 + $0x38] sm:$0xff]
      %v1280 = vld [vmem:[%s1271 + $0x40] sm:$0xff]
      %v1281 = vld [vmem:[%s1271 + $0x48] sm:$0xff]
      %v1282 = vld [vmem:[%s1271 + $0x50] sm:$0xff]
      %v1283 = vld [vmem:[%s1271 + $0x58] sm:$0xff]
      %v1284 = vld [vmem:[%s1271 + $0x60] sm:$0xff]
      %v1285 = vld [vmem:[%s1271 + $0x68] sm:$0xff]
      %v1286 = vld [vmem:[%s1271 + $0x70] sm:$0xff]
      %v1287 = vld [vmem:[%s1271 + $0x78] sm:$0xff]
      %1288 = vmatpush.msra.mxu0 %v1287
      %1289 = vmatpush.msra.mxu0 %v1286
      %1290 = vmatpush.msra.mxu0 %v1285
      %1291 = vmatpush.msra.mxu0 %v1284
      %1292 = vmatpush.msra.mxu0 %v1283
      %1293 = vmatpush.msra.mxu0 %v1282
      %1294 = vmatpush.msra.mxu0 %v1281
      %1295 = vmatpush.msra.mxu0 %v1280
      %1296 = vmatpush.msra.mxu0 %v1279
      %1297 = vmatpush.msra.mxu0 %v1278
      %1298 = vmatpush.msra.mxu0 %v1277
      %1299 = vmatpush.msra.mxu0 %v1276
      %1300 = vmatpush.msra.mxu0 %v1275
      %1301 = vmatpush.msra.mxu0 %v1274
      %1302 = vmatpush.msra.mxu0 %v1273
      %1303 = vmatpush.msra.mxu0 %v1272
      %1304 = vmatmul.f32.gmra.mxu0 %v1239
      %v1305 = vpop.f32.mrf.mxu0
      %v1306 = vadd.f32 0.0, %v1305
      %1307 = vmatmul.f32.gmra.mxu0 %v1240
      %v1308 = vpop.f32.mrf.mxu0
      %v1309 = vadd.f32 0.0, %v1308
      %1310 = vmatmul.f32.gmra.mxu0 %v1241
      %v1311 = vpop.f32.mrf.mxu0
      %v1312 = vadd.f32 0.0, %v1311
      %1313 = vmatmul.f32.gmra.mxu0 %v1242
      %v1314 = vpop.f32.mrf.mxu0
      %v1315 = vadd.f32 0.0, %v1314
      %1316 = vmatmul.f32.gmra.mxu0 %v1243
      %v1317 = vpop.f32.mrf.mxu0
      %v1318 = vadd.f32 0.0, %v1317
      %1319 = vmatmul.f32.gmra.mxu0 %v1244
      %v1320 = vpop.f32.mrf.mxu0
      %v1321 = vadd.f32 0.0, %v1320
      %1322 = vmatmul.f32.gmra.mxu0 %v1245
      %v1323 = vpop.f32.mrf.mxu0
      %v1324 = vadd.f32 0.0, %v1323
      %1325 = vmatmul.f32.gmra.mxu0 %v1246
      %v1326 = vpop.f32.mrf.mxu0
      %v1327 = vadd.f32 0.0, %v1326
      %1328 = vmatmul.f32.gmra.mxu0 %v1247
      %v1329 = vpop.f32.mrf.mxu0
      %v1330 = vadd.f32 0.0, %v1329
      %1331 = vmatmul.f32.gmra.mxu0 %v1248
      %v1332 = vpop.f32.mrf.mxu0
      %v1333 = vadd.f32 0.0, %v1332
      %1334 = vmatmul.f32.gmra.mxu0 %v1249
      %v1335 = vpop.f32.mrf.mxu0
      %v1336 = vadd.f32 0.0, %v1335
      %1337 = vmatmul.f32.gmra.mxu0 %v1250
      %v1338 = vpop.f32.mrf.mxu0
      %v1339 = vadd.f32 0.0, %v1338
      %1340 = vmatmul.f32.gmra.mxu0 %v1251
      %v1341 = vpop.f32.mrf.mxu0
      %v1342 = vadd.f32 0.0, %v1341
      %1343 = vmatmul.f32.gmra.mxu0 %v1252
      %v1344 = vpop.f32.mrf.mxu0
      %v1345 = vadd.f32 0.0, %v1344
      %1346 = vmatmul.f32.gmra.mxu0 %v1253
      %v1347 = vpop.f32.mrf.mxu0
      %v1348 = vadd.f32 0.0, %v1347
      %1349 = vmatmul.f32.gmra.mxu0 %v1254
      %v1350 = vpop.f32.mrf.mxu0
      %v1351 = vadd.f32 0.0, %v1350
      %1352 = vmatmul.f32.gmra.mxu0 %v1255
      %v1353 = vpop.f32.mrf.mxu0
      %v1354 = vadd.f32 0.0, %v1353
      %1355 = vmatmul.f32.gmra.mxu0 %v1256
      %v1356 = vpop.f32.mrf.mxu0
      %v1357 = vadd.f32 0.0, %v1356
      %1358 = vmatmul.f32.gmra.mxu0 %v1257
      %v1359 = vpop.f32.mrf.mxu0
      %v1360 = vadd.f32 0.0, %v1359
      %1361 = vmatmul.f32.gmra.mxu0 %v1258
      %v1362 = vpop.f32.mrf.mxu0
      %v1363 = vadd.f32 0.0, %v1362
      %1364 = vmatmul.f32.gmra.mxu0 %v1259
      %v1365 = vpop.f32.mrf.mxu0
      %v1366 = vadd.f32 0.0, %v1365
      %1367 = vmatmul.f32.gmra.mxu0 %v1260
      %v1368 = vpop.f32.mrf.mxu0
      %v1369 = vadd.f32 0.0, %v1368
      %1370 = vmatmul.f32.gmra.mxu0 %v1261
      %v1371 = vpop.f32.mrf.mxu0
      %v1372 = vadd.f32 0.0, %v1371
      %1373 = vmatmul.f32.gmra.mxu0 %v1262
      %v1374 = vpop.f32.mrf.mxu0
      %v1375 = vadd.f32 0.0, %v1374
      %1376 = vmatmul.f32.gmra.mxu0 %v1263
      %v1377 = vpop.f32.mrf.mxu0
      %v1378 = vadd.f32 0.0, %v1377
      %1379 = vmatmul.f32.gmra.mxu0 %v1264
      %v1380 = vpop.f32.mrf.mxu0
      %v1381 = vadd.f32 0.0, %v1380
      %1382 = vmatmul.f32.gmra.mxu0 %v1265
      %v1383 = vpop.f32.mrf.mxu0
      %v1384 = vadd.f32 0.0, %v1383
      %1385 = vmatmul.f32.gmra.mxu0 %v1266
      %v1386 = vpop.f32.mrf.mxu0
      %v1387 = vadd.f32 0.0, %v1386
      %1388 = vmatmul.f32.gmra.mxu0 %v1267
      %v1389 = vpop.f32.mrf.mxu0
      %v1390 = vadd.f32 0.0, %v1389
      %1391 = vmatmul.f32.gmra.mxu0 %v1268
      %v1392 = vpop.f32.mrf.mxu0
      %v1393 = vadd.f32 0.0, %v1392
      %1394 = vmatmul.f32.gmra.mxu0 %v1269
      %v1395 = vpop.f32.mrf.mxu0
      %v1396 = vadd.f32 0.0, %v1395
      %1397 = vmatmul.f32.gmra.mxu0 %v1270
      %v1398 = vpop.f32.mrf.mxu0
      %v1399 = vadd.f32 0.0, %v1398
      %1400 = vdwg.mxu0
      %v1401 = vadd.f32 %v1206, %v1306
      %v1402 = vadd.f32 %v1207, %v1309
      %v1403 = vadd.f32 %v1208, %v1312
      %v1404 = vadd.f32 %v1209, %v1315
      %v1405 = vadd.f32 %v1210, %v1318
      %v1406 = vadd.f32 %v1211, %v1321
      %v1407 = vadd.f32 %v1212, %v1324
      %v1408 = vadd.f32 %v1213, %v1327
      %v1409 = vadd.f32 %v1214, %v1330
      %v1410 = vadd.f32 %v1215, %v1333
      %v1411 = vadd.f32 %v1216, %v1336
      %v1412 = vadd.f32 %v1217, %v1339
      %v1413 = vadd.f32 %v1218, %v1342
      %v1414 = vadd.f32 %v1219, %v1345
      %v1415 = vadd.f32 %v1220, %v1348
      %v1416 = vadd.f32 %v1221, %v1351
      %v1417 = vadd.f32 %v1222, %v1354
      %v1418 = vadd.f32 %v1223, %v1357
      %v1419 = vadd.f32 %v1224, %v1360
      %v1420 = vadd.f32 %v1225, %v1363
      %v1421 = vadd.f32 %v1226, %v1366
      %v1422 = vadd.f32 %v1227, %v1369
      %v1423 = vadd.f32 %v1228, %v1372
      %v1424 = vadd.f32 %v1229, %v1375
      %v1425 = vadd.f32 %v1230, %v1378
      %v1426 = vadd.f32 %v1231, %v1381
      %v1427 = vadd.f32 %v1232, %v1384
      %v1428 = vadd.f32 %v1233, %v1387
      %v1429 = vadd.f32 %v1234, %v1390
      %v1430 = vadd.f32 %v1235, %v1393
      %v1431 = vadd.f32 %v1236, %v1396
      %v1432 = vadd.f32 %v1237, %v1399
      %s1433 = scalar_lea.vmem [#allocation2], 592
      %v1434 = vld [vmem:[%s1433] sm:$0xff]
      %v1435 = vld [vmem:[%s1433 + $0x8] sm:$0xff]
      %v1436 = vld [vmem:[%s1433 + $0x10] sm:$0xff]
      %v1437 = vld [vmem:[%s1433 + $0x18] sm:$0xff]
      %v1438 = vld [vmem:[%s1433 + $0x20] sm:$0xff]
      %v1439 = vld [vmem:[%s1433 + $0x28] sm:$0xff]
      %v1440 = vld [vmem:[%s1433 + $0x30] sm:$0xff]
      %v1441 = vld [vmem:[%s1433 + $0x38] sm:$0xff]
      %v1442 = vld [vmem:[%s1433 + $0x40] sm:$0xff]
      %v1443 = vld [vmem:[%s1433 + $0x48] sm:$0xff]
      %v1444 = vld [vmem:[%s1433 + $0x50] sm:$0xff]
      %v1445 = vld [vmem:[%s1433 + $0x58] sm:$0xff]
      %v1446 = vld [vmem:[%s1433 + $0x60] sm:$0xff]
      %v1447 = vld [vmem:[%s1433 + $0x68] sm:$0xff]
      %v1448 = vld [vmem:[%s1433 + $0x70] sm:$0xff]
      %v1449 = vld [vmem:[%s1433 + $0x78] sm:$0xff]
      %v1450 = vld [vmem:[%s1433 + $0x80] sm:$0xff]
      %v1451 = vld [vmem:[%s1433 + $0x88] sm:$0xff]
      %v1452 = vld [vmem:[%s1433 + $0x90] sm:$0xff]
      %v1453 = vld [vmem:[%s1433 + $0x98] sm:$0xff]
      %v1454 = vld [vmem:[%s1433 + $0xa0] sm:$0xff]
      %v1455 = vld [vmem:[%s1433 + $0xa8] sm:$0xff]
      %v1456 = vld [vmem:[%s1433 + $0xb0] sm:$0xff]
      %v1457 = vld [vmem:[%s1433 + $0xb8] sm:$0xff]
      %v1458 = vld [vmem:[%s1433 + $0xc0] sm:$0xff]
      %v1459 = vld [vmem:[%s1433 + $0xc8] sm:$0xff]
      %v1460 = vld [vmem:[%s1433 + $0xd0] sm:$0xff]
      %v1461 = vld [vmem:[%s1433 + $0xd8] sm:$0xff]
      %v1462 = vld [vmem:[%s1433 + $0xe0] sm:$0xff]
      %v1463 = vld [vmem:[%s1433 + $0xe8] sm:$0xff]
      %v1464 = vld [vmem:[%s1433 + $0xf0] sm:$0xff]
      %v1465 = vld [vmem:[%s1433 + $0xf8] sm:$0xff]
      %s1466 = scalar_lea.vmem %s265, 640
      %v1467 = vld [vmem:[%s1466] sm:$0xff]
      %v1468 = vld [vmem:[%s1466 + $0x8] sm:$0xff]
      %v1469 = vld [vmem:[%s1466 + $0x10] sm:$0xff]
      %v1470 = vld [vmem:[%s1466 + $0x18] sm:$0xff]
      %v1471 = vld [vmem:[%s1466 + $0x20] sm:$0xff]
      %v1472 = vld [vmem:[%s1466 + $0x28] sm:$0xff]
      %v1473 = vld [vmem:[%s1466 + $0x30] sm:$0xff]
      %v1474 = vld [vmem:[%s1466 + $0x38] sm:$0xff]
      %v1475 = vld [vmem:[%s1466 + $0x40] sm:$0xff]
      %v1476 = vld [vmem:[%s1466 + $0x48] sm:$0xff]
      %v1477 = vld [vmem:[%s1466 + $0x50] sm:$0xff]
      %v1478 = vld [vmem:[%s1466 + $0x58] sm:$0xff]
      %v1479 = vld [vmem:[%s1466 + $0x60] sm:$0xff]
      %v1480 = vld [vmem:[%s1466 + $0x68] sm:$0xff]
      %v1481 = vld [vmem:[%s1466 + $0x70] sm:$0xff]
      %v1482 = vld [vmem:[%s1466 + $0x78] sm:$0xff]
      %1483 = vmatpush.msra.mxu0 %v1482
      %1484 = vmatpush.msra.mxu0 %v1481
      %1485 = vmatpush.msra.mxu0 %v1480
      %1486 = vmatpush.msra.mxu0 %v1479
      %1487 = vmatpush.msra.mxu0 %v1478
      %1488 = vmatpush.msra.mxu0 %v1477
      %1489 = vmatpush.msra.mxu0 %v1476
      %1490 = vmatpush.msra.mxu0 %v1475
      %1491 = vmatpush.msra.mxu0 %v1474
      %1492 = vmatpush.msra.mxu0 %v1473
      %1493 = vmatpush.msra.mxu0 %v1472
      %1494 = vmatpush.msra.mxu0 %v1471
      %1495 = vmatpush.msra.mxu0 %v1470
      %1496 = vmatpush.msra.mxu0 %v1469
      %1497 = vmatpush.msra.mxu0 %v1468
      %1498 = vmatpush.msra.mxu0 %v1467
      %1499 = vmatmul.f32.gmra.mxu0 %v1434
      %v1500 = vpop.f32.mrf.mxu0
      %v1501 = vadd.f32 0.0, %v1500
      %1502 = vmatmul.f32.gmra.mxu0 %v1435
      %v1503 = vpop.f32.mrf.mxu0
      %v1504 = vadd.f32 0.0, %v1503
      %1505 = vmatmul.f32.gmra.mxu0 %v1436
      %v1506 = vpop.f32.mrf.mxu0
      %v1507 = vadd.f32 0.0, %v1506
      %1508 = vmatmul.f32.gmra.mxu0 %v1437
      %v1509 = vpop.f32.mrf.mxu0
      %v1510 = vadd.f32 0.0, %v1509
      %1511 = vmatmul.f32.gmra.mxu0 %v1438
      %v1512 = vpop.f32.mrf.mxu0
      %v1513 = vadd.f32 0.0, %v1512
      %1514 = vmatmul.f32.gmra.mxu0 %v1439
      %v1515 = vpop.f32.mrf.mxu0
      %v1516 = vadd.f32 0.0, %v1515
      %1517 = vmatmul.f32.gmra.mxu0 %v1440
      %v1518 = vpop.f32.mrf.mxu0
      %v1519 = vadd.f32 0.0, %v1518
      %1520 = vmatmul.f32.gmra.mxu0 %v1441
      %v1521 = vpop.f32.mrf.mxu0
      %v1522 = vadd.f32 0.0, %v1521
      %1523 = vmatmul.f32.gmra.mxu0 %v1442
      %v1524 = vpop.f32.mrf.mxu0
      %v1525 = vadd.f32 0.0, %v1524
      %1526 = vmatmul.f32.gmra.mxu0 %v1443
      %v1527 = vpop.f32.mrf.mxu0
      %v1528 = vadd.f32 0.0, %v1527
      %1529 = vmatmul.f32.gmra.mxu0 %v1444
      %v1530 = vpop.f32.mrf.mxu0
      %v1531 = vadd.f32 0.0, %v1530
      %1532 = vmatmul.f32.gmra.mxu0 %v1445
      %v1533 = vpop.f32.mrf.mxu0
      %v1534 = vadd.f32 0.0, %v1533
      %1535 = vmatmul.f32.gmra.mxu0 %v1446
      %v1536 = vpop.f32.mrf.mxu0
      %v1537 = vadd.f32 0.0, %v1536
      %1538 = vmatmul.f32.gmra.mxu0 %v1447
      %v1539 = vpop.f32.mrf.mxu0
      %v1540 = vadd.f32 0.0, %v1539
      %1541 = vmatmul.f32.gmra.mxu0 %v1448
      %v1542 = vpop.f32.mrf.mxu0
      %v1543 = vadd.f32 0.0, %v1542
      %1544 = vmatmul.f32.gmra.mxu0 %v1449
      %v1545 = vpop.f32.mrf.mxu0
      %v1546 = vadd.f32 0.0, %v1545
      %1547 = vmatmul.f32.gmra.mxu0 %v1450
      %v1548 = vpop.f32.mrf.mxu0
      %v1549 = vadd.f32 0.0, %v1548
      %1550 = vmatmul.f32.gmra.mxu0 %v1451
      %v1551 = vpop.f32.mrf.mxu0
      %v1552 = vadd.f32 0.0, %v1551
      %1553 = vmatmul.f32.gmra.mxu0 %v1452
      %v1554 = vpop.f32.mrf.mxu0
      %v1555 = vadd.f32 0.0, %v1554
      %1556 = vmatmul.f32.gmra.mxu0 %v1453
      %v1557 = vpop.f32.mrf.mxu0
      %v1558 = vadd.f32 0.0, %v1557
      %1559 = vmatmul.f32.gmra.mxu0 %v1454
      %v1560 = vpop.f32.mrf.mxu0
      %v1561 = vadd.f32 0.0, %v1560
      %1562 = vmatmul.f32.gmra.mxu0 %v1455
      %v1563 = vpop.f32.mrf.mxu0
      %v1564 = vadd.f32 0.0, %v1563
      %1565 = vmatmul.f32.gmra.mxu0 %v1456
      %v1566 = vpop.f32.mrf.mxu0
      %v1567 = vadd.f32 0.0, %v1566
      %1568 = vmatmul.f32.gmra.mxu0 %v1457
      %v1569 = vpop.f32.mrf.mxu0
      %v1570 = vadd.f32 0.0, %v1569
      %1571 = vmatmul.f32.gmra.mxu0 %v1458
      %v1572 = vpop.f32.mrf.mxu0
      %v1573 = vadd.f32 0.0, %v1572
      %1574 = vmatmul.f32.gmra.mxu0 %v1459
      %v1575 = vpop.f32.mrf.mxu0
      %v1576 = vadd.f32 0.0, %v1575
      %1577 = vmatmul.f32.gmra.mxu0 %v1460
      %v1578 = vpop.f32.mrf.mxu0
      %v1579 = vadd.f32 0.0, %v1578
      %1580 = vmatmul.f32.gmra.mxu0 %v1461
      %v1581 = vpop.f32.mrf.mxu0
      %v1582 = vadd.f32 0.0, %v1581
      %1583 = vmatmul.f32.gmra.mxu0 %v1462
      %v1584 = vpop.f32.mrf.mxu0
      %v1585 = vadd.f32 0.0, %v1584
      %1586 = vmatmul.f32.gmra.mxu0 %v1463
      %v1587 = vpop.f32.mrf.mxu0
      %v1588 = vadd.f32 0.0, %v1587
      %1589 = vmatmul.f32.gmra.mxu0 %v1464
      %v1590 = vpop.f32.mrf.mxu0
      %v1591 = vadd.f32 0.0, %v1590
      %1592 = vmatmul.f32.gmra.mxu0 %v1465
      %v1593 = vpop.f32.mrf.mxu0
      %v1594 = vadd.f32 0.0, %v1593
      %1595 = vdwg.mxu0
      %v1596 = vadd.f32 %v1401, %v1501
      %v1597 = vadd.f32 %v1402, %v1504
      %v1598 = vadd.f32 %v1403, %v1507
      %v1599 = vadd.f32 %v1404, %v1510
      %v1600 = vadd.f32 %v1405, %v1513
      %v1601 = vadd.f32 %v1406, %v1516
      %v1602 = vadd.f32 %v1407, %v1519
      %v1603 = vadd.f32 %v1408, %v1522
      %v1604 = vadd.f32 %v1409, %v1525
      %v1605 = vadd.f32 %v1410, %v1528
      %v1606 = vadd.f32 %v1411, %v1531
      %v1607 = vadd.f32 %v1412, %v1534
      %v1608 = vadd.f32 %v1413, %v1537
      %v1609 = vadd.f32 %v1414, %v1540
      %v1610 = vadd.f32 %v1415, %v1543
      %v1611 = vadd.f32 %v1416, %v1546
      %v1612 = vadd.f32 %v1417, %v1549
      %v1613 = vadd.f32 %v1418, %v1552
      %v1614 = vadd.f32 %v1419, %v1555
      %v1615 = vadd.f32 %v1420, %v1558
      %v1616 = vadd.f32 %v1421, %v1561
      %v1617 = vadd.f32 %v1422, %v1564
      %v1618 = vadd.f32 %v1423, %v1567
      %v1619 = vadd.f32 %v1424, %v1570
      %v1620 = vadd.f32 %v1425, %v1573
      %v1621 = vadd.f32 %v1426, %v1576
      %v1622 = vadd.f32 %v1427, %v1579
      %v1623 = vadd.f32 %v1428, %v1582
      %v1624 = vadd.f32 %v1429, %v1585
      %v1625 = vadd.f32 %v1430, %v1588
      %v1626 = vadd.f32 %v1431, %v1591
      %v1627 = vadd.f32 %v1432, %v1594
      %s1628 = scalar_lea.vmem [#allocation2], 32
      %v1629 = vld [vmem:[%s1628] sm:$0xff]
      %v1630 = vld [vmem:[%s1628 + $0x8] sm:$0xff]
      %v1631 = vld [vmem:[%s1628 + $0x10] sm:$0xff]
      %v1632 = vld [vmem:[%s1628 + $0x18] sm:$0xff]
      %v1633 = vld [vmem:[%s1628 + $0x20] sm:$0xff]
      %v1634 = vld [vmem:[%s1628 + $0x28] sm:$0xff]
      %v1635 = vld [vmem:[%s1628 + $0x30] sm:$0xff]
      %v1636 = vld [vmem:[%s1628 + $0x38] sm:$0xff]
      %v1637 = vld [vmem:[%s1628 + $0x40] sm:$0xff]
      %v1638 = vld [vmem:[%s1628 + $0x48] sm:$0xff]
      %v1639 = vld [vmem:[%s1628 + $0x50] sm:$0xff]
      %v1640 = vld [vmem:[%s1628 + $0x58] sm:$0xff]
      %v1641 = vld [vmem:[%s1628 + $0x60] sm:$0xff]
      %v1642 = vld [vmem:[%s1628 + $0x68] sm:$0xff]
      %v1643 = vld [vmem:[%s1628 + $0x70] sm:$0xff]
      %v1644 = vld [vmem:[%s1628 + $0x78] sm:$0xff]
      %v1645 = vld [vmem:[%s1628 + $0x80] sm:$0xff]
      %v1646 = vld [vmem:[%s1628 + $0x88] sm:$0xff]
      %v1647 = vld [vmem:[%s1628 + $0x90] sm:$0xff]
      %v1648 = vld [vmem:[%s1628 + $0x98] sm:$0xff]
      %v1649 = vld [vmem:[%s1628 + $0xa0] sm:$0xff]
      %v1650 = vld [vmem:[%s1628 + $0xa8] sm:$0xff]
      %v1651 = vld [vmem:[%s1628 + $0xb0] sm:$0xff]
      %v1652 = vld [vmem:[%s1628 + $0xb8] sm:$0xff]
      %v1653 = vld [vmem:[%s1628 + $0xc0] sm:$0xff]
      %v1654 = vld [vmem:[%s1628 + $0xc8] sm:$0xff]
      %v1655 = vld [vmem:[%s1628 + $0xd0] sm:$0xff]
      %v1656 = vld [vmem:[%s1628 + $0xd8] sm:$0xff]
      %v1657 = vld [vmem:[%s1628 + $0xe0] sm:$0xff]
      %v1658 = vld [vmem:[%s1628 + $0xe8] sm:$0xff]
      %v1659 = vld [vmem:[%s1628 + $0xf0] sm:$0xff]
      %v1660 = vld [vmem:[%s1628 + $0xf8] sm:$0xff]
      %s1661 = scalar_lea.vmem %s265, 768
      %v1662 = vld [vmem:[%s1661] sm:$0xff]
      %v1663 = vld [vmem:[%s1661 + $0x8] sm:$0xff]
      %v1664 = vld [vmem:[%s1661 + $0x10] sm:$0xff]
      %v1665 = vld [vmem:[%s1661 + $0x18] sm:$0xff]
      %v1666 = vld [vmem:[%s1661 + $0x20] sm:$0xff]
      %v1667 = vld [vmem:[%s1661 + $0x28] sm:$0xff]
      %v1668 = vld [vmem:[%s1661 + $0x30] sm:$0xff]
      %v1669 = vld [vmem:[%s1661 + $0x38] sm:$0xff]
      %v1670 = vld [vmem:[%s1661 + $0x40] sm:$0xff]
      %v1671 = vld [vmem:[%s1661 + $0x48] sm:$0xff]
      %v1672 = vld [vmem:[%s1661 + $0x50] sm:$0xff]
      %v1673 = vld [vmem:[%s1661 + $0x58] sm:$0xff]
      %v1674 = vld [vmem:[%s1661 + $0x60] sm:$0xff]
      %v1675 = vld [vmem:[%s1661 + $0x68] sm:$0xff]
      %v1676 = vld [vmem:[%s1661 + $0x70] sm:$0xff]
      %v1677 = vld [vmem:[%s1661 + $0x78] sm:$0xff]
      %1678 = vmatpush.msra.mxu0 %v1677
      %1679 = vmatpush.msra.mxu0 %v1676
      %1680 = vmatpush.msra.mxu0 %v1675
      %1681 = vmatpush.msra.mxu0 %v1674
      %1682 = vmatpush.msra.mxu0 %v1673
      %1683 = vmatpush.msra.mxu0 %v1672
      %1684 = vmatpush.msra.mxu0 %v1671
      %1685 = vmatpush.msra.mxu0 %v1670
      %1686 = vmatpush.msra.mxu0 %v1669
      %1687 = vmatpush.msra.mxu0 %v1668
      %1688 = vmatpush.msra.mxu0 %v1667
      %1689 = vmatpush.msra.mxu0 %v1666
      %1690 = vmatpush.msra.mxu0 %v1665
      %1691 = vmatpush.msra.mxu0 %v1664
      %1692 = vmatpush.msra.mxu0 %v1663
      %1693 = vmatpush.msra.mxu0 %v1662
      %1694 = vmatmul.f32.gmra.mxu0 %v1629
      %v1695 = vpop.f32.mrf.mxu0
      %v1696 = vadd.f32 0.0, %v1695
      %1697 = vmatmul.f32.gmra.mxu0 %v1630
      %v1698 = vpop.f32.mrf.mxu0
      %v1699 = vadd.f32 0.0, %v1698
      %1700 = vmatmul.f32.gmra.mxu0 %v1631
      %v1701 = vpop.f32.mrf.mxu0
      %v1702 = vadd.f32 0.0, %v1701
      %1703 = vmatmul.f32.gmra.mxu0 %v1632
      %v1704 = vpop.f32.mrf.mxu0
      %v1705 = vadd.f32 0.0, %v1704
      %1706 = vmatmul.f32.gmra.mxu0 %v1633
      %v1707 = vpop.f32.mrf.mxu0
      %v1708 = vadd.f32 0.0, %v1707
      %1709 = vmatmul.f32.gmra.mxu0 %v1634
      %v1710 = vpop.f32.mrf.mxu0
      %v1711 = vadd.f32 0.0, %v1710
      %1712 = vmatmul.f32.gmra.mxu0 %v1635
      %v1713 = vpop.f32.mrf.mxu0
      %v1714 = vadd.f32 0.0, %v1713
      %1715 = vmatmul.f32.gmra.mxu0 %v1636
      %v1716 = vpop.f32.mrf.mxu0
      %v1717 = vadd.f32 0.0, %v1716
      %1718 = vmatmul.f32.gmra.mxu0 %v1637
      %v1719 = vpop.f32.mrf.mxu0
      %v1720 = vadd.f32 0.0, %v1719
      %1721 = vmatmul.f32.gmra.mxu0 %v1638
      %v1722 = vpop.f32.mrf.mxu0
      %v1723 = vadd.f32 0.0, %v1722
      %1724 = vmatmul.f32.gmra.mxu0 %v1639
      %v1725 = vpop.f32.mrf.mxu0
      %v1726 = vadd.f32 0.0, %v1725
      %1727 = vmatmul.f32.gmra.mxu0 %v1640
      %v1728 = vpop.f32.mrf.mxu0
      %v1729 = vadd.f32 0.0, %v1728
      %1730 = vmatmul.f32.gmra.mxu0 %v1641
      %v1731 = vpop.f32.mrf.mxu0
      %v1732 = vadd.f32 0.0, %v1731
      %1733 = vmatmul.f32.gmra.mxu0 %v1642
      %v1734 = vpop.f32.mrf.mxu0
      %v1735 = vadd.f32 0.0, %v1734
      %1736 = vmatmul.f32.gmra.mxu0 %v1643
      %v1737 = vpop.f32.mrf.mxu0
      %v1738 = vadd.f32 0.0, %v1737
      %1739 = vmatmul.f32.gmra.mxu0 %v1644
      %v1740 = vpop.f32.mrf.mxu0
      %v1741 = vadd.f32 0.0, %v1740
      %1742 = vmatmul.f32.gmra.mxu0 %v1645
      %v1743 = vpop.f32.mrf.mxu0
      %v1744 = vadd.f32 0.0, %v1743
      %1745 = vmatmul.f32.gmra.mxu0 %v1646
      %v1746 = vpop.f32.mrf.mxu0
      %v1747 = vadd.f32 0.0, %v1746
      %1748 = vmatmul.f32.gmra.mxu0 %v1647
      %v1749 = vpop.f32.mrf.mxu0
      %v1750 = vadd.f32 0.0, %v1749
      %1751 = vmatmul.f32.gmra.mxu0 %v1648
      %v1752 = vpop.f32.mrf.mxu0
      %v1753 = vadd.f32 0.0, %v1752
      %1754 = vmatmul.f32.gmra.mxu0 %v1649
      %v1755 = vpop.f32.mrf.mxu0
      %v1756 = vadd.f32 0.0, %v1755
      %1757 = vmatmul.f32.gmra.mxu0 %v1650
      %v1758 = vpop.f32.mrf.mxu0
      %v1759 = vadd.f32 0.0, %v1758
      %1760 = vmatmul.f32.gmra.mxu0 %v1651
      %v1761 = vpop.f32.mrf.mxu0
      %v1762 = vadd.f32 0.0, %v1761
      %1763 = vmatmul.f32.gmra.mxu0 %v1652
      %v1764 = vpop.f32.mrf.mxu0
      %v1765 = vadd.f32 0.0, %v1764
      %1766 = vmatmul.f32.gmra.mxu0 %v1653
      %v1767 = vpop.f32.mrf.mxu0
      %v1768 = vadd.f32 0.0, %v1767
      %1769 = vmatmul.f32.gmra.mxu0 %v1654
      %v1770 = vpop.f32.mrf.mxu0
      %v1771 = vadd.f32 0.0, %v1770
      %1772 = vmatmul.f32.gmra.mxu0 %v1655
      %v1773 = vpop.f32.mrf.mxu0
      %v1774 = vadd.f32 0.0, %v1773
      %1775 = vmatmul.f32.gmra.mxu0 %v1656
      %v1776 = vpop.f32.mrf.mxu0
      %v1777 = vadd.f32 0.0, %v1776
      %1778 = vmatmul.f32.gmra.mxu0 %v1657
      %v1779 = vpop.f32.mrf.mxu0
      %v1780 = vadd.f32 0.0, %v1779
      %1781 = vmatmul.f32.gmra.mxu0 %v1658
      %v1782 = vpop.f32.mrf.mxu0
      %v1783 = vadd.f32 0.0, %v1782
      %1784 = vmatmul.f32.gmra.mxu0 %v1659
      %v1785 = vpop.f32.mrf.mxu0
      %v1786 = vadd.f32 0.0, %v1785
      %1787 = vmatmul.f32.gmra.mxu0 %v1660
      %v1788 = vpop.f32.mrf.mxu0
      %v1789 = vadd.f32 0.0, %v1788
      %1790 = vdwg.mxu0
      %v1791 = vadd.f32 %v1596, %v1696
      %v1792 = vadd.f32 %v1597, %v1699
      %v1793 = vadd.f32 %v1598, %v1702
      %v1794 = vadd.f32 %v1599, %v1705
      %v1795 = vadd.f32 %v1600, %v1708
      %v1796 = vadd.f32 %v1601, %v1711
      %v1797 = vadd.f32 %v1602, %v1714
      %v1798 = vadd.f32 %v1603, %v1717
      %v1799 = vadd.f32 %v1604, %v1720
      %v1800 = vadd.f32 %v1605, %v1723
      %v1801 = vadd.f32 %v1606, %v1726
      %v1802 = vadd.f32 %v1607, %v1729
      %v1803 = vadd.f32 %v1608, %v1732
      %v1804 = vadd.f32 %v1609, %v1735
      %v1805 = vadd.f32 %v1610, %v1738
      %v1806 = vadd.f32 %v1611, %v1741
      %v1807 = vadd.f32 %v1612, %v1744
      %v1808 = vadd.f32 %v1613, %v1747
      %v1809 = vadd.f32 %v1614, %v1750
      %v1810 = vadd.f32 %v1615, %v1753
      %v1811 = vadd.f32 %v1616, %v1756
      %v1812 = vadd.f32 %v1617, %v1759
      %v1813 = vadd.f32 %v1618, %v1762
      %v1814 = vadd.f32 %v1619, %v1765
      %v1815 = vadd.f32 %v1620, %v1768
      %v1816 = vadd.f32 %v1621, %v1771
      %v1817 = vadd.f32 %v1622, %v1774
      %v1818 = vadd.f32 %v1623, %v1777
      %v1819 = vadd.f32 %v1624, %v1780
      %v1820 = vadd.f32 %v1625, %v1783
      %v1821 = vadd.f32 %v1626, %v1786
      %v1822 = vadd.f32 %v1627, %v1789
      %s1823 = scalar_lea.vmem [#allocation2], 320
      %v1824 = vld [vmem:[%s1823] sm:$0xff]
      %v1825 = vld [vmem:[%s1823 + $0x8] sm:$0xff]
      %v1826 = vld [vmem:[%s1823 + $0x10] sm:$0xff]
      %v1827 = vld [vmem:[%s1823 + $0x18] sm:$0xff]
      %v1828 = vld [vmem:[%s1823 + $0x20] sm:$0xff]
      %v1829 = vld [vmem:[%s1823 + $0x28] sm:$0xff]
      %v1830 = vld [vmem:[%s1823 + $0x30] sm:$0xff]
      %v1831 = vld [vmem:[%s1823 + $0x38] sm:$0xff]
      %v1832 = vld [vmem:[%s1823 + $0x40] sm:$0xff]
      %v1833 = vld [vmem:[%s1823 + $0x48] sm:$0xff]
      %v1834 = vld [vmem:[%s1823 + $0x50] sm:$0xff]
      %v1835 = vld [vmem:[%s1823 + $0x58] sm:$0xff]
      %v1836 = vld [vmem:[%s1823 + $0x60] sm:$0xff]
      %v1837 = vld [vmem:[%s1823 + $0x68] sm:$0xff]
      %v1838 = vld [vmem:[%s1823 + $0x70] sm:$0xff]
      %v1839 = vld [vmem:[%s1823 + $0x78] sm:$0xff]
      %v1840 = vld [vmem:[%s1823 + $0x80] sm:$0xff]
      %v1841 = vld [vmem:[%s1823 + $0x88] sm:$0xff]
      %v1842 = vld [vmem:[%s1823 + $0x90] sm:$0xff]
      %v1843 = vld [vmem:[%s1823 + $0x98] sm:$0xff]
      %v1844 = vld [vmem:[%s1823 + $0xa0] sm:$0xff]
      %v1845 = vld [vmem:[%s1823 + $0xa8] sm:$0xff]
      %v1846 = vld [vmem:[%s1823 + $0xb0] sm:$0xff]
      %v1847 = vld [vmem:[%s1823 + $0xb8] sm:$0xff]
      %v1848 = vld [vmem:[%s1823 + $0xc0] sm:$0xff]
      %v1849 = vld [vmem:[%s1823 + $0xc8] sm:$0xff]
      %v1850 = vld [vmem:[%s1823 + $0xd0] sm:$0xff]
      %v1851 = vld [vmem:[%s1823 + $0xd8] sm:$0xff]
      %v1852 = vld [vmem:[%s1823 + $0xe0] sm:$0xff]
      %v1853 = vld [vmem:[%s1823 + $0xe8] sm:$0xff]
      %v1854 = vld [vmem:[%s1823 + $0xf0] sm:$0xff]
      %v1855 = vld [vmem:[%s1823 + $0xf8] sm:$0xff]
      %s1856 = scalar_lea.vmem %s265, 896
      %v1857 = vld [vmem:[%s1856] sm:$0xff]
      %v1858 = vld [vmem:[%s1856 + $0x8] sm:$0xff]
      %v1859 = vld [vmem:[%s1856 + $0x10] sm:$0xff]
      %v1860 = vld [vmem:[%s1856 + $0x18] sm:$0xff]
      %v1861 = vld [vmem:[%s1856 + $0x20] sm:$0xff]
      %v1862 = vld [vmem:[%s1856 + $0x28] sm:$0xff]
      %v1863 = vld [vmem:[%s1856 + $0x30] sm:$0xff]
      %v1864 = vld [vmem:[%s1856 + $0x38] sm:$0xff]
      %v1865 = vld [vmem:[%s1856 + $0x40] sm:$0xff]
      %v1866 = vld [vmem:[%s1856 + $0x48] sm:$0xff]
      %v1867 = vld [vmem:[%s1856 + $0x50] sm:$0xff]
      %v1868 = vld [vmem:[%s1856 + $0x58] sm:$0xff]
      %v1869 = vld [vmem:[%s1856 + $0x60] sm:$0xff]
      %v1870 = vld [vmem:[%s1856 + $0x68] sm:$0xff]
      %v1871 = vld [vmem:[%s1856 + $0x70] sm:$0xff]
      %v1872 = vld [vmem:[%s1856 + $0x78] sm:$0xff]
      %1873 = vmatpush.msra.mxu0 %v1872
      %1874 = vmatpush.msra.mxu0 %v1871
      %1875 = vmatpush.msra.mxu0 %v1870
      %1876 = vmatpush.msra.mxu0 %v1869
      %1877 = vmatpush.msra.mxu0 %v1868
      %1878 = vmatpush.msra.mxu0 %v1867
      %1879 = vmatpush.msra.mxu0 %v1866
      %1880 = vmatpush.msra.mxu0 %v1865
      %1881 = vmatpush.msra.mxu0 %v1864
      %1882 = vmatpush.msra.mxu0 %v1863
      %1883 = vmatpush.msra.mxu0 %v1862
      %1884 = vmatpush.msra.mxu0 %v1861
      %1885 = vmatpush.msra.mxu0 %v1860
      %1886 = vmatpush.msra.mxu0 %v1859
      %1887 = vmatpush.msra.mxu0 %v1858
      %1888 = vmatpush.msra.mxu0 %v1857
      %1889 = vmatmul.f32.gmra.mxu0 %v1824
      %v1890 = vpop.f32.mrf.mxu0
      %v1891 = vadd.f32 0.0, %v1890
      %1892 = vmatmul.f32.gmra.mxu0 %v1825
      %v1893 = vpop.f32.mrf.mxu0
      %v1894 = vadd.f32 0.0, %v1893
      %1895 = vmatmul.f32.gmra.mxu0 %v1826
      %v1896 = vpop.f32.mrf.mxu0
      %v1897 = vadd.f32 0.0, %v1896
      %1898 = vmatmul.f32.gmra.mxu0 %v1827
      %v1899 = vpop.f32.mrf.mxu0
      %v1900 = vadd.f32 0.0, %v1899
      %1901 = vmatmul.f32.gmra.mxu0 %v1828
      %v1902 = vpop.f32.mrf.mxu0
      %v1903 = vadd.f32 0.0, %v1902
      %1904 = vmatmul.f32.gmra.mxu0 %v1829
      %v1905 = vpop.f32.mrf.mxu0
      %v1906 = vadd.f32 0.0, %v1905
      %1907 = vmatmul.f32.gmra.mxu0 %v1830
      %v1908 = vpop.f32.mrf.mxu0
      %v1909 = vadd.f32 0.0, %v1908
      %1910 = vmatmul.f32.gmra.mxu0 %v1831
      %v1911 = vpop.f32.mrf.mxu0
      %v1912 = vadd.f32 0.0, %v1911
      %1913 = vmatmul.f32.gmra.mxu0 %v1832
      %v1914 = vpop.f32.mrf.mxu0
      %v1915 = vadd.f32 0.0, %v1914
      %1916 = vmatmul.f32.gmra.mxu0 %v1833
      %v1917 = vpop.f32.mrf.mxu0
      %v1918 = vadd.f32 0.0, %v1917
      %1919 = vmatmul.f32.gmra.mxu0 %v1834
      %v1920 = vpop.f32.mrf.mxu0
      %v1921 = vadd.f32 0.0, %v1920
      %1922 = vmatmul.f32.gmra.mxu0 %v1835
      %v1923 = vpop.f32.mrf.mxu0
      %v1924 = vadd.f32 0.0, %v1923
      %1925 = vmatmul.f32.gmra.mxu0 %v1836
      %v1926 = vpop.f32.mrf.mxu0
      %v1927 = vadd.f32 0.0, %v1926
      %1928 = vmatmul.f32.gmra.mxu0 %v1837
      %v1929 = vpop.f32.mrf.mxu0
      %v1930 = vadd.f32 0.0, %v1929
      %1931 = vmatmul.f32.gmra.mxu0 %v1838
      %v1932 = vpop.f32.mrf.mxu0
      %v1933 = vadd.f32 0.0, %v1932
      %1934 = vmatmul.f32.gmra.mxu0 %v1839
      %v1935 = vpop.f32.mrf.mxu0
      %v1936 = vadd.f32 0.0, %v1935
      %1937 = vmatmul.f32.gmra.mxu0 %v1840
      %v1938 = vpop.f32.mrf.mxu0
      %v1939 = vadd.f32 0.0, %v1938
      %1940 = vmatmul.f32.gmra.mxu0 %v1841
      %v1941 = vpop.f32.mrf.mxu0
      %v1942 = vadd.f32 0.0, %v1941
      %1943 = vmatmul.f32.gmra.mxu0 %v1842
      %v1944 = vpop.f32.mrf.mxu0
      %v1945 = vadd.f32 0.0, %v1944
      %1946 = vmatmul.f32.gmra.mxu0 %v1843
      %v1947 = vpop.f32.mrf.mxu0
      %v1948 = vadd.f32 0.0, %v1947
      %1949 = vmatmul.f32.gmra.mxu0 %v1844
      %v1950 = vpop.f32.mrf.mxu0
      %v1951 = vadd.f32 0.0, %v1950
      %1952 = vmatmul.f32.gmra.mxu0 %v1845
      %v1953 = vpop.f32.mrf.mxu0
      %v1954 = vadd.f32 0.0, %v1953
      %1955 = vmatmul.f32.gmra.mxu0 %v1846
      %v1956 = vpop.f32.mrf.mxu0
      %v1957 = vadd.f32 0.0, %v1956
      %1958 = vmatmul.f32.gmra.mxu0 %v1847
      %v1959 = vpop.f32.mrf.mxu0
      %v1960 = vadd.f32 0.0, %v1959
      %1961 = vmatmul.f32.gmra.mxu0 %v1848
      %v1962 = vpop.f32.mrf.mxu0
      %v1963 = vadd.f32 0.0, %v1962
      %1964 = vmatmul.f32.gmra.mxu0 %v1849
      %v1965 = vpop.f32.mrf.mxu0
      %v1966 = vadd.f32 0.0, %v1965
      %1967 = vmatmul.f32.gmra.mxu0 %v1850
      %v1968 = vpop.f32.mrf.mxu0
      %v1969 = vadd.f32 0.0, %v1968
      %1970 = vmatmul.f32.gmra.mxu0 %v1851
      %v1971 = vpop.f32.mrf.mxu0
      %v1972 = vadd.f32 0.0, %v1971
      %1973 = vmatmul.f32.gmra.mxu0 %v1852
      %v1974 = vpop.f32.mrf.mxu0
      %v1975 = vadd.f32 0.0, %v1974
      %1976 = vmatmul.f32.gmra.mxu0 %v1853
      %v1977 = vpop.f32.mrf.mxu0
      %v1978 = vadd.f32 0.0, %v1977
      %1979 = vmatmul.f32.gmra.mxu0 %v1854
      %v1980 = vpop.f32.mrf.mxu0
      %v1981 = vadd.f32 0.0, %v1980
      %1982 = vmatmul.f32.gmra.mxu0 %v1855
      %v1983 = vpop.f32.mrf.mxu0
      %v1984 = vadd.f32 0.0, %v1983
      %1985 = vdwg.mxu0
      %v1986 = vadd.f32 %v1791, %v1891
      %v1987 = vadd.f32 %v1792, %v1894
      %v1988 = vadd.f32 %v1793, %v1897
      %v1989 = vadd.f32 %v1794, %v1900
      %v1990 = vadd.f32 %v1795, %v1903
      %v1991 = vadd.f32 %v1796, %v1906
      %v1992 = vadd.f32 %v1797, %v1909
      %v1993 = vadd.f32 %v1798, %v1912
      %v1994 = vadd.f32 %v1799, %v1915
      %v1995 = vadd.f32 %v1800, %v1918
      %v1996 = vadd.f32 %v1801, %v1921
      %v1997 = vadd.f32 %v1802, %v1924
      %v1998 = vadd.f32 %v1803, %v1927
      %v1999 = vadd.f32 %v1804, %v1930
      %v2000 = vadd.f32 %v1805, %v1933
      %v2001 = vadd.f32 %v1806, %v1936
      %v2002 = vadd.f32 %v1807, %v1939
      %v2003 = vadd.f32 %v1808, %v1942
      %v2004 = vadd.f32 %v1809, %v1945
      %v2005 = vadd.f32 %v1810, %v1948
      %v2006 = vadd.f32 %v1811, %v1951
      %v2007 = vadd.f32 %v1812, %v1954
      %v2008 = vadd.f32 %v1813, %v1957
      %v2009 = vadd.f32 %v1814, %v1960
      %v2010 = vadd.f32 %v1815, %v1963
      %v2011 = vadd.f32 %v1816, %v1966
      %v2012 = vadd.f32 %v1817, %v1969
      %v2013 = vadd.f32 %v1818, %v1972
      %v2014 = vadd.f32 %v1819, %v1975
      %v2015 = vadd.f32 %v1820, %v1978
      %v2016 = vadd.f32 %v1821, %v1981
      %v2017 = vadd.f32 %v1822, %v1984
      %s2018 = scalar_lea.vmem [#allocation2], 608
      %v2019 = vld [vmem:[%s2018] sm:$0xff]
      %v2020 = vld [vmem:[%s2018 + $0x8] sm:$0xff]
      %v2021 = vld [vmem:[%s2018 + $0x10] sm:$0xff]
      %v2022 = vld [vmem:[%s2018 + $0x18] sm:$0xff]
      %v2023 = vld [vmem:[%s2018 + $0x20] sm:$0xff]
      %v2024 = vld [vmem:[%s2018 + $0x28] sm:$0xff]
      %v2025 = vld [vmem:[%s2018 + $0x30] sm:$0xff]
      %v2026 = vld [vmem:[%s2018 + $0x38] sm:$0xff]
      %v2027 = vld [vmem:[%s2018 + $0x40] sm:$0xff]
      %v2028 = vld [vmem:[%s2018 + $0x48] sm:$0xff]
      %v2029 = vld [vmem:[%s2018 + $0x50] sm:$0xff]
      %v2030 = vld [vmem:[%s2018 + $0x58] sm:$0xff]
      %v2031 = vld [vmem:[%s2018 + $0x60] sm:$0xff]
      %v2032 = vld [vmem:[%s2018 + $0x68] sm:$0xff]
      %v2033 = vld [vmem:[%s2018 + $0x70] sm:$0xff]
      %v2034 = vld [vmem:[%s2018 + $0x78] sm:$0xff]
      %v2035 = vld [vmem:[%s2018 + $0x80] sm:$0xff]
      %v2036 = vld [vmem:[%s2018 + $0x88] sm:$0xff]
      %v2037 = vld [vmem:[%s2018 + $0x90] sm:$0xff]
      %v2038 = vld [vmem:[%s2018 + $0x98] sm:$0xff]
      %v2039 = vld [vmem:[%s2018 + $0xa0] sm:$0xff]
      %v2040 = vld [vmem:[%s2018 + $0xa8] sm:$0xff]
      %v2041 = vld [vmem:[%s2018 + $0xb0] sm:$0xff]
      %v2042 = vld [vmem:[%s2018 + $0xb8] sm:$0xff]
      %v2043 = vld [vmem:[%s2018 + $0xc0] sm:$0xff]
      %v2044 = vld [vmem:[%s2018 + $0xc8] sm:$0xff]
      %v2045 = vld [vmem:[%s2018 + $0xd0] sm:$0xff]
      %v2046 = vld [vmem:[%s2018 + $0xd8] sm:$0xff]
      %v2047 = vld [vmem:[%s2018 + $0xe0] sm:$0xff]
      %v2048 = vld [vmem:[%s2018 + $0xe8] sm:$0xff]
      %v2049 = vld [vmem:[%s2018 + $0xf0] sm:$0xff]
      %v2050 = vld [vmem:[%s2018 + $0xf8] sm:$0xff]
      %s2051 = scalar_lea.vmem %s265, 1024
      %v2052 = vld [vmem:[%s2051] sm:$0xff]
      %v2053 = vld [vmem:[%s2051 + $0x8] sm:$0xff]
      %v2054 = vld [vmem:[%s2051 + $0x10] sm:$0xff]
      %v2055 = vld [vmem:[%s2051 + $0x18] sm:$0xff]
      %v2056 = vld [vmem:[%s2051 + $0x20] sm:$0xff]
      %v2057 = vld [vmem:[%s2051 + $0x28] sm:$0xff]
      %v2058 = vld [vmem:[%s2051 + $0x30] sm:$0xff]
      %v2059 = vld [vmem:[%s2051 + $0x38] sm:$0xff]
      %v2060 = vld [vmem:[%s2051 + $0x40] sm:$0xff]
      %v2061 = vld [vmem:[%s2051 + $0x48] sm:$0xff]
      %v2062 = vld [vmem:[%s2051 + $0x50] sm:$0xff]
      %v2063 = vld [vmem:[%s2051 + $0x58] sm:$0xff]
      %v2064 = vld [vmem:[%s2051 + $0x60] sm:$0xff]
      %v2065 = vld [vmem:[%s2051 + $0x68] sm:$0xff]
      %v2066 = vld [vmem:[%s2051 + $0x70] sm:$0xff]
      %v2067 = vld [vmem:[%s2051 + $0x78] sm:$0xff]
      %2068 = vmatpush.msra.mxu0 %v2067
      %2069 = vmatpush.msra.mxu0 %v2066
      %2070 = vmatpush.msra.mxu0 %v2065
      %2071 = vmatpush.msra.mxu0 %v2064
      %2072 = vmatpush.msra.mxu0 %v2063
      %2073 = vmatpush.msra.mxu0 %v2062
      %2074 = vmatpush.msra.mxu0 %v2061
      %2075 = vmatpush.msra.mxu0 %v2060
      %2076 = vmatpush.msra.mxu0 %v2059
      %2077 = vmatpush.msra.mxu0 %v2058
      %2078 = vmatpush.msra.mxu0 %v2057
      %2079 = vmatpush.msra.mxu0 %v2056
      %2080 = vmatpush.msra.mxu0 %v2055
      %2081 = vmatpush.msra.mxu0 %v2054
      %2082 = vmatpush.msra.mxu0 %v2053
      %2083 = vmatpush.msra.mxu0 %v2052
      %2084 = vmatmul.f32.gmra.mxu0 %v2019
      %v2085 = vpop.f32.mrf.mxu0
      %v2086 = vadd.f32 0.0, %v2085
      %2087 = vmatmul.f32.gmra.mxu0 %v2020
      %v2088 = vpop.f32.mrf.mxu0
      %v2089 = vadd.f32 0.0, %v2088
      %2090 = vmatmul.f32.gmra.mxu0 %v2021
      %v2091 = vpop.f32.mrf.mxu0
      %v2092 = vadd.f32 0.0, %v2091
      %2093 = vmatmul.f32.gmra.mxu0 %v2022
      %v2094 = vpop.f32.mrf.mxu0
      %v2095 = vadd.f32 0.0, %v2094
      %2096 = vmatmul.f32.gmra.mxu0 %v2023
      %v2097 = vpop.f32.mrf.mxu0
      %v2098 = vadd.f32 0.0, %v2097
      %2099 = vmatmul.f32.gmra.mxu0 %v2024
      %v2100 = vpop.f32.mrf.mxu0
      %v2101 = vadd.f32 0.0, %v2100
      %2102 = vmatmul.f32.gmra.mxu0 %v2025
      %v2103 = vpop.f32.mrf.mxu0
      %v2104 = vadd.f32 0.0, %v2103
      %2105 = vmatmul.f32.gmra.mxu0 %v2026
      %v2106 = vpop.f32.mrf.mxu0
      %v2107 = vadd.f32 0.0, %v2106
      %2108 = vmatmul.f32.gmra.mxu0 %v2027
      %v2109 = vpop.f32.mrf.mxu0
      %v2110 = vadd.f32 0.0, %v2109
      %2111 = vmatmul.f32.gmra.mxu0 %v2028
      %v2112 = vpop.f32.mrf.mxu0
      %v2113 = vadd.f32 0.0, %v2112
      %2114 = vmatmul.f32.gmra.mxu0 %v2029
      %v2115 = vpop.f32.mrf.mxu0
      %v2116 = vadd.f32 0.0, %v2115
      %2117 = vmatmul.f32.gmra.mxu0 %v2030
      %v2118 = vpop.f32.mrf.mxu0
      %v2119 = vadd.f32 0.0, %v2118
      %2120 = vmatmul.f32.gmra.mxu0 %v2031
      %v2121 = vpop.f32.mrf.mxu0
      %v2122 = vadd.f32 0.0, %v2121
      %2123 = vmatmul.f32.gmra.mxu0 %v2032
      %v2124 = vpop.f32.mrf.mxu0
      %v2125 = vadd.f32 0.0, %v2124
      %2126 = vmatmul.f32.gmra.mxu0 %v2033
      %v2127 = vpop.f32.mrf.mxu0
      %v2128 = vadd.f32 0.0, %v2127
      %2129 = vmatmul.f32.gmra.mxu0 %v2034
      %v2130 = vpop.f32.mrf.mxu0
      %v2131 = vadd.f32 0.0, %v2130
      %2132 = vmatmul.f32.gmra.mxu0 %v2035
      %v2133 = vpop.f32.mrf.mxu0
      %v2134 = vadd.f32 0.0, %v2133
      %2135 = vmatmul.f32.gmra.mxu0 %v2036
      %v2136 = vpop.f32.mrf.mxu0
      %v2137 = vadd.f32 0.0, %v2136
      %2138 = vmatmul.f32.gmra.mxu0 %v2037
      %v2139 = vpop.f32.mrf.mxu0
      %v2140 = vadd.f32 0.0, %v2139
      %2141 = vmatmul.f32.gmra.mxu0 %v2038
      %v2142 = vpop.f32.mrf.mxu0
      %v2143 = vadd.f32 0.0, %v2142
      %2144 = vmatmul.f32.gmra.mxu0 %v2039
      %v2145 = vpop.f32.mrf.mxu0
      %v2146 = vadd.f32 0.0, %v2145
      %2147 = vmatmul.f32.gmra.mxu0 %v2040
      %v2148 = vpop.f32.mrf.mxu0
      %v2149 = vadd.f32 0.0, %v2148
      %2150 = vmatmul.f32.gmra.mxu0 %v2041
      %v2151 = vpop.f32.mrf.mxu0
      %v2152 = vadd.f32 0.0, %v2151
      %2153 = vmatmul.f32.gmra.mxu0 %v2042
      %v2154 = vpop.f32.mrf.mxu0
      %v2155 = vadd.f32 0.0, %v2154
      %2156 = vmatmul.f32.gmra.mxu0 %v2043
      %v2157 = vpop.f32.mrf.mxu0
      %v2158 = vadd.f32 0.0, %v2157
      %2159 = vmatmul.f32.gmra.mxu0 %v2044
      %v2160 = vpop.f32.mrf.mxu0
      %v2161 = vadd.f32 0.0, %v2160
      %2162 = vmatmul.f32.gmra.mxu0 %v2045
      %v2163 = vpop.f32.mrf.mxu0
      %v2164 = vadd.f32 0.0, %v2163
      %2165 = vmatmul.f32.gmra.mxu0 %v2046
      %v2166 = vpop.f32.mrf.mxu0
      %v2167 = vadd.f32 0.0, %v2166
      %2168 = vmatmul.f32.gmra.mxu0 %v2047
      %v2169 = vpop.f32.mrf.mxu0
      %v2170 = vadd.f32 0.0, %v2169
      %2171 = vmatmul.f32.gmra.mxu0 %v2048
      %v2172 = vpop.f32.mrf.mxu0
      %v2173 = vadd.f32 0.0, %v2172
      %2174 = vmatmul.f32.gmra.mxu0 %v2049
      %v2175 = vpop.f32.mrf.mxu0
      %v2176 = vadd.f32 0.0, %v2175
      %2177 = vmatmul.f32.gmra.mxu0 %v2050
      %v2178 = vpop.f32.mrf.mxu0
      %v2179 = vadd.f32 0.0, %v2178
      %2180 = vdwg.mxu0
      %v2181 = vadd.f32 %v1986, %v2086
      %v2182 = vadd.f32 %v1987, %v2089
      %v2183 = vadd.f32 %v1988, %v2092
      %v2184 = vadd.f32 %v1989, %v2095
      %v2185 = vadd.f32 %v1990, %v2098
      %v2186 = vadd.f32 %v1991, %v2101
      %v2187 = vadd.f32 %v1992, %v2104
      %v2188 = vadd.f32 %v1993, %v2107
      %v2189 = vadd.f32 %v1994, %v2110
      %v2190 = vadd.f32 %v1995, %v2113
      %v2191 = vadd.f32 %v1996, %v2116
      %v2192 = vadd.f32 %v1997, %v2119
      %v2193 = vadd.f32 %v1998, %v2122
      %v2194 = vadd.f32 %v1999, %v2125
      %v2195 = vadd.f32 %v2000, %v2128
      %v2196 = vadd.f32 %v2001, %v2131
      %v2197 = vadd.f32 %v2002, %v2134
      %v2198 = vadd.f32 %v2003, %v2137
      %v2199 = vadd.f32 %v2004, %v2140
      %v2200 = vadd.f32 %v2005, %v2143
      %v2201 = vadd.f32 %v2006, %v2146
      %v2202 = vadd.f32 %v2007, %v2149
      %v2203 = vadd.f32 %v2008, %v2152
      %v2204 = vadd.f32 %v2009, %v2155
      %v2205 = vadd.f32 %v2010, %v2158
      %v2206 = vadd.f32 %v2011, %v2161
      %v2207 = vadd.f32 %v2012, %v2164
      %v2208 = vadd.f32 %v2013, %v2167
      %v2209 = vadd.f32 %v2014, %v2170
      %v2210 = vadd.f32 %v2015, %v2173
      %v2211 = vadd.f32 %v2016, %v2176
      %v2212 = vadd.f32 %v2017, %v2179
      %2213 = vst [vmem:[%s273] sm:$0xff] %v2181
      %2214 = vst [vmem:[%s273 + $0x8] sm:$0xff] %v2182
      %2215 = vst [vmem:[%s273 + $0x10] sm:$0xff] %v2183
      %2216 = vst [vmem:[%s273 + $0x18] sm:$0xff] %v2184
      %2217 = vst [vmem:[%s273 + $0x20] sm:$0xff] %v2185
      %2218 = vst [vmem:[%s273 + $0x28] sm:$0xff] %v2186
      %2219 = vst [vmem:[%s273 + $0x30] sm:$0xff] %v2187
      %2220 = vst [vmem:[%s273 + $0x38] sm:$0xff] %v2188
      %2221 = vst [vmem:[%s273 + $0x40] sm:$0xff] %v2189
      %2222 = vst [vmem:[%s273 + $0x48] sm:$0xff] %v2190
      %2223 = vst [vmem:[%s273 + $0x50] sm:$0xff] %v2191
      %2224 = vst [vmem:[%s273 + $0x58] sm:$0xff] %v2192
      %2225 = vst [vmem:[%s273 + $0x60] sm:$0xff] %v2193
      %2226 = vst [vmem:[%s273 + $0x68] sm:$0xff] %v2194
      %2227 = vst [vmem:[%s273 + $0x70] sm:$0xff] %v2195
      %2228 = vst [vmem:[%s273 + $0x78] sm:$0xff] %v2196
      %2229 = vst [vmem:[%s273 + $0x80] sm:$0xff] %v2197
      %2230 = vst [vmem:[%s273 + $0x88] sm:$0xff] %v2198
      %2231 = vst [vmem:[%s273 + $0x90] sm:$0xff] %v2199
      %2232 = vst [vmem:[%s273 + $0x98] sm:$0xff] %v2200
      %2233 = vst [vmem:[%s273 + $0xa0] sm:$0xff] %v2201
      %2234 = vst [vmem:[%s273 + $0xa8] sm:$0xff] %v2202
      %2235 = vst [vmem:[%s273 + $0xb0] sm:$0xff] %v2203
      %2236 = vst [vmem:[%s273 + $0xb8] sm:$0xff] %v2204
      %2237 = vst [vmem:[%s273 + $0xc0] sm:$0xff] %v2205
      %2238 = vst [vmem:[%s273 + $0xc8] sm:$0xff] %v2206
      %2239 = vst [vmem:[%s273 + $0xd0] sm:$0xff] %v2207
      %2240 = vst [vmem:[%s273 + $0xd8] sm:$0xff] %v2208
      %2241 = vst [vmem:[%s273 + $0xe0] sm:$0xff] %v2209
      %2242 = vst [vmem:[%s273 + $0xe8] sm:$0xff] %v2210
      %2243 = vst [vmem:[%s273 + $0xf0] sm:$0xff] %v2211
      %2244 = vst [vmem:[%s273 + $0xf8] sm:$0xff] %v2212
      %v2245 = vadd.f32 %v2181, %v2182
      %v2246 = vadd.f32 %v2245, %v2183
      %v2247 = vadd.f32 %v2246, %v2184
      %v2248 = vadd.f32 %v2247, %v2185
      %v2249 = vadd.f32 %v2248, %v2186
      %v2250 = vadd.f32 %v2249, %v2187
      %v2251 = vadd.f32 %v2250, %v2188
      %v2252 = vadd.f32 %v2251, %v2189
      %v2253 = vadd.f32 %v2252, %v2190
      %v2254 = vadd.f32 %v2253, %v2191
      %v2255 = vadd.f32 %v2254, %v2192
      %v2256 = vadd.f32 %v2255, %v2193
      %v2257 = vadd.f32 %v2256, %v2194
      %v2258 = vadd.f32 %v2257, %v2195
      %v2259 = vadd.f32 %v2258, %v2196
      %v2260 = vadd.f32 %v2259, %v2197
      %v2261 = vadd.f32 %v2260, %v2198
      %v2262 = vadd.f32 %v2261, %v2199
      %v2263 = vadd.f32 %v2262, %v2200
      %v2264 = vadd.f32 %v2263, %v2201
      %v2265 = vadd.f32 %v2264, %v2202
      %v2266 = vadd.f32 %v2265, %v2203
      %v2267 = vadd.f32 %v2266, %v2204
      %v2268 = vadd.f32 %v2267, %v2205
      %v2269 = vadd.f32 %v2268, %v2206
      %v2270 = vadd.f32 %v2269, %v2207
      %v2271 = vadd.f32 %v2270, %v2208
      %v2272 = vadd.f32 %v2271, %v2209
      %v2273 = vadd.f32 %v2272, %v2210
      %v2274 = vadd.f32 %v2273, %v2211
      %v2275 = vadd.f32 %v2274, %v2212
      %v2276 = vrot.slane %v2275, 4
      %v2277 = vadd.f32 %v2275, %v2276
      %v2278 = vrot.slane %v2277, 2
      %v2279 = vadd.f32 %v2277, %v2278
      %v2280 = vrot.slane %v2279, 1
      %v2281 = vadd.f32 %v2279, %v2280
      %v2282 = vmul.f32 %v2181, %v2181
      %v2283 = vmul.f32 %v2182, %v2182
      %v2284 = vmul.f32 %v2183, %v2183
      %v2285 = vmul.f32 %v2184, %v2184
      %v2286 = vmul.f32 %v2185, %v2185
      %v2287 = vmul.f32 %v2186, %v2186
      %v2288 = vmul.f32 %v2187, %v2187
      %v2289 = vmul.f32 %v2188, %v2188
      %v2290 = vmul.f32 %v2189, %v2189
      %v2291 = vmul.f32 %v2190, %v2190
      %v2292 = vmul.f32 %v2191, %v2191
      %v2293 = vmul.f32 %v2192, %v2192
      %v2294 = vmul.f32 %v2193, %v2193
      %v2295 = vmul.f32 %v2194, %v2194
      %v2296 = vmul.f32 %v2195, %v2195
      %v2297 = vmul.f32 %v2196, %v2196
      %v2298 = vmul.f32 %v2197, %v2197
      %v2299 = vmul.f32 %v2198, %v2198
      %v2300 = vmul.f32 %v2199, %v2199
      %v2301 = vmul.f32 %v2200, %v2200
      %v2302 = vmul.f32 %v2201, %v2201
      %v2303 = vmul.f32 %v2202, %v2202
      %v2304 = vmul.f32 %v2203, %v2203
      %v2305 = vmul.f32 %v2204, %v2204
      %v2306 = vmul.f32 %v2205, %v2205
      %v2307 = vmul.f32 %v2206, %v2206
      %v2308 = vmul.f32 %v2207, %v2207
      %v2309 = vmul.f32 %v2208, %v2208
      %v2310 = vmul.f32 %v2209, %v2209
      %v2311 = vmul.f32 %v2210, %v2210
      %v2312 = vmul.f32 %v2211, %v2211
      %v2313 = vmul.f32 %v2212, %v2212
      %v2314 = vadd.f32 %v2282, %v2283
      %v2315 = vadd.f32 %v2314, %v2284
      %v2316 = vadd.f32 %v2315, %v2285
      %v2317 = vadd.f32 %v2316, %v2286
      %v2318 = vadd.f32 %v2317, %v2287
      %v2319 = vadd.f32 %v2318, %v2288
      %v2320 = vadd.f32 %v2319, %v2289
      %v2321 = vadd.f32 %v2320, %v2290
      %v2322 = vadd.f32 %v2321, %v2291
      %v2323 = vadd.f32 %v2322, %v2292
      %v2324 = vadd.f32 %v2323, %v2293
      %v2325 = vadd.f32 %v2324, %v2294
      %v2326 = vadd.f32 %v2325, %v2295
      %v2327 = vadd.f32 %v2326, %v2296
      %v2328 = vadd.f32 %v2327, %v2297
      %v2329 = vadd.f32 %v2328, %v2298
      %v2330 = vadd.f32 %v2329, %v2299
      %v2331 = vadd.f32 %v2330, %v2300
      %v2332 = vadd.f32 %v2331, %v2301
      %v2333 = vadd.f32 %v2332, %v2302
      %v2334 = vadd.f32 %v2333, %v2303
      %v2335 = vadd.f32 %v2334, %v2304
      %v2336 = vadd.f32 %v2335, %v2305
      %v2337 = vadd.f32 %v2336, %v2306
      %v2338 = vadd.f32 %v2337, %v2307
      %v2339 = vadd.f32 %v2338, %v2308
      %v2340 = vadd.f32 %v2339, %v2309
      %v2341 = vadd.f32 %v2340, %v2310
      %v2342 = vadd.f32 %v2341, %v2311
      %v2343 = vadd.f32 %v2342, %v2312
      %v2344 = vadd.f32 %v2343, %v2313
      %v2345 = vrot.slane %v2344, 4
      %v2346 = vadd.f32 %v2344, %v2345
      %v2347 = vrot.slane %v2346, 2
      %v2348 = vadd.f32 %v2346, %v2347
      %v2349 = vrot.slane %v2348, 1
      %v2350 = vadd.f32 %v2348, %v2349
      %vm2351 = vcmask 1040384
      %v2352 = vsel %vm2351, %v2281, %v2350
      %2353 = vst [vmem:[%s280] sm:$0x3] %v2352
      %p2354 = scmp.lt.s32.totalorder %s21, 1
      %s2355 = scalar_select %p2354, %s21, 1
      %p2356 = scmp.lt.s32.totalorder %s22, 0
      %s2357 = scalar_select %p2356, %s22, 0
      %s2358 = smul.addr %s2355, 32
      %s2359 = sadd.s32 %s2357, %s2358
      %s2360 = smul.addr %s2359, 8
      %s2361 = scalar_lea.vmem %s4, %s2360
      %p2362 = scmp.lt.s32.totalorder %s21, 1
      %s2363 = scalar_select %p2362, %s21, 1
      %p2364 = scmp.lt.s32.totalorder %s22, 0
      %s2365 = scalar_select %p2364, %s22, 0
      %s2366 = sadd.s32 %s2365, %s2363
      %s2367 = smul.addr %s2366, 2
      %s2368 = scalar_lea.vmem %s5, %s2367
      // Predicated region
      $region41: #{encoder_block_forward.3} parent=35 // pred_check
        %p2369 = pneg %p143
      $region42: #{encoder_block_forward.3} parent=35 // pred_check_branch
        %2371 = sbr.rel (%p2369) target = $region44
      $region43: #{encoder_block_forward.3} parent=35 // pred_region
        _
      $region44: #{encoder_block_forward.3} parent=35 // pred_fallthru
        _
      // Predicated region
      $region45: #{encoder_block_forward.3} parent=35 // pred_check
        %p2372 = pneg %p171
      $region46: #{encoder_block_forward.3} parent=35 // pred_check_branch
        %2374 = sbr.rel (%p2372) target = $region48
      $region47: #{encoder_block_forward.3} parent=35 // pred_region
        _
      $region48: #{encoder_block_forward.3} parent=35 // pred_fallthru
        _
    $region36: #{encoder_block_forward.3} parent=5 // pred_fallthru
      _
    %p2375 = scmp.le.s32.totalorder 2, %s12
    // Predicated region
    $region49: #{encoder_block_forward.3} parent=5 // pred_check
      %p2376 = pneg %p2375
    $region50: #{encoder_block_forward.3} parent=5 // pred_check_branch
      %2378 = sbr.rel (%p2376) target = $region52
    $region51: #{encoder_block_forward.3} parent=5 // pred_region
      %s2379 = ssub.s32 %s12, 2
      // Predicated region
      $region53: #{encoder_block_forward.3} parent=51 // pred_check
        %p2380 = pneg %p149
      $region54: #{encoder_block_forward.3} parent=51 // pred_check_branch
        %2382 = sbr.rel (%p2380) target = $region56
      $region55: #{encoder_block_forward.3} parent=51 // pred_region
        %p2383 = scmp.lt.s32.totalorder %s23, 1
        %s2384 = scalar_select %p2383, %s23, 1
        %p2385 = scmp.lt.s32.totalorder %s24, 0
        %s2386 = scalar_select %p2385, %s24, 0
        %s2387 = smul.addr %s2384, 32
        %s2388 = sadd.s32 %s2386, %s2387
        %s2389 = smul.addr %s2388, 8
        %s2390 = scalar_lea.vmem %s4, %s2389
      $region56: #{encoder_block_forward.3} parent=51 // pred_fallthru
        _
      // Predicated region
      $region57: #{encoder_block_forward.3} parent=51 // pred_check
        %p2391 = pneg %p177
      $region58: #{encoder_block_forward.3} parent=51 // pred_check_branch
        %2393 = sbr.rel (%p2391) target = $region60
      $region59: #{encoder_block_forward.3} parent=51 // pred_region
        %p2394 = scmp.lt.s32.totalorder %s23, 1
        %s2395 = scalar_select %p2394, %s23, 1
        %p2396 = scmp.lt.s32.totalorder %s24, 0
        %s2397 = scalar_select %p2396, %s24, 0
        %s2398 = sadd.s32 %s2397, %s2395
        %s2399 = smul.addr %s2398, 2
        %s2400 = scalar_lea.vmem %s5, %s2399
      $region60: #{encoder_block_forward.3} parent=51 // pred_fallthru
        _
    $region52: #{encoder_block_forward.3} parent=5 // pred_fallthru
      _
  $region6: #{encoder_block_forward.3} parent=0 // loop_footer
    %s16 = sadd.s32 1, %s12
  $region7: #{encoder_block_forward.3} parent=0 // loop_footer_branch
    %11 = sbr.rel target = $region3
  $region8: #{encoder_block_forward.3} parent=0 // loop_exit
    _

// kernel: encoder_block_forward.4
$region0: #{encoder_block_forward.4}
  #allocation0 [shape = 'u32[]', space=smem, size = 0x4, offset = 0x4, fixed_abs, tag = 'smem constant byte address 0x4 - core index']
  #allocation1 [shape = 'u32[72,128]{1,0:T(1,128)}', space=vmem, size = 0x9000, scoped, tag = 'internal scratch']
  #allocation2 [shape = 'f32[3,18,16,128]{3,2,1,0:T(8,128)}', space=vmem, size = 0x6c000, scoped, tag = 'scratch operand']
  %s0 = inlined_call_operand.vmem [shape: f32[2,16,16,128], index: 0, kind: input, shape index: {}]
  %s1 = inlined_call_operand.vmem [shape: f32[3,3,128,128], index: 1, kind: input, shape index: {}]
  %s2 = inlined_call_operand.vmem [shape: f32[1,128], index: 2, kind: input, shape index: {}]
  %s3 = inlined_call_operand.vmem [shape: f32[1,128], index: 3, kind: input, shape index: {}]
  %s4 = inlined_call_operand.vmem [shape: f32[2,16,16,128], index: 4, kind: output, shape index: {0}]
  %s5 = inlined_call_operand.vmem [shape: f32[2,2,128], index: 5, kind: output, shape index: {1}]
  %6 = xla_tuple %s4, %s5
  %s7 = sld [smem:[#allocation0]]
  $region61: #{encoder_block_forward.4} parent=0
    _
  %s9 = ssub.s32 1, %s7
  %s10 = scalar_select 0, %s9, %s7
  loop: start=0, step=1, limit=4
  $region2: #{encoder_block_forward.4} parent=0 // loop_pre_header
    _
  $region3: #{encoder_block_forward.4} parent=0 // loop_header
    %s12 = sphi 0, %s16
    %p13 = scmp.ge.s32.totalorder %s12, 4
    %s19 = sphi 0, %s31
    %s20 = sphi 0, %s27
    %s21 = sphi 0, %s19
    %s22 = sphi 0, %s20
    %s23 = sphi 0, %s21
    %s24 = sphi 0, %s22
    %s34 = sphi 0, %s36
    %s37 = sphi 0, %s34
    %s38 = sphi 0, %s37
    %s54 = sphi 0, %s38
    %s60 = sphi 0, %s62
    %s63 = sphi 0, %s60
    %s64 = sphi 0, %s63
    %s80 = sphi 0, %s64
    %s84 = sphi 0, %s84
    %s86 = sphi 0, %s84
    %s87 = sphi 0, %s86
    %s101 = sphi 0, %s87
    %s105 = sphi 0, %s105
    %s107 = sphi 0, %s105
    %s108 = sphi 0, %s107
    %s122 = sphi 0, %s108
    %s130 = sphi 0, %s132
    %s133 = sphi 0, %s130
    %s134 = sphi 0, %s133
    %s150 = sphi 0, %s134
    %s158 = sphi 0, %s160
    %s161 = sphi 0, %s158
    %s162 = sphi 0, %s161
    %s178 = sphi 0, %s162
  $region4: #{encoder_block_forward.4} parent=0 // loop_header_branch
    %15 = sbr.rel (%p13) target = $region8
  $region5: #{encoder_block_forward.4} parent=0 // loop_body
    %s17 = ssub.s32 %s12, 1
    %s18 = ssub.s32 %s12, 2
    %s25 = sadd.s32 1, %s20
    %p26 = scmp.ge.s32.totalorder %s25, 1
    %s27 = scalar_select %p26, 0, %s25
    %s28 = sadd.s32 1, %s19
    %s29 = scalar_select %p26, %s28, %s19
    %p30 = scmp.ge.s32.totalorder %s29, 2
    %s31 = scalar_select %p30, 0, %s29
    %s32 = ssub.s32 %s19, %s31
    %p33 = scmp.eq.s32.totalorder %s32, 0
    %s35 = sadd.s32 %s34, 1
    %s36 = scalar_select %p33, %s34, %s35
    %p39 = pneg %p33
    %p40 = scmp.eq.s32.totalorder %s12, 1
    %p41 = por %p39, %p40
    %p42 = scmp.ne.s32.totalorder %s34, %s37
    %p43 = scmp.eq.s32.totalorder %s12, 0
    %p44 = por %p42, %p43
    %p45 = scmp.ne.s32.totalorder %s34, %s37
    %p46 = scmp.eq.s32.totalorder %s17, 1
    %p47 = por %p45, %p46
    %p48 = scmp.ne.s32.totalorder %s37, %s38
    %p49 = scmp.eq.s32.totalorder %s17, 0
    %p50 = por %p48, %p49
    %p51 = scmp.ne.s32.totalorder %s37, %s38
    %p52 = scmp.eq.s32.totalorder %s18, 1
    %p53 = por %p51, %p52
    %p55 = scmp.ne.s32.totalorder %s38, %s54
    %p56 = scmp.eq.s32.totalorder %s18, 0
    %p57 = por %p55, %p56
    %s58 = ssub.s32 %s20, %s27
    %p59 = scmp.eq.s32.totalorder %s58, 0
    %s61 = sadd.s32 %s60, 1
    %s62 = scalar_select %p59, %s60, %s61
    %p65 = pneg %p59
    %p66 = scmp.eq.s32.totalorder %s12, 1
    %p67 = por %p65, %p66
    %p68 = scmp.ne.s32.totalorder %s60, %s63
    %p69 = scmp.eq.s32.totalorder %s12, 0
    %p70 = por %p68, %p69
    %p71 = scmp.ne.s32.totalorder %s60, %s63
    %p72 = scmp.eq.s32.totalorder %s17, 1
    %p73 = por %p71, %p72
    %p74 = scmp.ne.s32.totalorder %s63, %s64
    %p75 = scmp.eq.s32.totalorder %s17, 0
    %p76 = por %p74, %p75
    %p77 = scmp.ne.s32.totalorder %s63, %s64
    %p78 = scmp.eq.s32.totalorder %s18, 1
    %p79 = por %p77, %p78
    %p81 = scmp.ne.s32.totalorder %s64, %s80
    %p82 = scmp.eq.s32.totalorder %s18, 0
    %p83 = por %p81, %p82
    %s85 = sadd.s32 %s84, 1
    %p88 = scmp.eq.s32.totalorder %s12, 1
    %p89 = scmp.ne.s32.totalorder %s84, %s86
    %p90 = scmp.eq.s32.totalorder %s12, 0
    %p91 = por %p89, %p90
    %p92 = scmp.ne.s32.totalorder %s84, %s86
    %p93 = scmp.eq.s32.totalorder %s17, 1
    %p94 = por %p92, %p93
    %p95 = scmp.ne.s32.totalorder %s86, %s87
    %p96 = scmp.eq.s32.totalorder %s17, 0
    %p97 = por %p95, %p96
    %p98 = scmp.ne.s32.totalorder %s86, %s87
    %p99 = scmp.eq.s32.totalorder %s18, 1
    %p100 = por %p98, %p99
    %p102 = scmp.ne.s32.totalorder %s87, %s101
    %p103 = scmp.eq.s32.totalorder %s18, 0
    %p104 = por %p102, %p103
    %s106 = sadd.s32 %s105, 1
    %p109 = scmp.eq.s32.totalorder %s12, 1
    %p110 = scmp.ne.s32.totalorder %s105, %s107
    %p111 = scmp.eq.s32.totalorder %s12, 0
    %p112 = por %p110, %p111
    %p113 = scmp.ne.s32.totalorder %s105, %s107
    %p114 = scmp.eq.s32.totalorder %s17, 1
    %p115 = por %p113, %p114
    %p116 = scmp.ne.s32.totalorder %s107, %s108
    %p117 = scmp.eq.s32.totalorder %s17, 0
    %p118 = por %p116, %p117
    %p119 = scmp.ne.s32.totalorder %s107, %s108
    %p120 = scmp.eq.s32.totalorder %s18, 1
    %p121 = por %p119, %p120
    %p123 = scmp.ne.s32.totalorder %s108, %s122
    %p124 = scmp.eq.s32.totalorder %s18, 0
    %p125 = por %p123, %p124
    %s126 = ssub.s32 %s19, %s31
    %s127 = ssub.s32 %s20, %s27
    %s128 = sor.u32 %s126, %s127
    %p129 = scmp.eq.s32.totalorder %s128, 0
    %s131 = sadd.s32 %s130, 1
    %s132 = scalar_select %p129, %s130, %s131
    %p135 = pneg %p129
    %p136 = scmp.eq.s32.totalorder %s12, 1
    %p137 = por %p135, %p136
    %p138 = scmp.ne.s32.totalorder %s130, %s133
    %p139 = scmp.eq.s32.totalorder %s12, 0
    %p140 = por %p138, %p139
    %p141 = scmp.ne.s32.totalorder %s130, %s133
    %p142 = scmp.eq.s32.totalorder %s17, 1
    %p143 = por %p141, %p142
    %p144 = scmp.ne.s32.totalorder %s133, %s134
    %p145 = scmp.eq.s32.totalorder %s17, 0
    %p146 = por %p144, %p145
    %p147 = scmp.ne.s32.totalorder %s133, %s134
    %p148 = scmp.eq.s32.totalorder %s18, 1
    %p149 = por %p147, %p148
    %p151 = scmp.ne.s32.totalorder %s134, %s150
    %p152 = scmp.eq.s32.totalorder %s18, 0
    %p153 = por %p151, %p152
    %s154 = ssub.s32 %s19, %s31
    %s155 = ssub.s32 %s20, %s27
    %s156 = sor.u32 %s154, %s155
    %p157 = scmp.eq.s32.totalorder %s156, 0
    %s159 = sadd.s32 %s158, 1
    %s160 = scalar_select %p157, %s158, %s159
    %p163 = pneg %p157
    %p164 = scmp.eq.s32.totalorder %s12, 1
    %p165 = por %p163, %p164
    %p166 = scmp.ne.s32.totalorder %s158, %s161
    %p167 = scmp.eq.s32.totalorder %s12, 0
    %p168 = por %p166, %p167
    %p169 = scmp.ne.s32.totalorder %s158, %s161
    %p170 = scmp.eq.s32.totalorder %s17, 1
    %p171 = por %p169, %p170
    %p172 = scmp.ne.s32.totalorder %s161, %s162
    %p173 = scmp.eq.s32.totalorder %s17, 0
    %p174 = por %p172, %p173
    %p175 = scmp.ne.s32.totalorder %s161, %s162
    %p176 = scmp.eq.s32.totalorder %s18, 1
    %p177 = por %p175, %p176
    %p179 = scmp.ne.s32.totalorder %s162, %s178
    %p180 = scmp.eq.s32.totalorder %s18, 0
    %p181 = por %p179, %p180
    %p182 = scmp.le.s32.totalorder 1, %s12
    %p183 = scmp.lt.s32.totalorder %s12, 3
    %p184 = pnand %p182, %p183
    %p185 = pneg %p184
    // Predicated region
    $region9: #{encoder_block_forward.4} parent=5 // pred_check
      _
    $region10: #{encoder_block_forward.4} parent=5 // pred_check_branch
      %187 = sbr.rel (%p184) target = $region12
    $region11: #{encoder_block_forward.4} parent=5 // pred_region
      %s188 = ssub.s32 %s12, 1
      // Predicated region
      $region13: #{encoder_block_forward.4} parent=11 // pred_check
        %p189 = pneg %p76
      $region14: #{encoder_block_forward.4} parent=11 // pred_check_branch
        %191 = sbr.rel (%p189) target = $region16
      $region15: #{encoder_block_forward.4} parent=11 // pred_region
        %p192 = scmp.lt.s32.totalorder %s22, 0
        %s193 = scalar_select %p192, %s22, 0
        %s194 = smul.addr %s193, 8
        %s195 = scalar_lea.vmem %s1, %s194
      $region16: #{encoder_block_forward.4} parent=11 // pred_fallthru
        _
      // Predicated region
      $region17: #{encoder_block_forward.4} parent=11 // pred_check
        %p196 = pneg %p97
      $region18: #{encoder_block_forward.4} parent=11 // pred_check_branch
        %198 = sbr.rel (%p196) target = $region20
      $region19: #{encoder_block_forward.4} parent=11 // pred_region
        _
      $region20: #{encoder_block_forward.4} parent=11 // pred_fallthru
        _
      // Predicated region
      $region21: #{encoder_block_forward.4} parent=11 // pred_check
        %p199 = pneg %p118
      $region22: #{encoder_block_forward.4} parent=11 // pred_check_branch
        %201 = sbr.rel (%p199) target = $region24
      $region23: #{encoder_block_forward.4} parent=11 // pred_region
        _
      $region24: #{encoder_block_forward.4} parent=11 // pred_fallthru
        _
    $region12: #{encoder_block_forward.4} parent=5 // pred_fallthru
      _
    %p202 = scmp.lt.s32.totalorder %s12, 2
    // Predicated region
    $region25: #{encoder_block_forward.4} parent=5 // pred_check
      %p203 = pneg %p202
    $region26: #{encoder_block_forward.4} parent=5 // pred_check_branch
      %205 = sbr.rel (%p203) target = $region28
    $region27: #{encoder_block_forward.4} parent=5 // pred_region
      // Predicated region
      $region29: #{encoder_block_forward.4} parent=27 // pred_check
        %p206 = pneg %p44
      $region30: #{encoder_block_forward.4} parent=27 // pred_check_branch
        %208 = sbr.rel (%p206) target = $region32
      $region31: #{encoder_block_forward.4} parent=27 // pred_region
        %p209 = scmp.lt.s32.totalorder %s19, 1
        %s210 = scalar_select %p209, %s19, 1
        %s211 = smul.addr %s210, 32
        %s212 = smul.addr %s211, 8
        %s213 = scalar_lea.vmem %s0, %s212
      $region32: #{encoder_block_forward.4} parent=27 // pred_fallthru
        _
    $region28: #{encoder_block_forward.4} parent=5 // pred_fallthru
      _
    %p214 = scmp.le.s32.totalorder 1, %s12
    %p215 = scmp.lt.s32.totalorder %s12, 3
    %p216 = pnand %p214, %p215
    %p217 = pneg %p216
    // Predicated region
    $region33: #{encoder_block_forward.4} parent=5 // pred_check
      _
    $region34: #{encoder_block_forward.4} parent=5 // pred_check_branch
      %219 = sbr.rel (%p216) target = $region36
    $region35: #{encoder_block_forward.4} parent=5 // pred_region
      %s220 = ssub.s32 %s12, 1
      %p221 = scmp.lt.s32.totalorder %s21, 1
      %s222 = scalar_select %p221, %s21, 1
      %s223 = smul.addr %s222, 32
      %s224 = smul.addr %s223, 8
      %s225 = scalar_lea.vmem %s0, %s224
      %p226 = pneg %p50
      %p227 = pneg %p47
      %p228 = scmp.lt.s32.totalorder %s22, 0
      %s229 = scalar_select %p228, %s22, 0
      %s230 = smul.addr %s229, 8
      %s231 = scalar_lea.vmem %s1, %s230
      %p232 = pneg %p76
      %p233 = pneg %p73
      %p234 = pneg %p97
      %p235 = pneg %p94
      %p236 = pneg %p118
      %p237 = pneg %p115
      %p238 = pneg %p146
      %p239 = pneg %p143
      %p240 = scmp.lt.s32.totalorder %s21, 1
      %s241 = scalar_select %p240, %s21, 1
      %p242 = scmp.lt.s32.totalorder %s22, 0
      %s243 = scalar_select %p242, %s22, 0
      %s244 = smul.addr %s241, 32
      %s245 = sadd.s32 %s243, %s244
      %s246 = smul.addr %s245, 8
      %s247 = scalar_lea.vmem %s4, %s246
      %p248 = pneg %p174
      %p249 = pneg %p171
      %p250 = scmp.lt.s32.totalorder %s21, 1
      %s251 = scalar_select %p250, %s21, 1
      %p252 = scmp.lt.s32.totalorder %s22, 0
      %s253 = scalar_select %p252, %s22, 0
      %s254 = sadd.s32 %s253, %s251
      %s255 = smul.addr %s254, 2
      %s256 = scalar_lea.vmem %s5, %s255
      %p257 = scmp.lt.s32.totalorder %s21, 1
      %s258 = scalar_select %p257, %s21, 1
      %s259 = smul.addr %s258, 32
      %s260 = smul.addr %s259, 8
      %s261 = scalar_lea.vmem %s0, %s260
      %p262 = scmp.lt.s32.totalorder %s22, 0
      %s263 = scalar_select %p262, %s22, 0
      %s264 = smul.addr %s263, 8
      %s265 = scalar_lea.vmem %s1, %s264
      %p266 = scmp.lt.s32.totalorder %s21, 1
      %s267 = scalar_select %p266, %s21, 1
      %p268 = scmp.lt.s32.totalorder %s22, 0
      %s269 = scalar_select %p268, %s22, 0
      %s270 = smul.addr %s267, 32
      %s271 = sadd.s32 %s269, %s270
      %s272 = smul.addr %s271, 8
      %s273 = scalar_lea.vmem %s4, %s272
      %p274 = scmp.lt.s32.totalorder %s21, 1
      %s275 = scalar_select %p274, %s21, 1
      %p276 = scmp.lt.s32.totalorder %s22, 0
      %s277 = scalar_select %p276, %s22, 0
      %s278 = sadd.s32 %s277, %s275
      %s279 = smul.addr %s278, 2
      %s280 = scalar_lea.vmem %s5, %s279
      %p281 = scmp.eq.s32.totalorder %s22, 0
      // Predicated region
      $region37: #{encoder_block_forward.4} parent=35 // pred_check
        %p282 = pneg %p281
      $region38: #{encoder_block_forward.4} parent=35 // pred_check_branch
        %284 = sbr.rel (%p282) target = $region40
      $region39: #{encoder_block_forward.4} parent=35 // pred_region
        %v285 = vld [vmem:[%s261] sm:$0xff]
        %v286 = vld [vmem:[%s261 + $0x8] sm:$0xff]
        %v287 = vld [vmem:[%s261 + $0x10] sm:$0xff]
        %v288 = vld [vmem:[%s261 + $0x18] sm:$0xff]
        %v289 = vld [vmem:[%s261 + $0x20] sm:$0xff]
        %v290 = vld [vmem:[%s261 + $0x28] sm:$0xff]
        %v291 = vld [vmem:[%s261 + $0x30] sm:$0xff]
        %v292 = vld [vmem:[%s261 + $0x38] sm:$0xff]
        %v293 = vld [vmem:[%s261 + $0x40] sm:$0xff]
        %v294 = vld [vmem:[%s261 + $0x48] sm:$0xff]
        %v295 = vld [vmem:[%s261 + $0x50] sm:$0xff]
        %v296 = vld [vmem:[%s261 + $0x58] sm:$0xff]
        %v297 = vld [vmem:[%s261 + $0x60] sm:$0xff]
        %v298 = vld [vmem:[%s261 + $0x68] sm:$0xff]
        %v299 = vld [vmem:[%s261 + $0x70] sm:$0xff]
        %v300 = vld [vmem:[%s261 + $0x78] sm:$0xff]
        %v301 = vld [vmem:[%s261 + $0x80] sm:$0xff]
        %v302 = vld [vmem:[%s261 + $0x88] sm:$0xff]
        %v303 = vld [vmem:[%s261 + $0x90] sm:$0xff]
        %v304 = vld [vmem:[%s261 + $0x98] sm:$0xff]
        %v305 = vld [vmem:[%s261 + $0xa0] sm:$0xff]
        %v306 = vld [vmem:[%s261 + $0xa8] sm:$0xff]
        %v307 = vld [vmem:[%s261 + $0xb0] sm:$0xff]
        %v308 = vld [vmem:[%s261 + $0xb8] sm:$0xff]
        %v309 = vld [vmem:[%s261 + $0xc0] sm:$0xff]
        %v310 = vld [vmem:[%s261 + $0xc8] sm:$0xff]
        %v311 = vld [vmem:[%s261 + $0xd0] sm:$0xff]
        %v312 = vld [vmem:[%s261 + $0xd8] sm:$0xff]
        %v313 = vld [vmem:[%s261 + $0xe0] sm:$0xff]
        %v314 = vld [vmem:[%s261 + $0xe8] sm:$0xff]
        %v315 = vld [vmem:[%s261 + $0xf0] sm:$0xff]
        %v316 = vld [vmem:[%s261 + $0xf8] sm:$0xff]
        %v317 = vld [vmem:[%s2] sm:$0x1]
        %v319 = vperm.slane %v317, 0
        %v321 = vmul.f32 %v285, %v319
        %v322 = vmul.f32 %v286, %v319
        %v323 = vmul.f32 %v287, %v319
        %v324 = vmul.f32 %v288, %v319
        %v325 = vmul.f32 %v289, %v319
        %v326 = vmul.f32 %v290, %v319
        %v327 = vmul.f32 %v291, %v319
        %v328 = vmul.f32 %v292, %v319
        %v329 = vmul.f32 %v293, %v319
        %v330 = vmul.f32 %v294, %v319
        %v331 = vmul.f32 %v295, %v319
        %v332 = vmul.f32 %v296, %v319
        %v333 = vmul.f32 %v297, %v319
        %v334 = vmul.f32 %v298, %v319
        %v335 = vmul.f32 %v299, %v319
        %v336 = vmul.f32 %v300, %v319
        %v337 = vmul.f32 %v301, %v319
        %v338 = vmul.f32 %v302, %v319
        %v339 = vmul.f32 %v303, %v319
        %v340 = vmul.f32 %v304, %v319
        %v341 = vmul.f32 %v305, %v319
        %v342 = vmul.f32 %v306, %v319
        %v343 = vmul.f32 %v307, %v319
        %v344 = vmul.f32 %v308, %v319
        %v345 = vmul.f32 %v309, %v319
        %v346 = vmul.f32 %v310, %v319
        %v347 = vmul.f32 %v311, %v319
        %v348 = vmul.f32 %v312, %v319
        %v349 = vmul.f32 %v313, %v319
        %v350 = vmul.f32 %v314, %v319
        %v351 = vmul.f32 %v315, %v319
        %v352 = vmul.f32 %v316, %v319
        %v353 = vld [vmem:[%s3] sm:$0x1]
        %v355 = vperm.slane %v353, 0
        %v357 = vadd.f32 %v321, %v355
        %v358 = vadd.f32 %v322, %v355
        %v359 = vadd.f32 %v323, %v355
        %v360 = vadd.f32 %v324, %v355
        %v361 = vadd.f32 %v325, %v355
        %v362 = vadd.f32 %v326, %v355
        %v363 = vadd.f32 %v327, %v355
        %v364 = vadd.f32 %v328, %v355
        %v365 = vadd.f32 %v329, %v355
        %v366 = vadd.f32 %v330, %v355
        %v367 = vadd.f32 %v331, %v355
        %v368 = vadd.f32 %v332, %v355
        %v369 = vadd.f32 %v333, %v355
        %v370 = vadd.f32 %v334, %v355
        %v371 = vadd.f32 %v335, %v355
        %v372 = vadd.f32 %v336, %v355
        %v373 = vadd.f32 %v337, %v355
        %v374 = vadd.f32 %v338, %v355
        %v375 = vadd.f32 %v339, %v355
        %v376 = vadd.f32 %v340, %v355
        %v377 = vadd.f32 %v341, %v355
        %v378 = vadd.f32 %v342, %v355
        %v379 = vadd.f32 %v343, %v355
        %v380 = vadd.f32 %v344, %v355
        %v381 = vadd.f32 %v345, %v355
        %v382 = vadd.f32 %v346, %v355
        %v383 = vadd.f32 %v347, %v355
        %v384 = vadd.f32 %v348, %v355
        %v385 = vadd.f32 %v349, %v355
        %v386 = vadd.f32 %v350, %v355
        %v387 = vadd.f32 %v351, %v355
        %v388 = vadd.f32 %v352, %v355
        %v389 = vmax.f32 %v357, 0.0
        %v390 = vmax.f32 %v358, 0.0
        %v391 = vmax.f32 %v359, 0.0
        %v392 = vmax.f32 %v360, 0.0
        %v393 = vmax.f32 %v361, 0.0
        %v394 = vmax.f32 %v362, 0.0
        %v395 = vmax.f32 %v363, 0.0
        %v396 = vmax.f32 %v364, 0.0
        %v397 = vmax.f32 %v365, 0.0
        %v398 = vmax.f32 %v366, 0.0
        %v399 = vmax.f32 %v367, 0.0
        %v400 = vmax.f32 %v368, 0.0
        %v401 = vmax.f32 %v369, 0.0
        %v402 = vmax.f32 %v370, 0.0
        %v403 = vmax.f32 %v371, 0.0
        %v404 = vmax.f32 %v372, 0.0
        %v405 = vmax.f32 %v373, 0.0
        %v406 = vmax.f32 %v374, 0.0
        %v407 = vmax.f32 %v375, 0.0
        %v408 = vmax.f32 %v376, 0.0
        %v409 = vmax.f32 %v377, 0.0
        %v410 = vmax.f32 %v378, 0.0
        %v411 = vmax.f32 %v379, 0.0
        %v412 = vmax.f32 %v380, 0.0
        %v413 = vmax.f32 %v381, 0.0
        %v414 = vmax.f32 %v382, 0.0
        %v415 = vmax.f32 %v383, 0.0
        %v416 = vmax.f32 %v384, 0.0
        %v417 = vmax.f32 %v385, 0.0
        %v418 = vmax.f32 %v386, 0.0
        %v419 = vmax.f32 %v387, 0.0
        %v420 = vmax.f32 %v388, 0.0
        %421 = vst [vmem:[#allocation2] sm:$0xff] 0.0
        %422 = vst [vmem:[#allocation2 + $0x8] sm:$0xff] 0.0
        %423 = vst [vmem:[#allocation2 + $0x10] sm:$0xff] 0.0
        %424 = vst [vmem:[#allocation2 + $0x18] sm:$0xff] 0.0
        %425 = vst [vmem:[#allocation2 + $0x20] sm:$0xff] 0.0
        %426 = vst [vmem:[#allocation2 + $0x28] sm:$0xff] 0.0
        %427 = vst [vmem:[#allocation2 + $0x30] sm:$0xff] 0.0
        %428 = vst [vmem:[#allocation2 + $0x38] sm:$0xff] 0.0
        %429 = vst [vmem:[#allocation2 + $0x40] sm:$0xff] 0.0
        %430 = vst [vmem:[#allocation2 + $0x48] sm:$0xff] 0.0
        %431 = vst [vmem:[#allocation2 + $0x50] sm:$0xff] 0.0
        %432 = vst [vmem:[#allocation2 + $0x58] sm:$0xff] 0.0
        %433 = vst [vmem:[#allocation2 + $0x60] sm:$0xff] 0.0
        %434 = vst [vmem:[#allocation2 + $0x68] sm:$0xff] 0.0
        %435 = vst [vmem:[#allocation2 + $0x70] sm:$0xff] 0.0
        %436 = vst [vmem:[#allocation2 + $0x78] sm:$0xff] 0.0
        %437 = vst [vmem:[#allocation2 + $0x80] sm:$0xff] 0.0
        %438 = vst [vmem:[#allocation2 + $0x88] sm:$0xff] 0.0
        %439 = vst [vmem:[#allocation2 + $0x90] sm:$0xff] 0.0
        %440 = vst [vmem:[#allocation2 + $0x98] sm:$0xff] 0.0
        %441 = vst [vmem:[#allocation2 + $0xa0] sm:$0xff] 0.0
        %442 = vst [vmem:[#allocation2 + $0xa8] sm:$0xff] 0.0
        %443 = vst [vmem:[#allocation2 + $0xb0] sm:$0xff] 0.0
        %444 = vst [vmem:[#allocation2 + $0xb8] sm:$0xff] 0.0
        %445 = vst [vmem:[#allocation2 + $0xc0] sm:$0xff] 0.0
        %446 = vst [vmem:[#allocation2 + $0xc8] sm:$0xff] 0.0
        %447 = vst [vmem:[#allocation2 + $0xd0] sm:$0xff] 0.0
        %448 = vst [vmem:[#allocation2 + $0xd8] sm:$0xff] 0.0
        %449 = vst [vmem:[#allocation2 + $0xe0] sm:$0xff] 0.0
        %450 = vst [vmem:[#allocation2 + $0xe8] sm:$0xff] 0.0
        %451 = vst [vmem:[#allocation2 + $0xf0] sm:$0xff] 0.0
        %452 = vst [vmem:[#allocation2 + $0xf8] sm:$0xff] 0.0
        %453 = vst [vmem:[#allocation2 + $0x100] sm:$0xff] 0.0
        %454 = vst [vmem:[#allocation2 + $0x108] sm:$0xff] 0.0
        %455 = vst [vmem:[#allocation2 + $0x110] sm:$0xff] 0.0
        %456 = vst [vmem:[#allocation2 + $0x118] sm:$0xff] 0.0
        %457 = vst [vmem:[#allocation2 + $0x120] sm:$0xff] 0.0
        %458 = vst [vmem:[#allocation2 + $0x128] sm:$0xff] 0.0
        %459 = vst [vmem:[#allocation2 + $0x130] sm:$0xff] 0.0
        %460 = vst [vmem:[#allocation2 + $0x138] sm:$0xff] 0.0
        %461 = vst [vmem:[#allocation2 + $0x140] sm:$0xff] 0.0
        %462 = vst [vmem:[#allocation2 + $0x148] sm:$0xff] 0.0
        %463 = vst [vmem:[#allocation2 + $0x150] sm:$0xff] 0.0
        %464 = vst [vmem:[#allocation2 + $0x158] sm:$0xff] 0.0
        %465 = vst [vmem:[#allocation2 + $0x160] sm:$0xff] 0.0
        %466 = vst [vmem:[#allocation2 + $0x168] sm:$0xff] 0.0
        %467 = vst [vmem:[#allocation2 + $0x170] sm:$0xff] 0.0
        %468 = vst [vmem:[#allocation2 + $0x178] sm:$0xff] 0.0
        %469 = vst [vmem:[#allocation2 + $0x180] sm:$0xff] 0.0
        %470 = vst [vmem:[#allocation2 + $0x188] sm:$0xff] 0.0
        %471 = vst [vmem:[#allocation2 + $0x190] sm:$0xff] 0.0
        %472 = vst [vmem:[#allocation2 + $0x198] sm:$0xff] 0.0
        %473 = vst [vmem:[#allocation2 + $0x1a0] sm:$0xff] 0.0
        %474 = vst [vmem:[#allocation2 + $0x1a8] sm:$0xff] 0.0
        %475 = vst [vmem:[#allocation2 + $0x1b0] sm:$0xff] 0.0
        %476 = vst [vmem:[#allocation2 + $0x1b8] sm:$0xff] 0.0
        %477 = vst [vmem:[#allocation2 + $0x1c0] sm:$0xff] 0.0
        %478 = vst [vmem:[#allocation2 + $0x1c8] sm:$0xff] 0.0
        %479 = vst [vmem:[#allocation2 + $0x1d0] sm:$0xff] 0.0
        %480 = vst [vmem:[#allocation2 + $0x1d8] sm:$0xff] 0.0
        %481 = vst [vmem:[#allocation2 + $0x1e0] sm:$0xff] 0.0
        %482 = vst [vmem:[#allocation2 + $0x1e8] sm:$0xff] 0.0
        %483 = vst [vmem:[#allocation2 + $0x1f0] sm:$0xff] 0.0
        %484 = vst [vmem:[#allocation2 + $0x1f8] sm:$0xff] 0.0
        %485 = vst [vmem:[#allocation2 + $0x200] sm:$0xff] 0.0
        %486 = vst [vmem:[#allocation2 + $0x208] sm:$0xff] 0.0
        %487 = vst [vmem:[#allocation2 + $0x210] sm:$0xff] 0.0
        %488 = vst [vmem:[#allocation2 + $0x218] sm:$0xff] 0.0
        %489 = vst [vmem:[#allocation2 + $0x220] sm:$0xff] 0.0
        %490 = vst [vmem:[#allocation2 + $0x228] sm:$0xff] 0.0
        %491 = vst [vmem:[#allocation2 + $0x230] sm:$0xff] 0.0
        %492 = vst [vmem:[#allocation2 + $0x238] sm:$0xff] 0.0
        %493 = vst [vmem:[#allocation2 + $0x240] sm:$0xff] 0.0
        %494 = vst [vmem:[#allocation2 + $0x248] sm:$0xff] 0.0
        %495 = vst [vmem:[#allocation2 + $0x250] sm:$0xff] 0.0
        %496 = vst [vmem:[#allocation2 + $0x258] sm:$0xff] 0.0
        %497 = vst [vmem:[#allocation2 + $0x260] sm:$0xff] 0.0
        %498 = vst [vmem:[#allocation2 + $0x268] sm:$0xff] 0.0
        %499 = vst [vmem:[#allocation2 + $0x270] sm:$0xff] 0.0
        %500 = vst [vmem:[#allocation2 + $0x278] sm:$0xff] 0.0
        %501 = vst [vmem:[#allocation2 + $0x280] sm:$0xff] 0.0
        %502 = vst [vmem:[#allocation2 + $0x288] sm:$0xff] 0.0
        %503 = vst [vmem:[#allocation2 + $0x290] sm:$0xff] 0.0
        %504 = vst [vmem:[#allocation2 + $0x298] sm:$0xff] 0.0
        %505 = vst [vmem:[#allocation2 + $0x2a0] sm:$0xff] 0.0
        %506 = vst [vmem:[#allocation2 + $0x2a8] sm:$0xff] 0.0
        %507 = vst [vmem:[#allocation2 + $0x2b0] sm:$0xff] 0.0
        %508 = vst [vmem:[#allocation2 + $0x2b8] sm:$0xff] 0.0
        %509 = vst [vmem:[#allocation2 + $0x2c0] sm:$0xff] 0.0
        %510 = vst [vmem:[#allocation2 + $0x2c8] sm:$0xff] 0.0
        %511 = vst [vmem:[#allocation2 + $0x2d0] sm:$0xff] 0.0
        %512 = vst [vmem:[#allocation2 + $0x2d8] sm:$0xff] 0.0
        %513 = vst [vmem:[#allocation2 + $0x2e0] sm:$0xff] 0.0
        %514 = vst [vmem:[#allocation2 + $0x2e8] sm:$0xff] 0.0
        %515 = vst [vmem:[#allocation2 + $0x2f0] sm:$0xff] 0.0
        %516 = vst [vmem:[#allocation2 + $0x2f8] sm:$0xff] 0.0
        %517 = vst [vmem:[#allocation2 + $0x300] sm:$0xff] 0.0
        %518 = vst [vmem:[#allocation2 + $0x308] sm:$0xff] 0.0
        %519 = vst [vmem:[#allocation2 + $0x310] sm:$0xff] 0.0
        %520 = vst [vmem:[#allocation2 + $0x318] sm:$0xff] 0.0
        %521 = vst [vmem:[#allocation2 + $0x320] sm:$0xff] 0.0
        %522 = vst [vmem:[#allocation2 + $0x328] sm:$0xff] 0.0
        %523 = vst [vmem:[#allocation2 + $0x330] sm:$0xff] 0.0
        %524 = vst [vmem:[#allocation2 + $0x338] sm:$0xff] 0.0
        %525 = vst [vmem:[#allocation2 + $0x340] sm:$0xff] 0.0
        %526 = vst [vmem:[#allocation2 + $0x348] sm:$0xff] 0.0
        %527 = vst [vmem:[#allocation2 + $0x350] sm:$0xff] 0.0
        %528 = vst [vmem:[#allocation2 + $0x358] sm:$0xff] 0.0
        %s529 = scalar_lea.vmem [#allocation2], 304
        %530 = vst [vmem:[%s529] sm:$0xff] %v389
        %531 = vst [vmem:[%s529 + $0x8] sm:$0xff] %v390
        %532 = vst [vmem:[%s529 + $0x10] sm:$0xff] %v391
        %533 = vst [vmem:[%s529 + $0x18] sm:$0xff] %v392
        %534 = vst [vmem:[%s529 + $0x20] sm:$0xff] %v393
        %535 = vst [vmem:[%s529 + $0x28] sm:$0xff] %v394
        %536 = vst [vmem:[%s529 + $0x30] sm:$0xff] %v395
        %537 = vst [vmem:[%s529 + $0x38] sm:$0xff] %v396
        %538 = vst [vmem:[%s529 + $0x40] sm:$0xff] %v397
        %539 = vst [vmem:[%s529 + $0x48] sm:$0xff] %v398
        %540 = vst [vmem:[%s529 + $0x50] sm:$0xff] %v399
        %541 = vst [vmem:[%s529 + $0x58] sm:$0xff] %v400
        %542 = vst [vmem:[%s529 + $0x60] sm:$0xff] %v401
        %543 = vst [vmem:[%s529 + $0x68] sm:$0xff] %v402
        %544 = vst [vmem:[%s529 + $0x70] sm:$0xff] %v403
        %545 = vst [vmem:[%s529 + $0x78] sm:$0xff] %v404
        %546 = vst [vmem:[%s529 + $0x80] sm:$0xff] %v405
        %547 = vst [vmem:[%s529 + $0x88] sm:$0xff] %v406
        %548 = vst [vmem:[%s529 + $0x90] sm:$0xff] %v407
        %549 = vst [vmem:[%s529 + $0x98] sm:$0xff] %v408
        %550 = vst [vmem:[%s529 + $0xa0] sm:$0xff] %v409
        %551 = vst [vmem:[%s529 + $0xa8] sm:$0xff] %v410
        %552 = vst [vmem:[%s529 + $0xb0] sm:$0xff] %v411
        %553 = vst [vmem:[%s529 + $0xb8] sm:$0xff] %v412
        %554 = vst [vmem:[%s529 + $0xc0] sm:$0xff] %v413
        %555 = vst [vmem:[%s529 + $0xc8] sm:$0xff] %v414
        %556 = vst [vmem:[%s529 + $0xd0] sm:$0xff] %v415
        %557 = vst [vmem:[%s529 + $0xd8] sm:$0xff] %v416
        %558 = vst [vmem:[%s529 + $0xe0] sm:$0xff] %v417
        %559 = vst [vmem:[%s529 + $0xe8] sm:$0xff] %v418
        %560 = vst [vmem:[%s529 + $0xf0] sm:$0xff] %v419
        %561 = vst [vmem:[%s529 + $0xf8] sm:$0xff] %v420
        %s562 = scalar_lea.vmem [#allocation2], 16
        %563 = vst [vmem:[%s562 + $0x1] sm:$0xff] %v389
        %564 = vst [vmem:[%s562 + $0x9] sm:$0x7f] %v390
        %565 = vst [vmem:[%s562 + $0x11] sm:$0xff] %v391
        %566 = vst [vmem:[%s562 + $0x19] sm:$0x7f] %v392
        %567 = vst [vmem:[%s562 + $0x21] sm:$0xff] %v393
        %568 = vst [vmem:[%s562 + $0x29] sm:$0x7f] %v394
        %569 = vst [vmem:[%s562 + $0x31] sm:$0xff] %v395
        %570 = vst [vmem:[%s562 + $0x39] sm:$0x7f] %v396
        %571 = vst [vmem:[%s562 + $0x41] sm:$0xff] %v397
        %572 = vst [vmem:[%s562 + $0x49] sm:$0x7f] %v398
        %573 = vst [vmem:[%s562 + $0x51] sm:$0xff] %v399
        %574 = vst [vmem:[%s562 + $0x59] sm:$0x7f] %v400
        %575 = vst [vmem:[%s562 + $0x61] sm:$0xff] %v401
        %576 = vst [vmem:[%s562 + $0x69] sm:$0x7f] %v402
        %577 = vst [vmem:[%s562 + $0x71] sm:$0xff] %v403
        %578 = vst [vmem:[%s562 + $0x79] sm:$0x7f] %v404
        %579 = vst [vmem:[%s562 + $0x81] sm:$0xff] %v405
        %580 = vst [vmem:[%s562 + $0x89] sm:$0x7f] %v406
        %581 = vst [vmem:[%s562 + $0x91] sm:$0xff] %v407
        %582 = vst [vmem:[%s562 + $0x99] sm:$0x7f] %v408
        %583 = vst [vmem:[%s562 + $0xa1] sm:$0xff] %v409
        %584 = vst [vmem:[%s562 + $0xa9] sm:$0x7f] %v410
        %585 = vst [vmem:[%s562 + $0xb1] sm:$0xff] %v411
        %586 = vst [vmem:[%s562 + $0xb9] sm:$0x7f] %v412
        %587 = vst [vmem:[%s562 + $0xc1] sm:$0xff] %v413
        %588 = vst [vmem:[%s562 + $0xc9] sm:$0x7f] %v414
        %589 = vst [vmem:[%s562 + $0xd1] sm:$0xff] %v415
        %590 = vst [vmem:[%s562 + $0xd9] sm:$0x7f] %v416
        %591 = vst [vmem:[%s562 + $0xe1] sm:$0xff] %v417
        %592 = vst [vmem:[%s562 + $0xe9] sm:$0x7f] %v418
        %593 = vst [vmem:[%s562 + $0xf1] sm:$0xff] %v419
        %594 = vst [vmem:[%s562 + $0xf9] sm:$0x7f] %v420
        %s595 = scalar_lea.vmem [#allocation2], 592
        %596 = vst [vmem:[%s595 - $0x1] sm:$0xfe] %v389
        %597 = vst [vmem:[%s595 + $0x7] sm:$0xff] %v390
        %598 = vst [vmem:[%s595 + $0xf] sm:$0xfe] %v391
        %599 = vst [vmem:[%s595 + $0x17] sm:$0xff] %v392
        %600 = vst [vmem:[%s595 + $0x1f] sm:$0xfe] %v393
        %601 = vst [vmem:[%s595 + $0x27] sm:$0xff] %v394
        %602 = vst [vmem:[%s595 + $0x2f] sm:$0xfe] %v395
        %603 = vst [vmem:[%s595 + $0x37] sm:$0xff] %v396
        %604 = vst [vmem:[%s595 + $0x3f] sm:$0xfe] %v397
        %605 = vst [vmem:[%s595 + $0x47] sm:$0xff] %v398
        %606 = vst [vmem:[%s595 + $0x4f] sm:$0xfe] %v399
        %607 = vst [vmem:[%s595 + $0x57] sm:$0xff] %v400
        %608 = vst [vmem:[%s595 + $0x5f] sm:$0xfe] %v401
        %609 = vst [vmem:[%s595 + $0x67] sm:$0xff] %v402
        %610 = vst [vmem:[%s595 + $0x6f] sm:$0xfe] %v403
        %611 = vst [vmem:[%s595 + $0x77] sm:$0xff] %v404
        %612 = vst [vmem:[%s595 + $0x7f] sm:$0xfe] %v405
        %613 = vst [vmem:[%s595 + $0x87] sm:$0xff] %v406
        %614 = vst [vmem:[%s595 + $0x8f] sm:$0xfe] %v407
        %615 = vst [vmem:[%s595 + $0x97] sm:$0xff] %v408
        %616 = vst [vmem:[%s595 + $0x9f] sm:$0xfe] %v409
        %617 = vst [vmem:[%s595 + $0xa7] sm:$0xff] %v410
        %618 = vst [vmem:[%s595 + $0xaf] sm:$0xfe] %v411
        %619 = vst [vmem:[%s595 + $0xb7] sm:$0xff] %v412
        %620 = vst [vmem:[%s595 + $0xbf] sm:$0xfe] %v413
        %621 = vst [vmem:[%s595 + $0xc7] sm:$0xff] %v414
        %622 = vst [vmem:[%s595 + $0xcf] sm:$0xfe] %v415
        %623 = vst [vmem:[%s595 + $0xd7] sm:$0xff] %v416
        %624 = vst [vmem:[%s595 + $0xdf] sm:$0xfe] %v417
        %625 = vst [vmem:[%s595 + $0xe7] sm:$0xff] %v418
        %626 = vst [vmem:[%s595 + $0xef] sm:$0xfe] %v419
        %627 = vst [vmem:[%s595 + $0xf7] sm:$0xff] %v420
      $region40: #{encoder_block_forward.4} parent=35 // pred_fallthru
        _
      %v628 = vld [vmem:[#allocation2] sm:$0xff]
      %v629 = vld [vmem:[#allocation2 + $0x8] sm:$0xff]
      %v630 = vld [vmem:[#allocation2 + $0x10] sm:$0xff]
      %v631 = vld [vmem:[#allocation2 + $0x18] sm:$0xff]
      %v632 = vld [vmem:[#allocation2 + $0x20] sm:$0xff]
      %v633 = vld [vmem:[#allocation2 + $0x28] sm:$0xff]
      %v634 = vld [vmem:[#allocation2 + $0x30] sm:$0xff]
      %v635 = vld [vmem:[#allocation2 + $0x38] sm:$0xff]
      %v636 = vld [vmem:[#allocation2 + $0x40] sm:$0xff]
      %v637 = vld [vmem:[#allocation2 + $0x48] sm:$0xff]
      %v638 = vld [vmem:[#allocation2 + $0x50] sm:$0xff]
      %v639 = vld [vmem:[#allocation2 + $0x58] sm:$0xff]
      %v640 = vld [vmem:[#allocation2 + $0x60] sm:$0xff]
      %v641 = vld [vmem:[#allocation2 + $0x68] sm:$0xff]
      %v642 = vld [vmem:[#allocation2 + $0x70] sm:$0xff]
      %v643 = vld [vmem:[#allocation2 + $0x78] sm:$0xff]
      %v644 = vld [vmem:[#allocation2 + $0x80] sm:$0xff]
      %v645 = vld [vmem:[#allocation2 + $0x88] sm:$0xff]
      %v646 = vld [vmem:[#allocation2 + $0x90] sm:$0xff]
      %v647 = vld [vmem:[#allocation2 + $0x98] sm:$0xff]
      %v648 = vld [vmem:[#allocation2 + $0xa0] sm:$0xff]
      %v649 = vld [vmem:[#allocation2 + $0xa8] sm:$0xff]
      %v650 = vld [vmem:[#allocation2 + $0xb0] sm:$0xff]
      %v651 = vld [vmem:[#allocation2 + $0xb8] sm:$0xff]
      %v652 = vld [vmem:[#allocation2 + $0xc0] sm:$0xff]
      %v653 = vld [vmem:[#allocation2 + $0xc8] sm:$0xff]
      %v654 = vld [vmem:[#allocation2 + $0xd0] sm:$0xff]
      %v655 = vld [vmem:[#allocation2 + $0xd8] sm:$0xff]
      %v656 = vld [vmem:[#allocation2 + $0xe0] sm:$0xff]
      %v657 = vld [vmem:[#allocation2 + $0xe8] sm:$0xff]
      %v658 = vld [vmem:[#allocation2 + $0xf0] sm:$0xff]
      %v659 = vld [vmem:[#allocation2 + $0xf8] sm:$0xff]
      %v660 = vld [vmem:[%s265] sm:$0xff]
      %v661 = vld [vmem:[%s265 + $0x8] sm:$0xff]
      %v662 = vld [vmem:[%s265 + $0x10] sm:$0xff]
      %v663 = vld [vmem:[%s265 + $0x18] sm:$0xff]
      %v664 = vld [vmem:[%s265 + $0x20] sm:$0xff]
      %v665 = vld [vmem:[%s265 + $0x28] sm:$0xff]
      %v666 = vld [vmem:[%s265 + $0x30] sm:$0xff]
      %v667 = vld [vmem:[%s265 + $0x38] sm:$0xff]
      %v668 = vld [vmem:[%s265 + $0x40] sm:$0xff]
      %v669 = vld [vmem:[%s265 + $0x48] sm:$0xff]
      %v670 = vld [vmem:[%s265 + $0x50] sm:$0xff]
      %v671 = vld [vmem:[%s265 + $0x58] sm:$0xff]
      %v672 = vld [vmem:[%s265 + $0x60] sm:$0xff]
      %v673 = vld [vmem:[%s265 + $0x68] sm:$0xff]
      %v674 = vld [vmem:[%s265 + $0x70] sm:$0xff]
      %v675 = vld [vmem:[%s265 + $0x78] sm:$0xff]
      %s676 = scalar_lea.vmem [#allocation2], 288
      %v677 = vld [vmem:[%s676] sm:$0xff]
      %v678 = vld [vmem:[%s676 + $0x8] sm:$0xff]
      %v679 = vld [vmem:[%s676 + $0x10] sm:$0xff]
      %v680 = vld [vmem:[%s676 + $0x18] sm:$0xff]
      %v681 = vld [vmem:[%s676 + $0x20] sm:$0xff]
      %v682 = vld [vmem:[%s676 + $0x28] sm:$0xff]
      %v683 = vld [vmem:[%s676 + $0x30] sm:$0xff]
      %v684 = vld [vmem:[%s676 + $0x38] sm:$0xff]
      %v685 = vld [vmem:[%s676 + $0x40] sm:$0xff]
      %v686 = vld [vmem:[%s676 + $0x48] sm:$0xff]
      %v687 = vld [vmem:[%s676 + $0x50] sm:$0xff]
      %v688 = vld [vmem:[%s676 + $0x58] sm:$0xff]
      %v689 = vld [vmem:[%s676 + $0x60] sm:$0xff]
      %v690 = vld [vmem:[%s676 + $0x68] sm:$0xff]
      %v691 = vld [vmem:[%s676 + $0x70] sm:$0xff]
      %v692 = vld [vmem:[%s676 + $0x78] sm:$0xff]
      %v693 = vld [vmem:[%s676 + $0x80] sm:$0xff]
      %v694 = vld [vmem:[%s676 + $0x88] sm:$0xff]
      %v695 = vld [vmem:[%s676 + $0x90] sm:$0xff]
      %v696 = vld [vmem:[%s676 + $0x98] sm:$0xff]
      %v697 = vld [vmem:[%s676 + $0xa0] sm:$0xff]
      %v698 = vld [vmem:[%s676 + $0xa8] sm:$0xff]
      %v699 = vld [vmem:[%s676 + $0xb0] sm:$0xff]
      %v700 = vld [vmem:[%s676 + $0xb8] sm:$0xff]
      %v701 = vld [vmem:[%s676 + $0xc0] sm:$0xff]
      %v702 = vld [vmem:[%s676 + $0xc8] sm:$0xff]
      %v703 = vld [vmem:[%s676 + $0xd0] sm:$0xff]
      %v704 = vld [vmem:[%s676 + $0xd8] sm:$0xff]
      %v705 = vld [vmem:[%s676 + $0xe0] sm:$0xff]
      %v706 = vld [vmem:[%s676 + $0xe8] sm:$0xff]
      %v707 = vld [vmem:[%s676 + $0xf0] sm:$0xff]
      %v708 = vld [vmem:[%s676 + $0xf8] sm:$0xff]
      %s709 = scalar_lea.vmem %s265, 128
      %v710 = vld [vmem:[%s709] sm:$0xff]
      %v711 = vld [vmem:[%s709 + $0x8] sm:$0xff]
      %v712 = vld [vmem:[%s709 + $0x10] sm:$0xff]
      %v713 = vld [vmem:[%s709 + $0x18] sm:$0xff]
      %v714 = vld [vmem:[%s709 + $0x20] sm:$0xff]
      %v715 = vld [vmem:[%s709 + $0x28] sm:$0xff]
      %v716 = vld [vmem:[%s709 + $0x30] sm:$0xff]
      %v717 = vld [vmem:[%s709 + $0x38] sm:$0xff]
      %v718 = vld [vmem:[%s709 + $0x40] sm:$0xff]
      %v719 = vld [vmem:[%s709 + $0x48] sm:$0xff]
      %v720 = vld [vmem:[%s709 + $0x50] sm:$0xff]
      %v721 = vld [vmem:[%s709 + $0x58] sm:$0xff]
      %v722 = vld [vmem:[%s709 + $0x60] sm:$0xff]
      %v723 = vld [vmem:[%s709 + $0x68] sm:$0xff]
      %v724 = vld [vmem:[%s709 + $0x70] sm:$0xff]
      %v725 = vld [vmem:[%s709 + $0x78] sm:$0xff]
      %726 = vmatpush.msra.mxu0 %v725
      %727 = vmatpush.msra.mxu0 %v724
      %728 = vmatpush.msra.mxu0 %v723
      %729 = vmatpush.msra.mxu0 %v722
      %730 = vmatpush.msra.mxu0 %v721
      %731 = vmatpush.msra.mxu0 %v720
      %732 = vmatpush.msra.mxu0 %v719
      %733 = vmatpush.msra.mxu0 %v718
      %734 = vmatpush.msra.mxu0 %v717
      %735 = vmatpush.msra.mxu0 %v716
      %736 = vmatpush.msra.mxu0 %v715
      %737 = vmatpush.msra.mxu0 %v714
      %738 = vmatpush.msra.mxu0 %v713
      %739 = vmatpush.msra.mxu0 %v712
      %740 = vmatpush.msra.mxu0 %v711
      %741 = vmatpush.msra.mxu0 %v710
      %742 = vmatmul.f32.gmra.mxu0 %v677
      %v743 = vpop.f32.mrf.mxu0
      %v744 = vadd.f32 0.0, %v743
      %745 = vmatmul.f32.gmra.mxu0 %v678
      %v746 = vpop.f32.mrf.mxu0
      %v747 = vadd.f32 0.0, %v746
      %748 = vmatmul.f32.gmra.mxu0 %v679
      %v749 = vpop.f32.mrf.mxu0
      %v750 = vadd.f32 0.0, %v749
      %751 = vmatmul.f32.gmra.mxu0 %v680
      %v752 = vpop.f32.mrf.mxu0
      %v753 = vadd.f32 0.0, %v752
      %754 = vmatmul.f32.gmra.mxu0 %v681
      %v755 = vpop.f32.mrf.mxu0
      %v756 = vadd.f32 0.0, %v755
      %757 = vmatmul.f32.gmra.mxu0 %v682
      %v758 = vpop.f32.mrf.mxu0
      %v759 = vadd.f32 0.0, %v758
      %760 = vmatmul.f32.gmra.mxu0 %v683
      %v761 = vpop.f32.mrf.mxu0
      %v762 = vadd.f32 0.0, %v761
      %763 = vmatmul.f32.gmra.mxu0 %v684
      %v764 = vpop.f32.mrf.mxu0
      %v765 = vadd.f32 0.0, %v764
      %766 = vmatmul.f32.gmra.mxu0 %v685
      %v767 = vpop.f32.mrf.mxu0
      %v768 = vadd.f32 0.0, %v767
      %769 = vmatmul.f32.gmra.mxu0 %v686
      %v770 = vpop.f32.mrf.mxu0
      %v771 = vadd.f32 0.0, %v770
      %772 = vmatmul.f32.gmra.mxu0 %v687
      %v773 = vpop.f32.mrf.mxu0
      %v774 = vadd.f32 0.0, %v773
      %775 = vmatmul.f32.gmra.mxu0 %v688
      %v776 = vpop.f32.mrf.mxu0
      %v777 = vadd.f32 0.0, %v776
      %778 = vmatmul.f32.gmra.mxu0 %v689
      %v779 = vpop.f32.mrf.mxu0
      %v780 = vadd.f32 0.0, %v779
      %781 = vmatmul.f32.gmra.mxu0 %v690
      %v782 = vpop.f32.mrf.mxu0
      %v783 = vadd.f32 0.0, %v782
      %784 = vmatmul.f32.gmra.mxu0 %v691
      %v785 = vpop.f32.mrf.mxu0
      %v786 = vadd.f32 0.0, %v785
      %787 = vmatmul.f32.gmra.mxu0 %v692
      %v788 = vpop.f32.mrf.mxu0
      %v789 = vadd.f32 0.0, %v788
      %790 = vmatmul.f32.gmra.mxu0 %v693
      %v791 = vpop.f32.mrf.mxu0
      %v792 = vadd.f32 0.0, %v791
      %793 = vmatmul.f32.gmra.mxu0 %v694
      %v794 = vpop.f32.mrf.mxu0
      %v795 = vadd.f32 0.0, %v794
      %796 = vmatmul.f32.gmra.mxu0 %v695
      %v797 = vpop.f32.mrf.mxu0
      %v798 = vadd.f32 0.0, %v797
      %799 = vmatmul.f32.gmra.mxu0 %v696
      %v800 = vpop.f32.mrf.mxu0
      %v801 = vadd.f32 0.0, %v800
      %802 = vmatmul.f32.gmra.mxu0 %v697
      %v803 = vpop.f32.mrf.mxu0
      %v804 = vadd.f32 0.0, %v803
      %805 = vmatmul.f32.gmra.mxu0 %v698
      %v806 = vpop.f32.mrf.mxu0
      %v807 = vadd.f32 0.0, %v806
      %808 = vmatmul.f32.gmra.mxu0 %v699
      %v809 = vpop.f32.mrf.mxu0
      %v810 = vadd.f32 0.0, %v809
      %811 = vmatmul.f32.gmra.mxu0 %v700
      %v812 = vpop.f32.mrf.mxu0
      %v813 = vadd.f32 0.0, %v812
      %814 = vmatmul.f32.gmra.mxu0 %v701
      %v815 = vpop.f32.mrf.mxu0
      %v816 = vadd.f32 0.0, %v815
      %817 = vmatmul.f32.gmra.mxu0 %v702
      %v818 = vpop.f32.mrf.mxu0
      %v819 = vadd.f32 0.0, %v818
      %820 = vmatmul.f32.gmra.mxu0 %v703
      %v821 = vpop.f32.mrf.mxu0
      %v822 = vadd.f32 0.0, %v821
      %823 = vmatmul.f32.gmra.mxu0 %v704
      %v824 = vpop.f32.mrf.mxu0
      %v825 = vadd.f32 0.0, %v824
      %826 = vmatmul.f32.gmra.mxu0 %v705
      %v827 = vpop.f32.mrf.mxu0
      %v828 = vadd.f32 0.0, %v827
      %829 = vmatmul.f32.gmra.mxu0 %v706
      %v830 = vpop.f32.mrf.mxu0
      %v831 = vadd.f32 0.0, %v830
      %832 = vmatmul.f32.gmra.mxu0 %v707
      %v833 = vpop.f32.mrf.mxu0
      %v834 = vadd.f32 0.0, %v833
      %835 = vmatmul.f32.gmra.mxu0 %v708
      %v836 = vpop.f32.mrf.mxu0
      %v837 = vadd.f32 0.0, %v836
      %838 = vdwg.mxu0
      %839 = vmatpush.msra.mxu0 %v675
      %840 = vmatpush.msra.mxu0 %v674
      %841 = vmatpush.msra.mxu0 %v673
      %842 = vmatpush.msra.mxu0 %v672
      %843 = vmatpush.msra.mxu0 %v671
      %844 = vmatpush.msra.mxu0 %v670
      %845 = vmatpush.msra.mxu0 %v669
      %846 = vmatpush.msra.mxu0 %v668
      %847 = vmatpush.msra.mxu0 %v667
      %848 = vmatpush.msra.mxu0 %v666
      %849 = vmatpush.msra.mxu0 %v665
      %850 = vmatpush.msra.mxu0 %v664
      %851 = vmatpush.msra.mxu0 %v663
      %852 = vmatpush.msra.mxu0 %v662
      %853 = vmatpush.msra.mxu0 %v661
      %854 = vmatpush.msra.mxu0 %v660
      %855 = vmatmul.f32.gmra.mxu0 %v628
      %v856 = vpop.f32.mrf.mxu0
      %v857 = vadd.f32 %v744, %v856
      %858 = vmatmul.f32.gmra.mxu0 %v629
      %v859 = vpop.f32.mrf.mxu0
      %v860 = vadd.f32 %v747, %v859
      %861 = vmatmul.f32.gmra.mxu0 %v630
      %v862 = vpop.f32.mrf.mxu0
      %v863 = vadd.f32 %v750, %v862
      %864 = vmatmul.f32.gmra.mxu0 %v631
      %v865 = vpop.f32.mrf.mxu0
      %v866 = vadd.f32 %v753, %v865
      %867 = vmatmul.f32.gmra.mxu0 %v632
      %v868 = vpop.f32.mrf.mxu0
      %v869 = vadd.f32 %v756, %v868
      %870 = vmatmul.f32.gmra.mxu0 %v633
      %v871 = vpop.f32.mrf.mxu0
      %v872 = vadd.f32 %v759, %v871
      %873 = vmatmul.f32.gmra.mxu0 %v634
      %v874 = vpop.f32.mrf.mxu0
      %v875 = vadd.f32 %v762, %v874
      %876 = vmatmul.f32.gmra.mxu0 %v635
      %v877 = vpop.f32.mrf.mxu0
      %v878 = vadd.f32 %v765, %v877
      %879 = vmatmul.f32.gmra.mxu0 %v636
      %v880 = vpop.f32.mrf.mxu0
      %v881 = vadd.f32 %v768, %v880
      %882 = vmatmul.f32.gmra.mxu0 %v637
      %v883 = vpop.f32.mrf.mxu0
      %v884 = vadd.f32 %v771, %v883
      %885 = vmatmul.f32.gmra.mxu0 %v638
      %v886 = vpop.f32.mrf.mxu0
      %v887 = vadd.f32 %v774, %v886
      %888 = vmatmul.f32.gmra.mxu0 %v639
      %v889 = vpop.f32.mrf.mxu0
      %v890 = vadd.f32 %v777, %v889
      %891 = vmatmul.f32.gmra.mxu0 %v640
      %v892 = vpop.f32.mrf.mxu0
      %v893 = vadd.f32 %v780, %v892
      %894 = vmatmul.f32.gmra.mxu0 %v641
      %v895 = vpop.f32.mrf.mxu0
      %v896 = vadd.f32 %v783, %v895
      %897 = vmatmul.f32.gmra.mxu0 %v642
      %v898 = vpop.f32.mrf.mxu0
      %v899 = vadd.f32 %v786, %v898
      %900 = vmatmul.f32.gmra.mxu0 %v643
      %v901 = vpop.f32.mrf.mxu0
      %v902 = vadd.f32 %v789, %v901
      %903 = vmatmul.f32.gmra.mxu0 %v644
      %v904 = vpop.f32.mrf.mxu0
      %v905 = vadd.f32 %v792, %v904
      %906 = vmatmul.f32.gmra.mxu0 %v645
      %v907 = vpop.f32.mrf.mxu0
      %v908 = vadd.f32 %v795, %v907
      %909 = vmatmul.f32.gmra.mxu0 %v646
      %v910 = vpop.f32.mrf.mxu0
      %v911 = vadd.f32 %v798, %v910
      %912 = vmatmul.f32.gmra.mxu0 %v647
      %v913 = vpop.f32.mrf.mxu0
      %v914 = vadd.f32 %v801, %v913
      %915 = vmatmul.f32.gmra.mxu0 %v648
      %v916 = vpop.f32.mrf.mxu0
      %v917 = vadd.f32 %v804, %v916
      %918 = vmatmul.f32.gmra.mxu0 %v649
      %v919 = vpop.f32.mrf.mxu0
      %v920 = vadd.f32 %v807, %v919
      %921 = vmatmul.f32.gmra.mxu0 %v650
      %v922 = vpop.f32.mrf.mxu0
      %v923 = vadd.f32 %v810, %v922
      %924 = vmatmul.f32.gmra.mxu0 %v651
      %v925 = vpop.f32.mrf.mxu0
      %v926 = vadd.f32 %v813, %v925
      %927 = vmatmul.f32.gmra.mxu0 %v652
      %v928 = vpop.f32.mrf.mxu0
      %v929 = vadd.f32 %v816, %v928
      %930 = vmatmul.f32.gmra.mxu0 %v653
      %v931 = vpop.f32.mrf.mxu0
      %v932 = vadd.f32 %v819, %v931
      %933 = vmatmul.f32.gmra.mxu0 %v654
      %v934 = vpop.f32.mrf.mxu0
      %v935 = vadd.f32 %v822, %v934
      %936 = vmatmul.f32.gmra.mxu0 %v655
      %v937 = vpop.f32.mrf.mxu0
      %v938 = vadd.f32 %v825, %v937
      %939 = vmatmul.f32.gmra.mxu0 %v656
      %v940 = vpop.f32.mrf.mxu0
      %v941 = vadd.f32 %v828, %v940
      %942 = vmatmul.f32.gmra.mxu0 %v657
      %v943 = vpop.f32.mrf.mxu0
      %v944 = vadd.f32 %v831, %v943
      %945 = vmatmul.f32.gmra.mxu0 %v658
      %v946 = vpop.f32.mrf.mxu0
      %v947 = vadd.f32 %v834, %v946
      %948 = vmatmul.f32.gmra.mxu0 %v659
      %v949 = vpop.f32.mrf.mxu0
      %v950 = vadd.f32 %v837, %v949
      %951 = vdwg.mxu0
      %s952 = scalar_lea.vmem [#allocation2], 576
      %v953 = vld [vmem:[%s952] sm:$0xff]
      %v954 = vld [vmem:[%s952 + $0x8] sm:$0xff]
      %v955 = vld [vmem:[%s952 + $0x10] sm:$0xff]
      %v956 = vld [vmem:[%s952 + $0x18] sm:$0xff]
      %v957 = vld [vmem:[%s952 + $0x20] sm:$0xff]
      %v958 = vld [vmem:[%s952 + $0x28] sm:$0xff]
      %v959 = vld [vmem:[%s952 + $0x30] sm:$0xff]
      %v960 = vld [vmem:[%s952 + $0x38] sm:$0xff]
      %v961 = vld [vmem:[%s952 + $0x40] sm:$0xff]
      %v962 = vld [vmem:[%s952 + $0x48] sm:$0xff]
      %v963 = vld [vmem:[%s952 + $0x50] sm:$0xff]
      %v964 = vld [vmem:[%s952 + $0x58] sm:$0xff]
      %v965 = vld [vmem:[%s952 + $0x60] sm:$0xff]
      %v966 = vld [vmem:[%s952 + $0x68] sm:$0xff]
      %v967 = vld [vmem:[%s952 + $0x70] sm:$0xff]
      %v968 = vld [vmem:[%s952 + $0x78] sm:$0xff]
      %v969 = vld [vmem:[%s952 + $0x80] sm:$0xff]
      %v970 = vld [vmem:[%s952 + $0x88] sm:$0xff]
      %v971 = vld [vmem:[%s952 + $0x90] sm:$0xff]
      %v972 = vld [vmem:[%s952 + $0x98] sm:$0xff]
      %v973 = vld [vmem:[%s952 + $0xa0] sm:$0xff]
      %v974 = vld [vmem:[%s952 + $0xa8] sm:$0xff]
      %v975 = vld [vmem:[%s952 + $0xb0] sm:$0xff]
      %v976 = vld [vmem:[%s952 + $0xb8] sm:$0xff]
      %v977 = vld [vmem:[%s952 + $0xc0] sm:$0xff]
      %v978 = vld [vmem:[%s952 + $0xc8] sm:$0xff]
      %v979 = vld [vmem:[%s952 + $0xd0] sm:$0xff]
      %v980 = vld [vmem:[%s952 + $0xd8] sm:$0xff]
      %v981 = vld [vmem:[%s952 + $0xe0] sm:$0xff]
      %v982 = vld [vmem:[%s952 + $0xe8] sm:$0xff]
      %v983 = vld [vmem:[%s952 + $0xf0] sm:$0xff]
      %v984 = vld [vmem:[%s952 + $0xf8] sm:$0xff]
      %s985 = scalar_lea.vmem %s265, 256
      %v986 = vld [vmem:[%s985] sm:$0xff]
      %v987 = vld [vmem:[%s985 + $0x8] sm:$0xff]
      %v988 = vld [vmem:[%s985 + $0x10] sm:$0xff]
      %v989 = vld [vmem:[%s985 + $0x18] sm:$0xff]
      %v990 = vld [vmem:[%s985 + $0x20] sm:$0xff]
      %v991 = vld [vmem:[%s985 + $0x28] sm:$0xff]
      %v992 = vld [vmem:[%s985 + $0x30] sm:$0xff]
      %v993 = vld [vmem:[%s985 + $0x38] sm:$0xff]
      %v994 = vld [vmem:[%s985 + $0x40] sm:$0xff]
      %v995 = vld [vmem:[%s985 + $0x48] sm:$0xff]
      %v996 = vld [vmem:[%s985 + $0x50] sm:$0xff]
      %v997 = vld [vmem:[%s985 + $0x58] sm:$0xff]
      %v998 = vld [vmem:[%s985 + $0x60] sm:$0xff]
      %v999 = vld [vmem:[%s985 + $0x68] sm:$0xff]
      %v1000 = vld [vmem:[%s985 + $0x70] sm:$0xff]
      %v1001 = vld [vmem:[%s985 + $0x78] sm:$0xff]
      %1002 = vmatpush.msra.mxu0 %v1001
      %1003 = vmatpush.msra.mxu0 %v1000
      %1004 = vmatpush.msra.mxu0 %v999
      %1005 = vmatpush.msra.mxu0 %v998
      %1006 = vmatpush.msra.mxu0 %v997
      %1007 = vmatpush.msra.mxu0 %v996
      %1008 = vmatpush.msra.mxu0 %v995
      %1009 = vmatpush.msra.mxu0 %v994
      %1010 = vmatpush.msra.mxu0 %v993
      %1011 = vmatpush.msra.mxu0 %v992
      %1012 = vmatpush.msra.mxu0 %v991
      %1013 = vmatpush.msra.mxu0 %v990
      %1014 = vmatpush.msra.mxu0 %v989
      %1015 = vmatpush.msra.mxu0 %v988
      %1016 = vmatpush.msra.mxu0 %v987
      %1017 = vmatpush.msra.mxu0 %v986
      %1018 = vmatmul.f32.gmra.mxu0 %v953
      %v1019 = vpop.f32.mrf.mxu0
      %v1020 = vadd.f32 0.0, %v1019
      %1021 = vmatmul.f32.gmra.mxu0 %v954
      %v1022 = vpop.f32.mrf.mxu0
      %v1023 = vadd.f32 0.0, %v1022
      %1024 = vmatmul.f32.gmra.mxu0 %v955
      %v1025 = vpop.f32.mrf.mxu0
      %v1026 = vadd.f32 0.0, %v1025
      %1027 = vmatmul.f32.gmra.mxu0 %v956
      %v1028 = vpop.f32.mrf.mxu0
      %v1029 = vadd.f32 0.0, %v1028
      %1030 = vmatmul.f32.gmra.mxu0 %v957
      %v1031 = vpop.f32.mrf.mxu0
      %v1032 = vadd.f32 0.0, %v1031
      %1033 = vmatmul.f32.gmra.mxu0 %v958
      %v1034 = vpop.f32.mrf.mxu0
      %v1035 = vadd.f32 0.0, %v1034
      %1036 = vmatmul.f32.gmra.mxu0 %v959
      %v1037 = vpop.f32.mrf.mxu0
      %v1038 = vadd.f32 0.0, %v1037
      %1039 = vmatmul.f32.gmra.mxu0 %v960
      %v1040 = vpop.f32.mrf.mxu0
      %v1041 = vadd.f32 0.0, %v1040
      %1042 = vmatmul.f32.gmra.mxu0 %v961
      %v1043 = vpop.f32.mrf.mxu0
      %v1044 = vadd.f32 0.0, %v1043
      %1045 = vmatmul.f32.gmra.mxu0 %v962
      %v1046 = vpop.f32.mrf.mxu0
      %v1047 = vadd.f32 0.0, %v1046
      %1048 = vmatmul.f32.gmra.mxu0 %v963
      %v1049 = vpop.f32.mrf.mxu0
      %v1050 = vadd.f32 0.0, %v1049
      %1051 = vmatmul.f32.gmra.mxu0 %v964
      %v1052 = vpop.f32.mrf.mxu0
      %v1053 = vadd.f32 0.0, %v1052
      %1054 = vmatmul.f32.gmra.mxu0 %v965
      %v1055 = vpop.f32.mrf.mxu0
      %v1056 = vadd.f32 0.0, %v1055
      %1057 = vmatmul.f32.gmra.mxu0 %v966
      %v1058 = vpop.f32.mrf.mxu0
      %v1059 = vadd.f32 0.0, %v1058
      %1060 = vmatmul.f32.gmra.mxu0 %v967
      %v1061 = vpop.f32.mrf.mxu0
      %v1062 = vadd.f32 0.0, %v1061
      %1063 = vmatmul.f32.gmra.mxu0 %v968
      %v1064 = vpop.f32.mrf.mxu0
      %v1065 = vadd.f32 0.0, %v1064
      %1066 = vmatmul.f32.gmra.mxu0 %v969
      %v1067 = vpop.f32.mrf.mxu0
      %v1068 = vadd.f32 0.0, %v1067
      %1069 = vmatmul.f32.gmra.mxu0 %v970
      %v1070 = vpop.f32.mrf.mxu0
      %v1071 = vadd.f32 0.0, %v1070
      %1072 = vmatmul.f32.gmra.mxu0 %v971
      %v1073 = vpop.f32.mrf.mxu0
      %v1074 = vadd.f32 0.0, %v1073
      %1075 = vmatmul.f32.gmra.mxu0 %v972
      %v1076 = vpop.f32.mrf.mxu0
      %v1077 = vadd.f32 0.0, %v1076
      %1078 = vmatmul.f32.gmra.mxu0 %v973
      %v1079 = vpop.f32.mrf.mxu0
      %v1080 = vadd.f32 0.0, %v1079
      %1081 = vmatmul.f32.gmra.mxu0 %v974
      %v1082 = vpop.f32.mrf.mxu0
      %v1083 = vadd.f32 0.0, %v1082
      %1084 = vmatmul.f32.gmra.mxu0 %v975
      %v1085 = vpop.f32.mrf.mxu0
      %v1086 = vadd.f32 0.0, %v1085
      %1087 = vmatmul.f32.gmra.mxu0 %v976
      %v1088 = vpop.f32.mrf.mxu0
      %v1089 = vadd.f32 0.0, %v1088
      %1090 = vmatmul.f32.gmra.mxu0 %v977
      %v1091 = vpop.f32.mrf.mxu0
      %v1092 = vadd.f32 0.0, %v1091
      %1093 = vmatmul.f32.gmra.mxu0 %v978
      %v1094 = vpop.f32.mrf.mxu0
      %v1095 = vadd.f32 0.0, %v1094
      %1096 = vmatmul.f32.gmra.mxu0 %v979
      %v1097 = vpop.f32.mrf.mxu0
      %v1098 = vadd.f32 0.0, %v1097
      %1099 = vmatmul.f32.gmra.mxu0 %v980
      %v1100 = vpop.f32.mrf.mxu0
      %v1101 = vadd.f32 0.0, %v1100
      %1102 = vmatmul.f32.gmra.mxu0 %v981
      %v1103 = vpop.f32.mrf.mxu0
      %v1104 = vadd.f32 0.0, %v1103
      %1105 = vmatmul.f32.gmra.mxu0 %v982
      %v1106 = vpop.f32.mrf.mxu0
      %v1107 = vadd.f32 0.0, %v1106
      %1108 = vmatmul.f32.gmra.mxu0 %v983
      %v1109 = vpop.f32.mrf.mxu0
      %v1110 = vadd.f32 0.0, %v1109
      %1111 = vmatmul.f32.gmra.mxu0 %v984
      %v1112 = vpop.f32.mrf.mxu0
      %v1113 = vadd.f32 0.0, %v1112
      %1114 = vdwg.mxu0
      %v1115 = vadd.f32 %v857, %v1020
      %v1116 = vadd.f32 %v860, %v1023
      %v1117 = vadd.f32 %v863, %v1026
      %v1118 = vadd.f32 %v866, %v1029
      %v1119 = vadd.f32 %v869, %v1032
      %v1120 = vadd.f32 %v872, %v1035
      %v1121 = vadd.f32 %v875, %v1038
      %v1122 = vadd.f32 %v878, %v1041
      %v1123 = vadd.f32 %v881, %v1044
      %v1124 = vadd.f32 %v884, %v1047
      %v1125 = vadd.f32 %v887, %v1050
      %v1126 = vadd.f32 %v890, %v1053
      %v1127 = vadd.f32 %v893, %v1056
      %v1128 = vadd.f32 %v896, %v1059
      %v1129 = vadd.f32 %v899, %v1062
      %v1130 = vadd.f32 %v902, %v1065
      %v1131 = vadd.f32 %v905, %v1068
      %v1132 = vadd.f32 %v908, %v1071
      %v1133 = vadd.f32 %v911, %v1074
      %v1134 = vadd.f32 %v914, %v1077
      %v1135 = vadd.f32 %v917, %v1080
      %v1136 = vadd.f32 %v920, %v1083
      %v1137 = vadd.f32 %v923, %v1086
      %v1138 = vadd.f32 %v926, %v1089
      %v1139 = vadd.f32 %v929, %v1092
      %v1140 = vadd.f32 %v932, %v1095
      %v1141 = vadd.f32 %v935, %v1098
      %v1142 = vadd.f32 %v938, %v1101
      %v1143 = vadd.f32 %v941, %v1104
      %v1144 = vadd.f32 %v944, %v1107
      %v1145 = vadd.f32 %v947, %v1110
      %v1146 = vadd.f32 %v950, %v1113
      %s1147 = scalar_lea.vmem [#allocation2], 16
      %v1148 = vld [vmem:[%s1147] sm:$0xff]
      %v1149 = vld [vmem:[%s1147 + $0x8] sm:$0xff]
      %v1150 = vld [vmem:[%s1147 + $0x10] sm:$0xff]
      %v1151 = vld [vmem:[%s1147 + $0x18] sm:$0xff]
      %v1152 = vld [vmem:[%s1147 + $0x20] sm:$0xff]
      %v1153 = vld [vmem:[%s1147 + $0x28] sm:$0xff]
      %v1154 = vld [vmem:[%s1147 + $0x30] sm:$0xff]
      %v1155 = vld [vmem:[%s1147 + $0x38] sm:$0xff]
      %v1156 = vld [vmem:[%s1147 + $0x40] sm:$0xff]
      %v1157 = vld [vmem:[%s1147 + $0x48] sm:$0xff]
      %v1158 = vld [vmem:[%s1147 + $0x50] sm:$0xff]
      %v1159 = vld [vmem:[%s1147 + $0x58] sm:$0xff]
      %v1160 = vld [vmem:[%s1147 + $0x60] sm:$0xff]
      %v1161 = vld [vmem:[%s1147 + $0x68] sm:$0xff]
      %v1162 = vld [vmem:[%s1147 + $0x70] sm:$0xff]
      %v1163 = vld [vmem:[%s1147 + $0x78] sm:$0xff]
      %v1164 = vld [vmem:[%s1147 + $0x80] sm:$0xff]
      %v1165 = vld [vmem:[%s1147 + $0x88] sm:$0xff]
      %v1166 = vld [vmem:[%s1147 + $0x90] sm:$0xff]
      %v1167 = vld [vmem:[%s1147 + $0x98] sm:$0xff]
      %v1168 = vld [vmem:[%s1147 + $0xa0] sm:$0xff]
      %v1169 = vld [vmem:[%s1147 + $0xa8] sm:$0xff]
      %v1170 = vld [vmem:[%s1147 + $0xb0] sm:$0xff]
      %v1171 = vld [vmem:[%s1147 + $0xb8] sm:$0xff]
      %v1172 = vld [vmem:[%s1147 + $0xc0] sm:$0xff]
      %v1173 = vld [vmem:[%s1147 + $0xc8] sm:$0xff]
      %v1174 = vld [vmem:[%s1147 + $0xd0] sm:$0xff]
      %v1175 = vld [vmem:[%s1147 + $0xd8] sm:$0xff]
      %v1176 = vld [vmem:[%s1147 + $0xe0] sm:$0xff]
      %v1177 = vld [vmem:[%s1147 + $0xe8] sm:$0xff]
      %v1178 = vld [vmem:[%s1147 + $0xf0] sm:$0xff]
      %v1179 = vld [vmem:[%s1147 + $0xf8] sm:$0xff]
      %s1180 = scalar_lea.vmem %s265, 384
      %v1181 = vld [vmem:[%s1180] sm:$0xff]
      %v1182 = vld [vmem:[%s1180 + $0x8] sm:$0xff]
      %v1183 = vld [vmem:[%s1180 + $0x10] sm:$0xff]
      %v1184 = vld [vmem:[%s1180 + $0x18] sm:$0xff]
      %v1185 = vld [vmem:[%s1180 + $0x20] sm:$0xff]
      %v1186 = vld [vmem:[%s1180 + $0x28] sm:$0xff]
      %v1187 = vld [vmem:[%s1180 + $0x30] sm:$0xff]
      %v1188 = vld [vmem:[%s1180 + $0x38] sm:$0xff]
      %v1189 = vld [vmem:[%s1180 + $0x40] sm:$0xff]
      %v1190 = vld [vmem:[%s1180 + $0x48] sm:$0xff]
      %v1191 = vld [vmem:[%s1180 + $0x50] sm:$0xff]
      %v1192 = vld [vmem:[%s1180 + $0x58] sm:$0xff]
      %v1193 = vld [vmem:[%s1180 + $0x60] sm:$0xff]
      %v1194 = vld [vmem:[%s1180 + $0x68] sm:$0xff]
      %v1195 = vld [vmem:[%s1180 + $0x70] sm:$0xff]
      %v1196 = vld [vmem:[%s1180 + $0x78] sm:$0xff]
      %1197 = vmatpush.msra.mxu0 %v1196
      %1198 = vmatpush.msra.mxu0 %v1195
      %1199 = vmatpush.msra.mxu0 %v1194
      %1200 = vmatpush.msra.mxu0 %v1193
      %1201 = vmatpush.msra.mxu0 %v1192
      %1202 = vmatpush.msra.mxu0 %v1191
      %1203 = vmatpush.msra.mxu0 %v1190
      %1204 = vmatpush.msra.mxu0 %v1189
      %1205 = vmatpush.msra.mxu0 %v1188
      %1206 = vmatpush.msra.mxu0 %v1187
      %1207 = vmatpush.msra.mxu0 %v1186
      %1208 = vmatpush.msra.mxu0 %v1185
      %1209 = vmatpush.msra.mxu0 %v1184
      %1210 = vmatpush.msra.mxu0 %v1183
      %1211 = vmatpush.msra.mxu0 %v1182
      %1212 = vmatpush.msra.mxu0 %v1181
      %1213 = vmatmul.f32.gmra.mxu0 %v1148
      %v1214 = vpop.f32.mrf.mxu0
      %v1215 = vadd.f32 0.0, %v1214
      %1216 = vmatmul.f32.gmra.mxu0 %v1149
      %v1217 = vpop.f32.mrf.mxu0
      %v1218 = vadd.f32 0.0, %v1217
      %1219 = vmatmul.f32.gmra.mxu0 %v1150
      %v1220 = vpop.f32.mrf.mxu0
      %v1221 = vadd.f32 0.0, %v1220
      %1222 = vmatmul.f32.gmra.mxu0 %v1151
      %v1223 = vpop.f32.mrf.mxu0
      %v1224 = vadd.f32 0.0, %v1223
      %1225 = vmatmul.f32.gmra.mxu0 %v1152
      %v1226 = vpop.f32.mrf.mxu0
      %v1227 = vadd.f32 0.0, %v1226
      %1228 = vmatmul.f32.gmra.mxu0 %v1153
      %v1229 = vpop.f32.mrf.mxu0
      %v1230 = vadd.f32 0.0, %v1229
      %1231 = vmatmul.f32.gmra.mxu0 %v1154
      %v1232 = vpop.f32.mrf.mxu0
      %v1233 = vadd.f32 0.0, %v1232
      %1234 = vmatmul.f32.gmra.mxu0 %v1155
      %v1235 = vpop.f32.mrf.mxu0
      %v1236 = vadd.f32 0.0, %v1235
      %1237 = vmatmul.f32.gmra.mxu0 %v1156
      %v1238 = vpop.f32.mrf.mxu0
      %v1239 = vadd.f32 0.0, %v1238
      %1240 = vmatmul.f32.gmra.mxu0 %v1157
      %v1241 = vpop.f32.mrf.mxu0
      %v1242 = vadd.f32 0.0, %v1241
      %1243 = vmatmul.f32.gmra.mxu0 %v1158
      %v1244 = vpop.f32.mrf.mxu0
      %v1245 = vadd.f32 0.0, %v1244
      %1246 = vmatmul.f32.gmra.mxu0 %v1159
      %v1247 = vpop.f32.mrf.mxu0
      %v1248 = vadd.f32 0.0, %v1247
      %1249 = vmatmul.f32.gmra.mxu0 %v1160
      %v1250 = vpop.f32.mrf.mxu0
      %v1251 = vadd.f32 0.0, %v1250
      %1252 = vmatmul.f32.gmra.mxu0 %v1161
      %v1253 = vpop.f32.mrf.mxu0
      %v1254 = vadd.f32 0.0, %v1253
      %1255 = vmatmul.f32.gmra.mxu0 %v1162
      %v1256 = vpop.f32.mrf.mxu0
      %v1257 = vadd.f32 0.0, %v1256
      %1258 = vmatmul.f32.gmra.mxu0 %v1163
      %v1259 = vpop.f32.mrf.mxu0
      %v1260 = vadd.f32 0.0, %v1259
      %1261 = vmatmul.f32.gmra.mxu0 %v1164
      %v1262 = vpop.f32.mrf.mxu0
      %v1263 = vadd.f32 0.0, %v1262
      %1264 = vmatmul.f32.gmra.mxu0 %v1165
      %v1265 = vpop.f32.mrf.mxu0
      %v1266 = vadd.f32 0.0, %v1265
      %1267 = vmatmul.f32.gmra.mxu0 %v1166
      %v1268 = vpop.f32.mrf.mxu0
      %v1269 = vadd.f32 0.0, %v1268
      %1270 = vmatmul.f32.gmra.mxu0 %v1167
      %v1271 = vpop.f32.mrf.mxu0
      %v1272 = vadd.f32 0.0, %v1271
      %1273 = vmatmul.f32.gmra.mxu0 %v1168
      %v1274 = vpop.f32.mrf.mxu0
      %v1275 = vadd.f32 0.0, %v1274
      %1276 = vmatmul.f32.gmra.mxu0 %v1169
      %v1277 = vpop.f32.mrf.mxu0
      %v1278 = vadd.f32 0.0, %v1277
      %1279 = vmatmul.f32.gmra.mxu0 %v1170
      %v1280 = vpop.f32.mrf.mxu0
      %v1281 = vadd.f32 0.0, %v1280
      %1282 = vmatmul.f32.gmra.mxu0 %v1171
      %v1283 = vpop.f32.mrf.mxu0
      %v1284 = vadd.f32 0.0, %v1283
      %1285 = vmatmul.f32.gmra.mxu0 %v1172
      %v1286 = vpop.f32.mrf.mxu0
      %v1287 = vadd.f32 0.0, %v1286
      %1288 = vmatmul.f32.gmra.mxu0 %v1173
      %v1289 = vpop.f32.mrf.mxu0
      %v1290 = vadd.f32 0.0, %v1289
      %1291 = vmatmul.f32.gmra.mxu0 %v1174
      %v1292 = vpop.f32.mrf.mxu0
      %v1293 = vadd.f32 0.0, %v1292
      %1294 = vmatmul.f32.gmra.mxu0 %v1175
      %v1295 = vpop.f32.mrf.mxu0
      %v1296 = vadd.f32 0.0, %v1295
      %1297 = vmatmul.f32.gmra.mxu0 %v1176
      %v1298 = vpop.f32.mrf.mxu0
      %v1299 = vadd.f32 0.0, %v1298
      %1300 = vmatmul.f32.gmra.mxu0 %v1177
      %v1301 = vpop.f32.mrf.mxu0
      %v1302 = vadd.f32 0.0, %v1301
      %1303 = vmatmul.f32.gmra.mxu0 %v1178
      %v1304 = vpop.f32.mrf.mxu0
      %v1305 = vadd.f32 0.0, %v1304
      %1306 = vmatmul.f32.gmra.mxu0 %v1179
      %v1307 = vpop.f32.mrf.mxu0
      %v1308 = vadd.f32 0.0, %v1307
      %1309 = vdwg.mxu0
      %v1310 = vadd.f32 %v1115, %v1215
      %v1311 = vadd.f32 %v1116, %v1218
      %v1312 = vadd.f32 %v1117, %v1221
      %v1313 = vadd.f32 %v1118, %v1224
      %v1314 = vadd.f32 %v1119, %v1227
      %v1315 = vadd.f32 %v1120, %v1230
      %v1316 = vadd.f32 %v1121, %v1233
      %v1317 = vadd.f32 %v1122, %v1236
      %v1318 = vadd.f32 %v1123, %v1239
      %v1319 = vadd.f32 %v1124, %v1242
      %v1320 = vadd.f32 %v1125, %v1245
      %v1321 = vadd.f32 %v1126, %v1248
      %v1322 = vadd.f32 %v1127, %v1251
      %v1323 = vadd.f32 %v1128, %v1254
      %v1324 = vadd.f32 %v1129, %v1257
      %v1325 = vadd.f32 %v1130, %v1260
      %v1326 = vadd.f32 %v1131, %v1263
      %v1327 = vadd.f32 %v1132, %v1266
      %v1328 = vadd.f32 %v1133, %v1269
      %v1329 = vadd.f32 %v1134, %v1272
      %v1330 = vadd.f32 %v1135, %v1275
      %v1331 = vadd.f32 %v1136, %v1278
      %v1332 = vadd.f32 %v1137, %v1281
      %v1333 = vadd.f32 %v1138, %v1284
      %v1334 = vadd.f32 %v1139, %v1287
      %v1335 = vadd.f32 %v1140, %v1290
      %v1336 = vadd.f32 %v1141, %v1293
      %v1337 = vadd.f32 %v1142, %v1296
      %v1338 = vadd.f32 %v1143, %v1299
      %v1339 = vadd.f32 %v1144, %v1302
      %v1340 = vadd.f32 %v1145, %v1305
      %v1341 = vadd.f32 %v1146, %v1308
      %s1342 = scalar_lea.vmem [#allocation2], 304
      %v1343 = vld [vmem:[%s1342] sm:$0xff]
      %v1344 = vld [vmem:[%s1342 + $0x8] sm:$0xff]
      %v1345 = vld [vmem:[%s1342 + $0x10] sm:$0xff]
      %v1346 = vld [vmem:[%s1342 + $0x18] sm:$0xff]
      %v1347 = vld [vmem:[%s1342 + $0x20] sm:$0xff]
      %v1348 = vld [vmem:[%s1342 + $0x28] sm:$0xff]
      %v1349 = vld [vmem:[%s1342 + $0x30] sm:$0xff]
      %v1350 = vld [vmem:[%s1342 + $0x38] sm:$0xff]
      %v1351 = vld [vmem:[%s1342 + $0x40] sm:$0xff]
      %v1352 = vld [vmem:[%s1342 + $0x48] sm:$0xff]
      %v1353 = vld [vmem:[%s1342 + $0x50] sm:$0xff]
      %v1354 = vld [vmem:[%s1342 + $0x58] sm:$0xff]
      %v1355 = vld [vmem:[%s1342 + $0x60] sm:$0xff]
      %v1356 = vld [vmem:[%s1342 + $0x68] sm:$0xff]
      %v1357 = vld [vmem:[%s1342 + $0x70] sm:$0xff]
      %v1358 = vld [vmem:[%s1342 + $0x78] sm:$0xff]
      %v1359 = vld [vmem:[%s1342 + $0x80] sm:$0xff]
      %v1360 = vld [vmem:[%s1342 + $0x88] sm:$0xff]
      %v1361 = vld [vmem:[%s1342 + $0x90] sm:$0xff]
      %v1362 = vld [vmem:[%s1342 + $0x98] sm:$0xff]
      %v1363 = vld [vmem:[%s1342 + $0xa0] sm:$0xff]
      %v1364 = vld [vmem:[%s1342 + $0xa8] sm:$0xff]
      %v1365 = vld [vmem:[%s1342 + $0xb0] sm:$0xff]
      %v1366 = vld [vmem:[%s1342 + $0xb8] sm:$0xff]
      %v1367 = vld [vmem:[%s1342 + $0xc0] sm:$0xff]
      %v1368 = vld [vmem:[%s1342 + $0xc8] sm:$0xff]
      %v1369 = vld [vmem:[%s1342 + $0xd0] sm:$0xff]
      %v1370 = vld [vmem:[%s1342 + $0xd8] sm:$0xff]
      %v1371 = vld [vmem:[%s1342 + $0xe0] sm:$0xff]
      %v1372 = vld [vmem:[%s1342 + $0xe8] sm:$0xff]
      %v1373 = vld [vmem:[%s1342 + $0xf0] sm:$0xff]
      %v1374 = vld [vmem:[%s1342 + $0xf8] sm:$0xff]
      %s1375 = scalar_lea.vmem %s265, 512
      %v1376 = vld [vmem:[%s1375] sm:$0xff]
      %v1377 = vld [vmem:[%s1375 + $0x8] sm:$0xff]
      %v1378 = vld [vmem:[%s1375 + $0x10] sm:$0xff]
      %v1379 = vld [vmem:[%s1375 + $0x18] sm:$0xff]
      %v1380 = vld [vmem:[%s1375 + $0x20] sm:$0xff]
      %v1381 = vld [vmem:[%s1375 + $0x28] sm:$0xff]
      %v1382 = vld [vmem:[%s1375 + $0x30] sm:$0xff]
      %v1383 = vld [vmem:[%s1375 + $0x38] sm:$0xff]
      %v1384 = vld [vmem:[%s1375 + $0x40] sm:$0xff]
      %v1385 = vld [vmem:[%s1375 + $0x48] sm:$0xff]
      %v1386 = vld [vmem:[%s1375 + $0x50] sm:$0xff]
      %v1387 = vld [vmem:[%s1375 + $0x58] sm:$0xff]
      %v1388 = vld [vmem:[%s1375 + $0x60] sm:$0xff]
      %v1389 = vld [vmem:[%s1375 + $0x68] sm:$0xff]
      %v1390 = vld [vmem:[%s1375 + $0x70] sm:$0xff]
      %v1391 = vld [vmem:[%s1375 + $0x78] sm:$0xff]
      %1392 = vmatpush.msra.mxu0 %v1391
      %1393 = vmatpush.msra.mxu0 %v1390
      %1394 = vmatpush.msra.mxu0 %v1389
      %1395 = vmatpush.msra.mxu0 %v1388
      %1396 = vmatpush.msra.mxu0 %v1387
      %1397 = vmatpush.msra.mxu0 %v1386
      %1398 = vmatpush.msra.mxu0 %v1385
      %1399 = vmatpush.msra.mxu0 %v1384
      %1400 = vmatpush.msra.mxu0 %v1383
      %1401 = vmatpush.msra.mxu0 %v1382
      %1402 = vmatpush.msra.mxu0 %v1381
      %1403 = vmatpush.msra.mxu0 %v1380
      %1404 = vmatpush.msra.mxu0 %v1379
      %1405 = vmatpush.msra.mxu0 %v1378
      %1406 = vmatpush.msra.mxu0 %v1377
      %1407 = vmatpush.msra.mxu0 %v1376
      %1408 = vmatmul.f32.gmra.mxu0 %v1343
      %v1409 = vpop.f32.mrf.mxu0
      %v1410 = vadd.f32 0.0, %v1409
      %1411 = vmatmul.f32.gmra.mxu0 %v1344
      %v1412 = vpop.f32.mrf.mxu0
      %v1413 = vadd.f32 0.0, %v1412
      %1414 = vmatmul.f32.gmra.mxu0 %v1345
      %v1415 = vpop.f32.mrf.mxu0
      %v1416 = vadd.f32 0.0, %v1415
      %1417 = vmatmul.f32.gmra.mxu0 %v1346
      %v1418 = vpop.f32.mrf.mxu0
      %v1419 = vadd.f32 0.0, %v1418
      %1420 = vmatmul.f32.gmra.mxu0 %v1347
      %v1421 = vpop.f32.mrf.mxu0
      %v1422 = vadd.f32 0.0, %v1421
      %1423 = vmatmul.f32.gmra.mxu0 %v1348
      %v1424 = vpop.f32.mrf.mxu0
      %v1425 = vadd.f32 0.0, %v1424
      %1426 = vmatmul.f32.gmra.mxu0 %v1349
      %v1427 = vpop.f32.mrf.mxu0
      %v1428 = vadd.f32 0.0, %v1427
      %1429 = vmatmul.f32.gmra.mxu0 %v1350
      %v1430 = vpop.f32.mrf.mxu0
      %v1431 = vadd.f32 0.0, %v1430
      %1432 = vmatmul.f32.gmra.mxu0 %v1351
      %v1433 = vpop.f32.mrf.mxu0
      %v1434 = vadd.f32 0.0, %v1433
      %1435 = vmatmul.f32.gmra.mxu0 %v1352
      %v1436 = vpop.f32.mrf.mxu0
      %v1437 = vadd.f32 0.0, %v1436
      %1438 = vmatmul.f32.gmra.mxu0 %v1353
      %v1439 = vpop.f32.mrf.mxu0
      %v1440 = vadd.f32 0.0, %v1439
      %1441 = vmatmul.f32.gmra.mxu0 %v1354
      %v1442 = vpop.f32.mrf.mxu0
      %v1443 = vadd.f32 0.0, %v1442
      %1444 = vmatmul.f32.gmra.mxu0 %v1355
      %v1445 = vpop.f32.mrf.mxu0
      %v1446 = vadd.f32 0.0, %v1445
      %1447 = vmatmul.f32.gmra.mxu0 %v1356
      %v1448 = vpop.f32.mrf.mxu0
      %v1449 = vadd.f32 0.0, %v1448
      %1450 = vmatmul.f32.gmra.mxu0 %v1357
      %v1451 = vpop.f32.mrf.mxu0
      %v1452 = vadd.f32 0.0, %v1451
      %1453 = vmatmul.f32.gmra.mxu0 %v1358
      %v1454 = vpop.f32.mrf.mxu0
      %v1455 = vadd.f32 0.0, %v1454
      %1456 = vmatmul.f32.gmra.mxu0 %v1359
      %v1457 = vpop.f32.mrf.mxu0
      %v1458 = vadd.f32 0.0, %v1457
      %1459 = vmatmul.f32.gmra.mxu0 %v1360
      %v1460 = vpop.f32.mrf.mxu0
      %v1461 = vadd.f32 0.0, %v1460
      %1462 = vmatmul.f32.gmra.mxu0 %v1361
      %v1463 = vpop.f32.mrf.mxu0
      %v1464 = vadd.f32 0.0, %v1463
      %1465 = vmatmul.f32.gmra.mxu0 %v1362
      %v1466 = vpop.f32.mrf.mxu0
      %v1467 = vadd.f32 0.0, %v1466
      %1468 = vmatmul.f32.gmra.mxu0 %v1363
      %v1469 = vpop.f32.mrf.mxu0
      %v1470 = vadd.f32 0.0, %v1469
      %1471 = vmatmul.f32.gmra.mxu0 %v1364
      %v1472 = vpop.f32.mrf.mxu0
      %v1473 = vadd.f32 0.0, %v1472
      %1474 = vmatmul.f32.gmra.mxu0 %v1365
      %v1475 = vpop.f32.mrf.mxu0
      %v1476 = vadd.f32 0.0, %v1475
      %1477 = vmatmul.f32.gmra.mxu0 %v1366
      %v1478 = vpop.f32.mrf.mxu0
      %v1479 = vadd.f32 0.0, %v1478
      %1480 = vmatmul.f32.gmra.mxu0 %v1367
      %v1481 = vpop.f32.mrf.mxu0
      %v1482 = vadd.f32 0.0, %v1481
      %1483 = vmatmul.f32.gmra.mxu0 %v1368
      %v1484 = vpop.f32.mrf.mxu0
      %v1485 = vadd.f32 0.0, %v1484
      %1486 = vmatmul.f32.gmra.mxu0 %v1369
      %v1487 = vpop.f32.mrf.mxu0
      %v1488 = vadd.f32 0.0, %v1487
      %1489 = vmatmul.f32.gmra.mxu0 %v1370
      %v1490 = vpop.f32.mrf.mxu0
      %v1491 = vadd.f32 0.0, %v1490
      %1492 = vmatmul.f32.gmra.mxu0 %v1371
      %v1493 = vpop.f32.mrf.mxu0
      %v1494 = vadd.f32 0.0, %v1493
      %1495 = vmatmul.f32.gmra.mxu0 %v1372
      %v1496 = vpop.f32.mrf.mxu0
      %v1497 = vadd.f32 0.0, %v1496
      %1498 = vmatmul.f32.gmra.mxu0 %v1373
      %v1499 = vpop.f32.mrf.mxu0
      %v1500 = vadd.f32 0.0, %v1499
      %1501 = vmatmul.f32.gmra.mxu0 %v1374
      %v1502 = vpop.f32.mrf.mxu0
      %v1503 = vadd.f32 0.0, %v1502
      %1504 = vdwg.mxu0
      %v1505 = vadd.f32 %v1310, %v1410
      %v1506 = vadd.f32 %v1311, %v1413
      %v1507 = vadd.f32 %v1312, %v1416
      %v1508 = vadd.f32 %v1313, %v1419
      %v1509 = vadd.f32 %v1314, %v1422
      %v1510 = vadd.f32 %v1315, %v1425
      %v1511 = vadd.f32 %v1316, %v1428
      %v1512 = vadd.f32 %v1317, %v1431
      %v1513 = vadd.f32 %v1318, %v1434
      %v1514 = vadd.f32 %v1319, %v1437
      %v1515 = vadd.f32 %v1320, %v1440
      %v1516 = vadd.f32 %v1321, %v1443
      %v1517 = vadd.f32 %v1322, %v1446
      %v1518 = vadd.f32 %v1323, %v1449
      %v1519 = vadd.f32 %v1324, %v1452
      %v1520 = vadd.f32 %v1325, %v1455
      %v1521 = vadd.f32 %v1326, %v1458
      %v1522 = vadd.f32 %v1327, %v1461
      %v1523 = vadd.f32 %v1328, %v1464
      %v1524 = vadd.f32 %v1329, %v1467
      %v1525 = vadd.f32 %v1330, %v1470
      %v1526 = vadd.f32 %v1331, %v1473
      %v1527 = vadd.f32 %v1332, %v1476
      %v1528 = vadd.f32 %v1333, %v1479
      %v1529 = vadd.f32 %v1334, %v1482
      %v1530 = vadd.f32 %v1335, %v1485
      %v1531 = vadd.f32 %v1336, %v1488
      %v1532 = vadd.f32 %v1337, %v1491
      %v1533 = vadd.f32 %v1338, %v1494
      %v1534 = vadd.f32 %v1339, %v1497
      %v1535 = vadd.f32 %v1340, %v1500
      %v1536 = vadd.f32 %v1341, %v1503
      %s1537 = scalar_lea.vmem [#allocation2], 592
      %v1538 = vld [vmem:[%s1537] sm:$0xff]
      %v1539 = vld [vmem:[%s1537 + $0x8] sm:$0xff]
      %v1540 = vld [vmem:[%s1537 + $0x10] sm:$0xff]
      %v1541 = vld [vmem:[%s1537 + $0x18] sm:$0xff]
      %v1542 = vld [vmem:[%s1537 + $0x20] sm:$0xff]
      %v1543 = vld [vmem:[%s1537 + $0x28] sm:$0xff]
      %v1544 = vld [vmem:[%s1537 + $0x30] sm:$0xff]
      %v1545 = vld [vmem:[%s1537 + $0x38] sm:$0xff]
      %v1546 = vld [vmem:[%s1537 + $0x40] sm:$0xff]
      %v1547 = vld [vmem:[%s1537 + $0x48] sm:$0xff]
      %v1548 = vld [vmem:[%s1537 + $0x50] sm:$0xff]
      %v1549 = vld [vmem:[%s1537 + $0x58] sm:$0xff]
      %v1550 = vld [vmem:[%s1537 + $0x60] sm:$0xff]
      %v1551 = vld [vmem:[%s1537 + $0x68] sm:$0xff]
      %v1552 = vld [vmem:[%s1537 + $0x70] sm:$0xff]
      %v1553 = vld [vmem:[%s1537 + $0x78] sm:$0xff]
      %v1554 = vld [vmem:[%s1537 + $0x80] sm:$0xff]
      %v1555 = vld [vmem:[%s1537 + $0x88] sm:$0xff]
      %v1556 = vld [vmem:[%s1537 + $0x90] sm:$0xff]
      %v1557 = vld [vmem:[%s1537 + $0x98] sm:$0xff]
      %v1558 = vld [vmem:[%s1537 + $0xa0] sm:$0xff]
      %v1559 = vld [vmem:[%s1537 + $0xa8] sm:$0xff]
      %v1560 = vld [vmem:[%s1537 + $0xb0] sm:$0xff]
      %v1561 = vld [vmem:[%s1537 + $0xb8] sm:$0xff]
      %v1562 = vld [vmem:[%s1537 + $0xc0] sm:$0xff]
      %v1563 = vld [vmem:[%s1537 + $0xc8] sm:$0xff]
      %v1564 = vld [vmem:[%s1537 + $0xd0] sm:$0xff]
      %v1565 = vld [vmem:[%s1537 + $0xd8] sm:$0xff]
      %v1566 = vld [vmem:[%s1537 + $0xe0] sm:$0xff]
      %v1567 = vld [vmem:[%s1537 + $0xe8] sm:$0xff]
      %v1568 = vld [vmem:[%s1537 + $0xf0] sm:$0xff]
      %v1569 = vld [vmem:[%s1537 + $0xf8] sm:$0xff]
      %s1570 = scalar_lea.vmem %s265, 640
      %v1571 = vld [vmem:[%s1570] sm:$0xff]
      %v1572 = vld [vmem:[%s1570 + $0x8] sm:$0xff]
      %v1573 = vld [vmem:[%s1570 + $0x10] sm:$0xff]
      %v1574 = vld [vmem:[%s1570 + $0x18] sm:$0xff]
      %v1575 = vld [vmem:[%s1570 + $0x20] sm:$0xff]
      %v1576 = vld [vmem:[%s1570 + $0x28] sm:$0xff]
      %v1577 = vld [vmem:[%s1570 + $0x30] sm:$0xff]
      %v1578 = vld [vmem:[%s1570 + $0x38] sm:$0xff]
      %v1579 = vld [vmem:[%s1570 + $0x40] sm:$0xff]
      %v1580 = vld [vmem:[%s1570 + $0x48] sm:$0xff]
      %v1581 = vld [vmem:[%s1570 + $0x50] sm:$0xff]
      %v1582 = vld [vmem:[%s1570 + $0x58] sm:$0xff]
      %v1583 = vld [vmem:[%s1570 + $0x60] sm:$0xff]
      %v1584 = vld [vmem:[%s1570 + $0x68] sm:$0xff]
      %v1585 = vld [vmem:[%s1570 + $0x70] sm:$0xff]
      %v1586 = vld [vmem:[%s1570 + $0x78] sm:$0xff]
      %1587 = vmatpush.msra.mxu0 %v1586
      %1588 = vmatpush.msra.mxu0 %v1585
      %1589 = vmatpush.msra.mxu0 %v1584
      %1590 = vmatpush.msra.mxu0 %v1583
      %1591 = vmatpush.msra.mxu0 %v1582
      %1592 = vmatpush.msra.mxu0 %v1581
      %1593 = vmatpush.msra.mxu0 %v1580
      %1594 = vmatpush.msra.mxu0 %v1579
      %1595 = vmatpush.msra.mxu0 %v1578
      %1596 = vmatpush.msra.mxu0 %v1577
      %1597 = vmatpush.msra.mxu0 %v1576
      %1598 = vmatpush.msra.mxu0 %v1575
      %1599 = vmatpush.msra.mxu0 %v1574
      %1600 = vmatpush.msra.mxu0 %v1573
      %1601 = vmatpush.msra.mxu0 %v1572
      %1602 = vmatpush.msra.mxu0 %v1571
      %1603 = vmatmul.f32.gmra.mxu0 %v1538
      %v1604 = vpop.f32.mrf.mxu0
      %v1605 = vadd.f32 0.0, %v1604
      %1606 = vmatmul.f32.gmra.mxu0 %v1539
      %v1607 = vpop.f32.mrf.mxu0
      %v1608 = vadd.f32 0.0, %v1607
      %1609 = vmatmul.f32.gmra.mxu0 %v1540
      %v1610 = vpop.f32.mrf.mxu0
      %v1611 = vadd.f32 0.0, %v1610
      %1612 = vmatmul.f32.gmra.mxu0 %v1541
      %v1613 = vpop.f32.mrf.mxu0
      %v1614 = vadd.f32 0.0, %v1613
      %1615 = vmatmul.f32.gmra.mxu0 %v1542
      %v1616 = vpop.f32.mrf.mxu0
      %v1617 = vadd.f32 0.0, %v1616
      %1618 = vmatmul.f32.gmra.mxu0 %v1543
      %v1619 = vpop.f32.mrf.mxu0
      %v1620 = vadd.f32 0.0, %v1619
      %1621 = vmatmul.f32.gmra.mxu0 %v1544
      %v1622 = vpop.f32.mrf.mxu0
      %v1623 = vadd.f32 0.0, %v1622
      %1624 = vmatmul.f32.gmra.mxu0 %v1545
      %v1625 = vpop.f32.mrf.mxu0
      %v1626 = vadd.f32 0.0, %v1625
      %1627 = vmatmul.f32.gmra.mxu0 %v1546
      %v1628 = vpop.f32.mrf.mxu0
      %v1629 = vadd.f32 0.0, %v1628
      %1630 = vmatmul.f32.gmra.mxu0 %v1547
      %v1631 = vpop.f32.mrf.mxu0
      %v1632 = vadd.f32 0.0, %v1631
      %1633 = vmatmul.f32.gmra.mxu0 %v1548
      %v1634 = vpop.f32.mrf.mxu0
      %v1635 = vadd.f32 0.0, %v1634
      %1636 = vmatmul.f32.gmra.mxu0 %v1549
      %v1637 = vpop.f32.mrf.mxu0
      %v1638 = vadd.f32 0.0, %v1637
      %1639 = vmatmul.f32.gmra.mxu0 %v1550
      %v1640 = vpop.f32.mrf.mxu0
      %v1641 = vadd.f32 0.0, %v1640
      %1642 = vmatmul.f32.gmra.mxu0 %v1551
      %v1643 = vpop.f32.mrf.mxu0
      %v1644 = vadd.f32 0.0, %v1643
      %1645 = vmatmul.f32.gmra.mxu0 %v1552
      %v1646 = vpop.f32.mrf.mxu0
      %v1647 = vadd.f32 0.0, %v1646
      %1648 = vmatmul.f32.gmra.mxu0 %v1553
      %v1649 = vpop.f32.mrf.mxu0
      %v1650 = vadd.f32 0.0, %v1649
      %1651 = vmatmul.f32.gmra.mxu0 %v1554
      %v1652 = vpop.f32.mrf.mxu0
      %v1653 = vadd.f32 0.0, %v1652
      %1654 = vmatmul.f32.gmra.mxu0 %v1555
      %v1655 = vpop.f32.mrf.mxu0
      %v1656 = vadd.f32 0.0, %v1655
      %1657 = vmatmul.f32.gmra.mxu0 %v1556
      %v1658 = vpop.f32.mrf.mxu0
      %v1659 = vadd.f32 0.0, %v1658
      %1660 = vmatmul.f32.gmra.mxu0 %v1557
      %v1661 = vpop.f32.mrf.mxu0
      %v1662 = vadd.f32 0.0, %v1661
      %1663 = vmatmul.f32.gmra.mxu0 %v1558
      %v1664 = vpop.f32.mrf.mxu0
      %v1665 = vadd.f32 0.0, %v1664
      %1666 = vmatmul.f32.gmra.mxu0 %v1559
      %v1667 = vpop.f32.mrf.mxu0
      %v1668 = vadd.f32 0.0, %v1667
      %1669 = vmatmul.f32.gmra.mxu0 %v1560
      %v1670 = vpop.f32.mrf.mxu0
      %v1671 = vadd.f32 0.0, %v1670
      %1672 = vmatmul.f32.gmra.mxu0 %v1561
      %v1673 = vpop.f32.mrf.mxu0
      %v1674 = vadd.f32 0.0, %v1673
      %1675 = vmatmul.f32.gmra.mxu0 %v1562
      %v1676 = vpop.f32.mrf.mxu0
      %v1677 = vadd.f32 0.0, %v1676
      %1678 = vmatmul.f32.gmra.mxu0 %v1563
      %v1679 = vpop.f32.mrf.mxu0
      %v1680 = vadd.f32 0.0, %v1679
      %1681 = vmatmul.f32.gmra.mxu0 %v1564
      %v1682 = vpop.f32.mrf.mxu0
      %v1683 = vadd.f32 0.0, %v1682
      %1684 = vmatmul.f32.gmra.mxu0 %v1565
      %v1685 = vpop.f32.mrf.mxu0
      %v1686 = vadd.f32 0.0, %v1685
      %1687 = vmatmul.f32.gmra.mxu0 %v1566
      %v1688 = vpop.f32.mrf.mxu0
      %v1689 = vadd.f32 0.0, %v1688
      %1690 = vmatmul.f32.gmra.mxu0 %v1567
      %v1691 = vpop.f32.mrf.mxu0
      %v1692 = vadd.f32 0.0, %v1691
      %1693 = vmatmul.f32.gmra.mxu0 %v1568
      %v1694 = vpop.f32.mrf.mxu0
      %v1695 = vadd.f32 0.0, %v1694
      %1696 = vmatmul.f32.gmra.mxu0 %v1569
      %v1697 = vpop.f32.mrf.mxu0
      %v1698 = vadd.f32 0.0, %v1697
      %1699 = vdwg.mxu0
      %v1700 = vadd.f32 %v1505, %v1605
      %v1701 = vadd.f32 %v1506, %v1608
      %v1702 = vadd.f32 %v1507, %v1611
      %v1703 = vadd.f32 %v1508, %v1614
      %v1704 = vadd.f32 %v1509, %v1617
      %v1705 = vadd.f32 %v1510, %v1620
      %v1706 = vadd.f32 %v1511, %v1623
      %v1707 = vadd.f32 %v1512, %v1626
      %v1708 = vadd.f32 %v1513, %v1629
      %v1709 = vadd.f32 %v1514, %v1632
      %v1710 = vadd.f32 %v1515, %v1635
      %v1711 = vadd.f32 %v1516, %v1638
      %v1712 = vadd.f32 %v1517, %v1641
      %v1713 = vadd.f32 %v1518, %v1644
      %v1714 = vadd.f32 %v1519, %v1647
      %v1715 = vadd.f32 %v1520, %v1650
      %v1716 = vadd.f32 %v1521, %v1653
      %v1717 = vadd.f32 %v1522, %v1656
      %v1718 = vadd.f32 %v1523, %v1659
      %v1719 = vadd.f32 %v1524, %v1662
      %v1720 = vadd.f32 %v1525, %v1665
      %v1721 = vadd.f32 %v1526, %v1668
      %v1722 = vadd.f32 %v1527, %v1671
      %v1723 = vadd.f32 %v1528, %v1674
      %v1724 = vadd.f32 %v1529, %v1677
      %v1725 = vadd.f32 %v1530, %v1680
      %v1726 = vadd.f32 %v1531, %v1683
      %v1727 = vadd.f32 %v1532, %v1686
      %v1728 = vadd.f32 %v1533, %v1689
      %v1729 = vadd.f32 %v1534, %v1692
      %v1730 = vadd.f32 %v1535, %v1695
      %v1731 = vadd.f32 %v1536, %v1698
      %s1732 = scalar_lea.vmem [#allocation2], 32
      %v1733 = vld [vmem:[%s1732] sm:$0xff]
      %v1734 = vld [vmem:[%s1732 + $0x8] sm:$0xff]
      %v1735 = vld [vmem:[%s1732 + $0x10] sm:$0xff]
      %v1736 = vld [vmem:[%s1732 + $0x18] sm:$0xff]
      %v1737 = vld [vmem:[%s1732 + $0x20] sm:$0xff]
      %v1738 = vld [vmem:[%s1732 + $0x28] sm:$0xff]
      %v1739 = vld [vmem:[%s1732 + $0x30] sm:$0xff]
      %v1740 = vld [vmem:[%s1732 + $0x38] sm:$0xff]
      %v1741 = vld [vmem:[%s1732 + $0x40] sm:$0xff]
      %v1742 = vld [vmem:[%s1732 + $0x48] sm:$0xff]
      %v1743 = vld [vmem:[%s1732 + $0x50] sm:$0xff]
      %v1744 = vld [vmem:[%s1732 + $0x58] sm:$0xff]
      %v1745 = vld [vmem:[%s1732 + $0x60] sm:$0xff]
      %v1746 = vld [vmem:[%s1732 + $0x68] sm:$0xff]
      %v1747 = vld [vmem:[%s1732 + $0x70] sm:$0xff]
      %v1748 = vld [vmem:[%s1732 + $0x78] sm:$0xff]
      %v1749 = vld [vmem:[%s1732 + $0x80] sm:$0xff]
      %v1750 = vld [vmem:[%s1732 + $0x88] sm:$0xff]
      %v1751 = vld [vmem:[%s1732 + $0x90] sm:$0xff]
      %v1752 = vld [vmem:[%s1732 + $0x98] sm:$0xff]
      %v1753 = vld [vmem:[%s1732 + $0xa0] sm:$0xff]
      %v1754 = vld [vmem:[%s1732 + $0xa8] sm:$0xff]
      %v1755 = vld [vmem:[%s1732 + $0xb0] sm:$0xff]
      %v1756 = vld [vmem:[%s1732 + $0xb8] sm:$0xff]
      %v1757 = vld [vmem:[%s1732 + $0xc0] sm:$0xff]
      %v1758 = vld [vmem:[%s1732 + $0xc8] sm:$0xff]
      %v1759 = vld [vmem:[%s1732 + $0xd0] sm:$0xff]
      %v1760 = vld [vmem:[%s1732 + $0xd8] sm:$0xff]
      %v1761 = vld [vmem:[%s1732 + $0xe0] sm:$0xff]
      %v1762 = vld [vmem:[%s1732 + $0xe8] sm:$0xff]
      %v1763 = vld [vmem:[%s1732 + $0xf0] sm:$0xff]
      %v1764 = vld [vmem:[%s1732 + $0xf8] sm:$0xff]
      %s1765 = scalar_lea.vmem %s265, 768
      %v1766 = vld [vmem:[%s1765] sm:$0xff]
      %v1767 = vld [vmem:[%s1765 + $0x8] sm:$0xff]
      %v1768 = vld [vmem:[%s1765 + $0x10] sm:$0xff]
      %v1769 = vld [vmem:[%s1765 + $0x18] sm:$0xff]
      %v1770 = vld [vmem:[%s1765 + $0x20] sm:$0xff]
      %v1771 = vld [vmem:[%s1765 + $0x28] sm:$0xff]
      %v1772 = vld [vmem:[%s1765 + $0x30] sm:$0xff]
      %v1773 = vld [vmem:[%s1765 + $0x38] sm:$0xff]
      %v1774 = vld [vmem:[%s1765 + $0x40] sm:$0xff]
      %v1775 = vld [vmem:[%s1765 + $0x48] sm:$0xff]
      %v1776 = vld [vmem:[%s1765 + $0x50] sm:$0xff]
      %v1777 = vld [vmem:[%s1765 + $0x58] sm:$0xff]
      %v1778 = vld [vmem:[%s1765 + $0x60] sm:$0xff]
      %v1779 = vld [vmem:[%s1765 + $0x68] sm:$0xff]
      %v1780 = vld [vmem:[%s1765 + $0x70] sm:$0xff]
      %v1781 = vld [vmem:[%s1765 + $0x78] sm:$0xff]
      %1782 = vmatpush.msra.mxu0 %v1781
      %1783 = vmatpush.msra.mxu0 %v1780
      %1784 = vmatpush.msra.mxu0 %v1779
      %1785 = vmatpush.msra.mxu0 %v1778
      %1786 = vmatpush.msra.mxu0 %v1777
      %1787 = vmatpush.msra.mxu0 %v1776
      %1788 = vmatpush.msra.mxu0 %v1775
      %1789 = vmatpush.msra.mxu0 %v1774
      %1790 = vmatpush.msra.mxu0 %v1773
      %1791 = vmatpush.msra.mxu0 %v1772
      %1792 = vmatpush.msra.mxu0 %v1771
      %1793 = vmatpush.msra.mxu0 %v1770
      %1794 = vmatpush.msra.mxu0 %v1769
      %1795 = vmatpush.msra.mxu0 %v1768
      %1796 = vmatpush.msra.mxu0 %v1767
      %1797 = vmatpush.msra.mxu0 %v1766
      %1798 = vmatmul.f32.gmra.mxu0 %v1733
      %v1799 = vpop.f32.mrf.mxu0
      %v1800 = vadd.f32 0.0, %v1799
      %1801 = vmatmul.f32.gmra.mxu0 %v1734
      %v1802 = vpop.f32.mrf.mxu0
      %v1803 = vadd.f32 0.0, %v1802
      %1804 = vmatmul.f32.gmra.mxu0 %v1735
      %v1805 = vpop.f32.mrf.mxu0
      %v1806 = vadd.f32 0.0, %v1805
      %1807 = vmatmul.f32.gmra.mxu0 %v1736
      %v1808 = vpop.f32.mrf.mxu0
      %v1809 = vadd.f32 0.0, %v1808
      %1810 = vmatmul.f32.gmra.mxu0 %v1737
      %v1811 = vpop.f32.mrf.mxu0
      %v1812 = vadd.f32 0.0, %v1811
      %1813 = vmatmul.f32.gmra.mxu0 %v1738
      %v1814 = vpop.f32.mrf.mxu0
      %v1815 = vadd.f32 0.0, %v1814
      %1816 = vmatmul.f32.gmra.mxu0 %v1739
      %v1817 = vpop.f32.mrf.mxu0
      %v1818 = vadd.f32 0.0, %v1817
      %1819 = vmatmul.f32.gmra.mxu0 %v1740
      %v1820 = vpop.f32.mrf.mxu0
      %v1821 = vadd.f32 0.0, %v1820
      %1822 = vmatmul.f32.gmra.mxu0 %v1741
      %v1823 = vpop.f32.mrf.mxu0
      %v1824 = vadd.f32 0.0, %v1823
      %1825 = vmatmul.f32.gmra.mxu0 %v1742
      %v1826 = vpop.f32.mrf.mxu0
      %v1827 = vadd.f32 0.0, %v1826
      %1828 = vmatmul.f32.gmra.mxu0 %v1743
      %v1829 = vpop.f32.mrf.mxu0
      %v1830 = vadd.f32 0.0, %v1829
      %1831 = vmatmul.f32.gmra.mxu0 %v1744
      %v1832 = vpop.f32.mrf.mxu0
      %v1833 = vadd.f32 0.0, %v1832
      %1834 = vmatmul.f32.gmra.mxu0 %v1745
      %v1835 = vpop.f32.mrf.mxu0
      %v1836 = vadd.f32 0.0, %v1835
      %1837 = vmatmul.f32.gmra.mxu0 %v1746
      %v1838 = vpop.f32.mrf.mxu0
      %v1839 = vadd.f32 0.0, %v1838
      %1840 = vmatmul.f32.gmra.mxu0 %v1747
      %v1841 = vpop.f32.mrf.mxu0
      %v1842 = vadd.f32 0.0, %v1841
      %1843 = vmatmul.f32.gmra.mxu0 %v1748
      %v1844 = vpop.f32.mrf.mxu0
      %v1845 = vadd.f32 0.0, %v1844
      %1846 = vmatmul.f32.gmra.mxu0 %v1749
      %v1847 = vpop.f32.mrf.mxu0
      %v1848 = vadd.f32 0.0, %v1847
      %1849 = vmatmul.f32.gmra.mxu0 %v1750
      %v1850 = vpop.f32.mrf.mxu0
      %v1851 = vadd.f32 0.0, %v1850
      %1852 = vmatmul.f32.gmra.mxu0 %v1751
      %v1853 = vpop.f32.mrf.mxu0
      %v1854 = vadd.f32 0.0, %v1853
      %1855 = vmatmul.f32.gmra.mxu0 %v1752
      %v1856 = vpop.f32.mrf.mxu0
      %v1857 = vadd.f32 0.0, %v1856
      %1858 = vmatmul.f32.gmra.mxu0 %v1753
      %v1859 = vpop.f32.mrf.mxu0
      %v1860 = vadd.f32 0.0, %v1859
      %1861 = vmatmul.f32.gmra.mxu0 %v1754
      %v1862 = vpop.f32.mrf.mxu0
      %v1863 = vadd.f32 0.0, %v1862
      %1864 = vmatmul.f32.gmra.mxu0 %v1755
      %v1865 = vpop.f32.mrf.mxu0
      %v1866 = vadd.f32 0.0, %v1865
      %1867 = vmatmul.f32.gmra.mxu0 %v1756
      %v1868 = vpop.f32.mrf.mxu0
      %v1869 = vadd.f32 0.0, %v1868
      %1870 = vmatmul.f32.gmra.mxu0 %v1757
      %v1871 = vpop.f32.mrf.mxu0
      %v1872 = vadd.f32 0.0, %v1871
      %1873 = vmatmul.f32.gmra.mxu0 %v1758
      %v1874 = vpop.f32.mrf.mxu0
      %v1875 = vadd.f32 0.0, %v1874
      %1876 = vmatmul.f32.gmra.mxu0 %v1759
      %v1877 = vpop.f32.mrf.mxu0
      %v1878 = vadd.f32 0.0, %v1877
      %1879 = vmatmul.f32.gmra.mxu0 %v1760
      %v1880 = vpop.f32.mrf.mxu0
      %v1881 = vadd.f32 0.0, %v1880
      %1882 = vmatmul.f32.gmra.mxu0 %v1761
      %v1883 = vpop.f32.mrf.mxu0
      %v1884 = vadd.f32 0.0, %v1883
      %1885 = vmatmul.f32.gmra.mxu0 %v1762
      %v1886 = vpop.f32.mrf.mxu0
      %v1887 = vadd.f32 0.0, %v1886
      %1888 = vmatmul.f32.gmra.mxu0 %v1763
      %v1889 = vpop.f32.mrf.mxu0
      %v1890 = vadd.f32 0.0, %v1889
      %1891 = vmatmul.f32.gmra.mxu0 %v1764
      %v1892 = vpop.f32.mrf.mxu0
      %v1893 = vadd.f32 0.0, %v1892
      %1894 = vdwg.mxu0
      %v1895 = vadd.f32 %v1700, %v1800
      %v1896 = vadd.f32 %v1701, %v1803
      %v1897 = vadd.f32 %v1702, %v1806
      %v1898 = vadd.f32 %v1703, %v1809
      %v1899 = vadd.f32 %v1704, %v1812
      %v1900 = vadd.f32 %v1705, %v1815
      %v1901 = vadd.f32 %v1706, %v1818
      %v1902 = vadd.f32 %v1707, %v1821
      %v1903 = vadd.f32 %v1708, %v1824
      %v1904 = vadd.f32 %v1709, %v1827
      %v1905 = vadd.f32 %v1710, %v1830
      %v1906 = vadd.f32 %v1711, %v1833
      %v1907 = vadd.f32 %v1712, %v1836
      %v1908 = vadd.f32 %v1713, %v1839
      %v1909 = vadd.f32 %v1714, %v1842
      %v1910 = vadd.f32 %v1715, %v1845
      %v1911 = vadd.f32 %v1716, %v1848
      %v1912 = vadd.f32 %v1717, %v1851
      %v1913 = vadd.f32 %v1718, %v1854
      %v1914 = vadd.f32 %v1719, %v1857
      %v1915 = vadd.f32 %v1720, %v1860
      %v1916 = vadd.f32 %v1721, %v1863
      %v1917 = vadd.f32 %v1722, %v1866
      %v1918 = vadd.f32 %v1723, %v1869
      %v1919 = vadd.f32 %v1724, %v1872
      %v1920 = vadd.f32 %v1725, %v1875
      %v1921 = vadd.f32 %v1726, %v1878
      %v1922 = vadd.f32 %v1727, %v1881
      %v1923 = vadd.f32 %v1728, %v1884
      %v1924 = vadd.f32 %v1729, %v1887
      %v1925 = vadd.f32 %v1730, %v1890
      %v1926 = vadd.f32 %v1731, %v1893
      %s1927 = scalar_lea.vmem [#allocation2], 320
      %v1928 = vld [vmem:[%s1927] sm:$0xff]
      %v1929 = vld [vmem:[%s1927 + $0x8] sm:$0xff]
      %v1930 = vld [vmem:[%s1927 + $0x10] sm:$0xff]
      %v1931 = vld [vmem:[%s1927 + $0x18] sm:$0xff]
      %v1932 = vld [vmem:[%s1927 + $0x20] sm:$0xff]
      %v1933 = vld [vmem:[%s1927 + $0x28] sm:$0xff]
      %v1934 = vld [vmem:[%s1927 + $0x30] sm:$0xff]
      %v1935 = vld [vmem:[%s1927 + $0x38] sm:$0xff]
      %v1936 = vld [vmem:[%s1927 + $0x40] sm:$0xff]
      %v1937 = vld [vmem:[%s1927 + $0x48] sm:$0xff]
      %v1938 = vld [vmem:[%s1927 + $0x50] sm:$0xff]
      %v1939 = vld [vmem:[%s1927 + $0x58] sm:$0xff]
      %v1940 = vld [vmem:[%s1927 + $0x60] sm:$0xff]
      %v1941 = vld [vmem:[%s1927 + $0x68] sm:$0xff]
      %v1942 = vld [vmem:[%s1927 + $0x70] sm:$0xff]
      %v1943 = vld [vmem:[%s1927 + $0x78] sm:$0xff]
      %v1944 = vld [vmem:[%s1927 + $0x80] sm:$0xff]
      %v1945 = vld [vmem:[%s1927 + $0x88] sm:$0xff]
      %v1946 = vld [vmem:[%s1927 + $0x90] sm:$0xff]
      %v1947 = vld [vmem:[%s1927 + $0x98] sm:$0xff]
      %v1948 = vld [vmem:[%s1927 + $0xa0] sm:$0xff]
      %v1949 = vld [vmem:[%s1927 + $0xa8] sm:$0xff]
      %v1950 = vld [vmem:[%s1927 + $0xb0] sm:$0xff]
      %v1951 = vld [vmem:[%s1927 + $0xb8] sm:$0xff]
      %v1952 = vld [vmem:[%s1927 + $0xc0] sm:$0xff]
      %v1953 = vld [vmem:[%s1927 + $0xc8] sm:$0xff]
      %v1954 = vld [vmem:[%s1927 + $0xd0] sm:$0xff]
      %v1955 = vld [vmem:[%s1927 + $0xd8] sm:$0xff]
      %v1956 = vld [vmem:[%s1927 + $0xe0] sm:$0xff]
      %v1957 = vld [vmem:[%s1927 + $0xe8] sm:$0xff]
      %v1958 = vld [vmem:[%s1927 + $0xf0] sm:$0xff]
      %v1959 = vld [vmem:[%s1927 + $0xf8] sm:$0xff]
      %s1960 = scalar_lea.vmem %s265, 896
      %v1961 = vld [vmem:[%s1960] sm:$0xff]
      %v1962 = vld [vmem:[%s1960 + $0x8] sm:$0xff]
      %v1963 = vld [vmem:[%s1960 + $0x10] sm:$0xff]
      %v1964 = vld [vmem:[%s1960 + $0x18] sm:$0xff]
      %v1965 = vld [vmem:[%s1960 + $0x20] sm:$0xff]
      %v1966 = vld [vmem:[%s1960 + $0x28] sm:$0xff]
      %v1967 = vld [vmem:[%s1960 + $0x30] sm:$0xff]
      %v1968 = vld [vmem:[%s1960 + $0x38] sm:$0xff]
      %v1969 = vld [vmem:[%s1960 + $0x40] sm:$0xff]
      %v1970 = vld [vmem:[%s1960 + $0x48] sm:$0xff]
      %v1971 = vld [vmem:[%s1960 + $0x50] sm:$0xff]
      %v1972 = vld [vmem:[%s1960 + $0x58] sm:$0xff]
      %v1973 = vld [vmem:[%s1960 + $0x60] sm:$0xff]
      %v1974 = vld [vmem:[%s1960 + $0x68] sm:$0xff]
      %v1975 = vld [vmem:[%s1960 + $0x70] sm:$0xff]
      %v1976 = vld [vmem:[%s1960 + $0x78] sm:$0xff]
      %1977 = vmatpush.msra.mxu0 %v1976
      %1978 = vmatpush.msra.mxu0 %v1975
      %1979 = vmatpush.msra.mxu0 %v1974
      %1980 = vmatpush.msra.mxu0 %v1973
      %1981 = vmatpush.msra.mxu0 %v1972
      %1982 = vmatpush.msra.mxu0 %v1971
      %1983 = vmatpush.msra.mxu0 %v1970
      %1984 = vmatpush.msra.mxu0 %v1969
      %1985 = vmatpush.msra.mxu0 %v1968
      %1986 = vmatpush.msra.mxu0 %v1967
      %1987 = vmatpush.msra.mxu0 %v1966
      %1988 = vmatpush.msra.mxu0 %v1965
      %1989 = vmatpush.msra.mxu0 %v1964
      %1990 = vmatpush.msra.mxu0 %v1963
      %1991 = vmatpush.msra.mxu0 %v1962
      %1992 = vmatpush.msra.mxu0 %v1961
      %1993 = vmatmul.f32.gmra.mxu0 %v1928
      %v1994 = vpop.f32.mrf.mxu0
      %v1995 = vadd.f32 0.0, %v1994
      %1996 = vmatmul.f32.gmra.mxu0 %v1929
      %v1997 = vpop.f32.mrf.mxu0
      %v1998 = vadd.f32 0.0, %v1997
      %1999 = vmatmul.f32.gmra.mxu0 %v1930
      %v2000 = vpop.f32.mrf.mxu0
      %v2001 = vadd.f32 0.0, %v2000
      %2002 = vmatmul.f32.gmra.mxu0 %v1931
      %v2003 = vpop.f32.mrf.mxu0
      %v2004 = vadd.f32 0.0, %v2003
      %2005 = vmatmul.f32.gmra.mxu0 %v1932
      %v2006 = vpop.f32.mrf.mxu0
      %v2007 = vadd.f32 0.0, %v2006
      %2008 = vmatmul.f32.gmra.mxu0 %v1933
      %v2009 = vpop.f32.mrf.mxu0
      %v2010 = vadd.f32 0.0, %v2009
      %2011 = vmatmul.f32.gmra.mxu0 %v1934
      %v2012 = vpop.f32.mrf.mxu0
      %v2013 = vadd.f32 0.0, %v2012
      %2014 = vmatmul.f32.gmra.mxu0 %v1935
      %v2015 = vpop.f32.mrf.mxu0
      %v2016 = vadd.f32 0.0, %v2015
      %2017 = vmatmul.f32.gmra.mxu0 %v1936
      %v2018 = vpop.f32.mrf.mxu0
      %v2019 = vadd.f32 0.0, %v2018
      %2020 = vmatmul.f32.gmra.mxu0 %v1937
      %v2021 = vpop.f32.mrf.mxu0
      %v2022 = vadd.f32 0.0, %v2021
      %2023 = vmatmul.f32.gmra.mxu0 %v1938
      %v2024 = vpop.f32.mrf.mxu0
      %v2025 = vadd.f32 0.0, %v2024
      %2026 = vmatmul.f32.gmra.mxu0 %v1939
      %v2027 = vpop.f32.mrf.mxu0
      %v2028 = vadd.f32 0.0, %v2027
      %2029 = vmatmul.f32.gmra.mxu0 %v1940
      %v2030 = vpop.f32.mrf.mxu0
      %v2031 = vadd.f32 0.0, %v2030
      %2032 = vmatmul.f32.gmra.mxu0 %v1941
      %v2033 = vpop.f32.mrf.mxu0
      %v2034 = vadd.f32 0.0, %v2033
      %2035 = vmatmul.f32.gmra.mxu0 %v1942
      %v2036 = vpop.f32.mrf.mxu0
      %v2037 = vadd.f32 0.0, %v2036
      %2038 = vmatmul.f32.gmra.mxu0 %v1943
      %v2039 = vpop.f32.mrf.mxu0
      %v2040 = vadd.f32 0.0, %v2039
      %2041 = vmatmul.f32.gmra.mxu0 %v1944
      %v2042 = vpop.f32.mrf.mxu0
      %v2043 = vadd.f32 0.0, %v2042
      %2044 = vmatmul.f32.gmra.mxu0 %v1945
      %v2045 = vpop.f32.mrf.mxu0
      %v2046 = vadd.f32 0.0, %v2045
      %2047 = vmatmul.f32.gmra.mxu0 %v1946
      %v2048 = vpop.f32.mrf.mxu0
      %v2049 = vadd.f32 0.0, %v2048
      %2050 = vmatmul.f32.gmra.mxu0 %v1947
      %v2051 = vpop.f32.mrf.mxu0
      %v2052 = vadd.f32 0.0, %v2051
      %2053 = vmatmul.f32.gmra.mxu0 %v1948
      %v2054 = vpop.f32.mrf.mxu0
      %v2055 = vadd.f32 0.0, %v2054
      %2056 = vmatmul.f32.gmra.mxu0 %v1949
      %v2057 = vpop.f32.mrf.mxu0
      %v2058 = vadd.f32 0.0, %v2057
      %2059 = vmatmul.f32.gmra.mxu0 %v1950
      %v2060 = vpop.f32.mrf.mxu0
      %v2061 = vadd.f32 0.0, %v2060
      %2062 = vmatmul.f32.gmra.mxu0 %v1951
      %v2063 = vpop.f32.mrf.mxu0
      %v2064 = vadd.f32 0.0, %v2063
      %2065 = vmatmul.f32.gmra.mxu0 %v1952
      %v2066 = vpop.f32.mrf.mxu0
      %v2067 = vadd.f32 0.0, %v2066
      %2068 = vmatmul.f32.gmra.mxu0 %v1953
      %v2069 = vpop.f32.mrf.mxu0
      %v2070 = vadd.f32 0.0, %v2069
      %2071 = vmatmul.f32.gmra.mxu0 %v1954
      %v2072 = vpop.f32.mrf.mxu0
      %v2073 = vadd.f32 0.0, %v2072
      %2074 = vmatmul.f32.gmra.mxu0 %v1955
      %v2075 = vpop.f32.mrf.mxu0
      %v2076 = vadd.f32 0.0, %v2075
      %2077 = vmatmul.f32.gmra.mxu0 %v1956
      %v2078 = vpop.f32.mrf.mxu0
      %v2079 = vadd.f32 0.0, %v2078
      %2080 = vmatmul.f32.gmra.mxu0 %v1957
      %v2081 = vpop.f32.mrf.mxu0
      %v2082 = vadd.f32 0.0, %v2081
      %2083 = vmatmul.f32.gmra.mxu0 %v1958
      %v2084 = vpop.f32.mrf.mxu0
      %v2085 = vadd.f32 0.0, %v2084
      %2086 = vmatmul.f32.gmra.mxu0 %v1959
      %v2087 = vpop.f32.mrf.mxu0
      %v2088 = vadd.f32 0.0, %v2087
      %2089 = vdwg.mxu0
      %v2090 = vadd.f32 %v1895, %v1995
      %v2091 = vadd.f32 %v1896, %v1998
      %v2092 = vadd.f32 %v1897, %v2001
      %v2093 = vadd.f32 %v1898, %v2004
      %v2094 = vadd.f32 %v1899, %v2007
      %v2095 = vadd.f32 %v1900, %v2010
      %v2096 = vadd.f32 %v1901, %v2013
      %v2097 = vadd.f32 %v1902, %v2016
      %v2098 = vadd.f32 %v1903, %v2019
      %v2099 = vadd.f32 %v1904, %v2022
      %v2100 = vadd.f32 %v1905, %v2025
      %v2101 = vadd.f32 %v1906, %v2028
      %v2102 = vadd.f32 %v1907, %v2031
      %v2103 = vadd.f32 %v1908, %v2034
      %v2104 = vadd.f32 %v1909, %v2037
      %v2105 = vadd.f32 %v1910, %v2040
      %v2106 = vadd.f32 %v1911, %v2043
      %v2107 = vadd.f32 %v1912, %v2046
      %v2108 = vadd.f32 %v1913, %v2049
      %v2109 = vadd.f32 %v1914, %v2052
      %v2110 = vadd.f32 %v1915, %v2055
      %v2111 = vadd.f32 %v1916, %v2058
      %v2112 = vadd.f32 %v1917, %v2061
      %v2113 = vadd.f32 %v1918, %v2064
      %v2114 = vadd.f32 %v1919, %v2067
      %v2115 = vadd.f32 %v1920, %v2070
      %v2116 = vadd.f32 %v1921, %v2073
      %v2117 = vadd.f32 %v1922, %v2076
      %v2118 = vadd.f32 %v1923, %v2079
      %v2119 = vadd.f32 %v1924, %v2082
      %v2120 = vadd.f32 %v1925, %v2085
      %v2121 = vadd.f32 %v1926, %v2088
      %s2122 = scalar_lea.vmem [#allocation2], 608
      %v2123 = vld [vmem:[%s2122] sm:$0xff]
      %v2124 = vld [vmem:[%s2122 + $0x8] sm:$0xff]
      %v2125 = vld [vmem:[%s2122 + $0x10] sm:$0xff]
      %v2126 = vld [vmem:[%s2122 + $0x18] sm:$0xff]
      %v2127 = vld [vmem:[%s2122 + $0x20] sm:$0xff]
      %v2128 = vld [vmem:[%s2122 + $0x28] sm:$0xff]
      %v2129 = vld [vmem:[%s2122 + $0x30] sm:$0xff]
      %v2130 = vld [vmem:[%s2122 + $0x38] sm:$0xff]
      %v2131 = vld [vmem:[%s2122 + $0x40] sm:$0xff]
      %v2132 = vld [vmem:[%s2122 + $0x48] sm:$0xff]
      %v2133 = vld [vmem:[%s2122 + $0x50] sm:$0xff]
      %v2134 = vld [vmem:[%s2122 + $0x58] sm:$0xff]
      %v2135 = vld [vmem:[%s2122 + $0x60] sm:$0xff]
      %v2136 = vld [vmem:[%s2122 + $0x68] sm:$0xff]
      %v2137 = vld [vmem:[%s2122 + $0x70] sm:$0xff]
      %v2138 = vld [vmem:[%s2122 + $0x78] sm:$0xff]
      %v2139 = vld [vmem:[%s2122 + $0x80] sm:$0xff]
      %v2140 = vld [vmem:[%s2122 + $0x88] sm:$0xff]
      %v2141 = vld [vmem:[%s2122 + $0x90] sm:$0xff]
      %v2142 = vld [vmem:[%s2122 + $0x98] sm:$0xff]
      %v2143 = vld [vmem:[%s2122 + $0xa0] sm:$0xff]
      %v2144 = vld [vmem:[%s2122 + $0xa8] sm:$0xff]
      %v2145 = vld [vmem:[%s2122 + $0xb0] sm:$0xff]
      %v2146 = vld [vmem:[%s2122 + $0xb8] sm:$0xff]
      %v2147 = vld [vmem:[%s2122 + $0xc0] sm:$0xff]
      %v2148 = vld [vmem:[%s2122 + $0xc8] sm:$0xff]
      %v2149 = vld [vmem:[%s2122 + $0xd0] sm:$0xff]
      %v2150 = vld [vmem:[%s2122 + $0xd8] sm:$0xff]
      %v2151 = vld [vmem:[%s2122 + $0xe0] sm:$0xff]
      %v2152 = vld [vmem:[%s2122 + $0xe8] sm:$0xff]
      %v2153 = vld [vmem:[%s2122 + $0xf0] sm:$0xff]
      %v2154 = vld [vmem:[%s2122 + $0xf8] sm:$0xff]
      %s2155 = scalar_lea.vmem %s265, 1024
      %v2156 = vld [vmem:[%s2155] sm:$0xff]
      %v2157 = vld [vmem:[%s2155 + $0x8] sm:$0xff]
      %v2158 = vld [vmem:[%s2155 + $0x10] sm:$0xff]
      %v2159 = vld [vmem:[%s2155 + $0x18] sm:$0xff]
      %v2160 = vld [vmem:[%s2155 + $0x20] sm:$0xff]
      %v2161 = vld [vmem:[%s2155 + $0x28] sm:$0xff]
      %v2162 = vld [vmem:[%s2155 + $0x30] sm:$0xff]
      %v2163 = vld [vmem:[%s2155 + $0x38] sm:$0xff]
      %v2164 = vld [vmem:[%s2155 + $0x40] sm:$0xff]
      %v2165 = vld [vmem:[%s2155 + $0x48] sm:$0xff]
      %v2166 = vld [vmem:[%s2155 + $0x50] sm:$0xff]
      %v2167 = vld [vmem:[%s2155 + $0x58] sm:$0xff]
      %v2168 = vld [vmem:[%s2155 + $0x60] sm:$0xff]
      %v2169 = vld [vmem:[%s2155 + $0x68] sm:$0xff]
      %v2170 = vld [vmem:[%s2155 + $0x70] sm:$0xff]
      %v2171 = vld [vmem:[%s2155 + $0x78] sm:$0xff]
      %2172 = vmatpush.msra.mxu0 %v2171
      %2173 = vmatpush.msra.mxu0 %v2170
      %2174 = vmatpush.msra.mxu0 %v2169
      %2175 = vmatpush.msra.mxu0 %v2168
      %2176 = vmatpush.msra.mxu0 %v2167
      %2177 = vmatpush.msra.mxu0 %v2166
      %2178 = vmatpush.msra.mxu0 %v2165
      %2179 = vmatpush.msra.mxu0 %v2164
      %2180 = vmatpush.msra.mxu0 %v2163
      %2181 = vmatpush.msra.mxu0 %v2162
      %2182 = vmatpush.msra.mxu0 %v2161
      %2183 = vmatpush.msra.mxu0 %v2160
      %2184 = vmatpush.msra.mxu0 %v2159
      %2185 = vmatpush.msra.mxu0 %v2158
      %2186 = vmatpush.msra.mxu0 %v2157
      %2187 = vmatpush.msra.mxu0 %v2156
      %2188 = vmatmul.f32.gmra.mxu0 %v2123
      %v2189 = vpop.f32.mrf.mxu0
      %v2190 = vadd.f32 0.0, %v2189
      %2191 = vmatmul.f32.gmra.mxu0 %v2124
      %v2192 = vpop.f32.mrf.mxu0
      %v2193 = vadd.f32 0.0, %v2192
      %2194 = vmatmul.f32.gmra.mxu0 %v2125
      %v2195 = vpop.f32.mrf.mxu0
      %v2196 = vadd.f32 0.0, %v2195
      %2197 = vmatmul.f32.gmra.mxu0 %v2126
      %v2198 = vpop.f32.mrf.mxu0
      %v2199 = vadd.f32 0.0, %v2198
      %2200 = vmatmul.f32.gmra.mxu0 %v2127
      %v2201 = vpop.f32.mrf.mxu0
      %v2202 = vadd.f32 0.0, %v2201
      %2203 = vmatmul.f32.gmra.mxu0 %v2128
      %v2204 = vpop.f32.mrf.mxu0
      %v2205 = vadd.f32 0.0, %v2204
      %2206 = vmatmul.f32.gmra.mxu0 %v2129
      %v2207 = vpop.f32.mrf.mxu0
      %v2208 = vadd.f32 0.0, %v2207
      %2209 = vmatmul.f32.gmra.mxu0 %v2130
      %v2210 = vpop.f32.mrf.mxu0
      %v2211 = vadd.f32 0.0, %v2210
      %2212 = vmatmul.f32.gmra.mxu0 %v2131
      %v2213 = vpop.f32.mrf.mxu0
      %v2214 = vadd.f32 0.0, %v2213
      %2215 = vmatmul.f32.gmra.mxu0 %v2132
      %v2216 = vpop.f32.mrf.mxu0
      %v2217 = vadd.f32 0.0, %v2216
      %2218 = vmatmul.f32.gmra.mxu0 %v2133
      %v2219 = vpop.f32.mrf.mxu0
      %v2220 = vadd.f32 0.0, %v2219
      %2221 = vmatmul.f32.gmra.mxu0 %v2134
      %v2222 = vpop.f32.mrf.mxu0
      %v2223 = vadd.f32 0.0, %v2222
      %2224 = vmatmul.f32.gmra.mxu0 %v2135
      %v2225 = vpop.f32.mrf.mxu0
      %v2226 = vadd.f32 0.0, %v2225
      %2227 = vmatmul.f32.gmra.mxu0 %v2136
      %v2228 = vpop.f32.mrf.mxu0
      %v2229 = vadd.f32 0.0, %v2228
      %2230 = vmatmul.f32.gmra.mxu0 %v2137
      %v2231 = vpop.f32.mrf.mxu0
      %v2232 = vadd.f32 0.0, %v2231
      %2233 = vmatmul.f32.gmra.mxu0 %v2138
      %v2234 = vpop.f32.mrf.mxu0
      %v2235 = vadd.f32 0.0, %v2234
      %2236 = vmatmul.f32.gmra.mxu0 %v2139
      %v2237 = vpop.f32.mrf.mxu0
      %v2238 = vadd.f32 0.0, %v2237
      %2239 = vmatmul.f32.gmra.mxu0 %v2140
      %v2240 = vpop.f32.mrf.mxu0
      %v2241 = vadd.f32 0.0, %v2240
      %2242 = vmatmul.f32.gmra.mxu0 %v2141
      %v2243 = vpop.f32.mrf.mxu0
      %v2244 = vadd.f32 0.0, %v2243
      %2245 = vmatmul.f32.gmra.mxu0 %v2142
      %v2246 = vpop.f32.mrf.mxu0
      %v2247 = vadd.f32 0.0, %v2246
      %2248 = vmatmul.f32.gmra.mxu0 %v2143
      %v2249 = vpop.f32.mrf.mxu0
      %v2250 = vadd.f32 0.0, %v2249
      %2251 = vmatmul.f32.gmra.mxu0 %v2144
      %v2252 = vpop.f32.mrf.mxu0
      %v2253 = vadd.f32 0.0, %v2252
      %2254 = vmatmul.f32.gmra.mxu0 %v2145
      %v2255 = vpop.f32.mrf.mxu0
      %v2256 = vadd.f32 0.0, %v2255
      %2257 = vmatmul.f32.gmra.mxu0 %v2146
      %v2258 = vpop.f32.mrf.mxu0
      %v2259 = vadd.f32 0.0, %v2258
      %2260 = vmatmul.f32.gmra.mxu0 %v2147
      %v2261 = vpop.f32.mrf.mxu0
      %v2262 = vadd.f32 0.0, %v2261
      %2263 = vmatmul.f32.gmra.mxu0 %v2148
      %v2264 = vpop.f32.mrf.mxu0
      %v2265 = vadd.f32 0.0, %v2264
      %2266 = vmatmul.f32.gmra.mxu0 %v2149
      %v2267 = vpop.f32.mrf.mxu0
      %v2268 = vadd.f32 0.0, %v2267
      %2269 = vmatmul.f32.gmra.mxu0 %v2150
      %v2270 = vpop.f32.mrf.mxu0
      %v2271 = vadd.f32 0.0, %v2270
      %2272 = vmatmul.f32.gmra.mxu0 %v2151
      %v2273 = vpop.f32.mrf.mxu0
      %v2274 = vadd.f32 0.0, %v2273
      %2275 = vmatmul.f32.gmra.mxu0 %v2152
      %v2276 = vpop.f32.mrf.mxu0
      %v2277 = vadd.f32 0.0, %v2276
      %2278 = vmatmul.f32.gmra.mxu0 %v2153
      %v2279 = vpop.f32.mrf.mxu0
      %v2280 = vadd.f32 0.0, %v2279
      %2281 = vmatmul.f32.gmra.mxu0 %v2154
      %v2282 = vpop.f32.mrf.mxu0
      %v2283 = vadd.f32 0.0, %v2282
      %2284 = vdwg.mxu0
      %v2285 = vadd.f32 %v2090, %v2190
      %v2286 = vadd.f32 %v2091, %v2193
      %v2287 = vadd.f32 %v2092, %v2196
      %v2288 = vadd.f32 %v2093, %v2199
      %v2289 = vadd.f32 %v2094, %v2202
      %v2290 = vadd.f32 %v2095, %v2205
      %v2291 = vadd.f32 %v2096, %v2208
      %v2292 = vadd.f32 %v2097, %v2211
      %v2293 = vadd.f32 %v2098, %v2214
      %v2294 = vadd.f32 %v2099, %v2217
      %v2295 = vadd.f32 %v2100, %v2220
      %v2296 = vadd.f32 %v2101, %v2223
      %v2297 = vadd.f32 %v2102, %v2226
      %v2298 = vadd.f32 %v2103, %v2229
      %v2299 = vadd.f32 %v2104, %v2232
      %v2300 = vadd.f32 %v2105, %v2235
      %v2301 = vadd.f32 %v2106, %v2238
      %v2302 = vadd.f32 %v2107, %v2241
      %v2303 = vadd.f32 %v2108, %v2244
      %v2304 = vadd.f32 %v2109, %v2247
      %v2305 = vadd.f32 %v2110, %v2250
      %v2306 = vadd.f32 %v2111, %v2253
      %v2307 = vadd.f32 %v2112, %v2256
      %v2308 = vadd.f32 %v2113, %v2259
      %v2309 = vadd.f32 %v2114, %v2262
      %v2310 = vadd.f32 %v2115, %v2265
      %v2311 = vadd.f32 %v2116, %v2268
      %v2312 = vadd.f32 %v2117, %v2271
      %v2313 = vadd.f32 %v2118, %v2274
      %v2314 = vadd.f32 %v2119, %v2277
      %v2315 = vadd.f32 %v2120, %v2280
      %v2316 = vadd.f32 %v2121, %v2283
      %2317 = vst [vmem:[%s273] sm:$0xff] %v2285
      %2318 = vst [vmem:[%s273 + $0x8] sm:$0xff] %v2286
      %2319 = vst [vmem:[%s273 + $0x10] sm:$0xff] %v2287
      %2320 = vst [vmem:[%s273 + $0x18] sm:$0xff] %v2288
      %2321 = vst [vmem:[%s273 + $0x20] sm:$0xff] %v2289
      %2322 = vst [vmem:[%s273 + $0x28] sm:$0xff] %v2290
      %2323 = vst [vmem:[%s273 + $0x30] sm:$0xff] %v2291
      %2324 = vst [vmem:[%s273 + $0x38] sm:$0xff] %v2292
      %2325 = vst [vmem:[%s273 + $0x40] sm:$0xff] %v2293
      %2326 = vst [vmem:[%s273 + $0x48] sm:$0xff] %v2294
      %2327 = vst [vmem:[%s273 + $0x50] sm:$0xff] %v2295
      %2328 = vst [vmem:[%s273 + $0x58] sm:$0xff] %v2296
      %2329 = vst [vmem:[%s273 + $0x60] sm:$0xff] %v2297
      %2330 = vst [vmem:[%s273 + $0x68] sm:$0xff] %v2298
      %2331 = vst [vmem:[%s273 + $0x70] sm:$0xff] %v2299
      %2332 = vst [vmem:[%s273 + $0x78] sm:$0xff] %v2300
      %2333 = vst [vmem:[%s273 + $0x80] sm:$0xff] %v2301
      %2334 = vst [vmem:[%s273 + $0x88] sm:$0xff] %v2302
      %2335 = vst [vmem:[%s273 + $0x90] sm:$0xff] %v2303
      %2336 = vst [vmem:[%s273 + $0x98] sm:$0xff] %v2304
      %2337 = vst [vmem:[%s273 + $0xa0] sm:$0xff] %v2305
      %2338 = vst [vmem:[%s273 + $0xa8] sm:$0xff] %v2306
      %2339 = vst [vmem:[%s273 + $0xb0] sm:$0xff] %v2307
      %2340 = vst [vmem:[%s273 + $0xb8] sm:$0xff] %v2308
      %2341 = vst [vmem:[%s273 + $0xc0] sm:$0xff] %v2309
      %2342 = vst [vmem:[%s273 + $0xc8] sm:$0xff] %v2310
      %2343 = vst [vmem:[%s273 + $0xd0] sm:$0xff] %v2311
      %2344 = vst [vmem:[%s273 + $0xd8] sm:$0xff] %v2312
      %2345 = vst [vmem:[%s273 + $0xe0] sm:$0xff] %v2313
      %2346 = vst [vmem:[%s273 + $0xe8] sm:$0xff] %v2314
      %2347 = vst [vmem:[%s273 + $0xf0] sm:$0xff] %v2315
      %2348 = vst [vmem:[%s273 + $0xf8] sm:$0xff] %v2316
      %v2349 = vadd.f32 %v2285, %v2286
      %v2350 = vadd.f32 %v2349, %v2287
      %v2351 = vadd.f32 %v2350, %v2288
      %v2352 = vadd.f32 %v2351, %v2289
      %v2353 = vadd.f32 %v2352, %v2290
      %v2354 = vadd.f32 %v2353, %v2291
      %v2355 = vadd.f32 %v2354, %v2292
      %v2356 = vadd.f32 %v2355, %v2293
      %v2357 = vadd.f32 %v2356, %v2294
      %v2358 = vadd.f32 %v2357, %v2295
      %v2359 = vadd.f32 %v2358, %v2296
      %v2360 = vadd.f32 %v2359, %v2297
      %v2361 = vadd.f32 %v2360, %v2298
      %v2362 = vadd.f32 %v2361, %v2299
      %v2363 = vadd.f32 %v2362, %v2300
      %v2364 = vadd.f32 %v2363, %v2301
      %v2365 = vadd.f32 %v2364, %v2302
      %v2366 = vadd.f32 %v2365, %v2303
      %v2367 = vadd.f32 %v2366, %v2304
      %v2368 = vadd.f32 %v2367, %v2305
      %v2369 = vadd.f32 %v2368, %v2306
      %v2370 = vadd.f32 %v2369, %v2307
      %v2371 = vadd.f32 %v2370, %v2308
      %v2372 = vadd.f32 %v2371, %v2309
      %v2373 = vadd.f32 %v2372, %v2310
      %v2374 = vadd.f32 %v2373, %v2311
      %v2375 = vadd.f32 %v2374, %v2312
      %v2376 = vadd.f32 %v2375, %v2313
      %v2377 = vadd.f32 %v2376, %v2314
      %v2378 = vadd.f32 %v2377, %v2315
      %v2379 = vadd.f32 %v2378, %v2316
      %v2380 = vrot.slane %v2379, 4
      %v2381 = vadd.f32 %v2379, %v2380
      %v2382 = vrot.slane %v2381, 2
      %v2383 = vadd.f32 %v2381, %v2382
      %v2384 = vrot.slane %v2383, 1
      %v2385 = vadd.f32 %v2383, %v2384
      %v2386 = vmul.f32 %v2285, %v2285
      %v2387 = vmul.f32 %v2286, %v2286
      %v2388 = vmul.f32 %v2287, %v2287
      %v2389 = vmul.f32 %v2288, %v2288
      %v2390 = vmul.f32 %v2289, %v2289
      %v2391 = vmul.f32 %v2290, %v2290
      %v2392 = vmul.f32 %v2291, %v2291
      %v2393 = vmul.f32 %v2292, %v2292
      %v2394 = vmul.f32 %v2293, %v2293
      %v2395 = vmul.f32 %v2294, %v2294
      %v2396 = vmul.f32 %v2295, %v2295
      %v2397 = vmul.f32 %v2296, %v2296
      %v2398 = vmul.f32 %v2297, %v2297
      %v2399 = vmul.f32 %v2298, %v2298
      %v2400 = vmul.f32 %v2299, %v2299
      %v2401 = vmul.f32 %v2300, %v2300
      %v2402 = vmul.f32 %v2301, %v2301
      %v2403 = vmul.f32 %v2302, %v2302
      %v2404 = vmul.f32 %v2303, %v2303
      %v2405 = vmul.f32 %v2304, %v2304
      %v2406 = vmul.f32 %v2305, %v2305
      %v2407 = vmul.f32 %v2306, %v2306
      %v2408 = vmul.f32 %v2307, %v2307
      %v2409 = vmul.f32 %v2308, %v2308
      %v2410 = vmul.f32 %v2309, %v2309
      %v2411 = vmul.f32 %v2310, %v2310
      %v2412 = vmul.f32 %v2311, %v2311
      %v2413 = vmul.f32 %v2312, %v2312
      %v2414 = vmul.f32 %v2313, %v2313
      %v2415 = vmul.f32 %v2314, %v2314
      %v2416 = vmul.f32 %v2315, %v2315
      %v2417 = vmul.f32 %v2316, %v2316
      %v2418 = vadd.f32 %v2386, %v2387
      %v2419 = vadd.f32 %v2418, %v2388
      %v2420 = vadd.f32 %v2419, %v2389
      %v2421 = vadd.f32 %v2420, %v2390
      %v2422 = vadd.f32 %v2421, %v2391
      %v2423 = vadd.f32 %v2422, %v2392
      %v2424 = vadd.f32 %v2423, %v2393
      %v2425 = vadd.f32 %v2424, %v2394
      %v2426 = vadd.f32 %v2425, %v2395
      %v2427 = vadd.f32 %v2426, %v2396
      %v2428 = vadd.f32 %v2427, %v2397
      %v2429 = vadd.f32 %v2428, %v2398
      %v2430 = vadd.f32 %v2429, %v2399
      %v2431 = vadd.f32 %v2430, %v2400
      %v2432 = vadd.f32 %v2431, %v2401
      %v2433 = vadd.f32 %v2432, %v2402
      %v2434 = vadd.f32 %v2433, %v2403
      %v2435 = vadd.f32 %v2434, %v2404
      %v2436 = vadd.f32 %v2435, %v2405
      %v2437 = vadd.f32 %v2436, %v2406
      %v2438 = vadd.f32 %v2437, %v2407
      %v2439 = vadd.f32 %v2438, %v2408
      %v2440 = vadd.f32 %v2439, %v2409
      %v2441 = vadd.f32 %v2440, %v2410
      %v2442 = vadd.f32 %v2441, %v2411
      %v2443 = vadd.f32 %v2442, %v2412
      %v2444 = vadd.f32 %v2443, %v2413
      %v2445 = vadd.f32 %v2444, %v2414
      %v2446 = vadd.f32 %v2445, %v2415
      %v2447 = vadd.f32 %v2446, %v2416
      %v2448 = vadd.f32 %v2447, %v2417
      %v2449 = vrot.slane %v2448, 4
      %v2450 = vadd.f32 %v2448, %v2449
      %v2451 = vrot.slane %v2450, 2
      %v2452 = vadd.f32 %v2450, %v2451
      %v2453 = vrot.slane %v2452, 1
      %v2454 = vadd.f32 %v2452, %v2453
      %vm2455 = vcmask 1040384
      %v2456 = vsel %vm2455, %v2385, %v2454
      %2457 = vst [vmem:[%s280] sm:$0x3] %v2456
      %p2458 = scmp.lt.s32.totalorder %s21, 1
      %s2459 = scalar_select %p2458, %s21, 1
      %p2460 = scmp.lt.s32.totalorder %s22, 0
      %s2461 = scalar_select %p2460, %s22, 0
      %s2462 = smul.addr %s2459, 32
      %s2463 = sadd.s32 %s2461, %s2462
      %s2464 = smul.addr %s2463, 8
      %s2465 = scalar_lea.vmem %s4, %s2464
      %p2466 = scmp.lt.s32.totalorder %s21, 1
      %s2467 = scalar_select %p2466, %s21, 1
      %p2468 = scmp.lt.s32.totalorder %s22, 0
      %s2469 = scalar_select %p2468, %s22, 0
      %s2470 = sadd.s32 %s2469, %s2467
      %s2471 = smul.addr %s2470, 2
      %s2472 = scalar_lea.vmem %s5, %s2471
      // Predicated region
      $region41: #{encoder_block_forward.4} parent=35 // pred_check
        %p2473 = pneg %p143
      $region42: #{encoder_block_forward.4} parent=35 // pred_check_branch
        %2475 = sbr.rel (%p2473) target = $region44
      $region43: #{encoder_block_forward.4} parent=35 // pred_region
        _
      $region44: #{encoder_block_forward.4} parent=35 // pred_fallthru
        _
      // Predicated region
      $region45: #{encoder_block_forward.4} parent=35 // pred_check
        %p2476 = pneg %p171
      $region46: #{encoder_block_forward.4} parent=35 // pred_check_branch
        %2478 = sbr.rel (%p2476) target = $region48
      $region47: #{encoder_block_forward.4} parent=35 // pred_region
        _
      $region48: #{encoder_block_forward.4} parent=35 // pred_fallthru
        _
    $region36: #{encoder_block_forward.4} parent=5 // pred_fallthru
      _
    %p2479 = scmp.le.s32.totalorder 2, %s12
    // Predicated region
    $region49: #{encoder_block_forward.4} parent=5 // pred_check
      %p2480 = pneg %p2479
    $region50: #{encoder_block_forward.4} parent=5 // pred_check_branch
      %2482 = sbr.rel (%p2480) target = $region52
    $region51: #{encoder_block_forward.4} parent=5 // pred_region
      %s2483 = ssub.s32 %s12, 2
      // Predicated region
      $region53: #{encoder_block_forward.4} parent=51 // pred_check
        %p2484 = pneg %p149
      $region54: #{encoder_block_forward.4} parent=51 // pred_check_branch
        %2486 = sbr.rel (%p2484) target = $region56
      $region55: #{encoder_block_forward.4} parent=51 // pred_region
        %p2487 = scmp.lt.s32.totalorder %s23, 1
        %s2488 = scalar_select %p2487, %s23, 1
        %p2489 = scmp.lt.s32.totalorder %s24, 0
        %s2490 = scalar_select %p2489, %s24, 0
        %s2491 = smul.addr %s2488, 32
        %s2492 = sadd.s32 %s2490, %s2491
        %s2493 = smul.addr %s2492, 8
        %s2494 = scalar_lea.vmem %s4, %s2493
      $region56: #{encoder_block_forward.4} parent=51 // pred_fallthru
        _
      // Predicated region
      $region57: #{encoder_block_forward.4} parent=51 // pred_check
        %p2495 = pneg %p177
      $region58: #{encoder_block_forward.4} parent=51 // pred_check_branch
        %2497 = sbr.rel (%p2495) target = $region60
      $region59: #{encoder_block_forward.4} parent=51 // pred_region
        %p2498 = scmp.lt.s32.totalorder %s23, 1
        %s2499 = scalar_select %p2498, %s23, 1
        %p2500 = scmp.lt.s32.totalorder %s24, 0
        %s2501 = scalar_select %p2500, %s24, 0
        %s2502 = sadd.s32 %s2501, %s2499
        %s2503 = smul.addr %s2502, 2
        %s2504 = scalar_lea.vmem %s5, %s2503
      $region60: #{encoder_block_forward.4} parent=51 // pred_fallthru
        _
    $region52: #{encoder_block_forward.4} parent=5 // pred_fallthru
      _
  $region6: #{encoder_block_forward.4} parent=0 // loop_footer
    %s16 = sadd.s32 1, %s12
  $region7: #{encoder_block_forward.4} parent=0 // loop_footer_branch
    %11 = sbr.rel target = $region3
  $region8: #{encoder_block_forward.4} parent=0 // loop_exit
    _

</llo_original>
